<compile_context>
chip_gen: v5e
topology: v5e:2x2
jax: 0.10.0
libtpu: 0.0.40
codegen_flags: <defaults>
</compile_context>

<pallas_src>
import functools

import jax
import jax.numpy as jnp
from jax.experimental import pallas as pl
from jax.experimental.pallas import tpu as pltpu


# ----------------------------------------------------------------------------
# Single fused kernel: backbone conv + RPN head + RoI pool + box head + predictor
# ----------------------------------------------------------------------------
def _fused_frcnn_kernel(xn_ref, mask_ref, bw_ref, bb_ref, rw_ref, rb_ref,
                        hw_ref, hb_ref, pp_ref, w6_ref, b6_ref, w7_ref, b7_ref,
                        wp_ref, bp_ref, rpn_ref, det_ref, *, H, W, HWp, Cf):
    f32 = jnp.float32
    bf16 = jnp.bfloat16
    taps = [(dh, dw) for dh in (-1, 0, 1) for dw in (-1, 0, 1)]   # k == kh*3 + kw

    def shifted(x, k, dh, dw):
        # y[:, p] = x[:, p + dh*W + dw] when (h+dh, w+dw) is in bounds, else 0
        # (emulates the conv's zero padding).  One XLU lane-roll + one VPU multiply
        # per tap; masks are precomputed constants passed from the wrapper.
        off = dh * W + dw
        y = x if off == 0 else pltpu.roll(x, shift=(-off) % HWp, axis=1)
        return (y * mask_ref[k]).astype(bf16)

    # ---- backbone 3x3 conv (pad=1) + ReLU: 9 accumulated (Cf x Cin) matmuls ----
    xn = xn_ref[0]                                                # (Cinp, HWp) f32
    feat = jnp.zeros((Cf, HWp), f32)
    for k, (dh, dw) in enumerate(taps):
        feat += jnp.dot(bw_ref[k], shifted(xn, k, dh, dw),
                        preferred_element_type=f32)
    feat = jnp.maximum(feat + bb_ref[...], 0.0)                   # (Cf, HWp) f32, 4 dense vregs

    # ---- 2x2 average pool to 7x7 (RoI-feature stand-in) right after the backbone
    #      matmul so feat's live range across the RPN conv stays minimal ----
    # TODO(synk): true MultiScaleRoIAlign bilinear sampling per proposal not implemented.
    pooled = jnp.dot(feat.astype(bf16), pp_ref[...],
                     preferred_element_type=f32)                  # (Cf, 49)

    # ---- RPN 3x3 conv + ReLU: 9 accumulated (Cf x Cf) matmuls over rolled taps ----
    t = jnp.zeros((Cf, HWp), f32)
    for k, (dh, dw) in enumerate(taps):
        t += jnp.dot(rw_ref[k], shifted(feat, k, dh, dw),
                     preferred_element_type=f32)
    t = jnp.maximum(t + rb_ref[...], 0.0)

    # ---- RPN cls + bbox 1x1 heads fused; lane-dense (A5, HWp) store ----
    rpn = jnp.dot(hw_ref[...], t.astype(bf16),
                  preferred_element_type=f32) + hb_ref[...]
    rpn_ref[...] = rpn[None]                                      # (1, A5, HWp)

    # ---- box_head fc6: torch-order flatten (c*49+q) folded into per-channel
    #      weight slabs, accumulated so no value reshape/relayout is needed ----
    h = jnp.zeros((1, b6_ref.shape[-1]), f32)
    for c in range(Cf):
        h += jnp.dot(pooled[c:c + 1].astype(bf16), w6_ref[c],
                     preferred_element_type=f32)
    h = jnp.maximum(h + b6_ref[...], 0.0)                         # fc6 + ReLU
    # fc7 (the spec's box_head has NO ReLU after the second Linear)
    h = jnp.dot(h.astype(bf16), w7_ref[...], preferred_element_type=f32) + b7_ref[...]
    # FastRCNNPredictor: cls || bbox in one matmul
    det = jnp.dot(h.astype(bf16), wp_ref[...], preferred_element_type=f32) + bp_ref[...]
    det_ref[...] = det[None]                                      # (1, 1, 25)


def fused_faster_rcnn(xn, tapmask, bw, bb, rw, rb, hw, hb, pool, w6, b6, w7, b7,
                      wp, bp, *, H, W, HWp, Cf, A5):
    N, Cinp, _ = xn.shape
    Q = pool.shape[1]
    R = w7.shape[0]
    n_out = wp.shape[1]
    const2 = lambda n: (0, 0)
    const3 = lambda n: (0, 0, 0)
    kern = functools.partial(_fused_frcnn_kernel, H=H, W=W, HWp=HWp, Cf=Cf)
    return pl.pallas_call(
        kern,
        out_shape=(jax.ShapeDtypeStruct((N, A5, HWp), jnp.float32),
                   jax.ShapeDtypeStruct((N, 1, n_out), jnp.float32)),
        grid=(N,),
        in_specs=[
            pl.BlockSpec((1, Cinp, HWp), lambda n: (n, 0, 0)),   # per-image channel-major input
            pl.BlockSpec((9, 1, HWp), const3),                   # 3x3 tap border-validity masks
            pl.BlockSpec((9, Cf, Cinp), const3),                 # backbone per-tap weights
            pl.BlockSpec((Cf, 1), const2),                       # backbone bias
            pl.BlockSpec((9, Cf, Cf), const3),                   # rpn conv per-tap weights
            pl.BlockSpec((Cf, 1), const2),                       # rpn conv bias
            pl.BlockSpec((A5, Cf), const2),                      # rpn cls||bbox 1x1 weight
            pl.BlockSpec((A5, 1), const2),                       # rpn cls||bbox bias
            pl.BlockSpec((HWp, Q), const2),                      # 2x2 avg-pool matrix
            pl.BlockSpec((Cf, Q, R), const3),                    # fc6 weight (torch-order slabs)
            pl.BlockSpec((1, R), const2),                        # fc6 bias
            pl.BlockSpec((R, R), const2),                        # fc7 weight
            pl.BlockSpec((1, R), const2),                        # fc7 bias
            pl.BlockSpec((R, n_out), const2),                    # predictor cls||bbox weight
            pl.BlockSpec((1, n_out), const2),                    # predictor bias
        ],
        out_specs=(
            pl.BlockSpec((1, A5, HWp), lambda n: (n, 0, 0)),
            pl.BlockSpec((1, 1, n_out), lambda n: (n, 0, 0)),
        ),
        compiler_params=pltpu.CompilerParams(
            # v7x: one image per TensorCore; on single-TC v5e/v6e this is a short
            # 2-step sequential loop (weights stay resident across steps either way).
            dimension_semantics=("parallel",),
            vmem_limit_bytes=32 * 1024 * 1024),
    )(xn, tapmask, bw, bb, rw, rb, hw, hb, pool, w6, b6, w7, b7, wp, bp)


# ----------------------------------------------------------------------------
# Parameter initialization (deterministic, synthetic — no checkpoint loading)
# ----------------------------------------------------------------------------
def init_params(key, in_ch=3, out_ch=16, num_classes=5, num_anchors=3,
                resolution=7, representation_size=1024):
    ks = jax.random.split(key, 8)
    s = 0.02

    def nrm(k, shape):
        return (s * jax.random.normal(k, shape)).astype(jnp.float32)

    p = {}
    # backbone (stand-in: single 3x3 conv producing `out_channels` feature maps)
    p["backbone_w"] = nrm(ks[0], (3, 3, in_ch, out_ch))
    p["backbone_b"] = jnp.zeros((out_ch,), jnp.float32)
    # RPNHead: 3x3 conv + 1x1 cls (num_anchors) + 1x1 bbox (4*num_anchors)
    p["rpn_conv_w"] = nrm(ks[1], (3, 3, out_ch, out_ch))
    p["rpn_conv_b"] = jnp.zeros((out_ch,), jnp.float32)
    p["rpn_cls_w"] = nrm(ks[2], (out_ch, num_anchors))
    p["rpn_cls_b"] = jnp.zeros((num_anchors,), jnp.float32)
    p["rpn_bbox_w"] = nrm(ks[3], (out_ch, 4 * num_anchors))
    p["rpn_bbox_b"] = jnp.zeros((4 * num_anchors,), jnp.float32)
    # box_head: Flatten -> Linear(out_ch*7*7, 1024) -> ReLU -> Linear(1024, 1024)
    p["fc6_w"] = nrm(ks[4], (out_ch * resolution * resolution, representation_size))
    p["fc6_b"] = jnp.zeros((representation_size,), jnp.float32)
    p["fc7_w"] = nrm(ks[5], (representation_size, representation_size))
    p["fc7_b"] = jnp.zeros((representation_size,), jnp.float32)
    # FastRCNNPredictor
    p["cls_w"] = nrm(ks[6], (representation_size, num_classes))
    p["cls_b"] = jnp.zeros((num_classes,), jnp.float32)
    p["bbox_w"] = nrm(ks[7], (representation_size, num_classes * 4))
    p["bbox_b"] = jnp.zeros((num_classes * 4,), jnp.float32)
    return p


# ----------------------------------------------------------------------------
# Forward pass (eval mode, targets=None -> losses == {})
# ----------------------------------------------------------------------------
def faster_rcnn_forward(params, images_nchw, num_classes=5,
                        proposals_per_image=4, resolution=7):
    N, Cin, H, W = images_nchw.shape
    assert H == 2 * resolution and W == 2 * resolution
    HW = H * W
    HWp = ((HW + 127) // 128) * 128           # pad flat spatial axis to full lanes
    Cinp = 8                                  # pad input channels to a full sublane group
    Cf = params["backbone_w"].shape[-1]
    A = params["rpn_cls_w"].shape[-1]
    A5 = 5 * A
    Q = resolution * resolution
    R = params["fc6_w"].shape[-1]
    f32 = jnp.float32
    bf16 = jnp.bfloat16

    # -- GeneralizedRCNNTransform.normalize (cheap elementwise on a tiny tensor)
    # TODO(synk): GeneralizedRCNNTransform bilinear resize to min_size/max_size not implemented.
    mean = jnp.array([0.485, 0.456, 0.406], f32)
    std = jnp.array([0.229, 0.224, 0.225], f32)
    xn = (images_nchw.astype(f32) - mean[None, :, None, None]) / std[None, :, None, None]
    xn = xn.reshape(N, Cin, HW)
    xn = jnp.pad(xn, ((0, 0), (0, Cinp - Cin), (0, HWp - HW)))    # (N, Cinp, HWp)

    # -- 3x3 tap border-validity masks over the padded flat spatial axis (constants)
    hh = jnp.arange(HW) // W
    ww = jnp.arange(HW) % W
    masks = [((hh + dh >= 0) & (hh + dh < H) & (ww + dw >= 0) & (ww + dw < W))
             for dh in (-1, 0, 1) for dw in (-1, 0, 1)]
    tapmask = jnp.stack(masks).astype(f32)                        # (9, HW)
    tapmask = jnp.pad(tapmask, ((0, 0), (0, HWp - HW)))[:, None, :]   # (9, 1, HWp)

    # -- weights in channel-major / per-tap layouts, bf16 operands for the MXU
    bw = jnp.transpose(params["backbone_w"], (0, 1, 3, 2)).reshape(9, Cf, Cin)
    bw = jnp.pad(bw, ((0, 0), (0, 0), (0, Cinp - Cin))).astype(bf16)  # (9, Cf, Cinp)
    bb = params["backbone_b"].reshape(Cf, 1)
    rw = jnp.transpose(params["rpn_conv_w"], (0, 1, 3, 2)).reshape(9, Cf, Cf).astype(bf16)
    rb = params["rpn_conv_b"].reshape(Cf, 1)
    hw = jnp.concatenate([params["rpn_cls_w"].T, params["rpn_bbox_w"].T], axis=0).astype(bf16)
    hb = jnp.concatenate([params["rpn_cls_b"], params["rpn_bbox_b"]]).reshape(A5, 1)

    # -- 2x2/stride-2 average-pool matrix (flat spatial -> 7x7), pad rows are zero
    q_of_p = (hh // 2) * resolution + (ww // 2)
    pool = 0.25 * jax.nn.one_hot(q_of_p, Q, dtype=f32)             # (HW, Q)
    pool = jnp.pad(pool, ((0, HWp - HW), (0, 0))).astype(bf16)     # (HWp, Q)

    w6 = params["fc6_w"].reshape(Cf, Q, R).astype(bf16)            # torch flatten order c*49+q
    b6 = params["fc6_b"].reshape(1, R)
    w7 = params["fc7_w"].astype(bf16)
    b7 = params["fc7_b"].reshape(1, R)
    wp = jnp.concatenate([params["cls_w"], params["bbox_w"]], axis=1).astype(bf16)
    bp = jnp.concatenate([params["cls_b"], params["bbox_b"]]).reshape(1, -1)

    # -- single fused pallas_call (backbone + RPN + pool + box head + predictor)
    rpn_out, det_out = fused_faster_rcnn(
        xn, tapmask, bw, bb, rw, rb, hw, hb, pool, w6, b6, w7, b7, wp, bp,
        H=H, W=W, HWp=HWp, Cf=Cf, A5=A5)

    rpn = rpn_out[:, :, :HW]
    rpn_objectness = rpn[:, :A, :].reshape(N, A, H, W).transpose(0, 2, 3, 1)
    rpn_bbox_deltas = rpn[:, A:, :].reshape(N, 4 * A, H, W).transpose(0, 2, 3, 1)

    # TODO(synk): AnchorGenerator, proposal decode/clip, top-k + NMS, Matcher /
    #             BalancedPositiveNegativeSampler loss targets and
    #             RoIHeads.postprocess_detections / transform.postprocess are
    #             data-dependent with no clean Pallas equivalent; fixed proposals used.
    base_boxes = jnp.array([[0., 0., 7., 7.],
                            [0., 7., 7., 14.],
                            [7., 0., 14., 7.],
                            [7., 7., 14., 14.]], f32)[:proposals_per_image]
    proposals = jnp.tile(base_boxes[None], (N, 1, 1))              # (N, P, 4)

    # Box head ran once per image (stand-in RoI features are proposal-independent);
    # tile the 25-wide result per proposal here instead of repeating 784-wide features.
    head = det_out[:, 0, :]                                        # (N, 25)
    class_logits = jnp.repeat(head[:, :num_classes], proposals_per_image, axis=0)
    box_regression = jnp.repeat(head[:, num_classes:], proposals_per_image, axis=0)

    detections = {
        "proposals": proposals,
        "class_logits": class_logits,
        "box_regression": box_regression,
        "rpn_objectness": rpn_objectness,
        "rpn_bbox_deltas": rpn_bbox_deltas,
    }
    losses = {}  # eval mode / targets=None
    return detections, losses


# ----------------------------------------------------------------------------
# Demo
# ----------------------------------------------------------------------------
if __name__ == "__main__":
    key = jax.random.PRNGKey(0)
    pkey, xkey = jax.random.split(key)

    NUM_CLASSES = 5
    params = init_params(pkey, in_ch=3, out_ch=16, num_classes=NUM_CLASSES)

    # Small synthetic image batch, NCHW like PyTorch (N=2, C=3, H=W=14).
    images = jax.random.uniform(xkey, (2, 3, 14, 14), dtype=jnp.float32)

    fwd = jax.jit(functools.partial(faster_rcnn_forward, num_classes=NUM_CLASSES))
    detections, losses = fwd(params, images)
    jax.block_until_ready(detections)

    assert detections["class_logits"].shape == (2 * 4, NUM_CLASSES)
    assert detections["box_regression"].shape == (2 * 4, NUM_CLASSES * 4)
    assert detections["rpn_objectness"].shape == (2, 14, 14, 3)
    assert detections["rpn_bbox_deltas"].shape == (2, 14, 14, 12)
    assert losses == {}
    print("KERNEL_OK")
</pallas_src>

<mosaic_0001>
module attributes {stable_mosaic.version = 11 : i64} {
  func.func @_fused_frcnn_kernel(%arg0: i32, %arg1: memref<1x8x256xf32, #tpu.memory_space<vmem>>, %arg2: memref<9x1x256xf32, #tpu.memory_space<vmem>>, %arg3: memref<9x16x8xbf16, #tpu.memory_space<vmem>>, %arg4: memref<16x1xf32, #tpu.memory_space<vmem>>, %arg5: memref<9x16x16xbf16, #tpu.memory_space<vmem>>, %arg6: memref<16x1xf32, #tpu.memory_space<vmem>>, %arg7: memref<15x16xbf16, #tpu.memory_space<vmem>>, %arg8: memref<15x1xf32, #tpu.memory_space<vmem>>, %arg9: memref<256x49xbf16, #tpu.memory_space<vmem>>, %arg10: memref<16x49x1024xbf16, #tpu.memory_space<vmem>>, %arg11: memref<1x1024xf32, #tpu.memory_space<vmem>>, %arg12: memref<1024x1024xbf16, #tpu.memory_space<vmem>>, %arg13: memref<1x1024xf32, #tpu.memory_space<vmem>>, %arg14: memref<1024x25xbf16, #tpu.memory_space<vmem>>, %arg15: memref<1x25xf32, #tpu.memory_space<vmem>>, %arg16: memref<1x15x256xf32, #tpu.memory_space<vmem>>, %arg17: memref<1x1x25xf32, #tpu.memory_space<vmem>>) attributes {dimension_semantics = [#tpu.dimension_semantics<parallel>], iteration_bounds = array<i64: 2>, scalar_prefetch = 0 : i64, scratch_operands = 0 : i64, tpu.core_type = #tpu.core_type<tc>, window_params = [{transform_indices = @transform_0, window_bounds = array<i64: 1, 8, 256>}, {pipeline_mode = #tpu.pipeline_mode<synchronous>, transform_indices = @transform_1, window_bounds = array<i64: 9, 1, 256>}, {pipeline_mode = #tpu.pipeline_mode<synchronous>, transform_indices = @transform_2, window_bounds = array<i64: 9, 16, 8>}, {pipeline_mode = #tpu.pipeline_mode<synchronous>, transform_indices = @transform_3, window_bounds = array<i64: 16, 1>}, {pipeline_mode = #tpu.pipeline_mode<synchronous>, transform_indices = @transform_4, window_bounds = array<i64: 9, 16, 16>}, {pipeline_mode = #tpu.pipeline_mode<synchronous>, transform_indices = @transform_5, window_bounds = array<i64: 16, 1>}, {pipeline_mode = #tpu.pipeline_mode<synchronous>, transform_indices = @transform_6, window_bounds = array<i64: 15, 16>}, {pipeline_mode = #tpu.pipeline_mode<synchronous>, transform_indices = @transform_7, window_bounds = array<i64: 15, 1>}, {pipeline_mode = #tpu.pipeline_mode<synchronous>, transform_indices = @transform_8, window_bounds = array<i64: 256, 49>}, {pipeline_mode = #tpu.pipeline_mode<synchronous>, transform_indices = @transform_9, window_bounds = array<i64: 16, 49, 1024>}, {pipeline_mode = #tpu.pipeline_mode<synchronous>, transform_indices = @transform_10, window_bounds = array<i64: 1, 1024>}, {pipeline_mode = #tpu.pipeline_mode<synchronous>, transform_indices = @transform_11, window_bounds = array<i64: 1024, 1024>}, {pipeline_mode = #tpu.pipeline_mode<synchronous>, transform_indices = @transform_12, window_bounds = array<i64: 1, 1024>}, {pipeline_mode = #tpu.pipeline_mode<synchronous>, transform_indices = @transform_13, window_bounds = array<i64: 1024, 25>}, {pipeline_mode = #tpu.pipeline_mode<synchronous>, transform_indices = @transform_14, window_bounds = array<i64: 1, 25>}, {transform_indices = @transform_15, window_bounds = array<i64: 1, 15, 256>}, {transform_indices = @transform_16, window_bounds = array<i64: 1, 1, 25>}]} {
    %c0 = arith.constant 0 : index
    %c0_0 = arith.constant 0 : index
    %c0_1 = arith.constant 0 : index
    %0 = vector.load %arg1[%c0, %c0_0, %c0_1] : memref<1x8x256xf32, #tpu.memory_space<vmem>>, vector<1x8x256xf32>
    %1 = vector.shape_cast %0 : vector<1x8x256xf32> to vector<8x256xf32>
    %cst = arith.constant 0.000000e+00 : f32
    %2 = vector.broadcast %cst : f32 to vector<16x256xf32>
    %c0_2 = arith.constant 0 : index
    %c0_3 = arith.constant 0 : index
    %c0_4 = arith.constant 0 : index
    %3 = vector.load %arg3[%c0_2, %c0_3, %c0_4] : memref<9x16x8xbf16, #tpu.memory_space<vmem>>, vector<1x16x8xbf16>
    %4 = vector.shape_cast %3 : vector<1x16x8xbf16> to vector<16x8xbf16>
    %c15_i32 = arith.constant 15 : i32
    %5 = tpu.dynamic_rotate %1 by %c15_i32 dim 1 : vector<8x256xf32>, i32 -> vector<8x256xf32>
    %c0_5 = arith.constant 0 : index
    %c0_6 = arith.constant 0 : index
    %c0_7 = arith.constant 0 : index
    %6 = vector.load %arg2[%c0_5, %c0_6, %c0_7] : memref<9x1x256xf32, #tpu.memory_space<vmem>>, vector<1x1x256xf32>
    %7 = vector.shape_cast %6 : vector<1x1x256xf32> to vector<1x256xf32>
    %8 = vector.broadcast %7 : vector<1x256xf32> to vector<8x256xf32>
    %9 = arith.mulf %5, %8 : vector<8x256xf32>
    %10 = arith.truncf %9 : vector<8x256xf32> to vector<8x256xbf16>
    %cst_8 = arith.constant dense<0.000000e+00> : vector<16x256xf32>
    %11 = tpu.matmul %4, %10, %cst_8 {dimension_numbers = #tpu.dot_dimension_numbers<[1], [0], [0], [1], [0, 0, 1, 1], [], []>} : vector<16x8xbf16>, vector<8x256xbf16>, vector<16x256xf32> -> vector<16x256xf32>
    %12 = arith.addf %2, %11 : vector<16x256xf32>
    %c1 = arith.constant 1 : index
    %c0_9 = arith.constant 0 : index
    %c0_10 = arith.constant 0 : index
    %13 = vector.load %arg3[%c1, %c0_9, %c0_10] : memref<9x16x8xbf16, #tpu.memory_space<vmem>>, vector<1x16x8xbf16>
    %14 = vector.shape_cast %13 : vector<1x16x8xbf16> to vector<16x8xbf16>
    %c14_i32 = arith.constant 14 : i32
    %15 = tpu.dynamic_rotate %1 by %c14_i32 dim 1 : vector<8x256xf32>, i32 -> vector<8x256xf32>
    %c1_11 = arith.constant 1 : index
    %c0_12 = arith.constant 0 : index
    %c0_13 = arith.constant 0 : index
    %16 = vector.load %arg2[%c1_11, %c0_12, %c0_13] : memref<9x1x256xf32, #tpu.memory_space<vmem>>, vector<1x1x256xf32>
    %17 = vector.shape_cast %16 : vector<1x1x256xf32> to vector<1x256xf32>
    %18 = vector.broadcast %17 : vector<1x256xf32> to vector<8x256xf32>
    %19 = arith.mulf %15, %18 : vector<8x256xf32>
    %20 = arith.truncf %19 : vector<8x256xf32> to vector<8x256xbf16>
    %cst_14 = arith.constant dense<0.000000e+00> : vector<16x256xf32>
    %21 = tpu.matmul %14, %20, %cst_14 {dimension_numbers = #tpu.dot_dimension_numbers<[1], [0], [0], [1], [0, 0, 1, 1], [], []>} : vector<16x8xbf16>, vector<8x256xbf16>, vector<16x256xf32> -> vector<16x256xf32>
    %22 = arith.addf %12, %21 : vector<16x256xf32>
    %c2 = arith.constant 2 : index
    %c0_15 = arith.constant 0 : index
    %c0_16 = arith.constant 0 : index
    %23 = vector.load %arg3[%c2, %c0_15, %c0_16] : memref<9x16x8xbf16, #tpu.memory_space<vmem>>, vector<1x16x8xbf16>
    %24 = vector.shape_cast %23 : vector<1x16x8xbf16> to vector<16x8xbf16>
    %c13_i32 = arith.constant 13 : i32
    %25 = tpu.dynamic_rotate %1 by %c13_i32 dim 1 : vector<8x256xf32>, i32 -> vector<8x256xf32>
    %c2_17 = arith.constant 2 : index
    %c0_18 = arith.constant 0 : index
    %c0_19 = arith.constant 0 : index
    %26 = vector.load %arg2[%c2_17, %c0_18, %c0_19] : memref<9x1x256xf32, #tpu.memory_space<vmem>>, vector<1x1x256xf32>
    %27 = vector.shape_cast %26 : vector<1x1x256xf32> to vector<1x256xf32>
    %28 = vector.broadcast %27 : vector<1x256xf32> to vector<8x256xf32>
    %29 = arith.mulf %25, %28 : vector<8x256xf32>
    %30 = arith.truncf %29 : vector<8x256xf32> to vector<8x256xbf16>
    %cst_20 = arith.constant dense<0.000000e+00> : vector<16x256xf32>
    %31 = tpu.matmul %24, %30, %cst_20 {dimension_numbers = #tpu.dot_dimension_numbers<[1], [0], [0], [1], [0, 0, 1, 1], [], []>} : vector<16x8xbf16>, vector<8x256xbf16>, vector<16x256xf32> -> vector<16x256xf32>
    %32 = arith.addf %22, %31 : vector<16x256xf32>
    %c3 = arith.constant 3 : index
    %c0_21 = arith.constant 0 : index
    %c0_22 = arith.constant 0 : index
    %33 = vector.load %arg3[%c3, %c0_21, %c0_22] : memref<9x16x8xbf16, #tpu.memory_space<vmem>>, vector<1x16x8xbf16>
    %34 = vector.shape_cast %33 : vector<1x16x8xbf16> to vector<16x8xbf16>
    %c1_i32 = arith.constant 1 : i32
    %35 = tpu.dynamic_rotate %1 by %c1_i32 dim 1 : vector<8x256xf32>, i32 -> vector<8x256xf32>
    %c3_23 = arith.constant 3 : index
    %c0_24 = arith.constant 0 : index
    %c0_25 = arith.constant 0 : index
    %36 = vector.load %arg2[%c3_23, %c0_24, %c0_25] : memref<9x1x256xf32, #tpu.memory_space<vmem>>, vector<1x1x256xf32>
    %37 = vector.shape_cast %36 : vector<1x1x256xf32> to vector<1x256xf32>
    %38 = vector.broadcast %37 : vector<1x256xf32> to vector<8x256xf32>
    %39 = arith.mulf %35, %38 : vector<8x256xf32>
    %40 = arith.truncf %39 : vector<8x256xf32> to vector<8x256xbf16>
    %cst_26 = arith.constant dense<0.000000e+00> : vector<16x256xf32>
    %41 = tpu.matmul %34, %40, %cst_26 {dimension_numbers = #tpu.dot_dimension_numbers<[1], [0], [0], [1], [0, 0, 1, 1], [], []>} : vector<16x8xbf16>, vector<8x256xbf16>, vector<16x256xf32> -> vector<16x256xf32>
    %42 = arith.addf %32, %41 : vector<16x256xf32>
    %c4 = arith.constant 4 : index
    %c0_27 = arith.constant 0 : index
    %c0_28 = arith.constant 0 : index
    %43 = vector.load %arg3[%c4, %c0_27, %c0_28] : memref<9x16x8xbf16, #tpu.memory_space<vmem>>, vector<1x16x8xbf16>
    %44 = vector.shape_cast %43 : vector<1x16x8xbf16> to vector<16x8xbf16>
    %c4_29 = arith.constant 4 : index
    %c0_30 = arith.constant 0 : index
    %c0_31 = arith.constant 0 : index
    %45 = vector.load %arg2[%c4_29, %c0_30, %c0_31] : memref<9x1x256xf32, #tpu.memory_space<vmem>>, vector<1x1x256xf32>
    %46 = vector.shape_cast %45 : vector<1x1x256xf32> to vector<1x256xf32>
    %47 = vector.broadcast %46 : vector<1x256xf32> to vector<8x256xf32>
    %48 = arith.mulf %1, %47 : vector<8x256xf32>
    %49 = arith.truncf %48 : vector<8x256xf32> to vector<8x256xbf16>
    %cst_32 = arith.constant dense<0.000000e+00> : vector<16x256xf32>
    %50 = tpu.matmul %44, %49, %cst_32 {dimension_numbers = #tpu.dot_dimension_numbers<[1], [0], [0], [1], [0, 0, 1, 1], [], []>} : vector<16x8xbf16>, vector<8x256xbf16>, vector<16x256xf32> -> vector<16x256xf32>
    %51 = arith.addf %42, %50 : vector<16x256xf32>
    %c5 = arith.constant 5 : index
    %c0_33 = arith.constant 0 : index
    %c0_34 = arith.constant 0 : index
    %52 = vector.load %arg3[%c5, %c0_33, %c0_34] : memref<9x16x8xbf16, #tpu.memory_space<vmem>>, vector<1x16x8xbf16>
    %53 = vector.shape_cast %52 : vector<1x16x8xbf16> to vector<16x8xbf16>
    %c255_i32 = arith.constant 255 : i32
    %54 = tpu.dynamic_rotate %1 by %c255_i32 dim 1 : vector<8x256xf32>, i32 -> vector<8x256xf32>
    %c5_35 = arith.constant 5 : index
    %c0_36 = arith.constant 0 : index
    %c0_37 = arith.constant 0 : index
    %55 = vector.load %arg2[%c5_35, %c0_36, %c0_37] : memref<9x1x256xf32, #tpu.memory_space<vmem>>, vector<1x1x256xf32>
    %56 = vector.shape_cast %55 : vector<1x1x256xf32> to vector<1x256xf32>
    %57 = vector.broadcast %56 : vector<1x256xf32> to vector<8x256xf32>
    %58 = arith.mulf %54, %57 : vector<8x256xf32>
    %59 = arith.truncf %58 : vector<8x256xf32> to vector<8x256xbf16>
    %cst_38 = arith.constant dense<0.000000e+00> : vector<16x256xf32>
    %60 = tpu.matmul %53, %59, %cst_38 {dimension_numbers = #tpu.dot_dimension_numbers<[1], [0], [0], [1], [0, 0, 1, 1], [], []>} : vector<16x8xbf16>, vector<8x256xbf16>, vector<16x256xf32> -> vector<16x256xf32>
    %61 = arith.addf %51, %60 : vector<16x256xf32>
    %c6 = arith.constant 6 : index
    %c0_39 = arith.constant 0 : index
    %c0_40 = arith.constant 0 : index
    %62 = vector.load %arg3[%c6, %c0_39, %c0_40] : memref<9x16x8xbf16, #tpu.memory_space<vmem>>, vector<1x16x8xbf16>
    %63 = vector.shape_cast %62 : vector<1x16x8xbf16> to vector<16x8xbf16>
    %c243_i32 = arith.constant 243 : i32
    %64 = tpu.dynamic_rotate %1 by %c243_i32 dim 1 : vector<8x256xf32>, i32 -> vector<8x256xf32>
    %c6_41 = arith.constant 6 : index
    %c0_42 = arith.constant 0 : index
    %c0_43 = arith.constant 0 : index
    %65 = vector.load %arg2[%c6_41, %c0_42, %c0_43] : memref<9x1x256xf32, #tpu.memory_space<vmem>>, vector<1x1x256xf32>
    %66 = vector.shape_cast %65 : vector<1x1x256xf32> to vector<1x256xf32>
    %67 = vector.broadcast %66 : vector<1x256xf32> to vector<8x256xf32>
    %68 = arith.mulf %64, %67 : vector<8x256xf32>
    %69 = arith.truncf %68 : vector<8x256xf32> to vector<8x256xbf16>
    %cst_44 = arith.constant dense<0.000000e+00> : vector<16x256xf32>
    %70 = tpu.matmul %63, %69, %cst_44 {dimension_numbers = #tpu.dot_dimension_numbers<[1], [0], [0], [1], [0, 0, 1, 1], [], []>} : vector<16x8xbf16>, vector<8x256xbf16>, vector<16x256xf32> -> vector<16x256xf32>
    %71 = arith.addf %61, %70 : vector<16x256xf32>
    %c7 = arith.constant 7 : index
    %c0_45 = arith.constant 0 : index
    %c0_46 = arith.constant 0 : index
    %72 = vector.load %arg3[%c7, %c0_45, %c0_46] : memref<9x16x8xbf16, #tpu.memory_space<vmem>>, vector<1x16x8xbf16>
    %73 = vector.shape_cast %72 : vector<1x16x8xbf16> to vector<16x8xbf16>
    %c242_i32 = arith.constant 242 : i32
    %74 = tpu.dynamic_rotate %1 by %c242_i32 dim 1 : vector<8x256xf32>, i32 -> vector<8x256xf32>
    %c7_47 = arith.constant 7 : index
    %c0_48 = arith.constant 0 : index
    %c0_49 = arith.constant 0 : index
    %75 = vector.load %arg2[%c7_47, %c0_48, %c0_49] : memref<9x1x256xf32, #tpu.memory_space<vmem>>, vector<1x1x256xf32>
    %76 = vector.shape_cast %75 : vector<1x1x256xf32> to vector<1x256xf32>
    %77 = vector.broadcast %76 : vector<1x256xf32> to vector<8x256xf32>
    %78 = arith.mulf %74, %77 : vector<8x256xf32>
    %79 = arith.truncf %78 : vector<8x256xf32> to vector<8x256xbf16>
    %cst_50 = arith.constant dense<0.000000e+00> : vector<16x256xf32>
    %80 = tpu.matmul %73, %79, %cst_50 {dimension_numbers = #tpu.dot_dimension_numbers<[1], [0], [0], [1], [0, 0, 1, 1], [], []>} : vector<16x8xbf16>, vector<8x256xbf16>, vector<16x256xf32> -> vector<16x256xf32>
    %81 = arith.addf %71, %80 : vector<16x256xf32>
    %c8 = arith.constant 8 : index
    %c0_51 = arith.constant 0 : index
    %c0_52 = arith.constant 0 : index
    %82 = vector.load %arg3[%c8, %c0_51, %c0_52] : memref<9x16x8xbf16, #tpu.memory_space<vmem>>, vector<1x16x8xbf16>
    %83 = vector.shape_cast %82 : vector<1x16x8xbf16> to vector<16x8xbf16>
    %c241_i32 = arith.constant 241 : i32
    %84 = tpu.dynamic_rotate %1 by %c241_i32 dim 1 : vector<8x256xf32>, i32 -> vector<8x256xf32>
    %c8_53 = arith.constant 8 : index
    %c0_54 = arith.constant 0 : index
    %c0_55 = arith.constant 0 : index
    %85 = vector.load %arg2[%c8_53, %c0_54, %c0_55] : memref<9x1x256xf32, #tpu.memory_space<vmem>>, vector<1x1x256xf32>
    %86 = vector.shape_cast %85 : vector<1x1x256xf32> to vector<1x256xf32>
    %87 = vector.broadcast %86 : vector<1x256xf32> to vector<8x256xf32>
    %88 = arith.mulf %84, %87 : vector<8x256xf32>
    %89 = arith.truncf %88 : vector<8x256xf32> to vector<8x256xbf16>
    %cst_56 = arith.constant dense<0.000000e+00> : vector<16x256xf32>
    %90 = tpu.matmul %83, %89, %cst_56 {dimension_numbers = #tpu.dot_dimension_numbers<[1], [0], [0], [1], [0, 0, 1, 1], [], []>} : vector<16x8xbf16>, vector<8x256xbf16>, vector<16x256xf32> -> vector<16x256xf32>
    %91 = arith.addf %81, %90 : vector<16x256xf32>
    %c0_57 = arith.constant 0 : index
    %c0_58 = arith.constant 0 : index
    %92 = vector.load %arg4[%c0_57, %c0_58] : memref<16x1xf32, #tpu.memory_space<vmem>>, vector<16x1xf32>
    %93 = vector.broadcast %92 : vector<16x1xf32> to vector<16x256xf32>
    %94 = arith.addf %91, %93 : vector<16x256xf32>
    %cst_59 = arith.constant 0.000000e+00 : f32
    %95 = vector.broadcast %cst_59 : f32 to vector<16x256xf32>
    %96 = arith.maximumf %94, %95 : vector<16x256xf32>
    %97 = arith.truncf %96 : vector<16x256xf32> to vector<16x256xbf16>
    %c0_60 = arith.constant 0 : index
    %c0_61 = arith.constant 0 : index
    %98 = vector.load %arg9[%c0_60, %c0_61] : memref<256x49xbf16, #tpu.memory_space<vmem>>, vector<256x49xbf16>
    %cst_62 = arith.constant dense<0.000000e+00> : vector<16x49xf32>
    %99 = tpu.matmul %97, %98, %cst_62 {dimension_numbers = #tpu.dot_dimension_numbers<[1], [0], [0], [1], [0, 0, 1, 1], [], []>} : vector<16x256xbf16>, vector<256x49xbf16>, vector<16x49xf32> -> vector<16x49xf32>
    %cst_63 = arith.constant 0.000000e+00 : f32
    %100 = vector.broadcast %cst_63 : f32 to vector<16x256xf32>
    %c0_64 = arith.constant 0 : index
    %c0_65 = arith.constant 0 : index
    %c0_66 = arith.constant 0 : index
    %101 = vector.load %arg5[%c0_64, %c0_65, %c0_66] : memref<9x16x16xbf16, #tpu.memory_space<vmem>>, vector<1x16x16xbf16>
    %102 = vector.shape_cast %101 : vector<1x16x16xbf16> to vector<16x16xbf16>
    %c15_i32_67 = arith.constant 15 : i32
    %103 = tpu.dynamic_rotate %96 by %c15_i32_67 dim 1 : vector<16x256xf32>, i32 -> vector<16x256xf32>
    %c0_68 = arith.constant 0 : index
    %c0_69 = arith.constant 0 : index
    %c0_70 = arith.constant 0 : index
    %104 = vector.load %arg2[%c0_68, %c0_69, %c0_70] : memref<9x1x256xf32, #tpu.memory_space<vmem>>, vector<1x1x256xf32>
    %105 = vector.shape_cast %104 : vector<1x1x256xf32> to vector<1x256xf32>
    %106 = vector.broadcast %105 : vector<1x256xf32> to vector<16x256xf32>
    %107 = arith.mulf %103, %106 : vector<16x256xf32>
    %108 = arith.truncf %107 : vector<16x256xf32> to vector<16x256xbf16>
    %cst_71 = arith.constant dense<0.000000e+00> : vector<16x256xf32>
    %109 = tpu.matmul %102, %108, %cst_71 {dimension_numbers = #tpu.dot_dimension_numbers<[1], [0], [0], [1], [0, 0, 1, 1], [], []>} : vector<16x16xbf16>, vector<16x256xbf16>, vector<16x256xf32> -> vector<16x256xf32>
    %110 = arith.addf %100, %109 : vector<16x256xf32>
    %c1_72 = arith.constant 1 : index
    %c0_73 = arith.constant 0 : index
    %c0_74 = arith.constant 0 : index
    %111 = vector.load %arg5[%c1_72, %c0_73, %c0_74] : memref<9x16x16xbf16, #tpu.memory_space<vmem>>, vector<1x16x16xbf16>
    %112 = vector.shape_cast %111 : vector<1x16x16xbf16> to vector<16x16xbf16>
    %c14_i32_75 = arith.constant 14 : i32
    %113 = tpu.dynamic_rotate %96 by %c14_i32_75 dim 1 : vector<16x256xf32>, i32 -> vector<16x256xf32>
    %c1_76 = arith.constant 1 : index
    %c0_77 = arith.constant 0 : index
    %c0_78 = arith.constant 0 : index
    %114 = vector.load %arg2[%c1_76, %c0_77, %c0_78] : memref<9x1x256xf32, #tpu.memory_space<vmem>>, vector<1x1x256xf32>
    %115 = vector.shape_cast %114 : vector<1x1x256xf32> to vector<1x256xf32>
    %116 = vector.broadcast %115 : vector<1x256xf32> to vector<16x256xf32>
    %117 = arith.mulf %113, %116 : vector<16x256xf32>
    %118 = arith.truncf %117 : vector<16x256xf32> to vector<16x256xbf16>
    %cst_79 = arith.constant dense<0.000000e+00> : vector<16x256xf32>
    %119 = tpu.matmul %112, %118, %cst_79 {dimension_numbers = #tpu.dot_dimension_numbers<[1], [0], [0], [1], [0, 0, 1, 1], [], []>} : vector<16x16xbf16>, vector<16x256xbf16>, vector<16x256xf32> -> vector<16x256xf32>
    %120 = arith.addf %110, %119 : vector<16x256xf32>
    %c2_80 = arith.constant 2 : index
    %c0_81 = arith.constant 0 : index
    %c0_82 = arith.constant 0 : index
    %121 = vector.load %arg5[%c2_80, %c0_81, %c0_82] : memref<9x16x16xbf16, #tpu.memory_space<vmem>>, vector<1x16x16xbf16>
    %122 = vector.shape_cast %121 : vector<1x16x16xbf16> to vector<16x16xbf16>
    %c13_i32_83 = arith.constant 13 : i32
    %123 = tpu.dynamic_rotate %96 by %c13_i32_83 dim 1 : vector<16x256xf32>, i32 -> vector<16x256xf32>
    %c2_84 = arith.constant 2 : index
    %c0_85 = arith.constant 0 : index
    %c0_86 = arith.constant 0 : index
    %124 = vector.load %arg2[%c2_84, %c0_85, %c0_86] : memref<9x1x256xf32, #tpu.memory_space<vmem>>, vector<1x1x256xf32>
    %125 = vector.shape_cast %124 : vector<1x1x256xf32> to vector<1x256xf32>
    %126 = vector.broadcast %125 : vector<1x256xf32> to vector<16x256xf32>
    %127 = arith.mulf %123, %126 : vector<16x256xf32>
    %128 = arith.truncf %127 : vector<16x256xf32> to vector<16x256xbf16>
    %cst_87 = arith.constant dense<0.000000e+00> : vector<16x256xf32>
    %129 = tpu.matmul %122, %128, %cst_87 {dimension_numbers = #tpu.dot_dimension_numbers<[1], [0], [0], [1], [0, 0, 1, 1], [], []>} : vector<16x16xbf16>, vector<16x256xbf16>, vector<16x256xf32> -> vector<16x256xf32>
    %130 = arith.addf %120, %129 : vector<16x256xf32>
    %c3_88 = arith.constant 3 : index
    %c0_89 = arith.constant 0 : index
    %c0_90 = arith.constant 0 : index
    %131 = vector.load %arg5[%c3_88, %c0_89, %c0_90] : memref<9x16x16xbf16, #tpu.memory_space<vmem>>, vector<1x16x16xbf16>
    %132 = vector.shape_cast %131 : vector<1x16x16xbf16> to vector<16x16xbf16>
    %c1_i32_91 = arith.constant 1 : i32
    %133 = tpu.dynamic_rotate %96 by %c1_i32_91 dim 1 : vector<16x256xf32>, i32 -> vector<16x256xf32>
    %c3_92 = arith.constant 3 : index
    %c0_93 = arith.constant 0 : index
    %c0_94 = arith.constant 0 : index
    %134 = vector.load %arg2[%c3_92, %c0_93, %c0_94] : memref<9x1x256xf32, #tpu.memory_space<vmem>>, vector<1x1x256xf32>
    %135 = vector.shape_cast %134 : vector<1x1x256xf32> to vector<1x256xf32>
    %136 = vector.broadcast %135 : vector<1x256xf32> to vector<16x256xf32>
    %137 = arith.mulf %133, %136 : vector<16x256xf32>
    %138 = arith.truncf %137 : vector<16x256xf32> to vector<16x256xbf16>
    %cst_95 = arith.constant dense<0.000000e+00> : vector<16x256xf32>
    %139 = tpu.matmul %132, %138, %cst_95 {dimension_numbers = #tpu.dot_dimension_numbers<[1], [0], [0], [1], [0, 0, 1, 1], [], []>} : vector<16x16xbf16>, vector<16x256xbf16>, vector<16x256xf32> -> vector<16x256xf32>
    %140 = arith.addf %130, %139 : vector<16x256xf32>
    %c4_96 = arith.constant 4 : index
    %c0_97 = arith.constant 0 : index
    %c0_98 = arith.constant 0 : index
    %141 = vector.load %arg5[%c4_96, %c0_97, %c0_98] : memref<9x16x16xbf16, #tpu.memory_space<vmem>>, vector<1x16x16xbf16>
    %142 = vector.shape_cast %141 : vector<1x16x16xbf16> to vector<16x16xbf16>
    %c4_99 = arith.constant 4 : index
    %c0_100 = arith.constant 0 : index
    %c0_101 = arith.constant 0 : index
    %143 = vector.load %arg2[%c4_99, %c0_100, %c0_101] : memref<9x1x256xf32, #tpu.memory_space<vmem>>, vector<1x1x256xf32>
    %144 = vector.shape_cast %143 : vector<1x1x256xf32> to vector<1x256xf32>
    %145 = vector.broadcast %144 : vector<1x256xf32> to vector<16x256xf32>
    %146 = arith.mulf %96, %145 : vector<16x256xf32>
    %147 = arith.truncf %146 : vector<16x256xf32> to vector<16x256xbf16>
    %cst_102 = arith.constant dense<0.000000e+00> : vector<16x256xf32>
    %148 = tpu.matmul %142, %147, %cst_102 {dimension_numbers = #tpu.dot_dimension_numbers<[1], [0], [0], [1], [0, 0, 1, 1], [], []>} : vector<16x16xbf16>, vector<16x256xbf16>, vector<16x256xf32> -> vector<16x256xf32>
    %149 = arith.addf %140, %148 : vector<16x256xf32>
    %c5_103 = arith.constant 5 : index
    %c0_104 = arith.constant 0 : index
    %c0_105 = arith.constant 0 : index
    %150 = vector.load %arg5[%c5_103, %c0_104, %c0_105] : memref<9x16x16xbf16, #tpu.memory_space<vmem>>, vector<1x16x16xbf16>
    %151 = vector.shape_cast %150 : vector<1x16x16xbf16> to vector<16x16xbf16>
    %c255_i32_106 = arith.constant 255 : i32
    %152 = tpu.dynamic_rotate %96 by %c255_i32_106 dim 1 : vector<16x256xf32>, i32 -> vector<16x256xf32>
    %c5_107 = arith.constant 5 : index
    %c0_108 = arith.constant 0 : index
    %c0_109 = arith.constant 0 : index
    %153 = vector.load %arg2[%c5_107, %c0_108, %c0_109] : memref<9x1x256xf32, #tpu.memory_space<vmem>>, vector<1x1x256xf32>
    %154 = vector.shape_cast %153 : vector<1x1x256xf32> to vector<1x256xf32>
    %155 = vector.broadcast %154 : vector<1x256xf32> to vector<16x256xf32>
    %156 = arith.mulf %152, %155 : vector<16x256xf32>
    %157 = arith.truncf %156 : vector<16x256xf32> to vector<16x256xbf16>
    %cst_110 = arith.constant dense<0.000000e+00> : vector<16x256xf32>
    %158 = tpu.matmul %151, %157, %cst_110 {dimension_numbers = #tpu.dot_dimension_numbers<[1], [0], [0], [1], [0, 0, 1, 1], [], []>} : vector<16x16xbf16>, vector<16x256xbf16>, vector<16x256xf32> -> vector<16x256xf32>
    %159 = arith.addf %149, %158 : vector<16x256xf32>
    %c6_111 = arith.constant 6 : index
    %c0_112 = arith.constant 0 : index
    %c0_113 = arith.constant 0 : index
    %160 = vector.load %arg5[%c6_111, %c0_112, %c0_113] : memref<9x16x16xbf16, #tpu.memory_space<vmem>>, vector<1x16x16xbf16>
    %161 = vector.shape_cast %160 : vector<1x16x16xbf16> to vector<16x16xbf16>
    %c243_i32_114 = arith.constant 243 : i32
    %162 = tpu.dynamic_rotate %96 by %c243_i32_114 dim 1 : vector<16x256xf32>, i32 -> vector<16x256xf32>
    %c6_115 = arith.constant 6 : index
    %c0_116 = arith.constant 0 : index
    %c0_117 = arith.constant 0 : index
    %163 = vector.load %arg2[%c6_115, %c0_116, %c0_117] : memref<9x1x256xf32, #tpu.memory_space<vmem>>, vector<1x1x256xf32>
    %164 = vector.shape_cast %163 : vector<1x1x256xf32> to vector<1x256xf32>
    %165 = vector.broadcast %164 : vector<1x256xf32> to vector<16x256xf32>
    %166 = arith.mulf %162, %165 : vector<16x256xf32>
    %167 = arith.truncf %166 : vector<16x256xf32> to vector<16x256xbf16>
    %cst_118 = arith.constant dense<0.000000e+00> : vector<16x256xf32>
    %168 = tpu.matmul %161, %167, %cst_118 {dimension_numbers = #tpu.dot_dimension_numbers<[1], [0], [0], [1], [0, 0, 1, 1], [], []>} : vector<16x16xbf16>, vector<16x256xbf16>, vector<16x256xf32> -> vector<16x256xf32>
    %169 = arith.addf %159, %168 : vector<16x256xf32>
    %c7_119 = arith.constant 7 : index
    %c0_120 = arith.constant 0 : index
    %c0_121 = arith.constant 0 : index
    %170 = vector.load %arg5[%c7_119, %c0_120, %c0_121] : memref<9x16x16xbf16, #tpu.memory_space<vmem>>, vector<1x16x16xbf16>
    %171 = vector.shape_cast %170 : vector<1x16x16xbf16> to vector<16x16xbf16>
    %c242_i32_122 = arith.constant 242 : i32
    %172 = tpu.dynamic_rotate %96 by %c242_i32_122 dim 1 : vector<16x256xf32>, i32 -> vector<16x256xf32>
    %c7_123 = arith.constant 7 : index
    %c0_124 = arith.constant 0 : index
    %c0_125 = arith.constant 0 : index
    %173 = vector.load %arg2[%c7_123, %c0_124, %c0_125] : memref<9x1x256xf32, #tpu.memory_space<vmem>>, vector<1x1x256xf32>
    %174 = vector.shape_cast %173 : vector<1x1x256xf32> to vector<1x256xf32>
    %175 = vector.broadcast %174 : vector<1x256xf32> to vector<16x256xf32>
    %176 = arith.mulf %172, %175 : vector<16x256xf32>
    %177 = arith.truncf %176 : vector<16x256xf32> to vector<16x256xbf16>
    %cst_126 = arith.constant dense<0.000000e+00> : vector<16x256xf32>
    %178 = tpu.matmul %171, %177, %cst_126 {dimension_numbers = #tpu.dot_dimension_numbers<[1], [0], [0], [1], [0, 0, 1, 1], [], []>} : vector<16x16xbf16>, vector<16x256xbf16>, vector<16x256xf32> -> vector<16x256xf32>
    %179 = arith.addf %169, %178 : vector<16x256xf32>
    %c8_127 = arith.constant 8 : index
    %c0_128 = arith.constant 0 : index
    %c0_129 = arith.constant 0 : index
    %180 = vector.load %arg5[%c8_127, %c0_128, %c0_129] : memref<9x16x16xbf16, #tpu.memory_space<vmem>>, vector<1x16x16xbf16>
    %181 = vector.shape_cast %180 : vector<1x16x16xbf16> to vector<16x16xbf16>
    %c241_i32_130 = arith.constant 241 : i32
    %182 = tpu.dynamic_rotate %96 by %c241_i32_130 dim 1 : vector<16x256xf32>, i32 -> vector<16x256xf32>
    %c8_131 = arith.constant 8 : index
    %c0_132 = arith.constant 0 : index
    %c0_133 = arith.constant 0 : index
    %183 = vector.load %arg2[%c8_131, %c0_132, %c0_133] : memref<9x1x256xf32, #tpu.memory_space<vmem>>, vector<1x1x256xf32>
    %184 = vector.shape_cast %183 : vector<1x1x256xf32> to vector<1x256xf32>
    %185 = vector.broadcast %184 : vector<1x256xf32> to vector<16x256xf32>
    %186 = arith.mulf %182, %185 : vector<16x256xf32>
    %187 = arith.truncf %186 : vector<16x256xf32> to vector<16x256xbf16>
    %cst_134 = arith.constant dense<0.000000e+00> : vector<16x256xf32>
    %188 = tpu.matmul %181, %187, %cst_134 {dimension_numbers = #tpu.dot_dimension_numbers<[1], [0], [0], [1], [0, 0, 1, 1], [], []>} : vector<16x16xbf16>, vector<16x256xbf16>, vector<16x256xf32> -> vector<16x256xf32>
    %189 = arith.addf %179, %188 : vector<16x256xf32>
    %c0_135 = arith.constant 0 : index
    %c0_136 = arith.constant 0 : index
    %190 = vector.load %arg6[%c0_135, %c0_136] : memref<16x1xf32, #tpu.memory_space<vmem>>, vector<16x1xf32>
    %191 = vector.broadcast %190 : vector<16x1xf32> to vector<16x256xf32>
    %192 = arith.addf %189, %191 : vector<16x256xf32>
    %cst_137 = arith.constant 0.000000e+00 : f32
    %193 = vector.broadcast %cst_137 : f32 to vector<16x256xf32>
    %194 = arith.maximumf %192, %193 : vector<16x256xf32>
    %c0_138 = arith.constant 0 : index
    %c0_139 = arith.constant 0 : index
    %195 = vector.load %arg7[%c0_138, %c0_139] : memref<15x16xbf16, #tpu.memory_space<vmem>>, vector<15x16xbf16>
    %196 = arith.truncf %194 : vector<16x256xf32> to vector<16x256xbf16>
    %cst_140 = arith.constant dense<0.000000e+00> : vector<15x256xf32>
    %197 = tpu.matmul %195, %196, %cst_140 {dimension_numbers = #tpu.dot_dimension_numbers<[1], [0], [0], [1], [0, 0, 1, 1], [], []>} : vector<15x16xbf16>, vector<16x256xbf16>, vector<15x256xf32> -> vector<15x256xf32>
    %c0_141 = arith.constant 0 : index
    %c0_142 = arith.constant 0 : index
    %198 = vector.load %arg8[%c0_141, %c0_142] : memref<15x1xf32, #tpu.memory_space<vmem>>, vector<15x1xf32>
    %199 = vector.broadcast %198 : vector<15x1xf32> to vector<15x256xf32>
    %200 = arith.addf %197, %199 : vector<15x256xf32>
    %201 = vector.shape_cast %200 : vector<15x256xf32> to vector<1x15x256xf32>
    %c0_143 = arith.constant 0 : index
    %c0_144 = arith.constant 0 : index
    %c0_145 = arith.constant 0 : index
    %202 = vector.load %arg16[%c0_143, %c0_144, %c0_145] : memref<1x15x256xf32, #tpu.memory_space<vmem>>, vector<1x15x256xf32>
    tpu.vector_store %arg16[%c0_143, %c0_144, %c0_145], %201 {strides = array<i32>} : memref<1x15x256xf32, #tpu.memory_space<vmem>>, vector<1x15x256xf32>,
    %cst_146 = arith.constant 0.000000e+00 : f32
    %203 = vector.broadcast %cst_146 : f32 to vector<1x1024xf32>
    %204 = vector.extract_strided_slice %99 {offsets = [0, 0], sizes = [1, 49], strides = [1, 1]} : vector<16x49xf32> to vector<1x49xf32>
    %205 = arith.truncf %204 : vector<1x49xf32> to vector<1x49xbf16>
    %c0_147 = arith.constant 0 : index
    %c0_148 = arith.constant 0 : index
    %c0_149 = arith.constant 0 : index
    %206 = vector.load %arg10[%c0_147, %c0_148, %c0_149] : memref<16x49x1024xbf16, #tpu.memory_space<vmem>>, vector<1x49x1024xbf16>
    %207 = vector.shape_cast %206 : vector<1x49x1024xbf16> to vector<49x1024xbf16>
    %cst_150 = arith.constant dense<0.000000e+00> : vector<1x1024xf32>
    %208 = tpu.matmul %205, %207, %cst_150 {dimension_numbers = #tpu.dot_dimension_numbers<[1], [0], [0], [1], [0, 0, 1, 1], [], []>} : vector<1x49xbf16>, vector<49x1024xbf16>, vector<1x1024xf32> -> vector<1x1024xf32>
    %209 = arith.addf %203, %208 : vector<1x1024xf32>
    %210 = vector.extract_strided_slice %99 {offsets = [1, 0], sizes = [1, 49], strides = [1, 1]} : vector<16x49xf32> to vector<1x49xf32>
    %211 = arith.truncf %210 : vector<1x49xf32> to vector<1x49xbf16>
    %c1_151 = arith.constant 1 : index
    %c0_152 = arith.constant 0 : index
    %c0_153 = arith.constant 0 : index
    %212 = vector.load %arg10[%c1_151, %c0_152, %c0_153] : memref<16x49x1024xbf16, #tpu.memory_space<vmem>>, vector<1x49x1024xbf16>
    %213 = vector.shape_cast %212 : vector<1x49x1024xbf16> to vector<49x1024xbf16>
    %cst_154 = arith.constant dense<0.000000e+00> : vector<1x1024xf32>
    %214 = tpu.matmul %211, %213, %cst_154 {dimension_numbers = #tpu.dot_dimension_numbers<[1], [0], [0], [1], [0, 0, 1, 1], [], []>} : vector<1x49xbf16>, vector<49x1024xbf16>, vector<1x1024xf32> -> vector<1x1024xf32>
    %215 = arith.addf %209, %214 : vector<1x1024xf32>
    %216 = vector.extract_strided_slice %99 {offsets = [2, 0], sizes = [1, 49], strides = [1, 1]} : vector<16x49xf32> to vector<1x49xf32>
    %217 = arith.truncf %216 : vector<1x49xf32> to vector<1x49xbf16>
    %c2_155 = arith.constant 2 : index
    %c0_156 = arith.constant 0 : index
    %c0_157 = arith.constant 0 : index
    %218 = vector.load %arg10[%c2_155, %c0_156, %c0_157] : memref<16x49x1024xbf16, #tpu.memory_space<vmem>>, vector<1x49x1024xbf16>
    %219 = vector.shape_cast %218 : vector<1x49x1024xbf16> to vector<49x1024xbf16>
    %cst_158 = arith.constant dense<0.000000e+00> : vector<1x1024xf32>
    %220 = tpu.matmul %217, %219, %cst_158 {dimension_numbers = #tpu.dot_dimension_numbers<[1], [0], [0], [1], [0, 0, 1, 1], [], []>} : vector<1x49xbf16>, vector<49x1024xbf16>, vector<1x1024xf32> -> vector<1x1024xf32>
    %221 = arith.addf %215, %220 : vector<1x1024xf32>
    %222 = vector.extract_strided_slice %99 {offsets = [3, 0], sizes = [1, 49], strides = [1, 1]} : vector<16x49xf32> to vector<1x49xf32>
    %223 = arith.truncf %222 : vector<1x49xf32> to vector<1x49xbf16>
    %c3_159 = arith.constant 3 : index
    %c0_160 = arith.constant 0 : index
    %c0_161 = arith.constant 0 : index
    %224 = vector.load %arg10[%c3_159, %c0_160, %c0_161] : memref<16x49x1024xbf16, #tpu.memory_space<vmem>>, vector<1x49x1024xbf16>
    %225 = vector.shape_cast %224 : vector<1x49x1024xbf16> to vector<49x1024xbf16>
    %cst_162 = arith.constant dense<0.000000e+00> : vector<1x1024xf32>
    %226 = tpu.matmul %223, %225, %cst_162 {dimension_numbers = #tpu.dot_dimension_numbers<[1], [0], [0], [1], [0, 0, 1, 1], [], []>} : vector<1x49xbf16>, vector<49x1024xbf16>, vector<1x1024xf32> -> vector<1x1024xf32>
    %227 = arith.addf %221, %226 : vector<1x1024xf32>
    %228 = vector.extract_strided_slice %99 {offsets = [4, 0], sizes = [1, 49], strides = [1, 1]} : vector<16x49xf32> to vector<1x49xf32>
    %229 = arith.truncf %228 : vector<1x49xf32> to vector<1x49xbf16>
    %c4_163 = arith.constant 4 : index
    %c0_164 = arith.constant 0 : index
    %c0_165 = arith.constant 0 : index
    %230 = vector.load %arg10[%c4_163, %c0_164, %c0_165] : memref<16x49x1024xbf16, #tpu.memory_space<vmem>>, vector<1x49x1024xbf16>
    %231 = vector.shape_cast %230 : vector<1x49x1024xbf16> to vector<49x1024xbf16>
    %cst_166 = arith.constant dense<0.000000e+00> : vector<1x1024xf32>
    %232 = tpu.matmul %229, %231, %cst_166 {dimension_numbers = #tpu.dot_dimension_numbers<[1], [0], [0], [1], [0, 0, 1, 1], [], []>} : vector<1x49xbf16>, vector<49x1024xbf16>, vector<1x1024xf32> -> vector<1x1024xf32>
    %233 = arith.addf %227, %232 : vector<1x1024xf32>
    %234 = vector.extract_strided_slice %99 {offsets = [5, 0], sizes = [1, 49], strides = [1, 1]} : vector<16x49xf32> to vector<1x49xf32>
    %235 = arith.truncf %234 : vector<1x49xf32> to vector<1x49xbf16>
    %c5_167 = arith.constant 5 : index
    %c0_168 = arith.constant 0 : index
    %c0_169 = arith.constant 0 : index
    %236 = vector.load %arg10[%c5_167, %c0_168, %c0_169] : memref<16x49x1024xbf16, #tpu.memory_space<vmem>>, vector<1x49x1024xbf16>
    %237 = vector.shape_cast %236 : vector<1x49x1024xbf16> to vector<49x1024xbf16>
    %cst_170 = arith.constant dense<0.000000e+00> : vector<1x1024xf32>
    %238 = tpu.matmul %235, %237, %cst_170 {dimension_numbers = #tpu.dot_dimension_numbers<[1], [0], [0], [1], [0, 0, 1, 1], [], []>} : vector<1x49xbf16>, vector<49x1024xbf16>, vector<1x1024xf32> -> vector<1x1024xf32>
    %239 = arith.addf %233, %238 : vector<1x1024xf32>
    %240 = vector.extract_strided_slice %99 {offsets = [6, 0], sizes = [1, 49], strides = [1, 1]} : vector<16x49xf32> to vector<1x49xf32>
    %241 = arith.truncf %240 : vector<1x49xf32> to vector<1x49xbf16>
    %c6_171 = arith.constant 6 : index
    %c0_172 = arith.constant 0 : index
    %c0_173 = arith.constant 0 : index
    %242 = vector.load %arg10[%c6_171, %c0_172, %c0_173] : memref<16x49x1024xbf16, #tpu.memory_space<vmem>>, vector<1x49x1024xbf16>
    %243 = vector.shape_cast %242 : vector<1x49x1024xbf16> to vector<49x1024xbf16>
    %cst_174 = arith.constant dense<0.000000e+00> : vector<1x1024xf32>
    %244 = tpu.matmul %241, %243, %cst_174 {dimension_numbers = #tpu.dot_dimension_numbers<[1], [0], [0], [1], [0, 0, 1, 1], [], []>} : vector<1x49xbf16>, vector<49x1024xbf16>, vector<1x1024xf32> -> vector<1x1024xf32>
    %245 = arith.addf %239, %244 : vector<1x1024xf32>
    %246 = vector.extract_strided_slice %99 {offsets = [7, 0], sizes = [1, 49], strides = [1, 1]} : vector<16x49xf32> to vector<1x49xf32>
    %247 = arith.truncf %246 : vector<1x49xf32> to vector<1x49xbf16>
    %c7_175 = arith.constant 7 : index
    %c0_176 = arith.constant 0 : index
    %c0_177 = arith.constant 0 : index
    %248 = vector.load %arg10[%c7_175, %c0_176, %c0_177] : memref<16x49x1024xbf16, #tpu.memory_space<vmem>>, vector<1x49x1024xbf16>
    %249 = vector.shape_cast %248 : vector<1x49x1024xbf16> to vector<49x1024xbf16>
    %cst_178 = arith.constant dense<0.000000e+00> : vector<1x1024xf32>
    %250 = tpu.matmul %247, %249, %cst_178 {dimension_numbers = #tpu.dot_dimension_numbers<[1], [0], [0], [1], [0, 0, 1, 1], [], []>} : vector<1x49xbf16>, vector<49x1024xbf16>, vector<1x1024xf32> -> vector<1x1024xf32>
    %251 = arith.addf %245, %250 : vector<1x1024xf32>
    %252 = vector.extract_strided_slice %99 {offsets = [8, 0], sizes = [1, 49], strides = [1, 1]} : vector<16x49xf32> to vector<1x49xf32>
    %253 = arith.truncf %252 : vector<1x49xf32> to vector<1x49xbf16>
    %c8_179 = arith.constant 8 : index
    %c0_180 = arith.constant 0 : index
    %c0_181 = arith.constant 0 : index
    %254 = vector.load %arg10[%c8_179, %c0_180, %c0_181] : memref<16x49x1024xbf16, #tpu.memory_space<vmem>>, vector<1x49x1024xbf16>
    %255 = vector.shape_cast %254 : vector<1x49x1024xbf16> to vector<49x1024xbf16>
    %cst_182 = arith.constant dense<0.000000e+00> : vector<1x1024xf32>
    %256 = tpu.matmul %253, %255, %cst_182 {dimension_numbers = #tpu.dot_dimension_numbers<[1], [0], [0], [1], [0, 0, 1, 1], [], []>} : vector<1x49xbf16>, vector<49x1024xbf16>, vector<1x1024xf32> -> vector<1x1024xf32>
    %257 = arith.addf %251, %256 : vector<1x1024xf32>
    %258 = vector.extract_strided_slice %99 {offsets = [9, 0], sizes = [1, 49], strides = [1, 1]} : vector<16x49xf32> to vector<1x49xf32>
    %259 = arith.truncf %258 : vector<1x49xf32> to vector<1x49xbf16>
    %c9 = arith.constant 9 : index
    %c0_183 = arith.constant 0 : index
    %c0_184 = arith.constant 0 : index
    %260 = vector.load %arg10[%c9, %c0_183, %c0_184] : memref<16x49x1024xbf16, #tpu.memory_space<vmem>>, vector<1x49x1024xbf16>
    %261 = vector.shape_cast %260 : vector<1x49x1024xbf16> to vector<49x1024xbf16>
    %cst_185 = arith.constant dense<0.000000e+00> : vector<1x1024xf32>
    %262 = tpu.matmul %259, %261, %cst_185 {dimension_numbers = #tpu.dot_dimension_numbers<[1], [0], [0], [1], [0, 0, 1, 1], [], []>} : vector<1x49xbf16>, vector<49x1024xbf16>, vector<1x1024xf32> -> vector<1x1024xf32>
    %263 = arith.addf %257, %262 : vector<1x1024xf32>
    %264 = vector.extract_strided_slice %99 {offsets = [10, 0], sizes = [1, 49], strides = [1, 1]} : vector<16x49xf32> to vector<1x49xf32>
    %265 = arith.truncf %264 : vector<1x49xf32> to vector<1x49xbf16>
    %c10 = arith.constant 10 : index
    %c0_186 = arith.constant 0 : index
    %c0_187 = arith.constant 0 : index
    %266 = vector.load %arg10[%c10, %c0_186, %c0_187] : memref<16x49x1024xbf16, #tpu.memory_space<vmem>>, vector<1x49x1024xbf16>
    %267 = vector.shape_cast %266 : vector<1x49x1024xbf16> to vector<49x1024xbf16>
    %cst_188 = arith.constant dense<0.000000e+00> : vector<1x1024xf32>
    %268 = tpu.matmul %265, %267, %cst_188 {dimension_numbers = #tpu.dot_dimension_numbers<[1], [0], [0], [1], [0, 0, 1, 1], [], []>} : vector<1x49xbf16>, vector<49x1024xbf16>, vector<1x1024xf32> -> vector<1x1024xf32>
    %269 = arith.addf %263, %268 : vector<1x1024xf32>
    %270 = vector.extract_strided_slice %99 {offsets = [11, 0], sizes = [1, 49], strides = [1, 1]} : vector<16x49xf32> to vector<1x49xf32>
    %271 = arith.truncf %270 : vector<1x49xf32> to vector<1x49xbf16>
    %c11 = arith.constant 11 : index
    %c0_189 = arith.constant 0 : index
    %c0_190 = arith.constant 0 : index
    %272 = vector.load %arg10[%c11, %c0_189, %c0_190] : memref<16x49x1024xbf16, #tpu.memory_space<vmem>>, vector<1x49x1024xbf16>
    %273 = vector.shape_cast %272 : vector<1x49x1024xbf16> to vector<49x1024xbf16>
    %cst_191 = arith.constant dense<0.000000e+00> : vector<1x1024xf32>
    %274 = tpu.matmul %271, %273, %cst_191 {dimension_numbers = #tpu.dot_dimension_numbers<[1], [0], [0], [1], [0, 0, 1, 1], [], []>} : vector<1x49xbf16>, vector<49x1024xbf16>, vector<1x1024xf32> -> vector<1x1024xf32>
    %275 = arith.addf %269, %274 : vector<1x1024xf32>
    %276 = vector.extract_strided_slice %99 {offsets = [12, 0], sizes = [1, 49], strides = [1, 1]} : vector<16x49xf32> to vector<1x49xf32>
    %277 = arith.truncf %276 : vector<1x49xf32> to vector<1x49xbf16>
    %c12 = arith.constant 12 : index
    %c0_192 = arith.constant 0 : index
    %c0_193 = arith.constant 0 : index
    %278 = vector.load %arg10[%c12, %c0_192, %c0_193] : memref<16x49x1024xbf16, #tpu.memory_space<vmem>>, vector<1x49x1024xbf16>
    %279 = vector.shape_cast %278 : vector<1x49x1024xbf16> to vector<49x1024xbf16>
    %cst_194 = arith.constant dense<0.000000e+00> : vector<1x1024xf32>
    %280 = tpu.matmul %277, %279, %cst_194 {dimension_numbers = #tpu.dot_dimension_numbers<[1], [0], [0], [1], [0, 0, 1, 1], [], []>} : vector<1x49xbf16>, vector<49x1024xbf16>, vector<1x1024xf32> -> vector<1x1024xf32>
    %281 = arith.addf %275, %280 : vector<1x1024xf32>
    %282 = vector.extract_strided_slice %99 {offsets = [13, 0], sizes = [1, 49], strides = [1, 1]} : vector<16x49xf32> to vector<1x49xf32>
    %283 = arith.truncf %282 : vector<1x49xf32> to vector<1x49xbf16>
    %c13 = arith.constant 13 : index
    %c0_195 = arith.constant 0 : index
    %c0_196 = arith.constant 0 : index
    %284 = vector.load %arg10[%c13, %c0_195, %c0_196] : memref<16x49x1024xbf16, #tpu.memory_space<vmem>>, vector<1x49x1024xbf16>
    %285 = vector.shape_cast %284 : vector<1x49x1024xbf16> to vector<49x1024xbf16>
    %cst_197 = arith.constant dense<0.000000e+00> : vector<1x1024xf32>
    %286 = tpu.matmul %283, %285, %cst_197 {dimension_numbers = #tpu.dot_dimension_numbers<[1], [0], [0], [1], [0, 0, 1, 1], [], []>} : vector<1x49xbf16>, vector<49x1024xbf16>, vector<1x1024xf32> -> vector<1x1024xf32>
    %287 = arith.addf %281, %286 : vector<1x1024xf32>
    %288 = vector.extract_strided_slice %99 {offsets = [14, 0], sizes = [1, 49], strides = [1, 1]} : vector<16x49xf32> to vector<1x49xf32>
    %289 = arith.truncf %288 : vector<1x49xf32> to vector<1x49xbf16>
    %c14 = arith.constant 14 : index
    %c0_198 = arith.constant 0 : index
    %c0_199 = arith.constant 0 : index
    %290 = vector.load %arg10[%c14, %c0_198, %c0_199] : memref<16x49x1024xbf16, #tpu.memory_space<vmem>>, vector<1x49x1024xbf16>
    %291 = vector.shape_cast %290 : vector<1x49x1024xbf16> to vector<49x1024xbf16>
    %cst_200 = arith.constant dense<0.000000e+00> : vector<1x1024xf32>
    %292 = tpu.matmul %289, %291, %cst_200 {dimension_numbers = #tpu.dot_dimension_numbers<[1], [0], [0], [1], [0, 0, 1, 1], [], []>} : vector<1x49xbf16>, vector<49x1024xbf16>, vector<1x1024xf32> -> vector<1x1024xf32>
    %293 = arith.addf %287, %292 : vector<1x1024xf32>
    %294 = vector.extract_strided_slice %99 {offsets = [15, 0], sizes = [1, 49], strides = [1, 1]} : vector<16x49xf32> to vector<1x49xf32>
    %295 = arith.truncf %294 : vector<1x49xf32> to vector<1x49xbf16>
    %c15 = arith.constant 15 : index
    %c0_201 = arith.constant 0 : index
    %c0_202 = arith.constant 0 : index
    %296 = vector.load %arg10[%c15, %c0_201, %c0_202] : memref<16x49x1024xbf16, #tpu.memory_space<vmem>>, vector<1x49x1024xbf16>
    %297 = vector.shape_cast %296 : vector<1x49x1024xbf16> to vector<49x1024xbf16>
    %cst_203 = arith.constant dense<0.000000e+00> : vector<1x1024xf32>
    %298 = tpu.matmul %295, %297, %cst_203 {dimension_numbers = #tpu.dot_dimension_numbers<[1], [0], [0], [1], [0, 0, 1, 1], [], []>} : vector<1x49xbf16>, vector<49x1024xbf16>, vector<1x1024xf32> -> vector<1x1024xf32>
    %299 = arith.addf %293, %298 : vector<1x1024xf32>
    %c0_204 = arith.constant 0 : index
    %c0_205 = arith.constant 0 : index
    %300 = vector.load %arg11[%c0_204, %c0_205] : memref<1x1024xf32, #tpu.memory_space<vmem>>, vector<1x1024xf32>
    %301 = arith.addf %299, %300 : vector<1x1024xf32>
    %cst_206 = arith.constant 0.000000e+00 : f32
    %302 = vector.broadcast %cst_206 : f32 to vector<1x1024xf32>
    %303 = arith.maximumf %301, %302 : vector<1x1024xf32>
    %304 = arith.truncf %303 : vector<1x1024xf32> to vector<1x1024xbf16>
    %c0_207 = arith.constant 0 : index
    %c0_208 = arith.constant 0 : index
    %305 = vector.load %arg12[%c0_207, %c0_208] : memref<1024x1024xbf16, #tpu.memory_space<vmem>>, vector<1024x1024xbf16>
    %cst_209 = arith.constant dense<0.000000e+00> : vector<1x1024xf32>
    %306 = tpu.matmul %304, %305, %cst_209 {dimension_numbers = #tpu.dot_dimension_numbers<[1], [0], [0], [1], [0, 0, 1, 1], [], []>} : vector<1x1024xbf16>, vector<1024x1024xbf16>, vector<1x1024xf32> -> vector<1x1024xf32>
    %c0_210 = arith.constant 0 : index
    %c0_211 = arith.constant 0 : index
    %307 = vector.load %arg13[%c0_210, %c0_211] : memref<1x1024xf32, #tpu.memory_space<vmem>>, vector<1x1024xf32>
    %308 = arith.addf %306, %307 : vector<1x1024xf32>
    %309 = arith.truncf %308 : vector<1x1024xf32> to vector<1x1024xbf16>
    %c0_212 = arith.constant 0 : index
    %c0_213 = arith.constant 0 : index
    %310 = vector.load %arg14[%c0_212, %c0_213] : memref<1024x25xbf16, #tpu.memory_space<vmem>>, vector<1024x25xbf16>
    %cst_214 = arith.constant dense<0.000000e+00> : vector<1x25xf32>
    %311 = tpu.matmul %309, %310, %cst_214 {dimension_numbers = #tpu.dot_dimension_numbers<[1], [0], [0], [1], [0, 0, 1, 1], [], []>} : vector<1x1024xbf16>, vector<1024x25xbf16>, vector<1x25xf32> -> vector<1x25xf32>
    %c0_215 = arith.constant 0 : index
    %c0_216 = arith.constant 0 : index
    %312 = vector.load %arg15[%c0_215, %c0_216] : memref<1x25xf32, #tpu.memory_space<vmem>>, vector<1x25xf32>
    %313 = arith.addf %311, %312 : vector<1x25xf32>
    %314 = vector.shape_cast %313 : vector<1x25xf32> to vector<1x1x25xf32>
    %c0_217 = arith.constant 0 : index
    %c0_218 = arith.constant 0 : index
    %c0_219 = arith.constant 0 : index
    %315 = vector.load %arg17[%c0_217, %c0_218, %c0_219] : memref<1x1x25xf32, #tpu.memory_space<vmem>>, vector<1x1x25xf32>
    tpu.vector_store %arg17[%c0_217, %c0_218, %c0_219], %314 {strides = array<i32>} : memref<1x1x25xf32, #tpu.memory_space<vmem>>, vector<1x1x25xf32>,
    return
  }
  func.func @transform_0(%arg0: i32) -> (i32, i32, i32) {
    %c0_i32 = arith.constant 0 : i32
    %c0_i32_0 = arith.constant 0 : i32
    %c0_i32_1 = arith.constant 0 : i32
    return %arg0, %c0_i32, %c0_i32_0 : i32, i32, i32
  }
  func.func @transform_1(%arg0: i32) -> (i32, i32, i32) {
    %c0_i32 = arith.constant 0 : i32
    %c0_i32_0 = arith.constant 0 : i32
    %c0_i32_1 = arith.constant 0 : i32
    %c0_i32_2 = arith.constant 0 : i32
    return %c0_i32, %c0_i32_0, %c0_i32_1 : i32, i32, i32
  }
  func.func @transform_2(%arg0: i32) -> (i32, i32, i32) {
    %c0_i32 = arith.constant 0 : i32
    %c0_i32_0 = arith.constant 0 : i32
    %c0_i32_1 = arith.constant 0 : i32
    %c0_i32_2 = arith.constant 0 : i32
    return %c0_i32, %c0_i32_0, %c0_i32_1 : i32, i32, i32
  }
  func.func @transform_3(%arg0: i32) -> (i32, i32) {
    %c0_i32 = arith.constant 0 : i32
    %c0_i32_0 = arith.constant 0 : i32
    %c0_i32_1 = arith.constant 0 : i32
    return %c0_i32, %c0_i32_0 : i32, i32
  }
  func.func @transform_4(%arg0: i32) -> (i32, i32, i32) {
    %c0_i32 = arith.constant 0 : i32
    %c0_i32_0 = arith.constant 0 : i32
    %c0_i32_1 = arith.constant 0 : i32
    %c0_i32_2 = arith.constant 0 : i32
    return %c0_i32, %c0_i32_0, %c0_i32_1 : i32, i32, i32
  }
  func.func @transform_5(%arg0: i32) -> (i32, i32) {
    %c0_i32 = arith.constant 0 : i32
    %c0_i32_0 = arith.constant 0 : i32
    %c0_i32_1 = arith.constant 0 : i32
    return %c0_i32, %c0_i32_0 : i32, i32
  }
  func.func @transform_6(%arg0: i32) -> (i32, i32) {
    %c0_i32 = arith.constant 0 : i32
    %c0_i32_0 = arith.constant 0 : i32
    %c0_i32_1 = arith.constant 0 : i32
    return %c0_i32, %c0_i32_0 : i32, i32
  }
  func.func @transform_7(%arg0: i32) -> (i32, i32) {
    %c0_i32 = arith.constant 0 : i32
    %c0_i32_0 = arith.constant 0 : i32
    %c0_i32_1 = arith.constant 0 : i32
    return %c0_i32, %c0_i32_0 : i32, i32
  }
  func.func @transform_8(%arg0: i32) -> (i32, i32) {
    %c0_i32 = arith.constant 0 : i32
    %c0_i32_0 = arith.constant 0 : i32
    %c0_i32_1 = arith.constant 0 : i32
    return %c0_i32, %c0_i32_0 : i32, i32
  }
  func.func @transform_9(%arg0: i32) -> (i32, i32, i32) {
    %c0_i32 = arith.constant 0 : i32
    %c0_i32_0 = arith.constant 0 : i32
    %c0_i32_1 = arith.constant 0 : i32
    %c0_i32_2 = arith.constant 0 : i32
    return %c0_i32, %c0_i32_0, %c0_i32_1 : i32, i32, i32
  }
  func.func @transform_10(%arg0: i32) -> (i32, i32) {
    %c0_i32 = arith.constant 0 : i32
    %c0_i32_0 = arith.constant 0 : i32
    %c0_i32_1 = arith.constant 0 : i32
    return %c0_i32, %c0_i32_0 : i32, i32
  }
  func.func @transform_11(%arg0: i32) -> (i32, i32) {
    %c0_i32 = arith.constant 0 : i32
    %c0_i32_0 = arith.constant 0 : i32
    %c0_i32_1 = arith.constant 0 : i32
    return %c0_i32, %c0_i32_0 : i32, i32
  }
  func.func @transform_12(%arg0: i32) -> (i32, i32) {
    %c0_i32 = arith.constant 0 : i32
    %c0_i32_0 = arith.constant 0 : i32
    %c0_i32_1 = arith.constant 0 : i32
    return %c0_i32, %c0_i32_0 : i32, i32
  }
  func.func @transform_13(%arg0: i32) -> (i32, i32) {
    %c0_i32 = arith.constant 0 : i32
    %c0_i32_0 = arith.constant 0 : i32
    %c0_i32_1 = arith.constant 0 : i32
    return %c0_i32, %c0_i32_0 : i32, i32
  }
  func.func @transform_14(%arg0: i32) -> (i32, i32) {
    %c0_i32 = arith.constant 0 : i32
    %c0_i32_0 = arith.constant 0 : i32
    %c0_i32_1 = arith.constant 0 : i32
    return %c0_i32, %c0_i32_0 : i32, i32
  }
  func.func @transform_15(%arg0: i32) -> (i32, i32, i32) {
    %c0_i32 = arith.constant 0 : i32
    %c0_i32_0 = arith.constant 0 : i32
    %c0_i32_1 = arith.constant 0 : i32
    return %arg0, %c0_i32, %c0_i32_0 : i32, i32, i32
  }
  func.func @transform_16(%arg0: i32) -> (i32, i32, i32) {
    %c0_i32 = arith.constant 0 : i32
    %c0_i32_0 = arith.constant 0 : i32
    %c0_i32_1 = arith.constant 0 : i32
    return %arg0, %c0_i32, %c0_i32_0 : i32, i32, i32
  }
}

</mosaic_0001>

<llo_original>
// kernel: faster_rcnn_forward.1
$region0: #{faster_rcnn_forward.1}
  #allocation0 [shape = 'u32[]', space=smem, size = 0x4, offset = 0x4, fixed_abs, tag = 'smem constant byte address 0x4 - core index']
  #allocation1 [shape = 'u32[72,128]{1,0:T(1,128)}', space=vmem, size = 0x9000, scoped, tag = 'internal scratch']
  %s0 = inlined_call_operand.vmem [shape: f32[2,8,256], index: 0, kind: input, shape index: {}]
  %s1 = inlined_call_operand.vmem [shape: f32[9,1,256], index: 1, kind: input, shape index: {}]
  %s2 = inlined_call_operand.vmem [shape: bf16[9,16,8], index: 2, kind: input, shape index: {}]
  %s3 = inlined_call_operand.vmem [shape: f32[16,1], index: 3, kind: input, shape index: {}]
  %s4 = inlined_call_operand.vmem [shape: bf16[9,16,16], index: 4, kind: input, shape index: {}]
  %s5 = inlined_call_operand.vmem [shape: f32[16,1], index: 5, kind: input, shape index: {}]
  %s6 = inlined_call_operand.vmem [shape: bf16[15,16], index: 6, kind: input, shape index: {}]
  %s7 = inlined_call_operand.vmem [shape: f32[15,1], index: 7, kind: input, shape index: {}]
  %s8 = inlined_call_operand.vmem [shape: bf16[256,49], index: 8, kind: input, shape index: {}]
  %s9 = inlined_call_operand.vmem [shape: bf16[16,49,1024], index: 9, kind: input, shape index: {}]
  %s10 = inlined_call_operand.vmem [shape: f32[1,1024], index: 10, kind: input, shape index: {}]
  %s11 = inlined_call_operand.vmem [shape: bf16[1024,1024], index: 11, kind: input, shape index: {}]
  %s12 = inlined_call_operand.vmem [shape: f32[1,1024], index: 12, kind: input, shape index: {}]
  %s13 = inlined_call_operand.vmem [shape: bf16[1024,25], index: 13, kind: input, shape index: {}]
  %s14 = inlined_call_operand.vmem [shape: f32[1,25], index: 14, kind: input, shape index: {}]
  %s15 = inlined_call_operand.vmem [shape: f32[2,15,256], index: 15, kind: output, shape index: {0}]
  %s16 = inlined_call_operand.vmem [shape: f32[2,1,25], index: 16, kind: output, shape index: {1}]
  %17 = xla_tuple %s15, %s16
  %s18 = sld [smem:[#allocation0]]
  $region101: #{faster_rcnn_forward.1} parent=0
    _
  %s20 = ssub.s32 1, %s18
  %s21 = scalar_select 0, %s20, %s18
  loop: start=0, step=1, limit=4
  $region2: #{faster_rcnn_forward.1} parent=0 // loop_pre_header
    _
  $region3: #{faster_rcnn_forward.1} parent=0 // loop_header
    %s23 = sphi 0, %s27
    %p24 = scmp.ge.s32.totalorder %s23, 4
    %s33 = sphi 0, %s35
    %s36 = sphi 0, %s33
    %s37 = sphi 0, %s36
    %s53 = sphi 0, %s37
    %s57 = sphi 0, %s57
    %s59 = sphi 0, %s57
    %s60 = sphi 0, %s59
    %s74 = sphi 0, %s60
    %s78 = sphi 0, %s78
    %s80 = sphi 0, %s78
    %s81 = sphi 0, %s80
    %s95 = sphi 0, %s81
    %s99 = sphi 0, %s99
    %s101 = sphi 0, %s99
    %s102 = sphi 0, %s101
    %s116 = sphi 0, %s102
    %s120 = sphi 0, %s120
    %s122 = sphi 0, %s120
    %s123 = sphi 0, %s122
    %s137 = sphi 0, %s123
    %s141 = sphi 0, %s141
    %s143 = sphi 0, %s141
    %s144 = sphi 0, %s143
    %s158 = sphi 0, %s144
    %s162 = sphi 0, %s162
    %s164 = sphi 0, %s162
    %s165 = sphi 0, %s164
    %s179 = sphi 0, %s165
    %s183 = sphi 0, %s183
    %s185 = sphi 0, %s183
    %s186 = sphi 0, %s185
    %s200 = sphi 0, %s186
    %s204 = sphi 0, %s204
    %s206 = sphi 0, %s204
    %s207 = sphi 0, %s206
    %s221 = sphi 0, %s207
    %s225 = sphi 0, %s225
    %s227 = sphi 0, %s225
    %s228 = sphi 0, %s227
    %s242 = sphi 0, %s228
    %s246 = sphi 0, %s246
    %s248 = sphi 0, %s246
    %s249 = sphi 0, %s248
    %s263 = sphi 0, %s249
    %s267 = sphi 0, %s267
    %s269 = sphi 0, %s267
    %s270 = sphi 0, %s269
    %s284 = sphi 0, %s270
    %s288 = sphi 0, %s288
    %s290 = sphi 0, %s288
    %s291 = sphi 0, %s290
    %s305 = sphi 0, %s291
    %s309 = sphi 0, %s309
    %s311 = sphi 0, %s309
    %s312 = sphi 0, %s311
    %s326 = sphi 0, %s312
    %s330 = sphi 0, %s330
    %s332 = sphi 0, %s330
    %s333 = sphi 0, %s332
    %s347 = sphi 0, %s333
    %s353 = sphi 0, %s355
    %s356 = sphi 0, %s353
    %s357 = sphi 0, %s356
    %s373 = sphi 0, %s357
    %s379 = sphi 0, %s381
    %s382 = sphi 0, %s379
    %s383 = sphi 0, %s382
    %s399 = sphi 0, %s383
  $region4: #{faster_rcnn_forward.1} parent=0 // loop_header_branch
    %26 = sbr.rel (%p24) target = $region8
  $region5: #{faster_rcnn_forward.1} parent=0 // loop_body
    %s28 = ssub.s32 %s23, 1
    %s29 = ssub.s32 %s23, 2
    %s30 = sadd.s32 %s23, 1
    %s31 = ssub.s32 %s23, %s30
    %p32 = scmp.eq.s32.totalorder %s31, 0
    %s34 = sadd.s32 %s33, 1
    %s35 = scalar_select %p32, %s33, %s34
    %p38 = pneg %p32
    %p39 = scmp.eq.s32.totalorder %s23, 1
    %p40 = por %p38, %p39
    %p41 = scmp.ne.s32.totalorder %s33, %s36
    %p42 = scmp.eq.s32.totalorder %s23, 0
    %p43 = por %p41, %p42
    %p44 = scmp.ne.s32.totalorder %s33, %s36
    %p45 = scmp.eq.s32.totalorder %s28, 1
    %p46 = por %p44, %p45
    %p47 = scmp.ne.s32.totalorder %s36, %s37
    %p48 = scmp.eq.s32.totalorder %s28, 0
    %p49 = por %p47, %p48
    %p50 = scmp.ne.s32.totalorder %s36, %s37
    %p51 = scmp.eq.s32.totalorder %s29, 1
    %p52 = por %p50, %p51
    %p54 = scmp.ne.s32.totalorder %s37, %s53
    %p55 = scmp.eq.s32.totalorder %s29, 0
    %p56 = por %p54, %p55
    %s58 = sadd.s32 %s57, 1
    %p61 = scmp.eq.s32.totalorder %s23, 1
    %p62 = scmp.ne.s32.totalorder %s57, %s59
    %p63 = scmp.eq.s32.totalorder %s23, 0
    %p64 = por %p62, %p63
    %p65 = scmp.ne.s32.totalorder %s57, %s59
    %p66 = scmp.eq.s32.totalorder %s28, 1
    %p67 = por %p65, %p66
    %p68 = scmp.ne.s32.totalorder %s59, %s60
    %p69 = scmp.eq.s32.totalorder %s28, 0
    %p70 = por %p68, %p69
    %p71 = scmp.ne.s32.totalorder %s59, %s60
    %p72 = scmp.eq.s32.totalorder %s29, 1
    %p73 = por %p71, %p72
    %p75 = scmp.ne.s32.totalorder %s60, %s74
    %p76 = scmp.eq.s32.totalorder %s29, 0
    %p77 = por %p75, %p76
    %s79 = sadd.s32 %s78, 1
    %p82 = scmp.eq.s32.totalorder %s23, 1
    %p83 = scmp.ne.s32.totalorder %s78, %s80
    %p84 = scmp.eq.s32.totalorder %s23, 0
    %p85 = por %p83, %p84
    %p86 = scmp.ne.s32.totalorder %s78, %s80
    %p87 = scmp.eq.s32.totalorder %s28, 1
    %p88 = por %p86, %p87
    %p89 = scmp.ne.s32.totalorder %s80, %s81
    %p90 = scmp.eq.s32.totalorder %s28, 0
    %p91 = por %p89, %p90
    %p92 = scmp.ne.s32.totalorder %s80, %s81
    %p93 = scmp.eq.s32.totalorder %s29, 1
    %p94 = por %p92, %p93
    %p96 = scmp.ne.s32.totalorder %s81, %s95
    %p97 = scmp.eq.s32.totalorder %s29, 0
    %p98 = por %p96, %p97
    %s100 = sadd.s32 %s99, 1
    %p103 = scmp.eq.s32.totalorder %s23, 1
    %p104 = scmp.ne.s32.totalorder %s99, %s101
    %p105 = scmp.eq.s32.totalorder %s23, 0
    %p106 = por %p104, %p105
    %p107 = scmp.ne.s32.totalorder %s99, %s101
    %p108 = scmp.eq.s32.totalorder %s28, 1
    %p109 = por %p107, %p108
    %p110 = scmp.ne.s32.totalorder %s101, %s102
    %p111 = scmp.eq.s32.totalorder %s28, 0
    %p112 = por %p110, %p111
    %p113 = scmp.ne.s32.totalorder %s101, %s102
    %p114 = scmp.eq.s32.totalorder %s29, 1
    %p115 = por %p113, %p114
    %p117 = scmp.ne.s32.totalorder %s102, %s116
    %p118 = scmp.eq.s32.totalorder %s29, 0
    %p119 = por %p117, %p118
    %s121 = sadd.s32 %s120, 1
    %p124 = scmp.eq.s32.totalorder %s23, 1
    %p125 = scmp.ne.s32.totalorder %s120, %s122
    %p126 = scmp.eq.s32.totalorder %s23, 0
    %p127 = por %p125, %p126
    %p128 = scmp.ne.s32.totalorder %s120, %s122
    %p129 = scmp.eq.s32.totalorder %s28, 1
    %p130 = por %p128, %p129
    %p131 = scmp.ne.s32.totalorder %s122, %s123
    %p132 = scmp.eq.s32.totalorder %s28, 0
    %p133 = por %p131, %p132
    %p134 = scmp.ne.s32.totalorder %s122, %s123
    %p135 = scmp.eq.s32.totalorder %s29, 1
    %p136 = por %p134, %p135
    %p138 = scmp.ne.s32.totalorder %s123, %s137
    %p139 = scmp.eq.s32.totalorder %s29, 0
    %p140 = por %p138, %p139
    %s142 = sadd.s32 %s141, 1
    %p145 = scmp.eq.s32.totalorder %s23, 1
    %p146 = scmp.ne.s32.totalorder %s141, %s143
    %p147 = scmp.eq.s32.totalorder %s23, 0
    %p148 = por %p146, %p147
    %p149 = scmp.ne.s32.totalorder %s141, %s143
    %p150 = scmp.eq.s32.totalorder %s28, 1
    %p151 = por %p149, %p150
    %p152 = scmp.ne.s32.totalorder %s143, %s144
    %p153 = scmp.eq.s32.totalorder %s28, 0
    %p154 = por %p152, %p153
    %p155 = scmp.ne.s32.totalorder %s143, %s144
    %p156 = scmp.eq.s32.totalorder %s29, 1
    %p157 = por %p155, %p156
    %p159 = scmp.ne.s32.totalorder %s144, %s158
    %p160 = scmp.eq.s32.totalorder %s29, 0
    %p161 = por %p159, %p160
    %s163 = sadd.s32 %s162, 1
    %p166 = scmp.eq.s32.totalorder %s23, 1
    %p167 = scmp.ne.s32.totalorder %s162, %s164
    %p168 = scmp.eq.s32.totalorder %s23, 0
    %p169 = por %p167, %p168
    %p170 = scmp.ne.s32.totalorder %s162, %s164
    %p171 = scmp.eq.s32.totalorder %s28, 1
    %p172 = por %p170, %p171
    %p173 = scmp.ne.s32.totalorder %s164, %s165
    %p174 = scmp.eq.s32.totalorder %s28, 0
    %p175 = por %p173, %p174
    %p176 = scmp.ne.s32.totalorder %s164, %s165
    %p177 = scmp.eq.s32.totalorder %s29, 1
    %p178 = por %p176, %p177
    %p180 = scmp.ne.s32.totalorder %s165, %s179
    %p181 = scmp.eq.s32.totalorder %s29, 0
    %p182 = por %p180, %p181
    %s184 = sadd.s32 %s183, 1
    %p187 = scmp.eq.s32.totalorder %s23, 1
    %p188 = scmp.ne.s32.totalorder %s183, %s185
    %p189 = scmp.eq.s32.totalorder %s23, 0
    %p190 = por %p188, %p189
    %p191 = scmp.ne.s32.totalorder %s183, %s185
    %p192 = scmp.eq.s32.totalorder %s28, 1
    %p193 = por %p191, %p192
    %p194 = scmp.ne.s32.totalorder %s185, %s186
    %p195 = scmp.eq.s32.totalorder %s28, 0
    %p196 = por %p194, %p195
    %p197 = scmp.ne.s32.totalorder %s185, %s186
    %p198 = scmp.eq.s32.totalorder %s29, 1
    %p199 = por %p197, %p198
    %p201 = scmp.ne.s32.totalorder %s186, %s200
    %p202 = scmp.eq.s32.totalorder %s29, 0
    %p203 = por %p201, %p202
    %s205 = sadd.s32 %s204, 1
    %p208 = scmp.eq.s32.totalorder %s23, 1
    %p209 = scmp.ne.s32.totalorder %s204, %s206
    %p210 = scmp.eq.s32.totalorder %s23, 0
    %p211 = por %p209, %p210
    %p212 = scmp.ne.s32.totalorder %s204, %s206
    %p213 = scmp.eq.s32.totalorder %s28, 1
    %p214 = por %p212, %p213
    %p215 = scmp.ne.s32.totalorder %s206, %s207
    %p216 = scmp.eq.s32.totalorder %s28, 0
    %p217 = por %p215, %p216
    %p218 = scmp.ne.s32.totalorder %s206, %s207
    %p219 = scmp.eq.s32.totalorder %s29, 1
    %p220 = por %p218, %p219
    %p222 = scmp.ne.s32.totalorder %s207, %s221
    %p223 = scmp.eq.s32.totalorder %s29, 0
    %p224 = por %p222, %p223
    %s226 = sadd.s32 %s225, 1
    %p229 = scmp.eq.s32.totalorder %s23, 1
    %p230 = scmp.ne.s32.totalorder %s225, %s227
    %p231 = scmp.eq.s32.totalorder %s23, 0
    %p232 = por %p230, %p231
    %p233 = scmp.ne.s32.totalorder %s225, %s227
    %p234 = scmp.eq.s32.totalorder %s28, 1
    %p235 = por %p233, %p234
    %p236 = scmp.ne.s32.totalorder %s227, %s228
    %p237 = scmp.eq.s32.totalorder %s28, 0
    %p238 = por %p236, %p237
    %p239 = scmp.ne.s32.totalorder %s227, %s228
    %p240 = scmp.eq.s32.totalorder %s29, 1
    %p241 = por %p239, %p240
    %p243 = scmp.ne.s32.totalorder %s228, %s242
    %p244 = scmp.eq.s32.totalorder %s29, 0
    %p245 = por %p243, %p244
    %s247 = sadd.s32 %s246, 1
    %p250 = scmp.eq.s32.totalorder %s23, 1
    %p251 = scmp.ne.s32.totalorder %s246, %s248
    %p252 = scmp.eq.s32.totalorder %s23, 0
    %p253 = por %p251, %p252
    %p254 = scmp.ne.s32.totalorder %s246, %s248
    %p255 = scmp.eq.s32.totalorder %s28, 1
    %p256 = por %p254, %p255
    %p257 = scmp.ne.s32.totalorder %s248, %s249
    %p258 = scmp.eq.s32.totalorder %s28, 0
    %p259 = por %p257, %p258
    %p260 = scmp.ne.s32.totalorder %s248, %s249
    %p261 = scmp.eq.s32.totalorder %s29, 1
    %p262 = por %p260, %p261
    %p264 = scmp.ne.s32.totalorder %s249, %s263
    %p265 = scmp.eq.s32.totalorder %s29, 0
    %p266 = por %p264, %p265
    %s268 = sadd.s32 %s267, 1
    %p271 = scmp.eq.s32.totalorder %s23, 1
    %p272 = scmp.ne.s32.totalorder %s267, %s269
    %p273 = scmp.eq.s32.totalorder %s23, 0
    %p274 = por %p272, %p273
    %p275 = scmp.ne.s32.totalorder %s267, %s269
    %p276 = scmp.eq.s32.totalorder %s28, 1
    %p277 = por %p275, %p276
    %p278 = scmp.ne.s32.totalorder %s269, %s270
    %p279 = scmp.eq.s32.totalorder %s28, 0
    %p280 = por %p278, %p279
    %p281 = scmp.ne.s32.totalorder %s269, %s270
    %p282 = scmp.eq.s32.totalorder %s29, 1
    %p283 = por %p281, %p282
    %p285 = scmp.ne.s32.totalorder %s270, %s284
    %p286 = scmp.eq.s32.totalorder %s29, 0
    %p287 = por %p285, %p286
    %s289 = sadd.s32 %s288, 1
    %p292 = scmp.eq.s32.totalorder %s23, 1
    %p293 = scmp.ne.s32.totalorder %s288, %s290
    %p294 = scmp.eq.s32.totalorder %s23, 0
    %p295 = por %p293, %p294
    %p296 = scmp.ne.s32.totalorder %s288, %s290
    %p297 = scmp.eq.s32.totalorder %s28, 1
    %p298 = por %p296, %p297
    %p299 = scmp.ne.s32.totalorder %s290, %s291
    %p300 = scmp.eq.s32.totalorder %s28, 0
    %p301 = por %p299, %p300
    %p302 = scmp.ne.s32.totalorder %s290, %s291
    %p303 = scmp.eq.s32.totalorder %s29, 1
    %p304 = por %p302, %p303
    %p306 = scmp.ne.s32.totalorder %s291, %s305
    %p307 = scmp.eq.s32.totalorder %s29, 0
    %p308 = por %p306, %p307
    %s310 = sadd.s32 %s309, 1
    %p313 = scmp.eq.s32.totalorder %s23, 1
    %p314 = scmp.ne.s32.totalorder %s309, %s311
    %p315 = scmp.eq.s32.totalorder %s23, 0
    %p316 = por %p314, %p315
    %p317 = scmp.ne.s32.totalorder %s309, %s311
    %p318 = scmp.eq.s32.totalorder %s28, 1
    %p319 = por %p317, %p318
    %p320 = scmp.ne.s32.totalorder %s311, %s312
    %p321 = scmp.eq.s32.totalorder %s28, 0
    %p322 = por %p320, %p321
    %p323 = scmp.ne.s32.totalorder %s311, %s312
    %p324 = scmp.eq.s32.totalorder %s29, 1
    %p325 = por %p323, %p324
    %p327 = scmp.ne.s32.totalorder %s312, %s326
    %p328 = scmp.eq.s32.totalorder %s29, 0
    %p329 = por %p327, %p328
    %s331 = sadd.s32 %s330, 1
    %p334 = scmp.eq.s32.totalorder %s23, 1
    %p335 = scmp.ne.s32.totalorder %s330, %s332
    %p336 = scmp.eq.s32.totalorder %s23, 0
    %p337 = por %p335, %p336
    %p338 = scmp.ne.s32.totalorder %s330, %s332
    %p339 = scmp.eq.s32.totalorder %s28, 1
    %p340 = por %p338, %p339
    %p341 = scmp.ne.s32.totalorder %s332, %s333
    %p342 = scmp.eq.s32.totalorder %s28, 0
    %p343 = por %p341, %p342
    %p344 = scmp.ne.s32.totalorder %s332, %s333
    %p345 = scmp.eq.s32.totalorder %s29, 1
    %p346 = por %p344, %p345
    %p348 = scmp.ne.s32.totalorder %s333, %s347
    %p349 = scmp.eq.s32.totalorder %s29, 0
    %p350 = por %p348, %p349
    %s351 = ssub.s32 %s23, %s30
    %p352 = scmp.eq.s32.totalorder %s351, 0
    %s354 = sadd.s32 %s353, 1
    %s355 = scalar_select %p352, %s353, %s354
    %p358 = pneg %p352
    %p359 = scmp.eq.s32.totalorder %s23, 1
    %p360 = por %p358, %p359
    %p361 = scmp.ne.s32.totalorder %s353, %s356
    %p362 = scmp.eq.s32.totalorder %s23, 0
    %p363 = por %p361, %p362
    %p364 = scmp.ne.s32.totalorder %s353, %s356
    %p365 = scmp.eq.s32.totalorder %s28, 1
    %p366 = por %p364, %p365
    %p367 = scmp.ne.s32.totalorder %s356, %s357
    %p368 = scmp.eq.s32.totalorder %s28, 0
    %p369 = por %p367, %p368
    %p370 = scmp.ne.s32.totalorder %s356, %s357
    %p371 = scmp.eq.s32.totalorder %s29, 1
    %p372 = por %p370, %p371
    %p374 = scmp.ne.s32.totalorder %s357, %s373
    %p375 = scmp.eq.s32.totalorder %s29, 0
    %p376 = por %p374, %p375
    %s377 = ssub.s32 %s23, %s30
    %p378 = scmp.eq.s32.totalorder %s377, 0
    %s380 = sadd.s32 %s379, 1
    %s381 = scalar_select %p378, %s379, %s380
    %p384 = pneg %p378
    %p385 = scmp.eq.s32.totalorder %s23, 1
    %p386 = por %p384, %p385
    %p387 = scmp.ne.s32.totalorder %s379, %s382
    %p388 = scmp.eq.s32.totalorder %s23, 0
    %p389 = por %p387, %p388
    %p390 = scmp.ne.s32.totalorder %s379, %s382
    %p391 = scmp.eq.s32.totalorder %s28, 1
    %p392 = por %p390, %p391
    %p393 = scmp.ne.s32.totalorder %s382, %s383
    %p394 = scmp.eq.s32.totalorder %s28, 0
    %p395 = por %p393, %p394
    %p396 = scmp.ne.s32.totalorder %s382, %s383
    %p397 = scmp.eq.s32.totalorder %s29, 1
    %p398 = por %p396, %p397
    %p400 = scmp.ne.s32.totalorder %s383, %s399
    %p401 = scmp.eq.s32.totalorder %s29, 0
    %p402 = por %p400, %p401
    %p403 = scmp.le.s32.totalorder 1, %s23
    %p404 = scmp.lt.s32.totalorder %s23, 3
    %p405 = pnand %p403, %p404
    %p406 = pneg %p405
    // Predicated region
    $region9: #{faster_rcnn_forward.1} parent=5 // pred_check
      _
    $region10: #{faster_rcnn_forward.1} parent=5 // pred_check_branch
      %408 = sbr.rel (%p405) target = $region12
    $region11: #{faster_rcnn_forward.1} parent=5 // pred_region
      %s409 = ssub.s32 %s23, 1
      // Predicated region
      $region13: #{faster_rcnn_forward.1} parent=11 // pred_check
        %p410 = pneg %p70
      $region14: #{faster_rcnn_forward.1} parent=11 // pred_check_branch
        %412 = sbr.rel (%p410) target = $region16
      $region15: #{faster_rcnn_forward.1} parent=11 // pred_region
        _
      $region16: #{faster_rcnn_forward.1} parent=11 // pred_fallthru
        _
      // Predicated region
      $region17: #{faster_rcnn_forward.1} parent=11 // pred_check
        %p413 = pneg %p91
      $region18: #{faster_rcnn_forward.1} parent=11 // pred_check_branch
        %415 = sbr.rel (%p413) target = $region20
      $region19: #{faster_rcnn_forward.1} parent=11 // pred_region
        _
      $region20: #{faster_rcnn_forward.1} parent=11 // pred_fallthru
        _
      // Predicated region
      $region21: #{faster_rcnn_forward.1} parent=11 // pred_check
        %p416 = pneg %p112
      $region22: #{faster_rcnn_forward.1} parent=11 // pred_check_branch
        %418 = sbr.rel (%p416) target = $region24
      $region23: #{faster_rcnn_forward.1} parent=11 // pred_region
        _
      $region24: #{faster_rcnn_forward.1} parent=11 // pred_fallthru
        _
      // Predicated region
      $region25: #{faster_rcnn_forward.1} parent=11 // pred_check
        %p419 = pneg %p133
      $region26: #{faster_rcnn_forward.1} parent=11 // pred_check_branch
        %421 = sbr.rel (%p419) target = $region28
      $region27: #{faster_rcnn_forward.1} parent=11 // pred_region
        _
      $region28: #{faster_rcnn_forward.1} parent=11 // pred_fallthru
        _
      // Predicated region
      $region29: #{faster_rcnn_forward.1} parent=11 // pred_check
        %p422 = pneg %p154
      $region30: #{faster_rcnn_forward.1} parent=11 // pred_check_branch
        %424 = sbr.rel (%p422) target = $region32
      $region31: #{faster_rcnn_forward.1} parent=11 // pred_region
        _
      $region32: #{faster_rcnn_forward.1} parent=11 // pred_fallthru
        _
      // Predicated region
      $region33: #{faster_rcnn_forward.1} parent=11 // pred_check
        %p425 = pneg %p175
      $region34: #{faster_rcnn_forward.1} parent=11 // pred_check_branch
        %427 = sbr.rel (%p425) target = $region36
      $region35: #{faster_rcnn_forward.1} parent=11 // pred_region
        _
      $region36: #{faster_rcnn_forward.1} parent=11 // pred_fallthru
        _
      // Predicated region
      $region37: #{faster_rcnn_forward.1} parent=11 // pred_check
        %p428 = pneg %p196
      $region38: #{faster_rcnn_forward.1} parent=11 // pred_check_branch
        %430 = sbr.rel (%p428) target = $region40
      $region39: #{faster_rcnn_forward.1} parent=11 // pred_region
        _
      $region40: #{faster_rcnn_forward.1} parent=11 // pred_fallthru
        _
      // Predicated region
      $region41: #{faster_rcnn_forward.1} parent=11 // pred_check
        %p431 = pneg %p217
      $region42: #{faster_rcnn_forward.1} parent=11 // pred_check_branch
        %433 = sbr.rel (%p431) target = $region44
      $region43: #{faster_rcnn_forward.1} parent=11 // pred_region
        _
      $region44: #{faster_rcnn_forward.1} parent=11 // pred_fallthru
        _
      // Predicated region
      $region45: #{faster_rcnn_forward.1} parent=11 // pred_check
        %p434 = pneg %p238
      $region46: #{faster_rcnn_forward.1} parent=11 // pred_check_branch
        %436 = sbr.rel (%p434) target = $region48
      $region47: #{faster_rcnn_forward.1} parent=11 // pred_region
        _
      $region48: #{faster_rcnn_forward.1} parent=11 // pred_fallthru
        _
      // Predicated region
      $region49: #{faster_rcnn_forward.1} parent=11 // pred_check
        %p437 = pneg %p259
      $region50: #{faster_rcnn_forward.1} parent=11 // pred_check_branch
        %439 = sbr.rel (%p437) target = $region52
      $region51: #{faster_rcnn_forward.1} parent=11 // pred_region
        _
      $region52: #{faster_rcnn_forward.1} parent=11 // pred_fallthru
        _
      // Predicated region
      $region53: #{faster_rcnn_forward.1} parent=11 // pred_check
        %p440 = pneg %p280
      $region54: #{faster_rcnn_forward.1} parent=11 // pred_check_branch
        %442 = sbr.rel (%p440) target = $region56
      $region55: #{faster_rcnn_forward.1} parent=11 // pred_region
        _
      $region56: #{faster_rcnn_forward.1} parent=11 // pred_fallthru
        _
      // Predicated region
      $region57: #{faster_rcnn_forward.1} parent=11 // pred_check
        %p443 = pneg %p301
      $region58: #{faster_rcnn_forward.1} parent=11 // pred_check_branch
        %445 = sbr.rel (%p443) target = $region60
      $region59: #{faster_rcnn_forward.1} parent=11 // pred_region
        _
      $region60: #{faster_rcnn_forward.1} parent=11 // pred_fallthru
        _
      // Predicated region
      $region61: #{faster_rcnn_forward.1} parent=11 // pred_check
        %p446 = pneg %p322
      $region62: #{faster_rcnn_forward.1} parent=11 // pred_check_branch
        %448 = sbr.rel (%p446) target = $region64
      $region63: #{faster_rcnn_forward.1} parent=11 // pred_region
        _
      $region64: #{faster_rcnn_forward.1} parent=11 // pred_fallthru
        _
      // Predicated region
      $region65: #{faster_rcnn_forward.1} parent=11 // pred_check
        %p449 = pneg %p343
      $region66: #{faster_rcnn_forward.1} parent=11 // pred_check_branch
        %451 = sbr.rel (%p449) target = $region68
      $region67: #{faster_rcnn_forward.1} parent=11 // pred_region
        _
      $region68: #{faster_rcnn_forward.1} parent=11 // pred_fallthru
        _
    $region12: #{faster_rcnn_forward.1} parent=5 // pred_fallthru
      _
    %p452 = scmp.lt.s32.totalorder %s23, 2
    // Predicated region
    $region69: #{faster_rcnn_forward.1} parent=5 // pred_check
      %p453 = pneg %p452
    $region70: #{faster_rcnn_forward.1} parent=5 // pred_check_branch
      %455 = sbr.rel (%p453) target = $region72
    $region71: #{faster_rcnn_forward.1} parent=5 // pred_region
      // Predicated region
      $region73: #{faster_rcnn_forward.1} parent=71 // pred_check
        %p456 = pneg %p43
      $region74: #{faster_rcnn_forward.1} parent=71 // pred_check_branch
        %458 = sbr.rel (%p456) target = $region76
      $region75: #{faster_rcnn_forward.1} parent=71 // pred_region
        %p459 = scmp.lt.s32.totalorder %s23, 1
        %s460 = scalar_select %p459, %s23, 1
        %s461 = smul.addr %s460, 2
        %s462 = smul.addr %s461, 8
        %s463 = scalar_lea.vmem %s0, %s462
      $region76: #{faster_rcnn_forward.1} parent=71 // pred_fallthru
        _
    $region72: #{faster_rcnn_forward.1} parent=5 // pred_fallthru
      _
    %p464 = scmp.le.s32.totalorder 1, %s23
    %p465 = scmp.lt.s32.totalorder %s23, 3
    %p466 = pnand %p464, %p465
    %p467 = pneg %p466
    // Predicated region
    $region77: #{faster_rcnn_forward.1} parent=5 // pred_check
      _
    $region78: #{faster_rcnn_forward.1} parent=5 // pred_check_branch
      %469 = sbr.rel (%p466) target = $region80
    $region79: #{faster_rcnn_forward.1} parent=5 // pred_region
      %s470 = ssub.s32 %s23, 1
      %p471 = scmp.lt.s32.totalorder %s28, 1
      %s472 = scalar_select %p471, %s28, 1
      %s473 = smul.addr %s472, 2
      %s474 = smul.addr %s473, 8
      %s475 = scalar_lea.vmem %s0, %s474
      %p476 = pneg %p49
      %p477 = pneg %p46
      %p478 = pneg %p70
      %p479 = pneg %p67
      %p480 = pneg %p91
      %p481 = pneg %p88
      %p482 = pneg %p112
      %p483 = pneg %p109
      %p484 = pneg %p133
      %p485 = pneg %p130
      %p486 = pneg %p154
      %p487 = pneg %p151
      %p488 = pneg %p175
      %p489 = pneg %p172
      %p490 = pneg %p196
      %p491 = pneg %p193
      %p492 = pneg %p217
      %p493 = pneg %p214
      %p494 = pneg %p238
      %p495 = pneg %p235
      %p496 = pneg %p259
      %p497 = pneg %p256
      %p498 = pneg %p280
      %p499 = pneg %p277
      %p500 = pneg %p301
      %p501 = pneg %p298
      %p502 = pneg %p322
      %p503 = pneg %p319
      %p504 = pneg %p343
      %p505 = pneg %p340
      %p506 = pneg %p369
      %p507 = pneg %p366
      %p508 = scmp.lt.s32.totalorder %s28, 1
      %s509 = scalar_select %p508, %s28, 1
      %s510 = smul.addr %s509, 4
      %s511 = smul.addr %s510, 8
      %s512 = scalar_lea.vmem %s15, %s511
      %p513 = pneg %p395
      %p514 = pneg %p392
      %p515 = scmp.lt.s32.totalorder %s28, 1
      %s516 = scalar_select %p515, %s28, 1
      %s517 = scalar_lea.vmem %s16, %s516
      %p518 = scmp.lt.s32.totalorder %s28, 1
      %s519 = scalar_select %p518, %s28, 1
      %s520 = smul.addr %s519, 2
      %s521 = smul.addr %s520, 8
      %s522 = scalar_lea.vmem %s0, %s521
      %p523 = scmp.lt.s32.totalorder %s28, 1
      %s524 = scalar_select %p523, %s28, 1
      %s525 = smul.addr %s524, 4
      %s526 = smul.addr %s525, 8
      %s527 = scalar_lea.vmem %s15, %s526
      %p528 = scmp.lt.s32.totalorder %s28, 1
      %s529 = scalar_select %p528, %s28, 1
      %s530 = scalar_lea.vmem %s16, %s529
      %v532 = vld [vmem:[%s522] sm:$0xff]
      %v533 = vld [vmem:[%s522 + $0x8] sm:$0xff]
      %v534 = vld [vmem:[%s2] sm:$0xf]
      %v535 = vld [vmem:[%s2 + $0x4] sm:$0xf]
      %536 = vrot.lane.b32.xlu0 %v532, 15
      %v537 = vpop.permute.xlu0 %536
      %538 = vrot.lane.b32.xlu0 %v533, 15
      %v539 = vpop.permute.xlu0 %538
      %v540 = vlaneseq
      %v541 = vand.u32 %v540, 127
      %vm542 = vcmp.lt.s32.totalorder %v541, 15
      %v543 = vsel %vm542, %v537, %v539
      %v544 = vsel %vm542, %v539, %v537
      %v545 = vld [vmem:[%s1] sm:$0x3]
      %v547 = vperm.slane %v545, 0
      %v548 = vperm.slane %v545, 1
      %v551 = vmul.f32 %v544, %v547
      %v552 = vmul.f32 %v543, %v548
      %v553 = vpack.c.bf16 %v551, %v551
      %v554 = vpack.c.bf16 %v552, %v552
      %s555 = scalar_lea.vmem %s2, 8
      %v556 = vld [vmem:[%s555] sm:$0xf]
      %v557 = vld [vmem:[%s555 + $0x4] sm:$0xf]
      %558 = vrot.lane.b32.xlu0 %v532, 14
      %v559 = vpop.permute.xlu0 %558
      %560 = vrot.lane.b32.xlu0 %v533, 14
      %v561 = vpop.permute.xlu0 %560
      %vm562 = vcmp.lt.s32.totalorder %v541, 14
      %v563 = vsel %vm562, %v559, %v561
      %v564 = vsel %vm562, %v561, %v559
      %s565 = scalar_lea.vmem %s1, 2
      %v566 = vld [vmem:[%s565] sm:$0x3]
      %v568 = vperm.slane %v566, 0
      %v569 = vperm.slane %v566, 1
      %v572 = vmul.f32 %v564, %v568
      %v573 = vmul.f32 %v563, %v569
      %v574 = vpack.c.bf16 %v572, %v572
      %v575 = vpack.c.bf16 %v573, %v573
      %v578 = vunpack.c.l.b16 %v556
      %v579 = vunpack.c.l.b16 %v557
      %v580 = vpack.c.b16 %v579, %v578
      %vm581 = vcmask 64512
      %v583 = vsel %vm581, %v580, 0
      %vm585 = vcmask 1043456
      %v587 = vsel %vm585, %v574, 0
      %v590 = vsel %vm585, %v575, 0
      %592 = vmatpush.bf16.msra.mxu0 0
      %593 = vmatpush.bf16.msra.mxu0 0
      %594 = vmatpush.bf16.msra.mxu0 0
      %595 = vmatpush.bf16.msra.mxu0 0
      %596 = vmatpush.bf16.msra.mxu0 0
      %597 = vmatpush.bf16.msra.mxu0 0
      %598 = vmatpush.bf16.msra.mxu0 0
      %599 = vmatpush.bf16.msra.mxu0 %v587
      %600 = vmatmul.bf16.gmra.mxu0 %v583
      %v601 = vpop.f32.mrf.mxu0
      %v602 = vadd.f32 0.0, %v601
      %v603 = vpop.f32.mrf.mxu0
      %v604 = vadd.f32 0.0, %v603
      %605 = vdwg.mxu0
      %606 = vmatpush.bf16.msra.mxu0 0
      %607 = vmatpush.bf16.msra.mxu0 0
      %608 = vmatpush.bf16.msra.mxu0 0
      %609 = vmatpush.bf16.msra.mxu0 0
      %610 = vmatpush.bf16.msra.mxu0 0
      %611 = vmatpush.bf16.msra.mxu0 0
      %612 = vmatpush.bf16.msra.mxu0 0
      %613 = vmatpush.bf16.msra.mxu0 %v590
      %614 = vmatmul.bf16.gmra.mxu0 %v583
      %v615 = vpop.f32.mrf.mxu0
      %v616 = vadd.f32 0.0, %v615
      %v617 = vpop.f32.mrf.mxu0
      %v618 = vadd.f32 0.0, %v617
      %619 = vdwg.mxu0
      %v622 = vunpack.c.l.b16 %v534
      %v623 = vunpack.c.l.b16 %v535
      %v624 = vpack.c.b16 %v623, %v622
      %v626 = vsel %vm581, %v624, 0
      %v629 = vsel %vm585, %v553, 0
      %v632 = vsel %vm585, %v554, 0
      %634 = vmatpush.bf16.msra.mxu0 0
      %635 = vmatpush.bf16.msra.mxu0 0
      %636 = vmatpush.bf16.msra.mxu0 0
      %637 = vmatpush.bf16.msra.mxu0 0
      %638 = vmatpush.bf16.msra.mxu0 0
      %639 = vmatpush.bf16.msra.mxu0 0
      %640 = vmatpush.bf16.msra.mxu0 0
      %641 = vmatpush.bf16.msra.mxu0 %v629
      %642 = vmatmul.bf16.gmra.mxu0 %v626
      %v643 = vpop.f32.mrf.mxu0
      %v644 = vadd.f32 %v602, %v643
      %v645 = vpop.f32.mrf.mxu0
      %v646 = vadd.f32 %v604, %v645
      %647 = vdwg.mxu0
      %648 = vmatpush.bf16.msra.mxu0 0
      %649 = vmatpush.bf16.msra.mxu0 0
      %650 = vmatpush.bf16.msra.mxu0 0
      %651 = vmatpush.bf16.msra.mxu0 0
      %652 = vmatpush.bf16.msra.mxu0 0
      %653 = vmatpush.bf16.msra.mxu0 0
      %654 = vmatpush.bf16.msra.mxu0 0
      %655 = vmatpush.bf16.msra.mxu0 %v632
      %656 = vmatmul.bf16.gmra.mxu0 %v626
      %v657 = vpop.f32.mrf.mxu0
      %v658 = vadd.f32 %v616, %v657
      %v659 = vpop.f32.mrf.mxu0
      %v660 = vadd.f32 %v618, %v659
      %661 = vdwg.mxu0
      %s662 = scalar_lea.vmem %s2, 16
      %v663 = vld [vmem:[%s662] sm:$0xf]
      %v664 = vld [vmem:[%s662 + $0x4] sm:$0xf]
      %665 = vrot.lane.b32.xlu0 %v532, 13
      %v666 = vpop.permute.xlu0 %665
      %667 = vrot.lane.b32.xlu0 %v533, 13
      %v668 = vpop.permute.xlu0 %667
      %vm669 = vcmp.lt.s32.totalorder %v541, 13
      %v670 = vsel %vm669, %v666, %v668
      %v671 = vsel %vm669, %v668, %v666
      %s672 = scalar_lea.vmem %s1, 4
      %v673 = vld [vmem:[%s672] sm:$0x3]
      %v675 = vperm.slane %v673, 0
      %v676 = vperm.slane %v673, 1
      %v679 = vmul.f32 %v671, %v675
      %v680 = vmul.f32 %v670, %v676
      %v681 = vpack.c.bf16 %v679, %v679
      %v682 = vpack.c.bf16 %v680, %v680
      %v685 = vunpack.c.l.b16 %v663
      %v686 = vunpack.c.l.b16 %v664
      %v687 = vpack.c.b16 %v686, %v685
      %v689 = vsel %vm581, %v687, 0
      %v692 = vsel %vm585, %v681, 0
      %v695 = vsel %vm585, %v682, 0
      %697 = vmatpush.bf16.msra.mxu0 0
      %698 = vmatpush.bf16.msra.mxu0 0
      %699 = vmatpush.bf16.msra.mxu0 0
      %700 = vmatpush.bf16.msra.mxu0 0
      %701 = vmatpush.bf16.msra.mxu0 0
      %702 = vmatpush.bf16.msra.mxu0 0
      %703 = vmatpush.bf16.msra.mxu0 0
      %704 = vmatpush.bf16.msra.mxu0 %v692
      %705 = vmatmul.bf16.gmra.mxu0 %v689
      %v706 = vpop.f32.mrf.mxu0
      %v707 = vadd.f32 0.0, %v706
      %v708 = vpop.f32.mrf.mxu0
      %v709 = vadd.f32 0.0, %v708
      %710 = vdwg.mxu0
      %711 = vmatpush.bf16.msra.mxu0 0
      %712 = vmatpush.bf16.msra.mxu0 0
      %713 = vmatpush.bf16.msra.mxu0 0
      %714 = vmatpush.bf16.msra.mxu0 0
      %715 = vmatpush.bf16.msra.mxu0 0
      %716 = vmatpush.bf16.msra.mxu0 0
      %717 = vmatpush.bf16.msra.mxu0 0
      %718 = vmatpush.bf16.msra.mxu0 %v695
      %719 = vmatmul.bf16.gmra.mxu0 %v689
      %v720 = vpop.f32.mrf.mxu0
      %v721 = vadd.f32 0.0, %v720
      %v722 = vpop.f32.mrf.mxu0
      %v723 = vadd.f32 0.0, %v722
      %724 = vdwg.mxu0
      %v725 = vadd.f32 %v644, %v707
      %v726 = vadd.f32 %v658, %v721
      %v727 = vadd.f32 %v646, %v709
      %v728 = vadd.f32 %v660, %v723
      %s729 = scalar_lea.vmem %s2, 24
      %v730 = vld [vmem:[%s729] sm:$0xf]
      %v731 = vld [vmem:[%s729 + $0x4] sm:$0xf]
      %732 = vrot.lane.b32.xlu0 %v532, 1
      %v733 = vpop.permute.xlu0 %732
      %734 = vrot.lane.b32.xlu0 %v533, 1
      %v735 = vpop.permute.xlu0 %734
      %vm736 = vcmp.lt.s32.totalorder %v541, 1
      %v737 = vsel %vm736, %v733, %v735
      %v738 = vsel %vm736, %v735, %v733
      %s739 = scalar_lea.vmem %s1, 6
      %v740 = vld [vmem:[%s739] sm:$0x3]
      %v742 = vperm.slane %v740, 0
      %v743 = vperm.slane %v740, 1
      %v746 = vmul.f32 %v738, %v742
      %v747 = vmul.f32 %v737, %v743
      %v748 = vpack.c.bf16 %v746, %v746
      %v749 = vpack.c.bf16 %v747, %v747
      %v752 = vunpack.c.l.b16 %v730
      %v753 = vunpack.c.l.b16 %v731
      %v754 = vpack.c.b16 %v753, %v752
      %v756 = vsel %vm581, %v754, 0
      %v759 = vsel %vm585, %v748, 0
      %v762 = vsel %vm585, %v749, 0
      %764 = vmatpush.bf16.msra.mxu0 0
      %765 = vmatpush.bf16.msra.mxu0 0
      %766 = vmatpush.bf16.msra.mxu0 0
      %767 = vmatpush.bf16.msra.mxu0 0
      %768 = vmatpush.bf16.msra.mxu0 0
      %769 = vmatpush.bf16.msra.mxu0 0
      %770 = vmatpush.bf16.msra.mxu0 0
      %771 = vmatpush.bf16.msra.mxu0 %v759
      %772 = vmatmul.bf16.gmra.mxu0 %v756
      %v773 = vpop.f32.mrf.mxu0
      %v774 = vadd.f32 0.0, %v773
      %v775 = vpop.f32.mrf.mxu0
      %v776 = vadd.f32 0.0, %v775
      %777 = vdwg.mxu0
      %778 = vmatpush.bf16.msra.mxu0 0
      %779 = vmatpush.bf16.msra.mxu0 0
      %780 = vmatpush.bf16.msra.mxu0 0
      %781 = vmatpush.bf16.msra.mxu0 0
      %782 = vmatpush.bf16.msra.mxu0 0
      %783 = vmatpush.bf16.msra.mxu0 0
      %784 = vmatpush.bf16.msra.mxu0 0
      %785 = vmatpush.bf16.msra.mxu0 %v762
      %786 = vmatmul.bf16.gmra.mxu0 %v756
      %v787 = vpop.f32.mrf.mxu0
      %v788 = vadd.f32 0.0, %v787
      %v789 = vpop.f32.mrf.mxu0
      %v790 = vadd.f32 0.0, %v789
      %791 = vdwg.mxu0
      %v792 = vadd.f32 %v725, %v774
      %v793 = vadd.f32 %v726, %v788
      %v794 = vadd.f32 %v727, %v776
      %v795 = vadd.f32 %v728, %v790
      %s796 = scalar_lea.vmem %s2, 32
      %v797 = vld [vmem:[%s796] sm:$0xf]
      %v798 = vld [vmem:[%s796 + $0x4] sm:$0xf]
      %s799 = scalar_lea.vmem %s1, 8
      %v800 = vld [vmem:[%s799] sm:$0x3]
      %v802 = vperm.slane %v800, 0
      %v803 = vperm.slane %v800, 1
      %v806 = vmul.f32 %v532, %v802
      %v807 = vmul.f32 %v533, %v803
      %v808 = vpack.c.bf16 %v806, %v806
      %v809 = vpack.c.bf16 %v807, %v807
      %v812 = vunpack.c.l.b16 %v797
      %v813 = vunpack.c.l.b16 %v798
      %v814 = vpack.c.b16 %v813, %v812
      %v816 = vsel %vm581, %v814, 0
      %v819 = vsel %vm585, %v808, 0
      %v822 = vsel %vm585, %v809, 0
      %824 = vmatpush.bf16.msra.mxu0 0
      %825 = vmatpush.bf16.msra.mxu0 0
      %826 = vmatpush.bf16.msra.mxu0 0
      %827 = vmatpush.bf16.msra.mxu0 0
      %828 = vmatpush.bf16.msra.mxu0 0
      %829 = vmatpush.bf16.msra.mxu0 0
      %830 = vmatpush.bf16.msra.mxu0 0
      %831 = vmatpush.bf16.msra.mxu0 %v819
      %832 = vmatmul.bf16.gmra.mxu0 %v816
      %v833 = vpop.f32.mrf.mxu0
      %v834 = vadd.f32 0.0, %v833
      %v835 = vpop.f32.mrf.mxu0
      %v836 = vadd.f32 0.0, %v835
      %837 = vdwg.mxu0
      %838 = vmatpush.bf16.msra.mxu0 0
      %839 = vmatpush.bf16.msra.mxu0 0
      %840 = vmatpush.bf16.msra.mxu0 0
      %841 = vmatpush.bf16.msra.mxu0 0
      %842 = vmatpush.bf16.msra.mxu0 0
      %843 = vmatpush.bf16.msra.mxu0 0
      %844 = vmatpush.bf16.msra.mxu0 0
      %845 = vmatpush.bf16.msra.mxu0 %v822
      %846 = vmatmul.bf16.gmra.mxu0 %v816
      %v847 = vpop.f32.mrf.mxu0
      %v848 = vadd.f32 0.0, %v847
      %v849 = vpop.f32.mrf.mxu0
      %v850 = vadd.f32 0.0, %v849
      %851 = vdwg.mxu0
      %v852 = vadd.f32 %v792, %v834
      %v853 = vadd.f32 %v793, %v848
      %v854 = vadd.f32 %v794, %v836
      %v855 = vadd.f32 %v795, %v850
      %s856 = scalar_lea.vmem %s2, 40
      %v857 = vld [vmem:[%s856] sm:$0xf]
      %v858 = vld [vmem:[%s856 + $0x4] sm:$0xf]
      %859 = vrot.lane.b32.xlu0 %v532, 127
      %v860 = vpop.permute.xlu0 %859
      %861 = vrot.lane.b32.xlu0 %v533, 127
      %v862 = vpop.permute.xlu0 %861
      %vm863 = vcmp.lt.s32.totalorder %v541, 127
      %v864 = vsel %vm863, %v860, %v862
      %v865 = vsel %vm863, %v862, %v860
      %s866 = scalar_lea.vmem %s1, 10
      %v867 = vld [vmem:[%s866] sm:$0x3]
      %v869 = vperm.slane %v867, 0
      %v870 = vperm.slane %v867, 1
      %v873 = vmul.f32 %v864, %v869
      %v874 = vmul.f32 %v865, %v870
      %v875 = vpack.c.bf16 %v873, %v873
      %v876 = vpack.c.bf16 %v874, %v874
      %v879 = vunpack.c.l.b16 %v857
      %v880 = vunpack.c.l.b16 %v858
      %v881 = vpack.c.b16 %v880, %v879
      %v883 = vsel %vm581, %v881, 0
      %v886 = vsel %vm585, %v875, 0
      %v889 = vsel %vm585, %v876, 0
      %891 = vmatpush.bf16.msra.mxu0 0
      %892 = vmatpush.bf16.msra.mxu0 0
      %893 = vmatpush.bf16.msra.mxu0 0
      %894 = vmatpush.bf16.msra.mxu0 0
      %895 = vmatpush.bf16.msra.mxu0 0
      %896 = vmatpush.bf16.msra.mxu0 0
      %897 = vmatpush.bf16.msra.mxu0 0
      %898 = vmatpush.bf16.msra.mxu0 %v886
      %899 = vmatmul.bf16.gmra.mxu0 %v883
      %v900 = vpop.f32.mrf.mxu0
      %v901 = vadd.f32 0.0, %v900
      %v902 = vpop.f32.mrf.mxu0
      %v903 = vadd.f32 0.0, %v902
      %904 = vdwg.mxu0
      %905 = vmatpush.bf16.msra.mxu0 0
      %906 = vmatpush.bf16.msra.mxu0 0
      %907 = vmatpush.bf16.msra.mxu0 0
      %908 = vmatpush.bf16.msra.mxu0 0
      %909 = vmatpush.bf16.msra.mxu0 0
      %910 = vmatpush.bf16.msra.mxu0 0
      %911 = vmatpush.bf16.msra.mxu0 0
      %912 = vmatpush.bf16.msra.mxu0 %v889
      %913 = vmatmul.bf16.gmra.mxu0 %v883
      %v914 = vpop.f32.mrf.mxu0
      %v915 = vadd.f32 0.0, %v914
      %v916 = vpop.f32.mrf.mxu0
      %v917 = vadd.f32 0.0, %v916
      %918 = vdwg.mxu0
      %v919 = vadd.f32 %v852, %v901
      %v920 = vadd.f32 %v853, %v915
      %v921 = vadd.f32 %v854, %v903
      %v922 = vadd.f32 %v855, %v917
      %s923 = scalar_lea.vmem %s2, 48
      %v924 = vld [vmem:[%s923] sm:$0xf]
      %v925 = vld [vmem:[%s923 + $0x4] sm:$0xf]
      %926 = vrot.lane.b32.xlu0 %v532, 115
      %v927 = vpop.permute.xlu0 %926
      %928 = vrot.lane.b32.xlu0 %v533, 115
      %v929 = vpop.permute.xlu0 %928
      %vm930 = vcmp.lt.s32.totalorder %v541, 115
      %v931 = vsel %vm930, %v927, %v929
      %v932 = vsel %vm930, %v929, %v927
      %s933 = scalar_lea.vmem %s1, 12
      %v934 = vld [vmem:[%s933] sm:$0x3]
      %v936 = vperm.slane %v934, 0
      %v937 = vperm.slane %v934, 1
      %v940 = vmul.f32 %v931, %v936
      %v941 = vmul.f32 %v932, %v937
      %v942 = vpack.c.bf16 %v940, %v940
      %v943 = vpack.c.bf16 %v941, %v941
      %v946 = vunpack.c.l.b16 %v924
      %v947 = vunpack.c.l.b16 %v925
      %v948 = vpack.c.b16 %v947, %v946
      %v950 = vsel %vm581, %v948, 0
      %v953 = vsel %vm585, %v942, 0
      %v956 = vsel %vm585, %v943, 0
      %958 = vmatpush.bf16.msra.mxu0 0
      %959 = vmatpush.bf16.msra.mxu0 0
      %960 = vmatpush.bf16.msra.mxu0 0
      %961 = vmatpush.bf16.msra.mxu0 0
      %962 = vmatpush.bf16.msra.mxu0 0
      %963 = vmatpush.bf16.msra.mxu0 0
      %964 = vmatpush.bf16.msra.mxu0 0
      %965 = vmatpush.bf16.msra.mxu0 %v953
      %966 = vmatmul.bf16.gmra.mxu0 %v950
      %v967 = vpop.f32.mrf.mxu0
      %v968 = vadd.f32 0.0, %v967
      %v969 = vpop.f32.mrf.mxu0
      %v970 = vadd.f32 0.0, %v969
      %971 = vdwg.mxu0
      %972 = vmatpush.bf16.msra.mxu0 0
      %973 = vmatpush.bf16.msra.mxu0 0
      %974 = vmatpush.bf16.msra.mxu0 0
      %975 = vmatpush.bf16.msra.mxu0 0
      %976 = vmatpush.bf16.msra.mxu0 0
      %977 = vmatpush.bf16.msra.mxu0 0
      %978 = vmatpush.bf16.msra.mxu0 0
      %979 = vmatpush.bf16.msra.mxu0 %v956
      %980 = vmatmul.bf16.gmra.mxu0 %v950
      %v981 = vpop.f32.mrf.mxu0
      %v982 = vadd.f32 0.0, %v981
      %v983 = vpop.f32.mrf.mxu0
      %v984 = vadd.f32 0.0, %v983
      %985 = vdwg.mxu0
      %v986 = vadd.f32 %v919, %v968
      %v987 = vadd.f32 %v920, %v982
      %v988 = vadd.f32 %v921, %v970
      %v989 = vadd.f32 %v922, %v984
      %s990 = scalar_lea.vmem %s2, 56
      %v991 = vld [vmem:[%s990] sm:$0xf]
      %v992 = vld [vmem:[%s990 + $0x4] sm:$0xf]
      %993 = vrot.lane.b32.xlu0 %v532, 114
      %v994 = vpop.permute.xlu0 %993
      %995 = vrot.lane.b32.xlu0 %v533, 114
      %v996 = vpop.permute.xlu0 %995
      %vm997 = vcmp.lt.s32.totalorder %v541, 114
      %v998 = vsel %vm997, %v994, %v996
      %v999 = vsel %vm997, %v996, %v994
      %s1000 = scalar_lea.vmem %s1, 14
      %v1001 = vld [vmem:[%s1000] sm:$0x3]
      %v1003 = vperm.slane %v1001, 0
      %v1004 = vperm.slane %v1001, 1
      %v1007 = vmul.f32 %v998, %v1003
      %v1008 = vmul.f32 %v999, %v1004
      %v1009 = vpack.c.bf16 %v1007, %v1007
      %v1010 = vpack.c.bf16 %v1008, %v1008
      %v1013 = vunpack.c.l.b16 %v991
      %v1014 = vunpack.c.l.b16 %v992
      %v1015 = vpack.c.b16 %v1014, %v1013
      %v1017 = vsel %vm581, %v1015, 0
      %v1020 = vsel %vm585, %v1009, 0
      %v1023 = vsel %vm585, %v1010, 0
      %1025 = vmatpush.bf16.msra.mxu0 0
      %1026 = vmatpush.bf16.msra.mxu0 0
      %1027 = vmatpush.bf16.msra.mxu0 0
      %1028 = vmatpush.bf16.msra.mxu0 0
      %1029 = vmatpush.bf16.msra.mxu0 0
      %1030 = vmatpush.bf16.msra.mxu0 0
      %1031 = vmatpush.bf16.msra.mxu0 0
      %1032 = vmatpush.bf16.msra.mxu0 %v1020
      %1033 = vmatmul.bf16.gmra.mxu0 %v1017
      %v1034 = vpop.f32.mrf.mxu0
      %v1035 = vadd.f32 0.0, %v1034
      %v1036 = vpop.f32.mrf.mxu0
      %v1037 = vadd.f32 0.0, %v1036
      %1038 = vdwg.mxu0
      %1039 = vmatpush.bf16.msra.mxu0 0
      %1040 = vmatpush.bf16.msra.mxu0 0
      %1041 = vmatpush.bf16.msra.mxu0 0
      %1042 = vmatpush.bf16.msra.mxu0 0
      %1043 = vmatpush.bf16.msra.mxu0 0
      %1044 = vmatpush.bf16.msra.mxu0 0
      %1045 = vmatpush.bf16.msra.mxu0 0
      %1046 = vmatpush.bf16.msra.mxu0 %v1023
      %1047 = vmatmul.bf16.gmra.mxu0 %v1017
      %v1048 = vpop.f32.mrf.mxu0
      %v1049 = vadd.f32 0.0, %v1048
      %v1050 = vpop.f32.mrf.mxu0
      %v1051 = vadd.f32 0.0, %v1050
      %1052 = vdwg.mxu0
      %v1053 = vadd.f32 %v986, %v1035
      %v1054 = vadd.f32 %v987, %v1049
      %v1055 = vadd.f32 %v988, %v1037
      %v1056 = vadd.f32 %v989, %v1051
      %s1057 = scalar_lea.vmem %s2, 64
      %v1058 = vld [vmem:[%s1057] sm:$0xf]
      %v1059 = vld [vmem:[%s1057 + $0x4] sm:$0xf]
      %1060 = vrot.lane.b32.xlu0 %v532, 113
      %v1061 = vpop.permute.xlu0 %1060
      %1062 = vrot.lane.b32.xlu0 %v533, 113
      %v1063 = vpop.permute.xlu0 %1062
      %vm1064 = vcmp.lt.s32.totalorder %v541, 113
      %v1065 = vsel %vm1064, %v1061, %v1063
      %v1066 = vsel %vm1064, %v1063, %v1061
      %s1067 = scalar_lea.vmem %s1, 16
      %v1068 = vld [vmem:[%s1067] sm:$0x3]
      %v1070 = vperm.slane %v1068, 0
      %v1071 = vperm.slane %v1068, 1
      %v1074 = vmul.f32 %v1065, %v1070
      %v1075 = vmul.f32 %v1066, %v1071
      %v1076 = vpack.c.bf16 %v1074, %v1074
      %v1077 = vpack.c.bf16 %v1075, %v1075
      %v1080 = vunpack.c.l.b16 %v1058
      %v1081 = vunpack.c.l.b16 %v1059
      %v1082 = vpack.c.b16 %v1081, %v1080
      %v1084 = vsel %vm581, %v1082, 0
      %v1087 = vsel %vm585, %v1076, 0
      %v1090 = vsel %vm585, %v1077, 0
      %1092 = vmatpush.bf16.msra.mxu0 0
      %1093 = vmatpush.bf16.msra.mxu0 0
      %1094 = vmatpush.bf16.msra.mxu0 0
      %1095 = vmatpush.bf16.msra.mxu0 0
      %1096 = vmatpush.bf16.msra.mxu0 0
      %1097 = vmatpush.bf16.msra.mxu0 0
      %1098 = vmatpush.bf16.msra.mxu0 0
      %1099 = vmatpush.bf16.msra.mxu0 %v1087
      %1100 = vmatmul.bf16.gmra.mxu0 %v1084
      %v1101 = vpop.f32.mrf.mxu0
      %v1102 = vadd.f32 0.0, %v1101
      %v1103 = vpop.f32.mrf.mxu0
      %v1104 = vadd.f32 0.0, %v1103
      %1105 = vdwg.mxu0
      %1106 = vmatpush.bf16.msra.mxu0 0
      %1107 = vmatpush.bf16.msra.mxu0 0
      %1108 = vmatpush.bf16.msra.mxu0 0
      %1109 = vmatpush.bf16.msra.mxu0 0
      %1110 = vmatpush.bf16.msra.mxu0 0
      %1111 = vmatpush.bf16.msra.mxu0 0
      %1112 = vmatpush.bf16.msra.mxu0 0
      %1113 = vmatpush.bf16.msra.mxu0 %v1090
      %1114 = vmatmul.bf16.gmra.mxu0 %v1084
      %v1115 = vpop.f32.mrf.mxu0
      %v1116 = vadd.f32 0.0, %v1115
      %v1117 = vpop.f32.mrf.mxu0
      %v1118 = vadd.f32 0.0, %v1117
      %1119 = vdwg.mxu0
      %v1120 = vadd.f32 %v1053, %v1102
      %v1121 = vadd.f32 %v1054, %v1116
      %v1122 = vadd.f32 %v1055, %v1104
      %v1123 = vadd.f32 %v1056, %v1118
      %v1124 = vld [vmem:[%s3] sm:$0xff]
      %v1125 = vld [vmem:[%s3 + $0x8] sm:$0xff]
      %1127 = vset.pattern.permute.xlu0 0
      %1128 = vperm.xlu0 %1127, %v1124
      %v1129 = vpop.permute.xlu0 %1128
      %1132 = vset.pattern.permute.xlu0 0
      %1133 = vperm.xlu0 %1132, %v1125
      %v1134 = vpop.permute.xlu0 %1133
      %v1136 = vadd.f32 %v1120, %v1129
      %v1137 = vadd.f32 %v1121, %v1129
      %v1138 = vadd.f32 %v1122, %v1134
      %v1139 = vadd.f32 %v1123, %v1134
      %v1140 = vmax.f32 %v1136, 0.0
      %v1141 = vmax.f32 %v1137, 0.0
      %v1142 = vmax.f32 %v1138, 0.0
      %v1143 = vmax.f32 %v1139, 0.0
      %v1144 = vpack.c.bf16 %v1142, %v1140
      %v1145 = vpack.c.bf16 %v1143, %v1141
      %v1146 = vld [vmem:[%s8] sm:$0xf]
      %v1147 = vld [vmem:[%s8 + $0x4] sm:$0xf]
      %v1148 = vld [vmem:[%s8 + $0x8] sm:$0xf]
      %v1149 = vld [vmem:[%s8 + $0xc] sm:$0xf]
      %v1150 = vld [vmem:[%s8 + $0x10] sm:$0xf]
      %v1151 = vld [vmem:[%s8 + $0x14] sm:$0xf]
      %v1152 = vld [vmem:[%s8 + $0x18] sm:$0xf]
      %v1153 = vld [vmem:[%s8 + $0x1c] sm:$0xf]
      %v1154 = vld [vmem:[%s8 + $0x20] sm:$0xf]
      %v1155 = vld [vmem:[%s8 + $0x24] sm:$0xf]
      %v1156 = vld [vmem:[%s8 + $0x28] sm:$0xf]
      %v1157 = vld [vmem:[%s8 + $0x2c] sm:$0xf]
      %v1158 = vld [vmem:[%s8 + $0x30] sm:$0xf]
      %v1159 = vld [vmem:[%s8 + $0x34] sm:$0xf]
      %v1160 = vld [vmem:[%s8 + $0x38] sm:$0xf]
      %v1161 = vld [vmem:[%s8 + $0x3c] sm:$0xf]
      %v1162 = vld [vmem:[%s8 + $0x40] sm:$0xf]
      %v1163 = vld [vmem:[%s8 + $0x44] sm:$0xf]
      %v1164 = vld [vmem:[%s8 + $0x48] sm:$0xf]
      %v1165 = vld [vmem:[%s8 + $0x4c] sm:$0xf]
      %v1166 = vld [vmem:[%s8 + $0x50] sm:$0xf]
      %v1167 = vld [vmem:[%s8 + $0x54] sm:$0xf]
      %v1168 = vld [vmem:[%s8 + $0x58] sm:$0xf]
      %v1169 = vld [vmem:[%s8 + $0x5c] sm:$0xf]
      %v1170 = vld [vmem:[%s8 + $0x60] sm:$0xf]
      %v1171 = vld [vmem:[%s8 + $0x64] sm:$0xf]
      %v1172 = vld [vmem:[%s8 + $0x68] sm:$0xf]
      %v1173 = vld [vmem:[%s8 + $0x6c] sm:$0xf]
      %v1174 = vld [vmem:[%s8 + $0x70] sm:$0xf]
      %v1175 = vld [vmem:[%s8 + $0x74] sm:$0xf]
      %v1176 = vld [vmem:[%s8 + $0x78] sm:$0xf]
      %v1177 = vld [vmem:[%s8 + $0x7c] sm:$0xf]
      %v1210 = vunpack.c.l.b16 %v1146
      %v1211 = vunpack.c.l.b16 %v1147
      %v1212 = vunpack.c.l.b16 %v1148
      %v1213 = vunpack.c.l.b16 %v1149
      %v1214 = vunpack.c.l.b16 %v1150
      %v1215 = vunpack.c.l.b16 %v1151
      %v1216 = vunpack.c.l.b16 %v1152
      %v1217 = vunpack.c.l.b16 %v1153
      %v1218 = vunpack.c.l.b16 %v1154
      %v1219 = vunpack.c.l.b16 %v1155
      %v1220 = vunpack.c.l.b16 %v1156
      %v1221 = vunpack.c.l.b16 %v1157
      %v1222 = vunpack.c.l.b16 %v1158
      %v1223 = vunpack.c.l.b16 %v1159
      %v1224 = vunpack.c.l.b16 %v1160
      %v1225 = vunpack.c.l.b16 %v1161
      %v1226 = vunpack.c.l.b16 %v1162
      %v1227 = vunpack.c.l.b16 %v1163
      %v1228 = vunpack.c.l.b16 %v1164
      %v1229 = vunpack.c.l.b16 %v1165
      %v1230 = vunpack.c.l.b16 %v1166
      %v1231 = vunpack.c.l.b16 %v1167
      %v1232 = vunpack.c.l.b16 %v1168
      %v1233 = vunpack.c.l.b16 %v1169
      %v1234 = vunpack.c.l.b16 %v1170
      %v1235 = vunpack.c.l.b16 %v1171
      %v1236 = vunpack.c.l.b16 %v1172
      %v1237 = vunpack.c.l.b16 %v1173
      %v1238 = vunpack.c.l.b16 %v1174
      %v1239 = vunpack.c.l.b16 %v1175
      %v1240 = vunpack.c.l.b16 %v1176
      %v1241 = vunpack.c.l.b16 %v1177
      %v1242 = vpack.c.b16 %v1211, %v1210
      %v1243 = vpack.c.b16 %v1213, %v1212
      %v1244 = vpack.c.b16 %v1215, %v1214
      %v1245 = vpack.c.b16 %v1217, %v1216
      %v1246 = vpack.c.b16 %v1219, %v1218
      %v1247 = vpack.c.b16 %v1221, %v1220
      %v1248 = vpack.c.b16 %v1223, %v1222
      %v1249 = vpack.c.b16 %v1225, %v1224
      %v1250 = vpack.c.b16 %v1227, %v1226
      %v1251 = vpack.c.b16 %v1229, %v1228
      %v1252 = vpack.c.b16 %v1231, %v1230
      %v1253 = vpack.c.b16 %v1233, %v1232
      %v1254 = vpack.c.b16 %v1235, %v1234
      %v1255 = vpack.c.b16 %v1237, %v1236
      %v1256 = vpack.c.b16 %v1239, %v1238
      %v1257 = vpack.c.b16 %v1241, %v1240
      %1274 = vmatpush.bf16.msra.mxu0 %v1249
      %1275 = vmatpush.bf16.msra.mxu0 %v1248
      %1276 = vmatpush.bf16.msra.mxu0 %v1247
      %1277 = vmatpush.bf16.msra.mxu0 %v1246
      %1278 = vmatpush.bf16.msra.mxu0 %v1245
      %1279 = vmatpush.bf16.msra.mxu0 %v1244
      %1280 = vmatpush.bf16.msra.mxu0 %v1243
      %1281 = vmatpush.bf16.msra.mxu0 %v1242
      %1282 = vmatmul.bf16.gmra.mxu0 %v1144
      %v1283 = vpop.f32.mrf.mxu0
      %v1284 = vadd.f32 0.0, %v1283
      %v1285 = vpop.f32.mrf.mxu0
      %v1286 = vadd.f32 0.0, %v1285
      %1287 = vdwg.mxu0
      %1288 = vmatpush.bf16.msra.mxu0 %v1257
      %1289 = vmatpush.bf16.msra.mxu0 %v1256
      %1290 = vmatpush.bf16.msra.mxu0 %v1255
      %1291 = vmatpush.bf16.msra.mxu0 %v1254
      %1292 = vmatpush.bf16.msra.mxu0 %v1253
      %1293 = vmatpush.bf16.msra.mxu0 %v1252
      %1294 = vmatpush.bf16.msra.mxu0 %v1251
      %1295 = vmatpush.bf16.msra.mxu0 %v1250
      %1296 = vmatmul.bf16.gmra.mxu0 %v1145
      %v1297 = vpop.f32.mrf.mxu0
      %v1298 = vadd.f32 %v1284, %v1297
      %v1299 = vpop.f32.mrf.mxu0
      %v1300 = vadd.f32 %v1286, %v1299
      %1301 = vdwg.mxu0
      %v1302 = vld [vmem:[%s4] sm:$0xf]
      %v1303 = vld [vmem:[%s4 + $0x4] sm:$0xf]
      %1304 = vrot.lane.b32.xlu0 %v1140, 15
      %v1305 = vpop.permute.xlu0 %1304
      %1306 = vrot.lane.b32.xlu0 %v1142, 15
      %v1307 = vpop.permute.xlu0 %1306
      %1308 = vrot.lane.b32.xlu0 %v1141, 15
      %v1309 = vpop.permute.xlu0 %1308
      %1310 = vrot.lane.b32.xlu0 %v1143, 15
      %v1311 = vpop.permute.xlu0 %1310
      %v1312 = vsel %vm542, %v1305, %v1309
      %v1313 = vsel %vm542, %v1307, %v1311
      %v1314 = vsel %vm542, %v1309, %v1305
      %v1315 = vsel %vm542, %v1311, %v1307
      %v1316 = vmul.f32 %v1314, %v547
      %v1317 = vmul.f32 %v1312, %v548
      %v1318 = vmul.f32 %v1315, %v547
      %v1319 = vmul.f32 %v1313, %v548
      %v1320 = vpack.c.bf16 %v1318, %v1316
      %v1321 = vpack.c.bf16 %v1319, %v1317
      %s1322 = scalar_lea.vmem %s4, 8
      %v1323 = vld [vmem:[%s1322] sm:$0xf]
      %v1324 = vld [vmem:[%s1322 + $0x4] sm:$0xf]
      %1325 = vrot.lane.b32.xlu0 %v1140, 14
      %v1326 = vpop.permute.xlu0 %1325
      %1327 = vrot.lane.b32.xlu0 %v1142, 14
      %v1328 = vpop.permute.xlu0 %1327
      %1329 = vrot.lane.b32.xlu0 %v1141, 14
      %v1330 = vpop.permute.xlu0 %1329
      %1331 = vrot.lane.b32.xlu0 %v1143, 14
      %v1332 = vpop.permute.xlu0 %1331
      %v1333 = vsel %vm562, %v1326, %v1330
      %v1334 = vsel %vm562, %v1328, %v1332
      %v1335 = vsel %vm562, %v1330, %v1326
      %v1336 = vsel %vm562, %v1332, %v1328
      %v1337 = vmul.f32 %v1335, %v568
      %v1338 = vmul.f32 %v1333, %v569
      %v1339 = vmul.f32 %v1336, %v568
      %v1340 = vmul.f32 %v1334, %v569
      %v1341 = vpack.c.bf16 %v1339, %v1337
      %v1342 = vpack.c.bf16 %v1340, %v1338
      %v1345 = vunpack.c.l.b16 %v1323
      %v1346 = vunpack.c.l.b16 %v1324
      %v1347 = vpack.c.b16 %v1346, %v1345
      %vm1348 = vcmask 130048
      %v1350 = vsel %vm1348, %v1347, 0
      %1352 = vmatpush.bf16.msra.mxu0 0
      %1353 = vmatpush.bf16.msra.mxu0 0
      %1354 = vmatpush.bf16.msra.mxu0 0
      %1355 = vmatpush.bf16.msra.mxu0 0
      %1356 = vmatpush.bf16.msra.mxu0 0
      %1357 = vmatpush.bf16.msra.mxu0 0
      %1358 = vmatpush.bf16.msra.mxu0 0
      %1359 = vmatpush.bf16.msra.mxu0 %v1341
      %1360 = vmatmul.bf16.gmra.mxu0 %v1350
      %v1361 = vpop.f32.mrf.mxu0
      %v1362 = vadd.f32 0.0, %v1361
      %v1363 = vpop.f32.mrf.mxu0
      %v1364 = vadd.f32 0.0, %v1363
      %1365 = vdwg.mxu0
      %1366 = vmatpush.bf16.msra.mxu0 0
      %1367 = vmatpush.bf16.msra.mxu0 0
      %1368 = vmatpush.bf16.msra.mxu0 0
      %1369 = vmatpush.bf16.msra.mxu0 0
      %1370 = vmatpush.bf16.msra.mxu0 0
      %1371 = vmatpush.bf16.msra.mxu0 0
      %1372 = vmatpush.bf16.msra.mxu0 0
      %1373 = vmatpush.bf16.msra.mxu0 %v1342
      %1374 = vmatmul.bf16.gmra.mxu0 %v1350
      %v1375 = vpop.f32.mrf.mxu0
      %v1376 = vadd.f32 0.0, %v1375
      %v1377 = vpop.f32.mrf.mxu0
      %v1378 = vadd.f32 0.0, %v1377
      %1379 = vdwg.mxu0
      %v1382 = vunpack.c.l.b16 %v1302
      %v1383 = vunpack.c.l.b16 %v1303
      %v1384 = vpack.c.b16 %v1383, %v1382
      %v1386 = vsel %vm1348, %v1384, 0
      %1388 = vmatpush.bf16.msra.mxu0 0
      %1389 = vmatpush.bf16.msra.mxu0 0
      %1390 = vmatpush.bf16.msra.mxu0 0
      %1391 = vmatpush.bf16.msra.mxu0 0
      %1392 = vmatpush.bf16.msra.mxu0 0
      %1393 = vmatpush.bf16.msra.mxu0 0
      %1394 = vmatpush.bf16.msra.mxu0 0
      %1395 = vmatpush.bf16.msra.mxu0 %v1320
      %1396 = vmatmul.bf16.gmra.mxu0 %v1386
      %v1397 = vpop.f32.mrf.mxu0
      %v1398 = vadd.f32 %v1362, %v1397
      %v1399 = vpop.f32.mrf.mxu0
      %v1400 = vadd.f32 %v1364, %v1399
      %1401 = vdwg.mxu0
      %1402 = vmatpush.bf16.msra.mxu0 0
      %1403 = vmatpush.bf16.msra.mxu0 0
      %1404 = vmatpush.bf16.msra.mxu0 0
      %1405 = vmatpush.bf16.msra.mxu0 0
      %1406 = vmatpush.bf16.msra.mxu0 0
      %1407 = vmatpush.bf16.msra.mxu0 0
      %1408 = vmatpush.bf16.msra.mxu0 0
      %1409 = vmatpush.bf16.msra.mxu0 %v1321
      %1410 = vmatmul.bf16.gmra.mxu0 %v1386
      %v1411 = vpop.f32.mrf.mxu0
      %v1412 = vadd.f32 %v1376, %v1411
      %v1413 = vpop.f32.mrf.mxu0
      %v1414 = vadd.f32 %v1378, %v1413
      %1415 = vdwg.mxu0
      %s1416 = scalar_lea.vmem %s4, 16
      %v1417 = vld [vmem:[%s1416] sm:$0xf]
      %v1418 = vld [vmem:[%s1416 + $0x4] sm:$0xf]
      %1419 = vrot.lane.b32.xlu0 %v1140, 13
      %v1420 = vpop.permute.xlu0 %1419
      %1421 = vrot.lane.b32.xlu0 %v1142, 13
      %v1422 = vpop.permute.xlu0 %1421
      %1423 = vrot.lane.b32.xlu0 %v1141, 13
      %v1424 = vpop.permute.xlu0 %1423
      %1425 = vrot.lane.b32.xlu0 %v1143, 13
      %v1426 = vpop.permute.xlu0 %1425
      %v1427 = vsel %vm669, %v1420, %v1424
      %v1428 = vsel %vm669, %v1422, %v1426
      %v1429 = vsel %vm669, %v1424, %v1420
      %v1430 = vsel %vm669, %v1426, %v1422
      %v1431 = vmul.f32 %v1429, %v675
      %v1432 = vmul.f32 %v1427, %v676
      %v1433 = vmul.f32 %v1430, %v675
      %v1434 = vmul.f32 %v1428, %v676
      %v1435 = vpack.c.bf16 %v1433, %v1431
      %v1436 = vpack.c.bf16 %v1434, %v1432
      %v1439 = vunpack.c.l.b16 %v1417
      %v1440 = vunpack.c.l.b16 %v1418
      %v1441 = vpack.c.b16 %v1440, %v1439
      %v1443 = vsel %vm1348, %v1441, 0
      %1445 = vmatpush.bf16.msra.mxu0 0
      %1446 = vmatpush.bf16.msra.mxu0 0
      %1447 = vmatpush.bf16.msra.mxu0 0
      %1448 = vmatpush.bf16.msra.mxu0 0
      %1449 = vmatpush.bf16.msra.mxu0 0
      %1450 = vmatpush.bf16.msra.mxu0 0
      %1451 = vmatpush.bf16.msra.mxu0 0
      %1452 = vmatpush.bf16.msra.mxu0 %v1435
      %1453 = vmatmul.bf16.gmra.mxu0 %v1443
      %v1454 = vpop.f32.mrf.mxu0
      %v1455 = vadd.f32 0.0, %v1454
      %v1456 = vpop.f32.mrf.mxu0
      %v1457 = vadd.f32 0.0, %v1456
      %1458 = vdwg.mxu0
      %1459 = vmatpush.bf16.msra.mxu0 0
      %1460 = vmatpush.bf16.msra.mxu0 0
      %1461 = vmatpush.bf16.msra.mxu0 0
      %1462 = vmatpush.bf16.msra.mxu0 0
      %1463 = vmatpush.bf16.msra.mxu0 0
      %1464 = vmatpush.bf16.msra.mxu0 0
      %1465 = vmatpush.bf16.msra.mxu0 0
      %1466 = vmatpush.bf16.msra.mxu0 %v1436
      %1467 = vmatmul.bf16.gmra.mxu0 %v1443
      %v1468 = vpop.f32.mrf.mxu0
      %v1469 = vadd.f32 0.0, %v1468
      %v1470 = vpop.f32.mrf.mxu0
      %v1471 = vadd.f32 0.0, %v1470
      %1472 = vdwg.mxu0
      %v1473 = vadd.f32 %v1398, %v1455
      %v1474 = vadd.f32 %v1412, %v1469
      %v1475 = vadd.f32 %v1400, %v1457
      %v1476 = vadd.f32 %v1414, %v1471
      %s1477 = scalar_lea.vmem %s4, 24
      %v1478 = vld [vmem:[%s1477] sm:$0xf]
      %v1479 = vld [vmem:[%s1477 + $0x4] sm:$0xf]
      %1480 = vrot.lane.b32.xlu0 %v1140, 1
      %v1481 = vpop.permute.xlu0 %1480
      %1482 = vrot.lane.b32.xlu0 %v1142, 1
      %v1483 = vpop.permute.xlu0 %1482
      %1484 = vrot.lane.b32.xlu0 %v1141, 1
      %v1485 = vpop.permute.xlu0 %1484
      %1486 = vrot.lane.b32.xlu0 %v1143, 1
      %v1487 = vpop.permute.xlu0 %1486
      %v1488 = vsel %vm736, %v1481, %v1485
      %v1489 = vsel %vm736, %v1483, %v1487
      %v1490 = vsel %vm736, %v1485, %v1481
      %v1491 = vsel %vm736, %v1487, %v1483
      %v1492 = vmul.f32 %v1490, %v742
      %v1493 = vmul.f32 %v1488, %v743
      %v1494 = vmul.f32 %v1491, %v742
      %v1495 = vmul.f32 %v1489, %v743
      %v1496 = vpack.c.bf16 %v1494, %v1492
      %v1497 = vpack.c.bf16 %v1495, %v1493
      %v1500 = vunpack.c.l.b16 %v1478
      %v1501 = vunpack.c.l.b16 %v1479
      %v1502 = vpack.c.b16 %v1501, %v1500
      %v1504 = vsel %vm1348, %v1502, 0
      %1506 = vmatpush.bf16.msra.mxu0 0
      %1507 = vmatpush.bf16.msra.mxu0 0
      %1508 = vmatpush.bf16.msra.mxu0 0
      %1509 = vmatpush.bf16.msra.mxu0 0
      %1510 = vmatpush.bf16.msra.mxu0 0
      %1511 = vmatpush.bf16.msra.mxu0 0
      %1512 = vmatpush.bf16.msra.mxu0 0
      %1513 = vmatpush.bf16.msra.mxu0 %v1496
      %1514 = vmatmul.bf16.gmra.mxu0 %v1504
      %v1515 = vpop.f32.mrf.mxu0
      %v1516 = vadd.f32 0.0, %v1515
      %v1517 = vpop.f32.mrf.mxu0
      %v1518 = vadd.f32 0.0, %v1517
      %1519 = vdwg.mxu0
      %1520 = vmatpush.bf16.msra.mxu0 0
      %1521 = vmatpush.bf16.msra.mxu0 0
      %1522 = vmatpush.bf16.msra.mxu0 0
      %1523 = vmatpush.bf16.msra.mxu0 0
      %1524 = vmatpush.bf16.msra.mxu0 0
      %1525 = vmatpush.bf16.msra.mxu0 0
      %1526 = vmatpush.bf16.msra.mxu0 0
      %1527 = vmatpush.bf16.msra.mxu0 %v1497
      %1528 = vmatmul.bf16.gmra.mxu0 %v1504
      %v1529 = vpop.f32.mrf.mxu0
      %v1530 = vadd.f32 0.0, %v1529
      %v1531 = vpop.f32.mrf.mxu0
      %v1532 = vadd.f32 0.0, %v1531
      %1533 = vdwg.mxu0
      %v1534 = vadd.f32 %v1473, %v1516
      %v1535 = vadd.f32 %v1474, %v1530
      %v1536 = vadd.f32 %v1475, %v1518
      %v1537 = vadd.f32 %v1476, %v1532
      %s1538 = scalar_lea.vmem %s4, 32
      %v1539 = vld [vmem:[%s1538] sm:$0xf]
      %v1540 = vld [vmem:[%s1538 + $0x4] sm:$0xf]
      %v1541 = vmul.f32 %v1140, %v802
      %v1542 = vmul.f32 %v1141, %v803
      %v1543 = vmul.f32 %v1142, %v802
      %v1544 = vmul.f32 %v1143, %v803
      %v1545 = vpack.c.bf16 %v1543, %v1541
      %v1546 = vpack.c.bf16 %v1544, %v1542
      %v1549 = vunpack.c.l.b16 %v1539
      %v1550 = vunpack.c.l.b16 %v1540
      %v1551 = vpack.c.b16 %v1550, %v1549
      %v1553 = vsel %vm1348, %v1551, 0
      %1555 = vmatpush.bf16.msra.mxu0 0
      %1556 = vmatpush.bf16.msra.mxu0 0
      %1557 = vmatpush.bf16.msra.mxu0 0
      %1558 = vmatpush.bf16.msra.mxu0 0
      %1559 = vmatpush.bf16.msra.mxu0 0
      %1560 = vmatpush.bf16.msra.mxu0 0
      %1561 = vmatpush.bf16.msra.mxu0 0
      %1562 = vmatpush.bf16.msra.mxu0 %v1545
      %1563 = vmatmul.bf16.gmra.mxu0 %v1553
      %v1564 = vpop.f32.mrf.mxu0
      %v1565 = vadd.f32 0.0, %v1564
      %v1566 = vpop.f32.mrf.mxu0
      %v1567 = vadd.f32 0.0, %v1566
      %1568 = vdwg.mxu0
      %1569 = vmatpush.bf16.msra.mxu0 0
      %1570 = vmatpush.bf16.msra.mxu0 0
      %1571 = vmatpush.bf16.msra.mxu0 0
      %1572 = vmatpush.bf16.msra.mxu0 0
      %1573 = vmatpush.bf16.msra.mxu0 0
      %1574 = vmatpush.bf16.msra.mxu0 0
      %1575 = vmatpush.bf16.msra.mxu0 0
      %1576 = vmatpush.bf16.msra.mxu0 %v1546
      %1577 = vmatmul.bf16.gmra.mxu0 %v1553
      %v1578 = vpop.f32.mrf.mxu0
      %v1579 = vadd.f32 0.0, %v1578
      %v1580 = vpop.f32.mrf.mxu0
      %v1581 = vadd.f32 0.0, %v1580
      %1582 = vdwg.mxu0
      %v1583 = vadd.f32 %v1534, %v1565
      %v1584 = vadd.f32 %v1535, %v1579
      %v1585 = vadd.f32 %v1536, %v1567
      %v1586 = vadd.f32 %v1537, %v1581
      %s1587 = scalar_lea.vmem %s4, 40
      %v1588 = vld [vmem:[%s1587] sm:$0xf]
      %v1589 = vld [vmem:[%s1587 + $0x4] sm:$0xf]
      %1590 = vrot.lane.b32.xlu0 %v1140, 127
      %v1591 = vpop.permute.xlu0 %1590
      %1592 = vrot.lane.b32.xlu0 %v1142, 127
      %v1593 = vpop.permute.xlu0 %1592
      %1594 = vrot.lane.b32.xlu0 %v1141, 127
      %v1595 = vpop.permute.xlu0 %1594
      %1596 = vrot.lane.b32.xlu0 %v1143, 127
      %v1597 = vpop.permute.xlu0 %1596
      %v1598 = vsel %vm863, %v1591, %v1595
      %v1599 = vsel %vm863, %v1593, %v1597
      %v1600 = vsel %vm863, %v1595, %v1591
      %v1601 = vsel %vm863, %v1597, %v1593
      %v1602 = vmul.f32 %v1598, %v869
      %v1603 = vmul.f32 %v1600, %v870
      %v1604 = vmul.f32 %v1599, %v869
      %v1605 = vmul.f32 %v1601, %v870
      %v1606 = vpack.c.bf16 %v1604, %v1602
      %v1607 = vpack.c.bf16 %v1605, %v1603
      %v1610 = vunpack.c.l.b16 %v1588
      %v1611 = vunpack.c.l.b16 %v1589
      %v1612 = vpack.c.b16 %v1611, %v1610
      %v1614 = vsel %vm1348, %v1612, 0
      %1616 = vmatpush.bf16.msra.mxu0 0
      %1617 = vmatpush.bf16.msra.mxu0 0
      %1618 = vmatpush.bf16.msra.mxu0 0
      %1619 = vmatpush.bf16.msra.mxu0 0
      %1620 = vmatpush.bf16.msra.mxu0 0
      %1621 = vmatpush.bf16.msra.mxu0 0
      %1622 = vmatpush.bf16.msra.mxu0 0
      %1623 = vmatpush.bf16.msra.mxu0 %v1606
      %1624 = vmatmul.bf16.gmra.mxu0 %v1614
      %v1625 = vpop.f32.mrf.mxu0
      %v1626 = vadd.f32 0.0, %v1625
      %v1627 = vpop.f32.mrf.mxu0
      %v1628 = vadd.f32 0.0, %v1627
      %1629 = vdwg.mxu0
      %1630 = vmatpush.bf16.msra.mxu0 0
      %1631 = vmatpush.bf16.msra.mxu0 0
      %1632 = vmatpush.bf16.msra.mxu0 0
      %1633 = vmatpush.bf16.msra.mxu0 0
      %1634 = vmatpush.bf16.msra.mxu0 0
      %1635 = vmatpush.bf16.msra.mxu0 0
      %1636 = vmatpush.bf16.msra.mxu0 0
      %1637 = vmatpush.bf16.msra.mxu0 %v1607
      %1638 = vmatmul.bf16.gmra.mxu0 %v1614
      %v1639 = vpop.f32.mrf.mxu0
      %v1640 = vadd.f32 0.0, %v1639
      %v1641 = vpop.f32.mrf.mxu0
      %v1642 = vadd.f32 0.0, %v1641
      %1643 = vdwg.mxu0
      %v1644 = vadd.f32 %v1583, %v1626
      %v1645 = vadd.f32 %v1584, %v1640
      %v1646 = vadd.f32 %v1585, %v1628
      %v1647 = vadd.f32 %v1586, %v1642
      %s1648 = scalar_lea.vmem %s4, 48
      %v1649 = vld [vmem:[%s1648] sm:$0xf]
      %v1650 = vld [vmem:[%s1648 + $0x4] sm:$0xf]
      %1651 = vrot.lane.b32.xlu0 %v1140, 115
      %v1652 = vpop.permute.xlu0 %1651
      %1653 = vrot.lane.b32.xlu0 %v1142, 115
      %v1654 = vpop.permute.xlu0 %1653
      %1655 = vrot.lane.b32.xlu0 %v1141, 115
      %v1656 = vpop.permute.xlu0 %1655
      %1657 = vrot.lane.b32.xlu0 %v1143, 115
      %v1658 = vpop.permute.xlu0 %1657
      %v1659 = vsel %vm930, %v1652, %v1656
      %v1660 = vsel %vm930, %v1654, %v1658
      %v1661 = vsel %vm930, %v1656, %v1652
      %v1662 = vsel %vm930, %v1658, %v1654
      %v1663 = vmul.f32 %v1659, %v936
      %v1664 = vmul.f32 %v1661, %v937
      %v1665 = vmul.f32 %v1660, %v936
      %v1666 = vmul.f32 %v1662, %v937
      %v1667 = vpack.c.bf16 %v1665, %v1663
      %v1668 = vpack.c.bf16 %v1666, %v1664
      %v1671 = vunpack.c.l.b16 %v1649
      %v1672 = vunpack.c.l.b16 %v1650
      %v1673 = vpack.c.b16 %v1672, %v1671
      %v1675 = vsel %vm1348, %v1673, 0
      %1677 = vmatpush.bf16.msra.mxu0 0
      %1678 = vmatpush.bf16.msra.mxu0 0
      %1679 = vmatpush.bf16.msra.mxu0 0
      %1680 = vmatpush.bf16.msra.mxu0 0
      %1681 = vmatpush.bf16.msra.mxu0 0
      %1682 = vmatpush.bf16.msra.mxu0 0
      %1683 = vmatpush.bf16.msra.mxu0 0
      %1684 = vmatpush.bf16.msra.mxu0 %v1667
      %1685 = vmatmul.bf16.gmra.mxu0 %v1675
      %v1686 = vpop.f32.mrf.mxu0
      %v1687 = vadd.f32 0.0, %v1686
      %v1688 = vpop.f32.mrf.mxu0
      %v1689 = vadd.f32 0.0, %v1688
      %1690 = vdwg.mxu0
      %1691 = vmatpush.bf16.msra.mxu0 0
      %1692 = vmatpush.bf16.msra.mxu0 0
      %1693 = vmatpush.bf16.msra.mxu0 0
      %1694 = vmatpush.bf16.msra.mxu0 0
      %1695 = vmatpush.bf16.msra.mxu0 0
      %1696 = vmatpush.bf16.msra.mxu0 0
      %1697 = vmatpush.bf16.msra.mxu0 0
      %1698 = vmatpush.bf16.msra.mxu0 %v1668
      %1699 = vmatmul.bf16.gmra.mxu0 %v1675
      %v1700 = vpop.f32.mrf.mxu0
      %v1701 = vadd.f32 0.0, %v1700
      %v1702 = vpop.f32.mrf.mxu0
      %v1703 = vadd.f32 0.0, %v1702
      %1704 = vdwg.mxu0
      %v1705 = vadd.f32 %v1644, %v1687
      %v1706 = vadd.f32 %v1645, %v1701
      %v1707 = vadd.f32 %v1646, %v1689
      %v1708 = vadd.f32 %v1647, %v1703
      %s1709 = scalar_lea.vmem %s4, 56
      %v1710 = vld [vmem:[%s1709] sm:$0xf]
      %v1711 = vld [vmem:[%s1709 + $0x4] sm:$0xf]
      %1712 = vrot.lane.b32.xlu0 %v1140, 114
      %v1713 = vpop.permute.xlu0 %1712
      %1714 = vrot.lane.b32.xlu0 %v1142, 114
      %v1715 = vpop.permute.xlu0 %1714
      %1716 = vrot.lane.b32.xlu0 %v1141, 114
      %v1717 = vpop.permute.xlu0 %1716
      %1718 = vrot.lane.b32.xlu0 %v1143, 114
      %v1719 = vpop.permute.xlu0 %1718
      %v1720 = vsel %vm997, %v1713, %v1717
      %v1721 = vsel %vm997, %v1715, %v1719
      %v1722 = vsel %vm997, %v1717, %v1713
      %v1723 = vsel %vm997, %v1719, %v1715
      %v1724 = vmul.f32 %v1720, %v1003
      %v1725 = vmul.f32 %v1722, %v1004
      %v1726 = vmul.f32 %v1721, %v1003
      %v1727 = vmul.f32 %v1723, %v1004
      %v1728 = vpack.c.bf16 %v1726, %v1724
      %v1729 = vpack.c.bf16 %v1727, %v1725
      %v1732 = vunpack.c.l.b16 %v1710
      %v1733 = vunpack.c.l.b16 %v1711
      %v1734 = vpack.c.b16 %v1733, %v1732
      %v1736 = vsel %vm1348, %v1734, 0
      %1738 = vmatpush.bf16.msra.mxu0 0
      %1739 = vmatpush.bf16.msra.mxu0 0
      %1740 = vmatpush.bf16.msra.mxu0 0
      %1741 = vmatpush.bf16.msra.mxu0 0
      %1742 = vmatpush.bf16.msra.mxu0 0
      %1743 = vmatpush.bf16.msra.mxu0 0
      %1744 = vmatpush.bf16.msra.mxu0 0
      %1745 = vmatpush.bf16.msra.mxu0 %v1728
      %1746 = vmatmul.bf16.gmra.mxu0 %v1736
      %v1747 = vpop.f32.mrf.mxu0
      %v1748 = vadd.f32 0.0, %v1747
      %v1749 = vpop.f32.mrf.mxu0
      %v1750 = vadd.f32 0.0, %v1749
      %1751 = vdwg.mxu0
      %1752 = vmatpush.bf16.msra.mxu0 0
      %1753 = vmatpush.bf16.msra.mxu0 0
      %1754 = vmatpush.bf16.msra.mxu0 0
      %1755 = vmatpush.bf16.msra.mxu0 0
      %1756 = vmatpush.bf16.msra.mxu0 0
      %1757 = vmatpush.bf16.msra.mxu0 0
      %1758 = vmatpush.bf16.msra.mxu0 0
      %1759 = vmatpush.bf16.msra.mxu0 %v1729
      %1760 = vmatmul.bf16.gmra.mxu0 %v1736
      %v1761 = vpop.f32.mrf.mxu0
      %v1762 = vadd.f32 0.0, %v1761
      %v1763 = vpop.f32.mrf.mxu0
      %v1764 = vadd.f32 0.0, %v1763
      %1765 = vdwg.mxu0
      %v1766 = vadd.f32 %v1705, %v1748
      %v1767 = vadd.f32 %v1706, %v1762
      %v1768 = vadd.f32 %v1707, %v1750
      %v1769 = vadd.f32 %v1708, %v1764
      %s1770 = scalar_lea.vmem %s4, 64
      %v1771 = vld [vmem:[%s1770] sm:$0xf]
      %v1772 = vld [vmem:[%s1770 + $0x4] sm:$0xf]
      %1773 = vrot.lane.b32.xlu0 %v1140, 113
      %v1774 = vpop.permute.xlu0 %1773
      %1775 = vrot.lane.b32.xlu0 %v1142, 113
      %v1776 = vpop.permute.xlu0 %1775
      %1777 = vrot.lane.b32.xlu0 %v1141, 113
      %v1778 = vpop.permute.xlu0 %1777
      %1779 = vrot.lane.b32.xlu0 %v1143, 113
      %v1780 = vpop.permute.xlu0 %1779
      %v1781 = vsel %vm1064, %v1774, %v1778
      %v1782 = vsel %vm1064, %v1776, %v1780
      %v1783 = vsel %vm1064, %v1778, %v1774
      %v1784 = vsel %vm1064, %v1780, %v1776
      %v1785 = vmul.f32 %v1781, %v1070
      %v1786 = vmul.f32 %v1783, %v1071
      %v1787 = vmul.f32 %v1782, %v1070
      %v1788 = vmul.f32 %v1784, %v1071
      %v1789 = vpack.c.bf16 %v1787, %v1785
      %v1790 = vpack.c.bf16 %v1788, %v1786
      %v1793 = vunpack.c.l.b16 %v1771
      %v1794 = vunpack.c.l.b16 %v1772
      %v1795 = vpack.c.b16 %v1794, %v1793
      %v1797 = vsel %vm1348, %v1795, 0
      %1799 = vmatpush.bf16.msra.mxu0 0
      %1800 = vmatpush.bf16.msra.mxu0 0
      %1801 = vmatpush.bf16.msra.mxu0 0
      %1802 = vmatpush.bf16.msra.mxu0 0
      %1803 = vmatpush.bf16.msra.mxu0 0
      %1804 = vmatpush.bf16.msra.mxu0 0
      %1805 = vmatpush.bf16.msra.mxu0 0
      %1806 = vmatpush.bf16.msra.mxu0 %v1789
      %1807 = vmatmul.bf16.gmra.mxu0 %v1797
      %v1808 = vpop.f32.mrf.mxu0
      %v1809 = vadd.f32 0.0, %v1808
      %v1810 = vpop.f32.mrf.mxu0
      %v1811 = vadd.f32 0.0, %v1810
      %1812 = vdwg.mxu0
      %1813 = vmatpush.bf16.msra.mxu0 0
      %1814 = vmatpush.bf16.msra.mxu0 0
      %1815 = vmatpush.bf16.msra.mxu0 0
      %1816 = vmatpush.bf16.msra.mxu0 0
      %1817 = vmatpush.bf16.msra.mxu0 0
      %1818 = vmatpush.bf16.msra.mxu0 0
      %1819 = vmatpush.bf16.msra.mxu0 0
      %1820 = vmatpush.bf16.msra.mxu0 %v1790
      %1821 = vmatmul.bf16.gmra.mxu0 %v1797
      %v1822 = vpop.f32.mrf.mxu0
      %v1823 = vadd.f32 0.0, %v1822
      %v1824 = vpop.f32.mrf.mxu0
      %v1825 = vadd.f32 0.0, %v1824
      %1826 = vdwg.mxu0
      %v1827 = vadd.f32 %v1766, %v1809
      %v1828 = vadd.f32 %v1767, %v1823
      %v1829 = vadd.f32 %v1768, %v1811
      %v1830 = vadd.f32 %v1769, %v1825
      %v1831 = vld [vmem:[%s5] sm:$0xff]
      %v1832 = vld [vmem:[%s5 + $0x8] sm:$0xff]
      %1834 = vset.pattern.permute.xlu0 0
      %1835 = vperm.xlu0 %1834, %v1831
      %v1836 = vpop.permute.xlu0 %1835
      %1839 = vset.pattern.permute.xlu0 0
      %1840 = vperm.xlu0 %1839, %v1832
      %v1841 = vpop.permute.xlu0 %1840
      %v1843 = vadd.f32 %v1827, %v1836
      %v1844 = vadd.f32 %v1828, %v1836
      %v1845 = vadd.f32 %v1829, %v1841
      %v1846 = vadd.f32 %v1830, %v1841
      %v1847 = vmax.f32 %v1843, 0.0
      %v1848 = vmax.f32 %v1844, 0.0
      %v1849 = vmax.f32 %v1845, 0.0
      %v1850 = vmax.f32 %v1846, 0.0
      %v1851 = vld [vmem:[%s6] sm:$0xf]
      %v1852 = vld [vmem:[%s6 + $0x4] sm:$0xf]
      %v1853 = vpack.c.bf16 %v1849, %v1847
      %v1854 = vpack.c.bf16 %v1850, %v1848
      %v1855 = vld [vmem:[%s7] sm:$0xff]
      %v1856 = vld [vmem:[%s7 + $0x8] sm:$0x7f]
      %1858 = vset.pattern.permute.xlu0 0
      %1859 = vperm.xlu0 %1858, %v1855
      %v1860 = vpop.permute.xlu0 %1859
      %1863 = vset.pattern.permute.xlu0 0
      %1864 = vperm.xlu0 %1863, %v1856
      %v1865 = vpop.permute.xlu0 %1864
      %v1869 = vunpack.c.l.b16 %v1851
      %v1870 = vunpack.c.l.b16 %v1852
      %v1871 = vpack.c.b16 %v1870, %v1869
      %v1873 = vsel %vm1348, %v1871, 0
      %1875 = vmatpush.bf16.msra.mxu0 0
      %1876 = vmatpush.bf16.msra.mxu0 0
      %1877 = vmatpush.bf16.msra.mxu0 0
      %1878 = vmatpush.bf16.msra.mxu0 0
      %1879 = vmatpush.bf16.msra.mxu0 0
      %1880 = vmatpush.bf16.msra.mxu0 0
      %1881 = vmatpush.bf16.msra.mxu0 0
      %1882 = vmatpush.bf16.msra.mxu0 %v1853
      %1883 = vmatmul.bf16.gmra.mxu0 %v1873
      %v1884 = vpop.f32.mrf.mxu0
      %v1885 = vadd.f32 %v1860, %v1884
      %v1886 = vpop.f32.mrf.mxu0
      %v1887 = vadd.f32 %v1865, %v1886
      %1888 = vdwg.mxu0
      %1889 = vmatpush.bf16.msra.mxu0 0
      %1890 = vmatpush.bf16.msra.mxu0 0
      %1891 = vmatpush.bf16.msra.mxu0 0
      %1892 = vmatpush.bf16.msra.mxu0 0
      %1893 = vmatpush.bf16.msra.mxu0 0
      %1894 = vmatpush.bf16.msra.mxu0 0
      %1895 = vmatpush.bf16.msra.mxu0 0
      %1896 = vmatpush.bf16.msra.mxu0 %v1854
      %1897 = vmatmul.bf16.gmra.mxu0 %v1873
      %v1898 = vpop.f32.mrf.mxu0
      %v1899 = vadd.f32 %v1860, %v1898
      %v1900 = vpop.f32.mrf.mxu0
      %v1901 = vadd.f32 %v1865, %v1900
      %1902 = vdwg.mxu0
      %1903 = vst [vmem:[%s527] sm:$0xff] %v1885
      %1904 = vst [vmem:[%s527 + $0x8] sm:$0xff] %v1899
      %1905 = vst [vmem:[%s527 + $0x10] sm:$0x7f] %v1887
      %1906 = vst [vmem:[%s527 + $0x18] sm:$0x7f] %v1901
      %v1907 = vpack.c.bf16 %v1298, %v1298
      %v1908 = vld [vmem:[%s9] sm:$0xff]
      %v1909 = vld [vmem:[%s9 + $0x8] sm:$0xff]
      %v1910 = vld [vmem:[%s9 + $0x10] sm:$0xff]
      %v1911 = vld [vmem:[%s9 + $0x18] sm:$0xff]
      %v1912 = vld [vmem:[%s9 + $0x20] sm:$0xff]
      %v1913 = vld [vmem:[%s9 + $0x28] sm:$0xff]
      %v1914 = vld [vmem:[%s9 + $0x30] sm:$0xff]
      %v1915 = vld [vmem:[%s9 + $0x38] sm:$0xff]
      %v1916 = vld [vmem:[%s9 + $0x40] sm:$0xff]
      %v1917 = vld [vmem:[%s9 + $0x48] sm:$0xff]
      %v1918 = vld [vmem:[%s9 + $0x50] sm:$0xff]
      %v1919 = vld [vmem:[%s9 + $0x58] sm:$0xff]
      %v1920 = vld [vmem:[%s9 + $0x60] sm:$0xff]
      %v1921 = vld [vmem:[%s9 + $0x68] sm:$0xff]
      %v1922 = vld [vmem:[%s9 + $0x70] sm:$0xff]
      %v1923 = vld [vmem:[%s9 + $0x78] sm:$0xff]
      %v1924 = vld [vmem:[%s9 + $0x80] sm:$0xff]
      %v1925 = vld [vmem:[%s9 + $0x88] sm:$0xff]
      %v1926 = vld [vmem:[%s9 + $0x90] sm:$0xff]
      %v1927 = vld [vmem:[%s9 + $0x98] sm:$0xff]
      %v1928 = vld [vmem:[%s9 + $0xa0] sm:$0xff]
      %v1929 = vld [vmem:[%s9 + $0xa8] sm:$0xff]
      %v1930 = vld [vmem:[%s9 + $0xb0] sm:$0xff]
      %v1931 = vld [vmem:[%s9 + $0xb8] sm:$0xff]
      %v1932 = vld [vmem:[%s9 + $0xc0] sm:$0x11]
      %v1933 = vld [vmem:[%s9 + $0xc8] sm:$0x11]
      %v1934 = vld [vmem:[%s9 + $0xd0] sm:$0x11]
      %v1935 = vld [vmem:[%s9 + $0xd8] sm:$0x11]
      %s1936 = scalar_lea.vmem %s9, 224
      %v1937 = vld [vmem:[%s1936] sm:$0xff]
      %v1938 = vld [vmem:[%s1936 + $0x8] sm:$0xff]
      %v1939 = vld [vmem:[%s1936 + $0x10] sm:$0xff]
      %v1940 = vld [vmem:[%s1936 + $0x18] sm:$0xff]
      %v1941 = vld [vmem:[%s1936 + $0x20] sm:$0xff]
      %v1942 = vld [vmem:[%s1936 + $0x28] sm:$0xff]
      %v1943 = vld [vmem:[%s1936 + $0x30] sm:$0xff]
      %v1944 = vld [vmem:[%s1936 + $0x38] sm:$0xff]
      %v1945 = vld [vmem:[%s1936 + $0x40] sm:$0xff]
      %v1946 = vld [vmem:[%s1936 + $0x48] sm:$0xff]
      %v1947 = vld [vmem:[%s1936 + $0x50] sm:$0xff]
      %v1948 = vld [vmem:[%s1936 + $0x58] sm:$0xff]
      %v1949 = vld [vmem:[%s1936 + $0x60] sm:$0xff]
      %v1950 = vld [vmem:[%s1936 + $0x68] sm:$0xff]
      %v1951 = vld [vmem:[%s1936 + $0x70] sm:$0xff]
      %v1952 = vld [vmem:[%s1936 + $0x78] sm:$0xff]
      %v1953 = vld [vmem:[%s1936 + $0x80] sm:$0xff]
      %v1954 = vld [vmem:[%s1936 + $0x88] sm:$0xff]
      %v1955 = vld [vmem:[%s1936 + $0x90] sm:$0xff]
      %v1956 = vld [vmem:[%s1936 + $0x98] sm:$0xff]
      %v1957 = vld [vmem:[%s1936 + $0xa0] sm:$0xff]
      %v1958 = vld [vmem:[%s1936 + $0xa8] sm:$0xff]
      %v1959 = vld [vmem:[%s1936 + $0xb0] sm:$0xff]
      %v1960 = vld [vmem:[%s1936 + $0xb8] sm:$0xff]
      %v1961 = vld [vmem:[%s1936 + $0xc0] sm:$0x11]
      %v1962 = vld [vmem:[%s1936 + $0xc8] sm:$0x11]
      %v1963 = vld [vmem:[%s1936 + $0xd0] sm:$0x11]
      %v1964 = vld [vmem:[%s1936 + $0xd8] sm:$0x11]
      %v1966 = vshrl.u32 %v1907, 16
      %v1996 = vunpack.c.l.b16 %v1937
      %v1997 = vunpack.c.h.b16 %v1937
      %v1998 = vunpack.c.l.b16 %v1938
      %v1999 = vunpack.c.h.b16 %v1938
      %v2000 = vunpack.c.l.b16 %v1939
      %v2001 = vunpack.c.h.b16 %v1939
      %v2002 = vunpack.c.l.b16 %v1940
      %v2003 = vunpack.c.h.b16 %v1940
      %v2004 = vunpack.c.l.b16 %v1941
      %v2005 = vunpack.c.h.b16 %v1941
      %v2006 = vunpack.c.l.b16 %v1942
      %v2007 = vunpack.c.h.b16 %v1942
      %v2008 = vunpack.c.l.b16 %v1943
      %v2009 = vunpack.c.h.b16 %v1943
      %v2010 = vunpack.c.l.b16 %v1944
      %v2011 = vunpack.c.h.b16 %v1944
      %v2012 = vunpack.c.l.b16 %v1945
      %v2013 = vunpack.c.h.b16 %v1945
      %v2014 = vunpack.c.l.b16 %v1946
      %v2015 = vunpack.c.h.b16 %v1946
      %v2016 = vunpack.c.l.b16 %v1947
      %v2017 = vunpack.c.h.b16 %v1947
      %v2018 = vunpack.c.l.b16 %v1948
      %v2019 = vunpack.c.h.b16 %v1948
      %v2020 = vunpack.c.l.b16 %v1949
      %v2021 = vunpack.c.h.b16 %v1949
      %v2022 = vunpack.c.l.b16 %v1950
      %v2023 = vunpack.c.h.b16 %v1950
      %v2024 = vunpack.c.l.b16 %v1951
      %v2025 = vunpack.c.h.b16 %v1951
      %v2026 = vunpack.c.l.b16 %v1952
      %v2027 = vunpack.c.h.b16 %v1952
      %v2028 = vunpack.c.l.b16 %v1953
      %v2029 = vunpack.c.h.b16 %v1953
      %v2030 = vunpack.c.l.b16 %v1954
      %v2031 = vunpack.c.h.b16 %v1954
      %v2032 = vunpack.c.l.b16 %v1955
      %v2033 = vunpack.c.h.b16 %v1955
      %v2034 = vunpack.c.l.b16 %v1956
      %v2035 = vunpack.c.h.b16 %v1956
      %v2036 = vunpack.c.l.b16 %v1957
      %v2037 = vunpack.c.h.b16 %v1957
      %v2038 = vunpack.c.l.b16 %v1958
      %v2039 = vunpack.c.h.b16 %v1958
      %v2040 = vunpack.c.l.b16 %v1959
      %v2041 = vunpack.c.h.b16 %v1959
      %v2042 = vunpack.c.l.b16 %v1960
      %v2043 = vunpack.c.h.b16 %v1960
      %v2044 = vunpack.c.l.b16 %v1961
      %v2045 = vunpack.c.h.b16 %v1961
      %v2046 = vunpack.c.l.b16 %v1962
      %v2047 = vunpack.c.h.b16 %v1962
      %v2048 = vunpack.c.l.b16 %v1963
      %v2049 = vunpack.c.h.b16 %v1963
      %v2050 = vunpack.c.l.b16 %v1964
      %v2051 = vunpack.c.h.b16 %v1964
      %v2052 = vpack.c.b16 %v2004, %v1996
      %v2053 = vpack.c.b16 %v2005, %v1997
      %v2054 = vpack.c.b16 %v2006, %v1998
      %v2055 = vpack.c.b16 %v2007, %v1999
      %v2056 = vpack.c.b16 %v2008, %v2000
      %v2057 = vpack.c.b16 %v2009, %v2001
      %v2058 = vpack.c.b16 %v2010, %v2002
      %v2059 = vpack.c.b16 %v2011, %v2003
      %v2060 = vpack.c.b16 %v2020, %v2012
      %v2061 = vpack.c.b16 %v2021, %v2013
      %v2062 = vpack.c.b16 %v2022, %v2014
      %v2063 = vpack.c.b16 %v2023, %v2015
      %v2064 = vpack.c.b16 %v2024, %v2016
      %v2065 = vpack.c.b16 %v2025, %v2017
      %v2066 = vpack.c.b16 %v2026, %v2018
      %v2067 = vpack.c.b16 %v2027, %v2019
      %v2068 = vpack.c.b16 %v2036, %v2028
      %v2069 = vpack.c.b16 %v2037, %v2029
      %v2070 = vpack.c.b16 %v2038, %v2030
      %v2071 = vpack.c.b16 %v2039, %v2031
      %v2072 = vpack.c.b16 %v2040, %v2032
      %v2073 = vpack.c.b16 %v2041, %v2033
      %v2074 = vpack.c.b16 %v2042, %v2034
      %v2075 = vpack.c.b16 %v2043, %v2035
      %v2076 = vpack.c.b16 %v2044, %v2044
      %v2077 = vpack.c.b16 %v2045, %v2045
      %v2078 = vpack.c.b16 %v2046, %v2046
      %v2079 = vpack.c.b16 %v2047, %v2047
      %v2080 = vpack.c.b16 %v2048, %v2048
      %v2081 = vpack.c.b16 %v2049, %v2049
      %v2082 = vpack.c.b16 %v2050, %v2050
      %v2083 = vpack.c.b16 %v2051, %v2051
      %vm2108 = vcmask 400384
      %v2110 = vsel %vm2108, %v1966, 0
      %vm2112 = vcmask 1040384
      %v2113 = vsel 0, 4294967295, 65535
      %v2114 = vsel %vm2112, %v2113, 0
      %v2116 = vand.u32 %v2076, %v2114
      %v2119 = vand.u32 %v2077, %v2114
      %v2122 = vand.u32 %v2078, %v2114
      %v2125 = vand.u32 %v2079, %v2114
      %v2128 = vand.u32 %v2080, %v2114
      %v2131 = vand.u32 %v2081, %v2114
      %v2134 = vand.u32 %v2082, %v2114
      %v2137 = vand.u32 %v2083, %v2114
      %2139 = vmatpush.bf16.msra.mxu0 0
      %2140 = vmatpush.bf16.msra.mxu0 0
      %2141 = vmatpush.bf16.msra.mxu0 0
      %2142 = vmatpush.bf16.msra.mxu0 0
      %2143 = vmatpush.bf16.msra.mxu0 %v2116
      %2144 = vmatpush.bf16.msra.mxu0 %v2068
      %2145 = vmatpush.bf16.msra.mxu0 %v2060
      %2146 = vmatpush.bf16.msra.mxu0 %v2052
      %2147 = vmatmul.bf16.gmra.mxu0 %v2110
      %v2148 = vpop.f32.mrf.mxu0
      %v2149 = vadd.f32 0.0, %v2148
      %v2150 = vpop.f32.mrf.mxu0
      %2151 = vdwg.mxu0
      %2152 = vmatpush.bf16.msra.mxu0 0
      %2153 = vmatpush.bf16.msra.mxu0 0
      %2154 = vmatpush.bf16.msra.mxu0 0
      %2155 = vmatpush.bf16.msra.mxu0 0
      %2156 = vmatpush.bf16.msra.mxu0 %v2119
      %2157 = vmatpush.bf16.msra.mxu0 %v2069
      %2158 = vmatpush.bf16.msra.mxu0 %v2061
      %2159 = vmatpush.bf16.msra.mxu0 %v2053
      %2160 = vmatmul.bf16.gmra.mxu0 %v2110
      %v2161 = vpop.f32.mrf.mxu0
      %v2162 = vadd.f32 0.0, %v2161
      %v2163 = vpop.f32.mrf.mxu0
      %2164 = vdwg.mxu0
      %2165 = vmatpush.bf16.msra.mxu0 0
      %2166 = vmatpush.bf16.msra.mxu0 0
      %2167 = vmatpush.bf16.msra.mxu0 0
      %2168 = vmatpush.bf16.msra.mxu0 0
      %2169 = vmatpush.bf16.msra.mxu0 %v2122
      %2170 = vmatpush.bf16.msra.mxu0 %v2070
      %2171 = vmatpush.bf16.msra.mxu0 %v2062
      %2172 = vmatpush.bf16.msra.mxu0 %v2054
      %2173 = vmatmul.bf16.gmra.mxu0 %v2110
      %v2174 = vpop.f32.mrf.mxu0
      %v2175 = vadd.f32 0.0, %v2174
      %v2176 = vpop.f32.mrf.mxu0
      %2177 = vdwg.mxu0
      %2178 = vmatpush.bf16.msra.mxu0 0
      %2179 = vmatpush.bf16.msra.mxu0 0
      %2180 = vmatpush.bf16.msra.mxu0 0
      %2181 = vmatpush.bf16.msra.mxu0 0
      %2182 = vmatpush.bf16.msra.mxu0 %v2125
      %2183 = vmatpush.bf16.msra.mxu0 %v2071
      %2184 = vmatpush.bf16.msra.mxu0 %v2063
      %2185 = vmatpush.bf16.msra.mxu0 %v2055
      %2186 = vmatmul.bf16.gmra.mxu0 %v2110
      %v2187 = vpop.f32.mrf.mxu0
      %v2188 = vadd.f32 0.0, %v2187
      %v2189 = vpop.f32.mrf.mxu0
      %2190 = vdwg.mxu0
      %2191 = vmatpush.bf16.msra.mxu0 0
      %2192 = vmatpush.bf16.msra.mxu0 0
      %2193 = vmatpush.bf16.msra.mxu0 0
      %2194 = vmatpush.bf16.msra.mxu0 0
      %2195 = vmatpush.bf16.msra.mxu0 %v2128
      %2196 = vmatpush.bf16.msra.mxu0 %v2072
      %2197 = vmatpush.bf16.msra.mxu0 %v2064
      %2198 = vmatpush.bf16.msra.mxu0 %v2056
      %2199 = vmatmul.bf16.gmra.mxu0 %v2110
      %v2200 = vpop.f32.mrf.mxu0
      %v2201 = vadd.f32 0.0, %v2200
      %v2202 = vpop.f32.mrf.mxu0
      %2203 = vdwg.mxu0
      %2204 = vmatpush.bf16.msra.mxu0 0
      %2205 = vmatpush.bf16.msra.mxu0 0
      %2206 = vmatpush.bf16.msra.mxu0 0
      %2207 = vmatpush.bf16.msra.mxu0 0
      %2208 = vmatpush.bf16.msra.mxu0 %v2131
      %2209 = vmatpush.bf16.msra.mxu0 %v2073
      %2210 = vmatpush.bf16.msra.mxu0 %v2065
      %2211 = vmatpush.bf16.msra.mxu0 %v2057
      %2212 = vmatmul.bf16.gmra.mxu0 %v2110
      %v2213 = vpop.f32.mrf.mxu0
      %v2214 = vadd.f32 0.0, %v2213
      %v2215 = vpop.f32.mrf.mxu0
      %2216 = vdwg.mxu0
      %2217 = vmatpush.bf16.msra.mxu0 0
      %2218 = vmatpush.bf16.msra.mxu0 0
      %2219 = vmatpush.bf16.msra.mxu0 0
      %2220 = vmatpush.bf16.msra.mxu0 0
      %2221 = vmatpush.bf16.msra.mxu0 %v2134
      %2222 = vmatpush.bf16.msra.mxu0 %v2074
      %2223 = vmatpush.bf16.msra.mxu0 %v2066
      %2224 = vmatpush.bf16.msra.mxu0 %v2058
      %2225 = vmatmul.bf16.gmra.mxu0 %v2110
      %v2226 = vpop.f32.mrf.mxu0
      %v2227 = vadd.f32 0.0, %v2226
      %v2228 = vpop.f32.mrf.mxu0
      %2229 = vdwg.mxu0
      %2230 = vmatpush.bf16.msra.mxu0 0
      %2231 = vmatpush.bf16.msra.mxu0 0
      %2232 = vmatpush.bf16.msra.mxu0 0
      %2233 = vmatpush.bf16.msra.mxu0 0
      %2234 = vmatpush.bf16.msra.mxu0 %v2137
      %2235 = vmatpush.bf16.msra.mxu0 %v2075
      %2236 = vmatpush.bf16.msra.mxu0 %v2067
      %2237 = vmatpush.bf16.msra.mxu0 %v2059
      %2238 = vmatmul.bf16.gmra.mxu0 %v2110
      %v2239 = vpop.f32.mrf.mxu0
      %v2240 = vadd.f32 0.0, %v2239
      %v2241 = vpop.f32.mrf.mxu0
      %2242 = vdwg.mxu0
      %v2271 = vunpack.c.l.b16 %v1908
      %v2272 = vunpack.c.h.b16 %v1908
      %v2273 = vunpack.c.l.b16 %v1909
      %v2274 = vunpack.c.h.b16 %v1909
      %v2275 = vunpack.c.l.b16 %v1910
      %v2276 = vunpack.c.h.b16 %v1910
      %v2277 = vunpack.c.l.b16 %v1911
      %v2278 = vunpack.c.h.b16 %v1911
      %v2279 = vunpack.c.l.b16 %v1912
      %v2280 = vunpack.c.h.b16 %v1912
      %v2281 = vunpack.c.l.b16 %v1913
      %v2282 = vunpack.c.h.b16 %v1913
      %v2283 = vunpack.c.l.b16 %v1914
      %v2284 = vunpack.c.h.b16 %v1914
      %v2285 = vunpack.c.l.b16 %v1915
      %v2286 = vunpack.c.h.b16 %v1915
      %v2287 = vunpack.c.l.b16 %v1916
      %v2288 = vunpack.c.h.b16 %v1916
      %v2289 = vunpack.c.l.b16 %v1917
      %v2290 = vunpack.c.h.b16 %v1917
      %v2291 = vunpack.c.l.b16 %v1918
      %v2292 = vunpack.c.h.b16 %v1918
      %v2293 = vunpack.c.l.b16 %v1919
      %v2294 = vunpack.c.h.b16 %v1919
      %v2295 = vunpack.c.l.b16 %v1920
      %v2296 = vunpack.c.h.b16 %v1920
      %v2297 = vunpack.c.l.b16 %v1921
      %v2298 = vunpack.c.h.b16 %v1921
      %v2299 = vunpack.c.l.b16 %v1922
      %v2300 = vunpack.c.h.b16 %v1922
      %v2301 = vunpack.c.l.b16 %v1923
      %v2302 = vunpack.c.h.b16 %v1923
      %v2303 = vunpack.c.l.b16 %v1924
      %v2304 = vunpack.c.h.b16 %v1924
      %v2305 = vunpack.c.l.b16 %v1925
      %v2306 = vunpack.c.h.b16 %v1925
      %v2307 = vunpack.c.l.b16 %v1926
      %v2308 = vunpack.c.h.b16 %v1926
      %v2309 = vunpack.c.l.b16 %v1927
      %v2310 = vunpack.c.h.b16 %v1927
      %v2311 = vunpack.c.l.b16 %v1928
      %v2312 = vunpack.c.h.b16 %v1928
      %v2313 = vunpack.c.l.b16 %v1929
      %v2314 = vunpack.c.h.b16 %v1929
      %v2315 = vunpack.c.l.b16 %v1930
      %v2316 = vunpack.c.h.b16 %v1930
      %v2317 = vunpack.c.l.b16 %v1931
      %v2318 = vunpack.c.h.b16 %v1931
      %v2319 = vunpack.c.l.b16 %v1932
      %v2320 = vunpack.c.h.b16 %v1932
      %v2321 = vunpack.c.l.b16 %v1933
      %v2322 = vunpack.c.h.b16 %v1933
      %v2323 = vunpack.c.l.b16 %v1934
      %v2324 = vunpack.c.h.b16 %v1934
      %v2325 = vunpack.c.l.b16 %v1935
      %v2326 = vunpack.c.h.b16 %v1935
      %v2327 = vpack.c.b16 %v2279, %v2271
      %v2328 = vpack.c.b16 %v2280, %v2272
      %v2329 = vpack.c.b16 %v2281, %v2273
      %v2330 = vpack.c.b16 %v2282, %v2274
      %v2331 = vpack.c.b16 %v2283, %v2275
      %v2332 = vpack.c.b16 %v2284, %v2276
      %v2333 = vpack.c.b16 %v2285, %v2277
      %v2334 = vpack.c.b16 %v2286, %v2278
      %v2335 = vpack.c.b16 %v2295, %v2287
      %v2336 = vpack.c.b16 %v2296, %v2288
      %v2337 = vpack.c.b16 %v2297, %v2289
      %v2338 = vpack.c.b16 %v2298, %v2290
      %v2339 = vpack.c.b16 %v2299, %v2291
      %v2340 = vpack.c.b16 %v2300, %v2292
      %v2341 = vpack.c.b16 %v2301, %v2293
      %v2342 = vpack.c.b16 %v2302, %v2294
      %v2343 = vpack.c.b16 %v2311, %v2303
      %v2344 = vpack.c.b16 %v2312, %v2304
      %v2345 = vpack.c.b16 %v2313, %v2305
      %v2346 = vpack.c.b16 %v2314, %v2306
      %v2347 = vpack.c.b16 %v2315, %v2307
      %v2348 = vpack.c.b16 %v2316, %v2308
      %v2349 = vpack.c.b16 %v2317, %v2309
      %v2350 = vpack.c.b16 %v2318, %v2310
      %v2351 = vpack.c.b16 %v2319, %v2319
      %v2352 = vpack.c.b16 %v2320, %v2320
      %v2353 = vpack.c.b16 %v2321, %v2321
      %v2354 = vpack.c.b16 %v2322, %v2322
      %v2355 = vpack.c.b16 %v2323, %v2323
      %v2356 = vpack.c.b16 %v2324, %v2324
      %v2357 = vpack.c.b16 %v2325, %v2325
      %v2358 = vpack.c.b16 %v2326, %v2326
      %v2383 = vsel %vm2108, %v1907, 0
      %v2386 = vand.u32 %v2351, %v2114
      %v2389 = vand.u32 %v2352, %v2114
      %v2392 = vand.u32 %v2353, %v2114
      %v2395 = vand.u32 %v2354, %v2114
      %v2398 = vand.u32 %v2355, %v2114
      %v2401 = vand.u32 %v2356, %v2114
      %v2404 = vand.u32 %v2357, %v2114
      %v2407 = vand.u32 %v2358, %v2114
      %2409 = vmatpush.bf16.msra.mxu0 0
      %2410 = vmatpush.bf16.msra.mxu0 0
      %2411 = vmatpush.bf16.msra.mxu0 0
      %2412 = vmatpush.bf16.msra.mxu0 0
      %2413 = vmatpush.bf16.msra.mxu0 %v2386
      %2414 = vmatpush.bf16.msra.mxu0 %v2343
      %2415 = vmatpush.bf16.msra.mxu0 %v2335
      %2416 = vmatpush.bf16.msra.mxu0 %v2327
      %2417 = vmatmul.bf16.gmra.mxu0 %v2383
      %v2418 = vpop.f32.mrf.mxu0
      %v2419 = vadd.f32 %v2149, %v2418
      %v2420 = vpop.f32.mrf.mxu0
      %2421 = vdwg.mxu0
      %2422 = vmatpush.bf16.msra.mxu0 0
      %2423 = vmatpush.bf16.msra.mxu0 0
      %2424 = vmatpush.bf16.msra.mxu0 0
      %2425 = vmatpush.bf16.msra.mxu0 0
      %2426 = vmatpush.bf16.msra.mxu0 %v2389
      %2427 = vmatpush.bf16.msra.mxu0 %v2344
      %2428 = vmatpush.bf16.msra.mxu0 %v2336
      %2429 = vmatpush.bf16.msra.mxu0 %v2328
      %2430 = vmatmul.bf16.gmra.mxu0 %v2383
      %v2431 = vpop.f32.mrf.mxu0
      %v2432 = vadd.f32 %v2162, %v2431
      %v2433 = vpop.f32.mrf.mxu0
      %2434 = vdwg.mxu0
      %2435 = vmatpush.bf16.msra.mxu0 0
      %2436 = vmatpush.bf16.msra.mxu0 0
      %2437 = vmatpush.bf16.msra.mxu0 0
      %2438 = vmatpush.bf16.msra.mxu0 0
      %2439 = vmatpush.bf16.msra.mxu0 %v2392
      %2440 = vmatpush.bf16.msra.mxu0 %v2345
      %2441 = vmatpush.bf16.msra.mxu0 %v2337
      %2442 = vmatpush.bf16.msra.mxu0 %v2329
      %2443 = vmatmul.bf16.gmra.mxu0 %v2383
      %v2444 = vpop.f32.mrf.mxu0
      %v2445 = vadd.f32 %v2175, %v2444
      %v2446 = vpop.f32.mrf.mxu0
      %2447 = vdwg.mxu0
      %2448 = vmatpush.bf16.msra.mxu0 0
      %2449 = vmatpush.bf16.msra.mxu0 0
      %2450 = vmatpush.bf16.msra.mxu0 0
      %2451 = vmatpush.bf16.msra.mxu0 0
      %2452 = vmatpush.bf16.msra.mxu0 %v2395
      %2453 = vmatpush.bf16.msra.mxu0 %v2346
      %2454 = vmatpush.bf16.msra.mxu0 %v2338
      %2455 = vmatpush.bf16.msra.mxu0 %v2330
      %2456 = vmatmul.bf16.gmra.mxu0 %v2383
      %v2457 = vpop.f32.mrf.mxu0
      %v2458 = vadd.f32 %v2188, %v2457
      %v2459 = vpop.f32.mrf.mxu0
      %2460 = vdwg.mxu0
      %2461 = vmatpush.bf16.msra.mxu0 0
      %2462 = vmatpush.bf16.msra.mxu0 0
      %2463 = vmatpush.bf16.msra.mxu0 0
      %2464 = vmatpush.bf16.msra.mxu0 0
      %2465 = vmatpush.bf16.msra.mxu0 %v2398
      %2466 = vmatpush.bf16.msra.mxu0 %v2347
      %2467 = vmatpush.bf16.msra.mxu0 %v2339
      %2468 = vmatpush.bf16.msra.mxu0 %v2331
      %2469 = vmatmul.bf16.gmra.mxu0 %v2383
      %v2470 = vpop.f32.mrf.mxu0
      %v2471 = vadd.f32 %v2201, %v2470
      %v2472 = vpop.f32.mrf.mxu0
      %2473 = vdwg.mxu0
      %2474 = vmatpush.bf16.msra.mxu0 0
      %2475 = vmatpush.bf16.msra.mxu0 0
      %2476 = vmatpush.bf16.msra.mxu0 0
      %2477 = vmatpush.bf16.msra.mxu0 0
      %2478 = vmatpush.bf16.msra.mxu0 %v2401
      %2479 = vmatpush.bf16.msra.mxu0 %v2348
      %2480 = vmatpush.bf16.msra.mxu0 %v2340
      %2481 = vmatpush.bf16.msra.mxu0 %v2332
      %2482 = vmatmul.bf16.gmra.mxu0 %v2383
      %v2483 = vpop.f32.mrf.mxu0
      %v2484 = vadd.f32 %v2214, %v2483
      %v2485 = vpop.f32.mrf.mxu0
      %2486 = vdwg.mxu0
      %2487 = vmatpush.bf16.msra.mxu0 0
      %2488 = vmatpush.bf16.msra.mxu0 0
      %2489 = vmatpush.bf16.msra.mxu0 0
      %2490 = vmatpush.bf16.msra.mxu0 0
      %2491 = vmatpush.bf16.msra.mxu0 %v2404
      %2492 = vmatpush.bf16.msra.mxu0 %v2349
      %2493 = vmatpush.bf16.msra.mxu0 %v2341
      %2494 = vmatpush.bf16.msra.mxu0 %v2333
      %2495 = vmatmul.bf16.gmra.mxu0 %v2383
      %v2496 = vpop.f32.mrf.mxu0
      %v2497 = vadd.f32 %v2227, %v2496
      %v2498 = vpop.f32.mrf.mxu0
      %2499 = vdwg.mxu0
      %2500 = vmatpush.bf16.msra.mxu0 0
      %2501 = vmatpush.bf16.msra.mxu0 0
      %2502 = vmatpush.bf16.msra.mxu0 0
      %2503 = vmatpush.bf16.msra.mxu0 0
      %2504 = vmatpush.bf16.msra.mxu0 %v2407
      %2505 = vmatpush.bf16.msra.mxu0 %v2350
      %2506 = vmatpush.bf16.msra.mxu0 %v2342
      %2507 = vmatpush.bf16.msra.mxu0 %v2334
      %2508 = vmatmul.bf16.gmra.mxu0 %v2383
      %v2509 = vpop.f32.mrf.mxu0
      %v2510 = vadd.f32 %v2240, %v2509
      %v2511 = vpop.f32.mrf.mxu0
      %2512 = vdwg.mxu0
      %s2513 = scalar_lea.vmem %s9, 448
      %v2514 = vld [vmem:[%s2513] sm:$0xff]
      %v2515 = vld [vmem:[%s2513 + $0x8] sm:$0xff]
      %v2516 = vld [vmem:[%s2513 + $0x10] sm:$0xff]
      %v2517 = vld [vmem:[%s2513 + $0x18] sm:$0xff]
      %v2518 = vld [vmem:[%s2513 + $0x20] sm:$0xff]
      %v2519 = vld [vmem:[%s2513 + $0x28] sm:$0xff]
      %v2520 = vld [vmem:[%s2513 + $0x30] sm:$0xff]
      %v2521 = vld [vmem:[%s2513 + $0x38] sm:$0xff]
      %v2522 = vld [vmem:[%s2513 + $0x40] sm:$0xff]
      %v2523 = vld [vmem:[%s2513 + $0x48] sm:$0xff]
      %v2524 = vld [vmem:[%s2513 + $0x50] sm:$0xff]
      %v2525 = vld [vmem:[%s2513 + $0x58] sm:$0xff]
      %v2526 = vld [vmem:[%s2513 + $0x60] sm:$0xff]
      %v2527 = vld [vmem:[%s2513 + $0x68] sm:$0xff]
      %v2528 = vld [vmem:[%s2513 + $0x70] sm:$0xff]
      %v2529 = vld [vmem:[%s2513 + $0x78] sm:$0xff]
      %v2530 = vld [vmem:[%s2513 + $0x80] sm:$0xff]
      %v2531 = vld [vmem:[%s2513 + $0x88] sm:$0xff]
      %v2532 = vld [vmem:[%s2513 + $0x90] sm:$0xff]
      %v2533 = vld [vmem:[%s2513 + $0x98] sm:$0xff]
      %v2534 = vld [vmem:[%s2513 + $0xa0] sm:$0xff]
      %v2535 = vld [vmem:[%s2513 + $0xa8] sm:$0xff]
      %v2536 = vld [vmem:[%s2513 + $0xb0] sm:$0xff]
      %v2537 = vld [vmem:[%s2513 + $0xb8] sm:$0xff]
      %v2538 = vld [vmem:[%s2513 + $0xc0] sm:$0x11]
      %v2539 = vld [vmem:[%s2513 + $0xc8] sm:$0x11]
      %v2540 = vld [vmem:[%s2513 + $0xd0] sm:$0x11]
      %v2541 = vld [vmem:[%s2513 + $0xd8] sm:$0x11]
      %v2543 = vrot.slane %v1907, 1
      %v2572 = vunpack.c.l.b16 %v2514
      %v2573 = vunpack.c.h.b16 %v2514
      %v2574 = vunpack.c.l.b16 %v2515
      %v2575 = vunpack.c.h.b16 %v2515
      %v2576 = vunpack.c.l.b16 %v2516
      %v2577 = vunpack.c.h.b16 %v2516
      %v2578 = vunpack.c.l.b16 %v2517
      %v2579 = vunpack.c.h.b16 %v2517
      %v2580 = vunpack.c.l.b16 %v2518
      %v2581 = vunpack.c.h.b16 %v2518
      %v2582 = vunpack.c.l.b16 %v2519
      %v2583 = vunpack.c.h.b16 %v2519
      %v2584 = vunpack.c.l.b16 %v2520
      %v2585 = vunpack.c.h.b16 %v2520
      %v2586 = vunpack.c.l.b16 %v2521
      %v2587 = vunpack.c.h.b16 %v2521
      %v2588 = vunpack.c.l.b16 %v2522
      %v2589 = vunpack.c.h.b16 %v2522
      %v2590 = vunpack.c.l.b16 %v2523
      %v2591 = vunpack.c.h.b16 %v2523
      %v2592 = vunpack.c.l.b16 %v2524
      %v2593 = vunpack.c.h.b16 %v2524
      %v2594 = vunpack.c.l.b16 %v2525
      %v2595 = vunpack.c.h.b16 %v2525
      %v2596 = vunpack.c.l.b16 %v2526
      %v2597 = vunpack.c.h.b16 %v2526
      %v2598 = vunpack.c.l.b16 %v2527
      %v2599 = vunpack.c.h.b16 %v2527
      %v2600 = vunpack.c.l.b16 %v2528
      %v2601 = vunpack.c.h.b16 %v2528
      %v2602 = vunpack.c.l.b16 %v2529
      %v2603 = vunpack.c.h.b16 %v2529
      %v2604 = vunpack.c.l.b16 %v2530
      %v2605 = vunpack.c.h.b16 %v2530
      %v2606 = vunpack.c.l.b16 %v2531
      %v2607 = vunpack.c.h.b16 %v2531
      %v2608 = vunpack.c.l.b16 %v2532
      %v2609 = vunpack.c.h.b16 %v2532
      %v2610 = vunpack.c.l.b16 %v2533
      %v2611 = vunpack.c.h.b16 %v2533
      %v2612 = vunpack.c.l.b16 %v2534
      %v2613 = vunpack.c.h.b16 %v2534
      %v2614 = vunpack.c.l.b16 %v2535
      %v2615 = vunpack.c.h.b16 %v2535
      %v2616 = vunpack.c.l.b16 %v2536
      %v2617 = vunpack.c.h.b16 %v2536
      %v2618 = vunpack.c.l.b16 %v2537
      %v2619 = vunpack.c.h.b16 %v2537
      %v2620 = vunpack.c.l.b16 %v2538
      %v2621 = vunpack.c.h.b16 %v2538
      %v2622 = vunpack.c.l.b16 %v2539
      %v2623 = vunpack.c.h.b16 %v2539
      %v2624 = vunpack.c.l.b16 %v2540
      %v2625 = vunpack.c.h.b16 %v2540
      %v2626 = vunpack.c.l.b16 %v2541
      %v2627 = vunpack.c.h.b16 %v2541
      %v2628 = vpack.c.b16 %v2580, %v2572
      %v2629 = vpack.c.b16 %v2581, %v2573
      %v2630 = vpack.c.b16 %v2582, %v2574
      %v2631 = vpack.c.b16 %v2583, %v2575
      %v2632 = vpack.c.b16 %v2584, %v2576
      %v2633 = vpack.c.b16 %v2585, %v2577
      %v2634 = vpack.c.b16 %v2586, %v2578
      %v2635 = vpack.c.b16 %v2587, %v2579
      %v2636 = vpack.c.b16 %v2596, %v2588
      %v2637 = vpack.c.b16 %v2597, %v2589
      %v2638 = vpack.c.b16 %v2598, %v2590
      %v2639 = vpack.c.b16 %v2599, %v2591
      %v2640 = vpack.c.b16 %v2600, %v2592
      %v2641 = vpack.c.b16 %v2601, %v2593
      %v2642 = vpack.c.b16 %v2602, %v2594
      %v2643 = vpack.c.b16 %v2603, %v2595
      %v2644 = vpack.c.b16 %v2612, %v2604
      %v2645 = vpack.c.b16 %v2613, %v2605
      %v2646 = vpack.c.b16 %v2614, %v2606
      %v2647 = vpack.c.b16 %v2615, %v2607
      %v2648 = vpack.c.b16 %v2616, %v2608
      %v2649 = vpack.c.b16 %v2617, %v2609
      %v2650 = vpack.c.b16 %v2618, %v2610
      %v2651 = vpack.c.b16 %v2619, %v2611
      %v2652 = vpack.c.b16 %v2620, %v2620
      %v2653 = vpack.c.b16 %v2621, %v2621
      %v2654 = vpack.c.b16 %v2622, %v2622
      %v2655 = vpack.c.b16 %v2623, %v2623
      %v2656 = vpack.c.b16 %v2624, %v2624
      %v2657 = vpack.c.b16 %v2625, %v2625
      %v2658 = vpack.c.b16 %v2626, %v2626
      %v2659 = vpack.c.b16 %v2627, %v2627
      %v2685 = vsel %vm2108, %v2543, 0
      %v2688 = vand.u32 %v2652, %v2114
      %v2691 = vand.u32 %v2653, %v2114
      %v2694 = vand.u32 %v2654, %v2114
      %v2697 = vand.u32 %v2655, %v2114
      %v2700 = vand.u32 %v2656, %v2114
      %v2703 = vand.u32 %v2657, %v2114
      %v2706 = vand.u32 %v2658, %v2114
      %v2709 = vand.u32 %v2659, %v2114
      %2711 = vmatpush.bf16.msra.mxu0 0
      %2712 = vmatpush.bf16.msra.mxu0 0
      %2713 = vmatpush.bf16.msra.mxu0 0
      %2714 = vmatpush.bf16.msra.mxu0 0
      %2715 = vmatpush.bf16.msra.mxu0 %v2688
      %2716 = vmatpush.bf16.msra.mxu0 %v2644
      %2717 = vmatpush.bf16.msra.mxu0 %v2636
      %2718 = vmatpush.bf16.msra.mxu0 %v2628
      %2719 = vmatmul.bf16.gmra.mxu0 %v2685
      %v2720 = vpop.f32.mrf.mxu0
      %v2721 = vadd.f32 0.0, %v2720
      %v2722 = vpop.f32.mrf.mxu0
      %2723 = vdwg.mxu0
      %2724 = vmatpush.bf16.msra.mxu0 0
      %2725 = vmatpush.bf16.msra.mxu0 0
      %2726 = vmatpush.bf16.msra.mxu0 0
      %2727 = vmatpush.bf16.msra.mxu0 0
      %2728 = vmatpush.bf16.msra.mxu0 %v2691
      %2729 = vmatpush.bf16.msra.mxu0 %v2645
      %2730 = vmatpush.bf16.msra.mxu0 %v2637
      %2731 = vmatpush.bf16.msra.mxu0 %v2629
      %2732 = vmatmul.bf16.gmra.mxu0 %v2685
      %v2733 = vpop.f32.mrf.mxu0
      %v2734 = vadd.f32 0.0, %v2733
      %v2735 = vpop.f32.mrf.mxu0
      %2736 = vdwg.mxu0
      %2737 = vmatpush.bf16.msra.mxu0 0
      %2738 = vmatpush.bf16.msra.mxu0 0
      %2739 = vmatpush.bf16.msra.mxu0 0
      %2740 = vmatpush.bf16.msra.mxu0 0
      %2741 = vmatpush.bf16.msra.mxu0 %v2694
      %2742 = vmatpush.bf16.msra.mxu0 %v2646
      %2743 = vmatpush.bf16.msra.mxu0 %v2638
      %2744 = vmatpush.bf16.msra.mxu0 %v2630
      %2745 = vmatmul.bf16.gmra.mxu0 %v2685
      %v2746 = vpop.f32.mrf.mxu0
      %v2747 = vadd.f32 0.0, %v2746
      %v2748 = vpop.f32.mrf.mxu0
      %2749 = vdwg.mxu0
      %2750 = vmatpush.bf16.msra.mxu0 0
      %2751 = vmatpush.bf16.msra.mxu0 0
      %2752 = vmatpush.bf16.msra.mxu0 0
      %2753 = vmatpush.bf16.msra.mxu0 0
      %2754 = vmatpush.bf16.msra.mxu0 %v2697
      %2755 = vmatpush.bf16.msra.mxu0 %v2647
      %2756 = vmatpush.bf16.msra.mxu0 %v2639
      %2757 = vmatpush.bf16.msra.mxu0 %v2631
      %2758 = vmatmul.bf16.gmra.mxu0 %v2685
      %v2759 = vpop.f32.mrf.mxu0
      %v2760 = vadd.f32 0.0, %v2759
      %v2761 = vpop.f32.mrf.mxu0
      %2762 = vdwg.mxu0
      %2763 = vmatpush.bf16.msra.mxu0 0
      %2764 = vmatpush.bf16.msra.mxu0 0
      %2765 = vmatpush.bf16.msra.mxu0 0
      %2766 = vmatpush.bf16.msra.mxu0 0
      %2767 = vmatpush.bf16.msra.mxu0 %v2700
      %2768 = vmatpush.bf16.msra.mxu0 %v2648
      %2769 = vmatpush.bf16.msra.mxu0 %v2640
      %2770 = vmatpush.bf16.msra.mxu0 %v2632
      %2771 = vmatmul.bf16.gmra.mxu0 %v2685
      %v2772 = vpop.f32.mrf.mxu0
      %v2773 = vadd.f32 0.0, %v2772
      %v2774 = vpop.f32.mrf.mxu0
      %2775 = vdwg.mxu0
      %2776 = vmatpush.bf16.msra.mxu0 0
      %2777 = vmatpush.bf16.msra.mxu0 0
      %2778 = vmatpush.bf16.msra.mxu0 0
      %2779 = vmatpush.bf16.msra.mxu0 0
      %2780 = vmatpush.bf16.msra.mxu0 %v2703
      %2781 = vmatpush.bf16.msra.mxu0 %v2649
      %2782 = vmatpush.bf16.msra.mxu0 %v2641
      %2783 = vmatpush.bf16.msra.mxu0 %v2633
      %2784 = vmatmul.bf16.gmra.mxu0 %v2685
      %v2785 = vpop.f32.mrf.mxu0
      %v2786 = vadd.f32 0.0, %v2785
      %v2787 = vpop.f32.mrf.mxu0
      %2788 = vdwg.mxu0
      %2789 = vmatpush.bf16.msra.mxu0 0
      %2790 = vmatpush.bf16.msra.mxu0 0
      %2791 = vmatpush.bf16.msra.mxu0 0
      %2792 = vmatpush.bf16.msra.mxu0 0
      %2793 = vmatpush.bf16.msra.mxu0 %v2706
      %2794 = vmatpush.bf16.msra.mxu0 %v2650
      %2795 = vmatpush.bf16.msra.mxu0 %v2642
      %2796 = vmatpush.bf16.msra.mxu0 %v2634
      %2797 = vmatmul.bf16.gmra.mxu0 %v2685
      %v2798 = vpop.f32.mrf.mxu0
      %v2799 = vadd.f32 0.0, %v2798
      %v2800 = vpop.f32.mrf.mxu0
      %2801 = vdwg.mxu0
      %2802 = vmatpush.bf16.msra.mxu0 0
      %2803 = vmatpush.bf16.msra.mxu0 0
      %2804 = vmatpush.bf16.msra.mxu0 0
      %2805 = vmatpush.bf16.msra.mxu0 0
      %2806 = vmatpush.bf16.msra.mxu0 %v2709
      %2807 = vmatpush.bf16.msra.mxu0 %v2651
      %2808 = vmatpush.bf16.msra.mxu0 %v2643
      %2809 = vmatpush.bf16.msra.mxu0 %v2635
      %2810 = vmatmul.bf16.gmra.mxu0 %v2685
      %v2811 = vpop.f32.mrf.mxu0
      %v2812 = vadd.f32 0.0, %v2811
      %v2813 = vpop.f32.mrf.mxu0
      %2814 = vdwg.mxu0
      %v2815 = vadd.f32 %v2419, %v2721
      %v2816 = vadd.f32 %v2432, %v2734
      %v2817 = vadd.f32 %v2445, %v2747
      %v2818 = vadd.f32 %v2458, %v2760
      %v2819 = vadd.f32 %v2471, %v2773
      %v2820 = vadd.f32 %v2484, %v2786
      %v2821 = vadd.f32 %v2497, %v2799
      %v2822 = vadd.f32 %v2510, %v2812
      %s2823 = scalar_lea.vmem %s9, 672
      %v2824 = vld [vmem:[%s2823] sm:$0xff]
      %v2825 = vld [vmem:[%s2823 + $0x8] sm:$0xff]
      %v2826 = vld [vmem:[%s2823 + $0x10] sm:$0xff]
      %v2827 = vld [vmem:[%s2823 + $0x18] sm:$0xff]
      %v2828 = vld [vmem:[%s2823 + $0x20] sm:$0xff]
      %v2829 = vld [vmem:[%s2823 + $0x28] sm:$0xff]
      %v2830 = vld [vmem:[%s2823 + $0x30] sm:$0xff]
      %v2831 = vld [vmem:[%s2823 + $0x38] sm:$0xff]
      %v2832 = vld [vmem:[%s2823 + $0x40] sm:$0xff]
      %v2833 = vld [vmem:[%s2823 + $0x48] sm:$0xff]
      %v2834 = vld [vmem:[%s2823 + $0x50] sm:$0xff]
      %v2835 = vld [vmem:[%s2823 + $0x58] sm:$0xff]
      %v2836 = vld [vmem:[%s2823 + $0x60] sm:$0xff]
      %v2837 = vld [vmem:[%s2823 + $0x68] sm:$0xff]
      %v2838 = vld [vmem:[%s2823 + $0x70] sm:$0xff]
      %v2839 = vld [vmem:[%s2823 + $0x78] sm:$0xff]
      %v2840 = vld [vmem:[%s2823 + $0x80] sm:$0xff]
      %v2841 = vld [vmem:[%s2823 + $0x88] sm:$0xff]
      %v2842 = vld [vmem:[%s2823 + $0x90] sm:$0xff]
      %v2843 = vld [vmem:[%s2823 + $0x98] sm:$0xff]
      %v2844 = vld [vmem:[%s2823 + $0xa0] sm:$0xff]
      %v2845 = vld [vmem:[%s2823 + $0xa8] sm:$0xff]
      %v2846 = vld [vmem:[%s2823 + $0xb0] sm:$0xff]
      %v2847 = vld [vmem:[%s2823 + $0xb8] sm:$0xff]
      %v2848 = vld [vmem:[%s2823 + $0xc0] sm:$0x11]
      %v2849 = vld [vmem:[%s2823 + $0xc8] sm:$0x11]
      %v2850 = vld [vmem:[%s2823 + $0xd0] sm:$0x11]
      %v2851 = vld [vmem:[%s2823 + $0xd8] sm:$0x11]
      %v2852 = vrot.slane %v1966, 1
      %v2881 = vunpack.c.l.b16 %v2824
      %v2882 = vunpack.c.h.b16 %v2824
      %v2883 = vunpack.c.l.b16 %v2825
      %v2884 = vunpack.c.h.b16 %v2825
      %v2885 = vunpack.c.l.b16 %v2826
      %v2886 = vunpack.c.h.b16 %v2826
      %v2887 = vunpack.c.l.b16 %v2827
      %v2888 = vunpack.c.h.b16 %v2827
      %v2889 = vunpack.c.l.b16 %v2828
      %v2890 = vunpack.c.h.b16 %v2828
      %v2891 = vunpack.c.l.b16 %v2829
      %v2892 = vunpack.c.h.b16 %v2829
      %v2893 = vunpack.c.l.b16 %v2830
      %v2894 = vunpack.c.h.b16 %v2830
      %v2895 = vunpack.c.l.b16 %v2831
      %v2896 = vunpack.c.h.b16 %v2831
      %v2897 = vunpack.c.l.b16 %v2832
      %v2898 = vunpack.c.h.b16 %v2832
      %v2899 = vunpack.c.l.b16 %v2833
      %v2900 = vunpack.c.h.b16 %v2833
      %v2901 = vunpack.c.l.b16 %v2834
      %v2902 = vunpack.c.h.b16 %v2834
      %v2903 = vunpack.c.l.b16 %v2835
      %v2904 = vunpack.c.h.b16 %v2835
      %v2905 = vunpack.c.l.b16 %v2836
      %v2906 = vunpack.c.h.b16 %v2836
      %v2907 = vunpack.c.l.b16 %v2837
      %v2908 = vunpack.c.h.b16 %v2837
      %v2909 = vunpack.c.l.b16 %v2838
      %v2910 = vunpack.c.h.b16 %v2838
      %v2911 = vunpack.c.l.b16 %v2839
      %v2912 = vunpack.c.h.b16 %v2839
      %v2913 = vunpack.c.l.b16 %v2840
      %v2914 = vunpack.c.h.b16 %v2840
      %v2915 = vunpack.c.l.b16 %v2841
      %v2916 = vunpack.c.h.b16 %v2841
      %v2917 = vunpack.c.l.b16 %v2842
      %v2918 = vunpack.c.h.b16 %v2842
      %v2919 = vunpack.c.l.b16 %v2843
      %v2920 = vunpack.c.h.b16 %v2843
      %v2921 = vunpack.c.l.b16 %v2844
      %v2922 = vunpack.c.h.b16 %v2844
      %v2923 = vunpack.c.l.b16 %v2845
      %v2924 = vunpack.c.h.b16 %v2845
      %v2925 = vunpack.c.l.b16 %v2846
      %v2926 = vunpack.c.h.b16 %v2846
      %v2927 = vunpack.c.l.b16 %v2847
      %v2928 = vunpack.c.h.b16 %v2847
      %v2929 = vunpack.c.l.b16 %v2848
      %v2930 = vunpack.c.h.b16 %v2848
      %v2931 = vunpack.c.l.b16 %v2849
      %v2932 = vunpack.c.h.b16 %v2849
      %v2933 = vunpack.c.l.b16 %v2850
      %v2934 = vunpack.c.h.b16 %v2850
      %v2935 = vunpack.c.l.b16 %v2851
      %v2936 = vunpack.c.h.b16 %v2851
      %v2937 = vpack.c.b16 %v2889, %v2881
      %v2938 = vpack.c.b16 %v2890, %v2882
      %v2939 = vpack.c.b16 %v2891, %v2883
      %v2940 = vpack.c.b16 %v2892, %v2884
      %v2941 = vpack.c.b16 %v2893, %v2885
      %v2942 = vpack.c.b16 %v2894, %v2886
      %v2943 = vpack.c.b16 %v2895, %v2887
      %v2944 = vpack.c.b16 %v2896, %v2888
      %v2945 = vpack.c.b16 %v2905, %v2897
      %v2946 = vpack.c.b16 %v2906, %v2898
      %v2947 = vpack.c.b16 %v2907, %v2899
      %v2948 = vpack.c.b16 %v2908, %v2900
      %v2949 = vpack.c.b16 %v2909, %v2901
      %v2950 = vpack.c.b16 %v2910, %v2902
      %v2951 = vpack.c.b16 %v2911, %v2903
      %v2952 = vpack.c.b16 %v2912, %v2904
      %v2953 = vpack.c.b16 %v2921, %v2913
      %v2954 = vpack.c.b16 %v2922, %v2914
      %v2955 = vpack.c.b16 %v2923, %v2915
      %v2956 = vpack.c.b16 %v2924, %v2916
      %v2957 = vpack.c.b16 %v2925, %v2917
      %v2958 = vpack.c.b16 %v2926, %v2918
      %v2959 = vpack.c.b16 %v2927, %v2919
      %v2960 = vpack.c.b16 %v2928, %v2920
      %v2961 = vpack.c.b16 %v2929, %v2929
      %v2962 = vpack.c.b16 %v2930, %v2930
      %v2963 = vpack.c.b16 %v2931, %v2931
      %v2964 = vpack.c.b16 %v2932, %v2932
      %v2965 = vpack.c.b16 %v2933, %v2933
      %v2966 = vpack.c.b16 %v2934, %v2934
      %v2967 = vpack.c.b16 %v2935, %v2935
      %v2968 = vpack.c.b16 %v2936, %v2936
      %v2994 = vsel %vm2108, %v2852, 0
      %v2997 = vand.u32 %v2961, %v2114
      %v3000 = vand.u32 %v2962, %v2114
      %v3003 = vand.u32 %v2963, %v2114
      %v3006 = vand.u32 %v2964, %v2114
      %v3009 = vand.u32 %v2965, %v2114
      %v3012 = vand.u32 %v2966, %v2114
      %v3015 = vand.u32 %v2967, %v2114
      %v3018 = vand.u32 %v2968, %v2114
      %3020 = vmatpush.bf16.msra.mxu0 0
      %3021 = vmatpush.bf16.msra.mxu0 0
      %3022 = vmatpush.bf16.msra.mxu0 0
      %3023 = vmatpush.bf16.msra.mxu0 0
      %3024 = vmatpush.bf16.msra.mxu0 %v2997
      %3025 = vmatpush.bf16.msra.mxu0 %v2953
      %3026 = vmatpush.bf16.msra.mxu0 %v2945
      %3027 = vmatpush.bf16.msra.mxu0 %v2937
      %3028 = vmatmul.bf16.gmra.mxu0 %v2994
      %v3029 = vpop.f32.mrf.mxu0
      %v3030 = vadd.f32 0.0, %v3029
      %v3031 = vpop.f32.mrf.mxu0
      %3032 = vdwg.mxu0
      %3033 = vmatpush.bf16.msra.mxu0 0
      %3034 = vmatpush.bf16.msra.mxu0 0
      %3035 = vmatpush.bf16.msra.mxu0 0
      %3036 = vmatpush.bf16.msra.mxu0 0
      %3037 = vmatpush.bf16.msra.mxu0 %v3000
      %3038 = vmatpush.bf16.msra.mxu0 %v2954
      %3039 = vmatpush.bf16.msra.mxu0 %v2946
      %3040 = vmatpush.bf16.msra.mxu0 %v2938
      %3041 = vmatmul.bf16.gmra.mxu0 %v2994
      %v3042 = vpop.f32.mrf.mxu0
      %v3043 = vadd.f32 0.0, %v3042
      %v3044 = vpop.f32.mrf.mxu0
      %3045 = vdwg.mxu0
      %3046 = vmatpush.bf16.msra.mxu0 0
      %3047 = vmatpush.bf16.msra.mxu0 0
      %3048 = vmatpush.bf16.msra.mxu0 0
      %3049 = vmatpush.bf16.msra.mxu0 0
      %3050 = vmatpush.bf16.msra.mxu0 %v3003
      %3051 = vmatpush.bf16.msra.mxu0 %v2955
      %3052 = vmatpush.bf16.msra.mxu0 %v2947
      %3053 = vmatpush.bf16.msra.mxu0 %v2939
      %3054 = vmatmul.bf16.gmra.mxu0 %v2994
      %v3055 = vpop.f32.mrf.mxu0
      %v3056 = vadd.f32 0.0, %v3055
      %v3057 = vpop.f32.mrf.mxu0
      %3058 = vdwg.mxu0
      %3059 = vmatpush.bf16.msra.mxu0 0
      %3060 = vmatpush.bf16.msra.mxu0 0
      %3061 = vmatpush.bf16.msra.mxu0 0
      %3062 = vmatpush.bf16.msra.mxu0 0
      %3063 = vmatpush.bf16.msra.mxu0 %v3006
      %3064 = vmatpush.bf16.msra.mxu0 %v2956
      %3065 = vmatpush.bf16.msra.mxu0 %v2948
      %3066 = vmatpush.bf16.msra.mxu0 %v2940
      %3067 = vmatmul.bf16.gmra.mxu0 %v2994
      %v3068 = vpop.f32.mrf.mxu0
      %v3069 = vadd.f32 0.0, %v3068
      %v3070 = vpop.f32.mrf.mxu0
      %3071 = vdwg.mxu0
      %3072 = vmatpush.bf16.msra.mxu0 0
      %3073 = vmatpush.bf16.msra.mxu0 0
      %3074 = vmatpush.bf16.msra.mxu0 0
      %3075 = vmatpush.bf16.msra.mxu0 0
      %3076 = vmatpush.bf16.msra.mxu0 %v3009
      %3077 = vmatpush.bf16.msra.mxu0 %v2957
      %3078 = vmatpush.bf16.msra.mxu0 %v2949
      %3079 = vmatpush.bf16.msra.mxu0 %v2941
      %3080 = vmatmul.bf16.gmra.mxu0 %v2994
      %v3081 = vpop.f32.mrf.mxu0
      %v3082 = vadd.f32 0.0, %v3081
      %v3083 = vpop.f32.mrf.mxu0
      %3084 = vdwg.mxu0
      %3085 = vmatpush.bf16.msra.mxu0 0
      %3086 = vmatpush.bf16.msra.mxu0 0
      %3087 = vmatpush.bf16.msra.mxu0 0
      %3088 = vmatpush.bf16.msra.mxu0 0
      %3089 = vmatpush.bf16.msra.mxu0 %v3012
      %3090 = vmatpush.bf16.msra.mxu0 %v2958
      %3091 = vmatpush.bf16.msra.mxu0 %v2950
      %3092 = vmatpush.bf16.msra.mxu0 %v2942
      %3093 = vmatmul.bf16.gmra.mxu0 %v2994
      %v3094 = vpop.f32.mrf.mxu0
      %v3095 = vadd.f32 0.0, %v3094
      %v3096 = vpop.f32.mrf.mxu0
      %3097 = vdwg.mxu0
      %3098 = vmatpush.bf16.msra.mxu0 0
      %3099 = vmatpush.bf16.msra.mxu0 0
      %3100 = vmatpush.bf16.msra.mxu0 0
      %3101 = vmatpush.bf16.msra.mxu0 0
      %3102 = vmatpush.bf16.msra.mxu0 %v3015
      %3103 = vmatpush.bf16.msra.mxu0 %v2959
      %3104 = vmatpush.bf16.msra.mxu0 %v2951
      %3105 = vmatpush.bf16.msra.mxu0 %v2943
      %3106 = vmatmul.bf16.gmra.mxu0 %v2994
      %v3107 = vpop.f32.mrf.mxu0
      %v3108 = vadd.f32 0.0, %v3107
      %v3109 = vpop.f32.mrf.mxu0
      %3110 = vdwg.mxu0
      %3111 = vmatpush.bf16.msra.mxu0 0
      %3112 = vmatpush.bf16.msra.mxu0 0
      %3113 = vmatpush.bf16.msra.mxu0 0
      %3114 = vmatpush.bf16.msra.mxu0 0
      %3115 = vmatpush.bf16.msra.mxu0 %v3018
      %3116 = vmatpush.bf16.msra.mxu0 %v2960
      %3117 = vmatpush.bf16.msra.mxu0 %v2952
      %3118 = vmatpush.bf16.msra.mxu0 %v2944
      %3119 = vmatmul.bf16.gmra.mxu0 %v2994
      %v3120 = vpop.f32.mrf.mxu0
      %v3121 = vadd.f32 0.0, %v3120
      %v3122 = vpop.f32.mrf.mxu0
      %3123 = vdwg.mxu0
      %v3124 = vadd.f32 %v2815, %v3030
      %v3125 = vadd.f32 %v2816, %v3043
      %v3126 = vadd.f32 %v2817, %v3056
      %v3127 = vadd.f32 %v2818, %v3069
      %v3128 = vadd.f32 %v2819, %v3082
      %v3129 = vadd.f32 %v2820, %v3095
      %v3130 = vadd.f32 %v2821, %v3108
      %v3131 = vadd.f32 %v2822, %v3121
      %s3132 = scalar_lea.vmem %s9, 896
      %v3133 = vld [vmem:[%s3132] sm:$0xff]
      %v3134 = vld [vmem:[%s3132 + $0x8] sm:$0xff]
      %v3135 = vld [vmem:[%s3132 + $0x10] sm:$0xff]
      %v3136 = vld [vmem:[%s3132 + $0x18] sm:$0xff]
      %v3137 = vld [vmem:[%s3132 + $0x20] sm:$0xff]
      %v3138 = vld [vmem:[%s3132 + $0x28] sm:$0xff]
      %v3139 = vld [vmem:[%s3132 + $0x30] sm:$0xff]
      %v3140 = vld [vmem:[%s3132 + $0x38] sm:$0xff]
      %v3141 = vld [vmem:[%s3132 + $0x40] sm:$0xff]
      %v3142 = vld [vmem:[%s3132 + $0x48] sm:$0xff]
      %v3143 = vld [vmem:[%s3132 + $0x50] sm:$0xff]
      %v3144 = vld [vmem:[%s3132 + $0x58] sm:$0xff]
      %v3145 = vld [vmem:[%s3132 + $0x60] sm:$0xff]
      %v3146 = vld [vmem:[%s3132 + $0x68] sm:$0xff]
      %v3147 = vld [vmem:[%s3132 + $0x70] sm:$0xff]
      %v3148 = vld [vmem:[%s3132 + $0x78] sm:$0xff]
      %v3149 = vld [vmem:[%s3132 + $0x80] sm:$0xff]
      %v3150 = vld [vmem:[%s3132 + $0x88] sm:$0xff]
      %v3151 = vld [vmem:[%s3132 + $0x90] sm:$0xff]
      %v3152 = vld [vmem:[%s3132 + $0x98] sm:$0xff]
      %v3153 = vld [vmem:[%s3132 + $0xa0] sm:$0xff]
      %v3154 = vld [vmem:[%s3132 + $0xa8] sm:$0xff]
      %v3155 = vld [vmem:[%s3132 + $0xb0] sm:$0xff]
      %v3156 = vld [vmem:[%s3132 + $0xb8] sm:$0xff]
      %v3157 = vld [vmem:[%s3132 + $0xc0] sm:$0x11]
      %v3158 = vld [vmem:[%s3132 + $0xc8] sm:$0x11]
      %v3159 = vld [vmem:[%s3132 + $0xd0] sm:$0x11]
      %v3160 = vld [vmem:[%s3132 + $0xd8] sm:$0x11]
      %v3161 = vrot.slane %v1907, 2
      %v3190 = vunpack.c.l.b16 %v3133
      %v3191 = vunpack.c.h.b16 %v3133
      %v3192 = vunpack.c.l.b16 %v3134
      %v3193 = vunpack.c.h.b16 %v3134
      %v3194 = vunpack.c.l.b16 %v3135
      %v3195 = vunpack.c.h.b16 %v3135
      %v3196 = vunpack.c.l.b16 %v3136
      %v3197 = vunpack.c.h.b16 %v3136
      %v3198 = vunpack.c.l.b16 %v3137
      %v3199 = vunpack.c.h.b16 %v3137
      %v3200 = vunpack.c.l.b16 %v3138
      %v3201 = vunpack.c.h.b16 %v3138
      %v3202 = vunpack.c.l.b16 %v3139
      %v3203 = vunpack.c.h.b16 %v3139
      %v3204 = vunpack.c.l.b16 %v3140
      %v3205 = vunpack.c.h.b16 %v3140
      %v3206 = vunpack.c.l.b16 %v3141
      %v3207 = vunpack.c.h.b16 %v3141
      %v3208 = vunpack.c.l.b16 %v3142
      %v3209 = vunpack.c.h.b16 %v3142
      %v3210 = vunpack.c.l.b16 %v3143
      %v3211 = vunpack.c.h.b16 %v3143
      %v3212 = vunpack.c.l.b16 %v3144
      %v3213 = vunpack.c.h.b16 %v3144
      %v3214 = vunpack.c.l.b16 %v3145
      %v3215 = vunpack.c.h.b16 %v3145
      %v3216 = vunpack.c.l.b16 %v3146
      %v3217 = vunpack.c.h.b16 %v3146
      %v3218 = vunpack.c.l.b16 %v3147
      %v3219 = vunpack.c.h.b16 %v3147
      %v3220 = vunpack.c.l.b16 %v3148
      %v3221 = vunpack.c.h.b16 %v3148
      %v3222 = vunpack.c.l.b16 %v3149
      %v3223 = vunpack.c.h.b16 %v3149
      %v3224 = vunpack.c.l.b16 %v3150
      %v3225 = vunpack.c.h.b16 %v3150
      %v3226 = vunpack.c.l.b16 %v3151
      %v3227 = vunpack.c.h.b16 %v3151
      %v3228 = vunpack.c.l.b16 %v3152
      %v3229 = vunpack.c.h.b16 %v3152
      %v3230 = vunpack.c.l.b16 %v3153
      %v3231 = vunpack.c.h.b16 %v3153
      %v3232 = vunpack.c.l.b16 %v3154
      %v3233 = vunpack.c.h.b16 %v3154
      %v3234 = vunpack.c.l.b16 %v3155
      %v3235 = vunpack.c.h.b16 %v3155
      %v3236 = vunpack.c.l.b16 %v3156
      %v3237 = vunpack.c.h.b16 %v3156
      %v3238 = vunpack.c.l.b16 %v3157
      %v3239 = vunpack.c.h.b16 %v3157
      %v3240 = vunpack.c.l.b16 %v3158
      %v3241 = vunpack.c.h.b16 %v3158
      %v3242 = vunpack.c.l.b16 %v3159
      %v3243 = vunpack.c.h.b16 %v3159
      %v3244 = vunpack.c.l.b16 %v3160
      %v3245 = vunpack.c.h.b16 %v3160
      %v3246 = vpack.c.b16 %v3198, %v3190
      %v3247 = vpack.c.b16 %v3199, %v3191
      %v3248 = vpack.c.b16 %v3200, %v3192
      %v3249 = vpack.c.b16 %v3201, %v3193
      %v3250 = vpack.c.b16 %v3202, %v3194
      %v3251 = vpack.c.b16 %v3203, %v3195
      %v3252 = vpack.c.b16 %v3204, %v3196
      %v3253 = vpack.c.b16 %v3205, %v3197
      %v3254 = vpack.c.b16 %v3214, %v3206
      %v3255 = vpack.c.b16 %v3215, %v3207
      %v3256 = vpack.c.b16 %v3216, %v3208
      %v3257 = vpack.c.b16 %v3217, %v3209
      %v3258 = vpack.c.b16 %v3218, %v3210
      %v3259 = vpack.c.b16 %v3219, %v3211
      %v3260 = vpack.c.b16 %v3220, %v3212
      %v3261 = vpack.c.b16 %v3221, %v3213
      %v3262 = vpack.c.b16 %v3230, %v3222
      %v3263 = vpack.c.b16 %v3231, %v3223
      %v3264 = vpack.c.b16 %v3232, %v3224
      %v3265 = vpack.c.b16 %v3233, %v3225
      %v3266 = vpack.c.b16 %v3234, %v3226
      %v3267 = vpack.c.b16 %v3235, %v3227
      %v3268 = vpack.c.b16 %v3236, %v3228
      %v3269 = vpack.c.b16 %v3237, %v3229
      %v3270 = vpack.c.b16 %v3238, %v3238
      %v3271 = vpack.c.b16 %v3239, %v3239
      %v3272 = vpack.c.b16 %v3240, %v3240
      %v3273 = vpack.c.b16 %v3241, %v3241
      %v3274 = vpack.c.b16 %v3242, %v3242
      %v3275 = vpack.c.b16 %v3243, %v3243
      %v3276 = vpack.c.b16 %v3244, %v3244
      %v3277 = vpack.c.b16 %v3245, %v3245
      %v3303 = vsel %vm2108, %v3161, 0
      %v3306 = vand.u32 %v3270, %v2114
      %v3309 = vand.u32 %v3271, %v2114
      %v3312 = vand.u32 %v3272, %v2114
      %v3315 = vand.u32 %v3273, %v2114
      %v3318 = vand.u32 %v3274, %v2114
      %v3321 = vand.u32 %v3275, %v2114
      %v3324 = vand.u32 %v3276, %v2114
      %v3327 = vand.u32 %v3277, %v2114
      %3329 = vmatpush.bf16.msra.mxu0 0
      %3330 = vmatpush.bf16.msra.mxu0 0
      %3331 = vmatpush.bf16.msra.mxu0 0
      %3332 = vmatpush.bf16.msra.mxu0 0
      %3333 = vmatpush.bf16.msra.mxu0 %v3306
      %3334 = vmatpush.bf16.msra.mxu0 %v3262
      %3335 = vmatpush.bf16.msra.mxu0 %v3254
      %3336 = vmatpush.bf16.msra.mxu0 %v3246
      %3337 = vmatmul.bf16.gmra.mxu0 %v3303
      %v3338 = vpop.f32.mrf.mxu0
      %v3339 = vadd.f32 0.0, %v3338
      %v3340 = vpop.f32.mrf.mxu0
      %3341 = vdwg.mxu0
      %3342 = vmatpush.bf16.msra.mxu0 0
      %3343 = vmatpush.bf16.msra.mxu0 0
      %3344 = vmatpush.bf16.msra.mxu0 0
      %3345 = vmatpush.bf16.msra.mxu0 0
      %3346 = vmatpush.bf16.msra.mxu0 %v3309
      %3347 = vmatpush.bf16.msra.mxu0 %v3263
      %3348 = vmatpush.bf16.msra.mxu0 %v3255
      %3349 = vmatpush.bf16.msra.mxu0 %v3247
      %3350 = vmatmul.bf16.gmra.mxu0 %v3303
      %v3351 = vpop.f32.mrf.mxu0
      %v3352 = vadd.f32 0.0, %v3351
      %v3353 = vpop.f32.mrf.mxu0
      %3354 = vdwg.mxu0
      %3355 = vmatpush.bf16.msra.mxu0 0
      %3356 = vmatpush.bf16.msra.mxu0 0
      %3357 = vmatpush.bf16.msra.mxu0 0
      %3358 = vmatpush.bf16.msra.mxu0 0
      %3359 = vmatpush.bf16.msra.mxu0 %v3312
      %3360 = vmatpush.bf16.msra.mxu0 %v3264
      %3361 = vmatpush.bf16.msra.mxu0 %v3256
      %3362 = vmatpush.bf16.msra.mxu0 %v3248
      %3363 = vmatmul.bf16.gmra.mxu0 %v3303
      %v3364 = vpop.f32.mrf.mxu0
      %v3365 = vadd.f32 0.0, %v3364
      %v3366 = vpop.f32.mrf.mxu0
      %3367 = vdwg.mxu0
      %3368 = vmatpush.bf16.msra.mxu0 0
      %3369 = vmatpush.bf16.msra.mxu0 0
      %3370 = vmatpush.bf16.msra.mxu0 0
      %3371 = vmatpush.bf16.msra.mxu0 0
      %3372 = vmatpush.bf16.msra.mxu0 %v3315
      %3373 = vmatpush.bf16.msra.mxu0 %v3265
      %3374 = vmatpush.bf16.msra.mxu0 %v3257
      %3375 = vmatpush.bf16.msra.mxu0 %v3249
      %3376 = vmatmul.bf16.gmra.mxu0 %v3303
      %v3377 = vpop.f32.mrf.mxu0
      %v3378 = vadd.f32 0.0, %v3377
      %v3379 = vpop.f32.mrf.mxu0
      %3380 = vdwg.mxu0
      %3381 = vmatpush.bf16.msra.mxu0 0
      %3382 = vmatpush.bf16.msra.mxu0 0
      %3383 = vmatpush.bf16.msra.mxu0 0
      %3384 = vmatpush.bf16.msra.mxu0 0
      %3385 = vmatpush.bf16.msra.mxu0 %v3318
      %3386 = vmatpush.bf16.msra.mxu0 %v3266
      %3387 = vmatpush.bf16.msra.mxu0 %v3258
      %3388 = vmatpush.bf16.msra.mxu0 %v3250
      %3389 = vmatmul.bf16.gmra.mxu0 %v3303
      %v3390 = vpop.f32.mrf.mxu0
      %v3391 = vadd.f32 0.0, %v3390
      %v3392 = vpop.f32.mrf.mxu0
      %3393 = vdwg.mxu0
      %3394 = vmatpush.bf16.msra.mxu0 0
      %3395 = vmatpush.bf16.msra.mxu0 0
      %3396 = vmatpush.bf16.msra.mxu0 0
      %3397 = vmatpush.bf16.msra.mxu0 0
      %3398 = vmatpush.bf16.msra.mxu0 %v3321
      %3399 = vmatpush.bf16.msra.mxu0 %v3267
      %3400 = vmatpush.bf16.msra.mxu0 %v3259
      %3401 = vmatpush.bf16.msra.mxu0 %v3251
      %3402 = vmatmul.bf16.gmra.mxu0 %v3303
      %v3403 = vpop.f32.mrf.mxu0
      %v3404 = vadd.f32 0.0, %v3403
      %v3405 = vpop.f32.mrf.mxu0
      %3406 = vdwg.mxu0
      %3407 = vmatpush.bf16.msra.mxu0 0
      %3408 = vmatpush.bf16.msra.mxu0 0
      %3409 = vmatpush.bf16.msra.mxu0 0
      %3410 = vmatpush.bf16.msra.mxu0 0
      %3411 = vmatpush.bf16.msra.mxu0 %v3324
      %3412 = vmatpush.bf16.msra.mxu0 %v3268
      %3413 = vmatpush.bf16.msra.mxu0 %v3260
      %3414 = vmatpush.bf16.msra.mxu0 %v3252
      %3415 = vmatmul.bf16.gmra.mxu0 %v3303
      %v3416 = vpop.f32.mrf.mxu0
      %v3417 = vadd.f32 0.0, %v3416
      %v3418 = vpop.f32.mrf.mxu0
      %3419 = vdwg.mxu0
      %3420 = vmatpush.bf16.msra.mxu0 0
      %3421 = vmatpush.bf16.msra.mxu0 0
      %3422 = vmatpush.bf16.msra.mxu0 0
      %3423 = vmatpush.bf16.msra.mxu0 0
      %3424 = vmatpush.bf16.msra.mxu0 %v3327
      %3425 = vmatpush.bf16.msra.mxu0 %v3269
      %3426 = vmatpush.bf16.msra.mxu0 %v3261
      %3427 = vmatpush.bf16.msra.mxu0 %v3253
      %3428 = vmatmul.bf16.gmra.mxu0 %v3303
      %v3429 = vpop.f32.mrf.mxu0
      %v3430 = vadd.f32 0.0, %v3429
      %v3431 = vpop.f32.mrf.mxu0
      %3432 = vdwg.mxu0
      %v3433 = vadd.f32 %v3124, %v3339
      %v3434 = vadd.f32 %v3125, %v3352
      %v3435 = vadd.f32 %v3126, %v3365
      %v3436 = vadd.f32 %v3127, %v3378
      %v3437 = vadd.f32 %v3128, %v3391
      %v3438 = vadd.f32 %v3129, %v3404
      %v3439 = vadd.f32 %v3130, %v3417
      %v3440 = vadd.f32 %v3131, %v3430
      %s3441 = scalar_lea.vmem %s9, 1120
      %v3442 = vld [vmem:[%s3441] sm:$0xff]
      %v3443 = vld [vmem:[%s3441 + $0x8] sm:$0xff]
      %v3444 = vld [vmem:[%s3441 + $0x10] sm:$0xff]
      %v3445 = vld [vmem:[%s3441 + $0x18] sm:$0xff]
      %v3446 = vld [vmem:[%s3441 + $0x20] sm:$0xff]
      %v3447 = vld [vmem:[%s3441 + $0x28] sm:$0xff]
      %v3448 = vld [vmem:[%s3441 + $0x30] sm:$0xff]
      %v3449 = vld [vmem:[%s3441 + $0x38] sm:$0xff]
      %v3450 = vld [vmem:[%s3441 + $0x40] sm:$0xff]
      %v3451 = vld [vmem:[%s3441 + $0x48] sm:$0xff]
      %v3452 = vld [vmem:[%s3441 + $0x50] sm:$0xff]
      %v3453 = vld [vmem:[%s3441 + $0x58] sm:$0xff]
      %v3454 = vld [vmem:[%s3441 + $0x60] sm:$0xff]
      %v3455 = vld [vmem:[%s3441 + $0x68] sm:$0xff]
      %v3456 = vld [vmem:[%s3441 + $0x70] sm:$0xff]
      %v3457 = vld [vmem:[%s3441 + $0x78] sm:$0xff]
      %v3458 = vld [vmem:[%s3441 + $0x80] sm:$0xff]
      %v3459 = vld [vmem:[%s3441 + $0x88] sm:$0xff]
      %v3460 = vld [vmem:[%s3441 + $0x90] sm:$0xff]
      %v3461 = vld [vmem:[%s3441 + $0x98] sm:$0xff]
      %v3462 = vld [vmem:[%s3441 + $0xa0] sm:$0xff]
      %v3463 = vld [vmem:[%s3441 + $0xa8] sm:$0xff]
      %v3464 = vld [vmem:[%s3441 + $0xb0] sm:$0xff]
      %v3465 = vld [vmem:[%s3441 + $0xb8] sm:$0xff]
      %v3466 = vld [vmem:[%s3441 + $0xc0] sm:$0x11]
      %v3467 = vld [vmem:[%s3441 + $0xc8] sm:$0x11]
      %v3468 = vld [vmem:[%s3441 + $0xd0] sm:$0x11]
      %v3469 = vld [vmem:[%s3441 + $0xd8] sm:$0x11]
      %v3470 = vrot.slane %v1966, 2
      %v3499 = vunpack.c.l.b16 %v3442
      %v3500 = vunpack.c.h.b16 %v3442
      %v3501 = vunpack.c.l.b16 %v3443
      %v3502 = vunpack.c.h.b16 %v3443
      %v3503 = vunpack.c.l.b16 %v3444
      %v3504 = vunpack.c.h.b16 %v3444
      %v3505 = vunpack.c.l.b16 %v3445
      %v3506 = vunpack.c.h.b16 %v3445
      %v3507 = vunpack.c.l.b16 %v3446
      %v3508 = vunpack.c.h.b16 %v3446
      %v3509 = vunpack.c.l.b16 %v3447
      %v3510 = vunpack.c.h.b16 %v3447
      %v3511 = vunpack.c.l.b16 %v3448
      %v3512 = vunpack.c.h.b16 %v3448
      %v3513 = vunpack.c.l.b16 %v3449
      %v3514 = vunpack.c.h.b16 %v3449
      %v3515 = vunpack.c.l.b16 %v3450
      %v3516 = vunpack.c.h.b16 %v3450
      %v3517 = vunpack.c.l.b16 %v3451
      %v3518 = vunpack.c.h.b16 %v3451
      %v3519 = vunpack.c.l.b16 %v3452
      %v3520 = vunpack.c.h.b16 %v3452
      %v3521 = vunpack.c.l.b16 %v3453
      %v3522 = vunpack.c.h.b16 %v3453
      %v3523 = vunpack.c.l.b16 %v3454
      %v3524 = vunpack.c.h.b16 %v3454
      %v3525 = vunpack.c.l.b16 %v3455
      %v3526 = vunpack.c.h.b16 %v3455
      %v3527 = vunpack.c.l.b16 %v3456
      %v3528 = vunpack.c.h.b16 %v3456
      %v3529 = vunpack.c.l.b16 %v3457
      %v3530 = vunpack.c.h.b16 %v3457
      %v3531 = vunpack.c.l.b16 %v3458
      %v3532 = vunpack.c.h.b16 %v3458
      %v3533 = vunpack.c.l.b16 %v3459
      %v3534 = vunpack.c.h.b16 %v3459
      %v3535 = vunpack.c.l.b16 %v3460
      %v3536 = vunpack.c.h.b16 %v3460
      %v3537 = vunpack.c.l.b16 %v3461
      %v3538 = vunpack.c.h.b16 %v3461
      %v3539 = vunpack.c.l.b16 %v3462
      %v3540 = vunpack.c.h.b16 %v3462
      %v3541 = vunpack.c.l.b16 %v3463
      %v3542 = vunpack.c.h.b16 %v3463
      %v3543 = vunpack.c.l.b16 %v3464
      %v3544 = vunpack.c.h.b16 %v3464
      %v3545 = vunpack.c.l.b16 %v3465
      %v3546 = vunpack.c.h.b16 %v3465
      %v3547 = vunpack.c.l.b16 %v3466
      %v3548 = vunpack.c.h.b16 %v3466
      %v3549 = vunpack.c.l.b16 %v3467
      %v3550 = vunpack.c.h.b16 %v3467
      %v3551 = vunpack.c.l.b16 %v3468
      %v3552 = vunpack.c.h.b16 %v3468
      %v3553 = vunpack.c.l.b16 %v3469
      %v3554 = vunpack.c.h.b16 %v3469
      %v3555 = vpack.c.b16 %v3507, %v3499
      %v3556 = vpack.c.b16 %v3508, %v3500
      %v3557 = vpack.c.b16 %v3509, %v3501
      %v3558 = vpack.c.b16 %v3510, %v3502
      %v3559 = vpack.c.b16 %v3511, %v3503
      %v3560 = vpack.c.b16 %v3512, %v3504
      %v3561 = vpack.c.b16 %v3513, %v3505
      %v3562 = vpack.c.b16 %v3514, %v3506
      %v3563 = vpack.c.b16 %v3523, %v3515
      %v3564 = vpack.c.b16 %v3524, %v3516
      %v3565 = vpack.c.b16 %v3525, %v3517
      %v3566 = vpack.c.b16 %v3526, %v3518
      %v3567 = vpack.c.b16 %v3527, %v3519
      %v3568 = vpack.c.b16 %v3528, %v3520
      %v3569 = vpack.c.b16 %v3529, %v3521
      %v3570 = vpack.c.b16 %v3530, %v3522
      %v3571 = vpack.c.b16 %v3539, %v3531
      %v3572 = vpack.c.b16 %v3540, %v3532
      %v3573 = vpack.c.b16 %v3541, %v3533
      %v3574 = vpack.c.b16 %v3542, %v3534
      %v3575 = vpack.c.b16 %v3543, %v3535
      %v3576 = vpack.c.b16 %v3544, %v3536
      %v3577 = vpack.c.b16 %v3545, %v3537
      %v3578 = vpack.c.b16 %v3546, %v3538
      %v3579 = vpack.c.b16 %v3547, %v3547
      %v3580 = vpack.c.b16 %v3548, %v3548
      %v3581 = vpack.c.b16 %v3549, %v3549
      %v3582 = vpack.c.b16 %v3550, %v3550
      %v3583 = vpack.c.b16 %v3551, %v3551
      %v3584 = vpack.c.b16 %v3552, %v3552
      %v3585 = vpack.c.b16 %v3553, %v3553
      %v3586 = vpack.c.b16 %v3554, %v3554
      %v3612 = vsel %vm2108, %v3470, 0
      %v3615 = vand.u32 %v3579, %v2114
      %v3618 = vand.u32 %v3580, %v2114
      %v3621 = vand.u32 %v3581, %v2114
      %v3624 = vand.u32 %v3582, %v2114
      %v3627 = vand.u32 %v3583, %v2114
      %v3630 = vand.u32 %v3584, %v2114
      %v3633 = vand.u32 %v3585, %v2114
      %v3636 = vand.u32 %v3586, %v2114
      %3638 = vmatpush.bf16.msra.mxu0 0
      %3639 = vmatpush.bf16.msra.mxu0 0
      %3640 = vmatpush.bf16.msra.mxu0 0
      %3641 = vmatpush.bf16.msra.mxu0 0
      %3642 = vmatpush.bf16.msra.mxu0 %v3615
      %3643 = vmatpush.bf16.msra.mxu0 %v3571
      %3644 = vmatpush.bf16.msra.mxu0 %v3563
      %3645 = vmatpush.bf16.msra.mxu0 %v3555
      %3646 = vmatmul.bf16.gmra.mxu0 %v3612
      %v3647 = vpop.f32.mrf.mxu0
      %v3648 = vadd.f32 0.0, %v3647
      %v3649 = vpop.f32.mrf.mxu0
      %3650 = vdwg.mxu0
      %3651 = vmatpush.bf16.msra.mxu0 0
      %3652 = vmatpush.bf16.msra.mxu0 0
      %3653 = vmatpush.bf16.msra.mxu0 0
      %3654 = vmatpush.bf16.msra.mxu0 0
      %3655 = vmatpush.bf16.msra.mxu0 %v3618
      %3656 = vmatpush.bf16.msra.mxu0 %v3572
      %3657 = vmatpush.bf16.msra.mxu0 %v3564
      %3658 = vmatpush.bf16.msra.mxu0 %v3556
      %3659 = vmatmul.bf16.gmra.mxu0 %v3612
      %v3660 = vpop.f32.mrf.mxu0
      %v3661 = vadd.f32 0.0, %v3660
      %v3662 = vpop.f32.mrf.mxu0
      %3663 = vdwg.mxu0
      %3664 = vmatpush.bf16.msra.mxu0 0
      %3665 = vmatpush.bf16.msra.mxu0 0
      %3666 = vmatpush.bf16.msra.mxu0 0
      %3667 = vmatpush.bf16.msra.mxu0 0
      %3668 = vmatpush.bf16.msra.mxu0 %v3621
      %3669 = vmatpush.bf16.msra.mxu0 %v3573
      %3670 = vmatpush.bf16.msra.mxu0 %v3565
      %3671 = vmatpush.bf16.msra.mxu0 %v3557
      %3672 = vmatmul.bf16.gmra.mxu0 %v3612
      %v3673 = vpop.f32.mrf.mxu0
      %v3674 = vadd.f32 0.0, %v3673
      %v3675 = vpop.f32.mrf.mxu0
      %3676 = vdwg.mxu0
      %3677 = vmatpush.bf16.msra.mxu0 0
      %3678 = vmatpush.bf16.msra.mxu0 0
      %3679 = vmatpush.bf16.msra.mxu0 0
      %3680 = vmatpush.bf16.msra.mxu0 0
      %3681 = vmatpush.bf16.msra.mxu0 %v3624
      %3682 = vmatpush.bf16.msra.mxu0 %v3574
      %3683 = vmatpush.bf16.msra.mxu0 %v3566
      %3684 = vmatpush.bf16.msra.mxu0 %v3558
      %3685 = vmatmul.bf16.gmra.mxu0 %v3612
      %v3686 = vpop.f32.mrf.mxu0
      %v3687 = vadd.f32 0.0, %v3686
      %v3688 = vpop.f32.mrf.mxu0
      %3689 = vdwg.mxu0
      %3690 = vmatpush.bf16.msra.mxu0 0
      %3691 = vmatpush.bf16.msra.mxu0 0
      %3692 = vmatpush.bf16.msra.mxu0 0
      %3693 = vmatpush.bf16.msra.mxu0 0
      %3694 = vmatpush.bf16.msra.mxu0 %v3627
      %3695 = vmatpush.bf16.msra.mxu0 %v3575
      %3696 = vmatpush.bf16.msra.mxu0 %v3567
      %3697 = vmatpush.bf16.msra.mxu0 %v3559
      %3698 = vmatmul.bf16.gmra.mxu0 %v3612
      %v3699 = vpop.f32.mrf.mxu0
      %v3700 = vadd.f32 0.0, %v3699
      %v3701 = vpop.f32.mrf.mxu0
      %3702 = vdwg.mxu0
      %3703 = vmatpush.bf16.msra.mxu0 0
      %3704 = vmatpush.bf16.msra.mxu0 0
      %3705 = vmatpush.bf16.msra.mxu0 0
      %3706 = vmatpush.bf16.msra.mxu0 0
      %3707 = vmatpush.bf16.msra.mxu0 %v3630
      %3708 = vmatpush.bf16.msra.mxu0 %v3576
      %3709 = vmatpush.bf16.msra.mxu0 %v3568
      %3710 = vmatpush.bf16.msra.mxu0 %v3560
      %3711 = vmatmul.bf16.gmra.mxu0 %v3612
      %v3712 = vpop.f32.mrf.mxu0
      %v3713 = vadd.f32 0.0, %v3712
      %v3714 = vpop.f32.mrf.mxu0
      %3715 = vdwg.mxu0
      %3716 = vmatpush.bf16.msra.mxu0 0
      %3717 = vmatpush.bf16.msra.mxu0 0
      %3718 = vmatpush.bf16.msra.mxu0 0
      %3719 = vmatpush.bf16.msra.mxu0 0
      %3720 = vmatpush.bf16.msra.mxu0 %v3633
      %3721 = vmatpush.bf16.msra.mxu0 %v3577
      %3722 = vmatpush.bf16.msra.mxu0 %v3569
      %3723 = vmatpush.bf16.msra.mxu0 %v3561
      %3724 = vmatmul.bf16.gmra.mxu0 %v3612
      %v3725 = vpop.f32.mrf.mxu0
      %v3726 = vadd.f32 0.0, %v3725
      %v3727 = vpop.f32.mrf.mxu0
      %3728 = vdwg.mxu0
      %3729 = vmatpush.bf16.msra.mxu0 0
      %3730 = vmatpush.bf16.msra.mxu0 0
      %3731 = vmatpush.bf16.msra.mxu0 0
      %3732 = vmatpush.bf16.msra.mxu0 0
      %3733 = vmatpush.bf16.msra.mxu0 %v3636
      %3734 = vmatpush.bf16.msra.mxu0 %v3578
      %3735 = vmatpush.bf16.msra.mxu0 %v3570
      %3736 = vmatpush.bf16.msra.mxu0 %v3562
      %3737 = vmatmul.bf16.gmra.mxu0 %v3612
      %v3738 = vpop.f32.mrf.mxu0
      %v3739 = vadd.f32 0.0, %v3738
      %v3740 = vpop.f32.mrf.mxu0
      %3741 = vdwg.mxu0
      %v3742 = vadd.f32 %v3433, %v3648
      %v3743 = vadd.f32 %v3434, %v3661
      %v3744 = vadd.f32 %v3435, %v3674
      %v3745 = vadd.f32 %v3436, %v3687
      %v3746 = vadd.f32 %v3437, %v3700
      %v3747 = vadd.f32 %v3438, %v3713
      %v3748 = vadd.f32 %v3439, %v3726
      %v3749 = vadd.f32 %v3440, %v3739
      %s3750 = scalar_lea.vmem %s9, 1344
      %v3751 = vld [vmem:[%s3750] sm:$0xff]
      %v3752 = vld [vmem:[%s3750 + $0x8] sm:$0xff]
      %v3753 = vld [vmem:[%s3750 + $0x10] sm:$0xff]
      %v3754 = vld [vmem:[%s3750 + $0x18] sm:$0xff]
      %v3755 = vld [vmem:[%s3750 + $0x20] sm:$0xff]
      %v3756 = vld [vmem:[%s3750 + $0x28] sm:$0xff]
      %v3757 = vld [vmem:[%s3750 + $0x30] sm:$0xff]
      %v3758 = vld [vmem:[%s3750 + $0x38] sm:$0xff]
      %v3759 = vld [vmem:[%s3750 + $0x40] sm:$0xff]
      %v3760 = vld [vmem:[%s3750 + $0x48] sm:$0xff]
      %v3761 = vld [vmem:[%s3750 + $0x50] sm:$0xff]
      %v3762 = vld [vmem:[%s3750 + $0x58] sm:$0xff]
      %v3763 = vld [vmem:[%s3750 + $0x60] sm:$0xff]
      %v3764 = vld [vmem:[%s3750 + $0x68] sm:$0xff]
      %v3765 = vld [vmem:[%s3750 + $0x70] sm:$0xff]
      %v3766 = vld [vmem:[%s3750 + $0x78] sm:$0xff]
      %v3767 = vld [vmem:[%s3750 + $0x80] sm:$0xff]
      %v3768 = vld [vmem:[%s3750 + $0x88] sm:$0xff]
      %v3769 = vld [vmem:[%s3750 + $0x90] sm:$0xff]
      %v3770 = vld [vmem:[%s3750 + $0x98] sm:$0xff]
      %v3771 = vld [vmem:[%s3750 + $0xa0] sm:$0xff]
      %v3772 = vld [vmem:[%s3750 + $0xa8] sm:$0xff]
      %v3773 = vld [vmem:[%s3750 + $0xb0] sm:$0xff]
      %v3774 = vld [vmem:[%s3750 + $0xb8] sm:$0xff]
      %v3775 = vld [vmem:[%s3750 + $0xc0] sm:$0x11]
      %v3776 = vld [vmem:[%s3750 + $0xc8] sm:$0x11]
      %v3777 = vld [vmem:[%s3750 + $0xd0] sm:$0x11]
      %v3778 = vld [vmem:[%s3750 + $0xd8] sm:$0x11]
      %v3779 = vrot.slane %v1907, 3
      %v3808 = vunpack.c.l.b16 %v3751
      %v3809 = vunpack.c.h.b16 %v3751
      %v3810 = vunpack.c.l.b16 %v3752
      %v3811 = vunpack.c.h.b16 %v3752
      %v3812 = vunpack.c.l.b16 %v3753
      %v3813 = vunpack.c.h.b16 %v3753
      %v3814 = vunpack.c.l.b16 %v3754
      %v3815 = vunpack.c.h.b16 %v3754
      %v3816 = vunpack.c.l.b16 %v3755
      %v3817 = vunpack.c.h.b16 %v3755
      %v3818 = vunpack.c.l.b16 %v3756
      %v3819 = vunpack.c.h.b16 %v3756
      %v3820 = vunpack.c.l.b16 %v3757
      %v3821 = vunpack.c.h.b16 %v3757
      %v3822 = vunpack.c.l.b16 %v3758
      %v3823 = vunpack.c.h.b16 %v3758
      %v3824 = vunpack.c.l.b16 %v3759
      %v3825 = vunpack.c.h.b16 %v3759
      %v3826 = vunpack.c.l.b16 %v3760
      %v3827 = vunpack.c.h.b16 %v3760
      %v3828 = vunpack.c.l.b16 %v3761
      %v3829 = vunpack.c.h.b16 %v3761
      %v3830 = vunpack.c.l.b16 %v3762
      %v3831 = vunpack.c.h.b16 %v3762
      %v3832 = vunpack.c.l.b16 %v3763
      %v3833 = vunpack.c.h.b16 %v3763
      %v3834 = vunpack.c.l.b16 %v3764
      %v3835 = vunpack.c.h.b16 %v3764
      %v3836 = vunpack.c.l.b16 %v3765
      %v3837 = vunpack.c.h.b16 %v3765
      %v3838 = vunpack.c.l.b16 %v3766
      %v3839 = vunpack.c.h.b16 %v3766
      %v3840 = vunpack.c.l.b16 %v3767
      %v3841 = vunpack.c.h.b16 %v3767
      %v3842 = vunpack.c.l.b16 %v3768
      %v3843 = vunpack.c.h.b16 %v3768
      %v3844 = vunpack.c.l.b16 %v3769
      %v3845 = vunpack.c.h.b16 %v3769
      %v3846 = vunpack.c.l.b16 %v3770
      %v3847 = vunpack.c.h.b16 %v3770
      %v3848 = vunpack.c.l.b16 %v3771
      %v3849 = vunpack.c.h.b16 %v3771
      %v3850 = vunpack.c.l.b16 %v3772
      %v3851 = vunpack.c.h.b16 %v3772
      %v3852 = vunpack.c.l.b16 %v3773
      %v3853 = vunpack.c.h.b16 %v3773
      %v3854 = vunpack.c.l.b16 %v3774
      %v3855 = vunpack.c.h.b16 %v3774
      %v3856 = vunpack.c.l.b16 %v3775
      %v3857 = vunpack.c.h.b16 %v3775
      %v3858 = vunpack.c.l.b16 %v3776
      %v3859 = vunpack.c.h.b16 %v3776
      %v3860 = vunpack.c.l.b16 %v3777
      %v3861 = vunpack.c.h.b16 %v3777
      %v3862 = vunpack.c.l.b16 %v3778
      %v3863 = vunpack.c.h.b16 %v3778
      %v3864 = vpack.c.b16 %v3816, %v3808
      %v3865 = vpack.c.b16 %v3817, %v3809
      %v3866 = vpack.c.b16 %v3818, %v3810
      %v3867 = vpack.c.b16 %v3819, %v3811
      %v3868 = vpack.c.b16 %v3820, %v3812
      %v3869 = vpack.c.b16 %v3821, %v3813
      %v3870 = vpack.c.b16 %v3822, %v3814
      %v3871 = vpack.c.b16 %v3823, %v3815
      %v3872 = vpack.c.b16 %v3832, %v3824
      %v3873 = vpack.c.b16 %v3833, %v3825
      %v3874 = vpack.c.b16 %v3834, %v3826
      %v3875 = vpack.c.b16 %v3835, %v3827
      %v3876 = vpack.c.b16 %v3836, %v3828
      %v3877 = vpack.c.b16 %v3837, %v3829
      %v3878 = vpack.c.b16 %v3838, %v3830
      %v3879 = vpack.c.b16 %v3839, %v3831
      %v3880 = vpack.c.b16 %v3848, %v3840
      %v3881 = vpack.c.b16 %v3849, %v3841
      %v3882 = vpack.c.b16 %v3850, %v3842
      %v3883 = vpack.c.b16 %v3851, %v3843
      %v3884 = vpack.c.b16 %v3852, %v3844
      %v3885 = vpack.c.b16 %v3853, %v3845
      %v3886 = vpack.c.b16 %v3854, %v3846
      %v3887 = vpack.c.b16 %v3855, %v3847
      %v3888 = vpack.c.b16 %v3856, %v3856
      %v3889 = vpack.c.b16 %v3857, %v3857
      %v3890 = vpack.c.b16 %v3858, %v3858
      %v3891 = vpack.c.b16 %v3859, %v3859
      %v3892 = vpack.c.b16 %v3860, %v3860
      %v3893 = vpack.c.b16 %v3861, %v3861
      %v3894 = vpack.c.b16 %v3862, %v3862
      %v3895 = vpack.c.b16 %v3863, %v3863
      %v3921 = vsel %vm2108, %v3779, 0
      %v3924 = vand.u32 %v3888, %v2114
      %v3927 = vand.u32 %v3889, %v2114
      %v3930 = vand.u32 %v3890, %v2114
      %v3933 = vand.u32 %v3891, %v2114
      %v3936 = vand.u32 %v3892, %v2114
      %v3939 = vand.u32 %v3893, %v2114
      %v3942 = vand.u32 %v3894, %v2114
      %v3945 = vand.u32 %v3895, %v2114
      %3947 = vmatpush.bf16.msra.mxu0 0
      %3948 = vmatpush.bf16.msra.mxu0 0
      %3949 = vmatpush.bf16.msra.mxu0 0
      %3950 = vmatpush.bf16.msra.mxu0 0
      %3951 = vmatpush.bf16.msra.mxu0 %v3924
      %3952 = vmatpush.bf16.msra.mxu0 %v3880
      %3953 = vmatpush.bf16.msra.mxu0 %v3872
      %3954 = vmatpush.bf16.msra.mxu0 %v3864
      %3955 = vmatmul.bf16.gmra.mxu0 %v3921
      %v3956 = vpop.f32.mrf.mxu0
      %v3957 = vadd.f32 0.0, %v3956
      %v3958 = vpop.f32.mrf.mxu0
      %3959 = vdwg.mxu0
      %3960 = vmatpush.bf16.msra.mxu0 0
      %3961 = vmatpush.bf16.msra.mxu0 0
      %3962 = vmatpush.bf16.msra.mxu0 0
      %3963 = vmatpush.bf16.msra.mxu0 0
      %3964 = vmatpush.bf16.msra.mxu0 %v3927
      %3965 = vmatpush.bf16.msra.mxu0 %v3881
      %3966 = vmatpush.bf16.msra.mxu0 %v3873
      %3967 = vmatpush.bf16.msra.mxu0 %v3865
      %3968 = vmatmul.bf16.gmra.mxu0 %v3921
      %v3969 = vpop.f32.mrf.mxu0
      %v3970 = vadd.f32 0.0, %v3969
      %v3971 = vpop.f32.mrf.mxu0
      %3972 = vdwg.mxu0
      %3973 = vmatpush.bf16.msra.mxu0 0
      %3974 = vmatpush.bf16.msra.mxu0 0
      %3975 = vmatpush.bf16.msra.mxu0 0
      %3976 = vmatpush.bf16.msra.mxu0 0
      %3977 = vmatpush.bf16.msra.mxu0 %v3930
      %3978 = vmatpush.bf16.msra.mxu0 %v3882
      %3979 = vmatpush.bf16.msra.mxu0 %v3874
      %3980 = vmatpush.bf16.msra.mxu0 %v3866
      %3981 = vmatmul.bf16.gmra.mxu0 %v3921
      %v3982 = vpop.f32.mrf.mxu0
      %v3983 = vadd.f32 0.0, %v3982
      %v3984 = vpop.f32.mrf.mxu0
      %3985 = vdwg.mxu0
      %3986 = vmatpush.bf16.msra.mxu0 0
      %3987 = vmatpush.bf16.msra.mxu0 0
      %3988 = vmatpush.bf16.msra.mxu0 0
      %3989 = vmatpush.bf16.msra.mxu0 0
      %3990 = vmatpush.bf16.msra.mxu0 %v3933
      %3991 = vmatpush.bf16.msra.mxu0 %v3883
      %3992 = vmatpush.bf16.msra.mxu0 %v3875
      %3993 = vmatpush.bf16.msra.mxu0 %v3867
      %3994 = vmatmul.bf16.gmra.mxu0 %v3921
      %v3995 = vpop.f32.mrf.mxu0
      %v3996 = vadd.f32 0.0, %v3995
      %v3997 = vpop.f32.mrf.mxu0
      %3998 = vdwg.mxu0
      %3999 = vmatpush.bf16.msra.mxu0 0
      %4000 = vmatpush.bf16.msra.mxu0 0
      %4001 = vmatpush.bf16.msra.mxu0 0
      %4002 = vmatpush.bf16.msra.mxu0 0
      %4003 = vmatpush.bf16.msra.mxu0 %v3936
      %4004 = vmatpush.bf16.msra.mxu0 %v3884
      %4005 = vmatpush.bf16.msra.mxu0 %v3876
      %4006 = vmatpush.bf16.msra.mxu0 %v3868
      %4007 = vmatmul.bf16.gmra.mxu0 %v3921
      %v4008 = vpop.f32.mrf.mxu0
      %v4009 = vadd.f32 0.0, %v4008
      %v4010 = vpop.f32.mrf.mxu0
      %4011 = vdwg.mxu0
      %4012 = vmatpush.bf16.msra.mxu0 0
      %4013 = vmatpush.bf16.msra.mxu0 0
      %4014 = vmatpush.bf16.msra.mxu0 0
      %4015 = vmatpush.bf16.msra.mxu0 0
      %4016 = vmatpush.bf16.msra.mxu0 %v3939
      %4017 = vmatpush.bf16.msra.mxu0 %v3885
      %4018 = vmatpush.bf16.msra.mxu0 %v3877
      %4019 = vmatpush.bf16.msra.mxu0 %v3869
      %4020 = vmatmul.bf16.gmra.mxu0 %v3921
      %v4021 = vpop.f32.mrf.mxu0
      %v4022 = vadd.f32 0.0, %v4021
      %v4023 = vpop.f32.mrf.mxu0
      %4024 = vdwg.mxu0
      %4025 = vmatpush.bf16.msra.mxu0 0
      %4026 = vmatpush.bf16.msra.mxu0 0
      %4027 = vmatpush.bf16.msra.mxu0 0
      %4028 = vmatpush.bf16.msra.mxu0 0
      %4029 = vmatpush.bf16.msra.mxu0 %v3942
      %4030 = vmatpush.bf16.msra.mxu0 %v3886
      %4031 = vmatpush.bf16.msra.mxu0 %v3878
      %4032 = vmatpush.bf16.msra.mxu0 %v3870
      %4033 = vmatmul.bf16.gmra.mxu0 %v3921
      %v4034 = vpop.f32.mrf.mxu0
      %v4035 = vadd.f32 0.0, %v4034
      %v4036 = vpop.f32.mrf.mxu0
      %4037 = vdwg.mxu0
      %4038 = vmatpush.bf16.msra.mxu0 0
      %4039 = vmatpush.bf16.msra.mxu0 0
      %4040 = vmatpush.bf16.msra.mxu0 0
      %4041 = vmatpush.bf16.msra.mxu0 0
      %4042 = vmatpush.bf16.msra.mxu0 %v3945
      %4043 = vmatpush.bf16.msra.mxu0 %v3887
      %4044 = vmatpush.bf16.msra.mxu0 %v3879
      %4045 = vmatpush.bf16.msra.mxu0 %v3871
      %4046 = vmatmul.bf16.gmra.mxu0 %v3921
      %v4047 = vpop.f32.mrf.mxu0
      %v4048 = vadd.f32 0.0, %v4047
      %v4049 = vpop.f32.mrf.mxu0
      %4050 = vdwg.mxu0
      %v4051 = vadd.f32 %v3742, %v3957
      %v4052 = vadd.f32 %v3743, %v3970
      %v4053 = vadd.f32 %v3744, %v3983
      %v4054 = vadd.f32 %v3745, %v3996
      %v4055 = vadd.f32 %v3746, %v4009
      %v4056 = vadd.f32 %v3747, %v4022
      %v4057 = vadd.f32 %v3748, %v4035
      %v4058 = vadd.f32 %v3749, %v4048
      %s4059 = scalar_lea.vmem %s9, 1568
      %v4060 = vld [vmem:[%s4059] sm:$0xff]
      %v4061 = vld [vmem:[%s4059 + $0x8] sm:$0xff]
      %v4062 = vld [vmem:[%s4059 + $0x10] sm:$0xff]
      %v4063 = vld [vmem:[%s4059 + $0x18] sm:$0xff]
      %v4064 = vld [vmem:[%s4059 + $0x20] sm:$0xff]
      %v4065 = vld [vmem:[%s4059 + $0x28] sm:$0xff]
      %v4066 = vld [vmem:[%s4059 + $0x30] sm:$0xff]
      %v4067 = vld [vmem:[%s4059 + $0x38] sm:$0xff]
      %v4068 = vld [vmem:[%s4059 + $0x40] sm:$0xff]
      %v4069 = vld [vmem:[%s4059 + $0x48] sm:$0xff]
      %v4070 = vld [vmem:[%s4059 + $0x50] sm:$0xff]
      %v4071 = vld [vmem:[%s4059 + $0x58] sm:$0xff]
      %v4072 = vld [vmem:[%s4059 + $0x60] sm:$0xff]
      %v4073 = vld [vmem:[%s4059 + $0x68] sm:$0xff]
      %v4074 = vld [vmem:[%s4059 + $0x70] sm:$0xff]
      %v4075 = vld [vmem:[%s4059 + $0x78] sm:$0xff]
      %v4076 = vld [vmem:[%s4059 + $0x80] sm:$0xff]
      %v4077 = vld [vmem:[%s4059 + $0x88] sm:$0xff]
      %v4078 = vld [vmem:[%s4059 + $0x90] sm:$0xff]
      %v4079 = vld [vmem:[%s4059 + $0x98] sm:$0xff]
      %v4080 = vld [vmem:[%s4059 + $0xa0] sm:$0xff]
      %v4081 = vld [vmem:[%s4059 + $0xa8] sm:$0xff]
      %v4082 = vld [vmem:[%s4059 + $0xb0] sm:$0xff]
      %v4083 = vld [vmem:[%s4059 + $0xb8] sm:$0xff]
      %v4084 = vld [vmem:[%s4059 + $0xc0] sm:$0x11]
      %v4085 = vld [vmem:[%s4059 + $0xc8] sm:$0x11]
      %v4086 = vld [vmem:[%s4059 + $0xd0] sm:$0x11]
      %v4087 = vld [vmem:[%s4059 + $0xd8] sm:$0x11]
      %v4088 = vrot.slane %v1966, 3
      %v4117 = vunpack.c.l.b16 %v4060
      %v4118 = vunpack.c.h.b16 %v4060
      %v4119 = vunpack.c.l.b16 %v4061
      %v4120 = vunpack.c.h.b16 %v4061
      %v4121 = vunpack.c.l.b16 %v4062
      %v4122 = vunpack.c.h.b16 %v4062
      %v4123 = vunpack.c.l.b16 %v4063
      %v4124 = vunpack.c.h.b16 %v4063
      %v4125 = vunpack.c.l.b16 %v4064
      %v4126 = vunpack.c.h.b16 %v4064
      %v4127 = vunpack.c.l.b16 %v4065
      %v4128 = vunpack.c.h.b16 %v4065
      %v4129 = vunpack.c.l.b16 %v4066
      %v4130 = vunpack.c.h.b16 %v4066
      %v4131 = vunpack.c.l.b16 %v4067
      %v4132 = vunpack.c.h.b16 %v4067
      %v4133 = vunpack.c.l.b16 %v4068
      %v4134 = vunpack.c.h.b16 %v4068
      %v4135 = vunpack.c.l.b16 %v4069
      %v4136 = vunpack.c.h.b16 %v4069
      %v4137 = vunpack.c.l.b16 %v4070
      %v4138 = vunpack.c.h.b16 %v4070
      %v4139 = vunpack.c.l.b16 %v4071
      %v4140 = vunpack.c.h.b16 %v4071
      %v4141 = vunpack.c.l.b16 %v4072
      %v4142 = vunpack.c.h.b16 %v4072
      %v4143 = vunpack.c.l.b16 %v4073
      %v4144 = vunpack.c.h.b16 %v4073
      %v4145 = vunpack.c.l.b16 %v4074
      %v4146 = vunpack.c.h.b16 %v4074
      %v4147 = vunpack.c.l.b16 %v4075
      %v4148 = vunpack.c.h.b16 %v4075
      %v4149 = vunpack.c.l.b16 %v4076
      %v4150 = vunpack.c.h.b16 %v4076
      %v4151 = vunpack.c.l.b16 %v4077
      %v4152 = vunpack.c.h.b16 %v4077
      %v4153 = vunpack.c.l.b16 %v4078
      %v4154 = vunpack.c.h.b16 %v4078
      %v4155 = vunpack.c.l.b16 %v4079
      %v4156 = vunpack.c.h.b16 %v4079
      %v4157 = vunpack.c.l.b16 %v4080
      %v4158 = vunpack.c.h.b16 %v4080
      %v4159 = vunpack.c.l.b16 %v4081
      %v4160 = vunpack.c.h.b16 %v4081
      %v4161 = vunpack.c.l.b16 %v4082
      %v4162 = vunpack.c.h.b16 %v4082
      %v4163 = vunpack.c.l.b16 %v4083
      %v4164 = vunpack.c.h.b16 %v4083
      %v4165 = vunpack.c.l.b16 %v4084
      %v4166 = vunpack.c.h.b16 %v4084
      %v4167 = vunpack.c.l.b16 %v4085
      %v4168 = vunpack.c.h.b16 %v4085
      %v4169 = vunpack.c.l.b16 %v4086
      %v4170 = vunpack.c.h.b16 %v4086
      %v4171 = vunpack.c.l.b16 %v4087
      %v4172 = vunpack.c.h.b16 %v4087
      %v4173 = vpack.c.b16 %v4125, %v4117
      %v4174 = vpack.c.b16 %v4126, %v4118
      %v4175 = vpack.c.b16 %v4127, %v4119
      %v4176 = vpack.c.b16 %v4128, %v4120
      %v4177 = vpack.c.b16 %v4129, %v4121
      %v4178 = vpack.c.b16 %v4130, %v4122
      %v4179 = vpack.c.b16 %v4131, %v4123
      %v4180 = vpack.c.b16 %v4132, %v4124
      %v4181 = vpack.c.b16 %v4141, %v4133
      %v4182 = vpack.c.b16 %v4142, %v4134
      %v4183 = vpack.c.b16 %v4143, %v4135
      %v4184 = vpack.c.b16 %v4144, %v4136
      %v4185 = vpack.c.b16 %v4145, %v4137
      %v4186 = vpack.c.b16 %v4146, %v4138
      %v4187 = vpack.c.b16 %v4147, %v4139
      %v4188 = vpack.c.b16 %v4148, %v4140
      %v4189 = vpack.c.b16 %v4157, %v4149
      %v4190 = vpack.c.b16 %v4158, %v4150
      %v4191 = vpack.c.b16 %v4159, %v4151
      %v4192 = vpack.c.b16 %v4160, %v4152
      %v4193 = vpack.c.b16 %v4161, %v4153
      %v4194 = vpack.c.b16 %v4162, %v4154
      %v4195 = vpack.c.b16 %v4163, %v4155
      %v4196 = vpack.c.b16 %v4164, %v4156
      %v4197 = vpack.c.b16 %v4165, %v4165
      %v4198 = vpack.c.b16 %v4166, %v4166
      %v4199 = vpack.c.b16 %v4167, %v4167
      %v4200 = vpack.c.b16 %v4168, %v4168
      %v4201 = vpack.c.b16 %v4169, %v4169
      %v4202 = vpack.c.b16 %v4170, %v4170
      %v4203 = vpack.c.b16 %v4171, %v4171
      %v4204 = vpack.c.b16 %v4172, %v4172
      %v4230 = vsel %vm2108, %v4088, 0
      %v4233 = vand.u32 %v4197, %v2114
      %v4236 = vand.u32 %v4198, %v2114
      %v4239 = vand.u32 %v4199, %v2114
      %v4242 = vand.u32 %v4200, %v2114
      %v4245 = vand.u32 %v4201, %v2114
      %v4248 = vand.u32 %v4202, %v2114
      %v4251 = vand.u32 %v4203, %v2114
      %v4254 = vand.u32 %v4204, %v2114
      %4256 = vmatpush.bf16.msra.mxu0 0
      %4257 = vmatpush.bf16.msra.mxu0 0
      %4258 = vmatpush.bf16.msra.mxu0 0
      %4259 = vmatpush.bf16.msra.mxu0 0
      %4260 = vmatpush.bf16.msra.mxu0 %v4233
      %4261 = vmatpush.bf16.msra.mxu0 %v4189
      %4262 = vmatpush.bf16.msra.mxu0 %v4181
      %4263 = vmatpush.bf16.msra.mxu0 %v4173
      %4264 = vmatmul.bf16.gmra.mxu0 %v4230
      %v4265 = vpop.f32.mrf.mxu0
      %v4266 = vadd.f32 0.0, %v4265
      %v4267 = vpop.f32.mrf.mxu0
      %4268 = vdwg.mxu0
      %4269 = vmatpush.bf16.msra.mxu0 0
      %4270 = vmatpush.bf16.msra.mxu0 0
      %4271 = vmatpush.bf16.msra.mxu0 0
      %4272 = vmatpush.bf16.msra.mxu0 0
      %4273 = vmatpush.bf16.msra.mxu0 %v4236
      %4274 = vmatpush.bf16.msra.mxu0 %v4190
      %4275 = vmatpush.bf16.msra.mxu0 %v4182
      %4276 = vmatpush.bf16.msra.mxu0 %v4174
      %4277 = vmatmul.bf16.gmra.mxu0 %v4230
      %v4278 = vpop.f32.mrf.mxu0
      %v4279 = vadd.f32 0.0, %v4278
      %v4280 = vpop.f32.mrf.mxu0
      %4281 = vdwg.mxu0
      %4282 = vmatpush.bf16.msra.mxu0 0
      %4283 = vmatpush.bf16.msra.mxu0 0
      %4284 = vmatpush.bf16.msra.mxu0 0
      %4285 = vmatpush.bf16.msra.mxu0 0
      %4286 = vmatpush.bf16.msra.mxu0 %v4239
      %4287 = vmatpush.bf16.msra.mxu0 %v4191
      %4288 = vmatpush.bf16.msra.mxu0 %v4183
      %4289 = vmatpush.bf16.msra.mxu0 %v4175
      %4290 = vmatmul.bf16.gmra.mxu0 %v4230
      %v4291 = vpop.f32.mrf.mxu0
      %v4292 = vadd.f32 0.0, %v4291
      %v4293 = vpop.f32.mrf.mxu0
      %4294 = vdwg.mxu0
      %4295 = vmatpush.bf16.msra.mxu0 0
      %4296 = vmatpush.bf16.msra.mxu0 0
      %4297 = vmatpush.bf16.msra.mxu0 0
      %4298 = vmatpush.bf16.msra.mxu0 0
      %4299 = vmatpush.bf16.msra.mxu0 %v4242
      %4300 = vmatpush.bf16.msra.mxu0 %v4192
      %4301 = vmatpush.bf16.msra.mxu0 %v4184
      %4302 = vmatpush.bf16.msra.mxu0 %v4176
      %4303 = vmatmul.bf16.gmra.mxu0 %v4230
      %v4304 = vpop.f32.mrf.mxu0
      %v4305 = vadd.f32 0.0, %v4304
      %v4306 = vpop.f32.mrf.mxu0
      %4307 = vdwg.mxu0
      %4308 = vmatpush.bf16.msra.mxu0 0
      %4309 = vmatpush.bf16.msra.mxu0 0
      %4310 = vmatpush.bf16.msra.mxu0 0
      %4311 = vmatpush.bf16.msra.mxu0 0
      %4312 = vmatpush.bf16.msra.mxu0 %v4245
      %4313 = vmatpush.bf16.msra.mxu0 %v4193
      %4314 = vmatpush.bf16.msra.mxu0 %v4185
      %4315 = vmatpush.bf16.msra.mxu0 %v4177
      %4316 = vmatmul.bf16.gmra.mxu0 %v4230
      %v4317 = vpop.f32.mrf.mxu0
      %v4318 = vadd.f32 0.0, %v4317
      %v4319 = vpop.f32.mrf.mxu0
      %4320 = vdwg.mxu0
      %4321 = vmatpush.bf16.msra.mxu0 0
      %4322 = vmatpush.bf16.msra.mxu0 0
      %4323 = vmatpush.bf16.msra.mxu0 0
      %4324 = vmatpush.bf16.msra.mxu0 0
      %4325 = vmatpush.bf16.msra.mxu0 %v4248
      %4326 = vmatpush.bf16.msra.mxu0 %v4194
      %4327 = vmatpush.bf16.msra.mxu0 %v4186
      %4328 = vmatpush.bf16.msra.mxu0 %v4178
      %4329 = vmatmul.bf16.gmra.mxu0 %v4230
      %v4330 = vpop.f32.mrf.mxu0
      %v4331 = vadd.f32 0.0, %v4330
      %v4332 = vpop.f32.mrf.mxu0
      %4333 = vdwg.mxu0
      %4334 = vmatpush.bf16.msra.mxu0 0
      %4335 = vmatpush.bf16.msra.mxu0 0
      %4336 = vmatpush.bf16.msra.mxu0 0
      %4337 = vmatpush.bf16.msra.mxu0 0
      %4338 = vmatpush.bf16.msra.mxu0 %v4251
      %4339 = vmatpush.bf16.msra.mxu0 %v4195
      %4340 = vmatpush.bf16.msra.mxu0 %v4187
      %4341 = vmatpush.bf16.msra.mxu0 %v4179
      %4342 = vmatmul.bf16.gmra.mxu0 %v4230
      %v4343 = vpop.f32.mrf.mxu0
      %v4344 = vadd.f32 0.0, %v4343
      %v4345 = vpop.f32.mrf.mxu0
      %4346 = vdwg.mxu0
      %4347 = vmatpush.bf16.msra.mxu0 0
      %4348 = vmatpush.bf16.msra.mxu0 0
      %4349 = vmatpush.bf16.msra.mxu0 0
      %4350 = vmatpush.bf16.msra.mxu0 0
      %4351 = vmatpush.bf16.msra.mxu0 %v4254
      %4352 = vmatpush.bf16.msra.mxu0 %v4196
      %4353 = vmatpush.bf16.msra.mxu0 %v4188
      %4354 = vmatpush.bf16.msra.mxu0 %v4180
      %4355 = vmatmul.bf16.gmra.mxu0 %v4230
      %v4356 = vpop.f32.mrf.mxu0
      %v4357 = vadd.f32 0.0, %v4356
      %v4358 = vpop.f32.mrf.mxu0
      %4359 = vdwg.mxu0
      %v4360 = vadd.f32 %v4051, %v4266
      %v4361 = vadd.f32 %v4052, %v4279
      %v4362 = vadd.f32 %v4053, %v4292
      %v4363 = vadd.f32 %v4054, %v4305
      %v4364 = vadd.f32 %v4055, %v4318
      %v4365 = vadd.f32 %v4056, %v4331
      %v4366 = vadd.f32 %v4057, %v4344
      %v4367 = vadd.f32 %v4058, %v4357
      %v4368 = vpack.c.bf16 %v1300, %v1300
      %s4369 = scalar_lea.vmem %s9, 1792
      %v4370 = vld [vmem:[%s4369] sm:$0xff]
      %v4371 = vld [vmem:[%s4369 + $0x8] sm:$0xff]
      %v4372 = vld [vmem:[%s4369 + $0x10] sm:$0xff]
      %v4373 = vld [vmem:[%s4369 + $0x18] sm:$0xff]
      %v4374 = vld [vmem:[%s4369 + $0x20] sm:$0xff]
      %v4375 = vld [vmem:[%s4369 + $0x28] sm:$0xff]
      %v4376 = vld [vmem:[%s4369 + $0x30] sm:$0xff]
      %v4377 = vld [vmem:[%s4369 + $0x38] sm:$0xff]
      %v4378 = vld [vmem:[%s4369 + $0x40] sm:$0xff]
      %v4379 = vld [vmem:[%s4369 + $0x48] sm:$0xff]
      %v4380 = vld [vmem:[%s4369 + $0x50] sm:$0xff]
      %v4381 = vld [vmem:[%s4369 + $0x58] sm:$0xff]
      %v4382 = vld [vmem:[%s4369 + $0x60] sm:$0xff]
      %v4383 = vld [vmem:[%s4369 + $0x68] sm:$0xff]
      %v4384 = vld [vmem:[%s4369 + $0x70] sm:$0xff]
      %v4385 = vld [vmem:[%s4369 + $0x78] sm:$0xff]
      %v4386 = vld [vmem:[%s4369 + $0x80] sm:$0xff]
      %v4387 = vld [vmem:[%s4369 + $0x88] sm:$0xff]
      %v4388 = vld [vmem:[%s4369 + $0x90] sm:$0xff]
      %v4389 = vld [vmem:[%s4369 + $0x98] sm:$0xff]
      %v4390 = vld [vmem:[%s4369 + $0xa0] sm:$0xff]
      %v4391 = vld [vmem:[%s4369 + $0xa8] sm:$0xff]
      %v4392 = vld [vmem:[%s4369 + $0xb0] sm:$0xff]
      %v4393 = vld [vmem:[%s4369 + $0xb8] sm:$0xff]
      %v4394 = vld [vmem:[%s4369 + $0xc0] sm:$0x11]
      %v4395 = vld [vmem:[%s4369 + $0xc8] sm:$0x11]
      %v4396 = vld [vmem:[%s4369 + $0xd0] sm:$0x11]
      %v4397 = vld [vmem:[%s4369 + $0xd8] sm:$0x11]
      %v4426 = vunpack.c.l.b16 %v4370
      %v4427 = vunpack.c.h.b16 %v4370
      %v4428 = vunpack.c.l.b16 %v4371
      %v4429 = vunpack.c.h.b16 %v4371
      %v4430 = vunpack.c.l.b16 %v4372
      %v4431 = vunpack.c.h.b16 %v4372
      %v4432 = vunpack.c.l.b16 %v4373
      %v4433 = vunpack.c.h.b16 %v4373
      %v4434 = vunpack.c.l.b16 %v4374
      %v4435 = vunpack.c.h.b16 %v4374
      %v4436 = vunpack.c.l.b16 %v4375
      %v4437 = vunpack.c.h.b16 %v4375
      %v4438 = vunpack.c.l.b16 %v4376
      %v4439 = vunpack.c.h.b16 %v4376
      %v4440 = vunpack.c.l.b16 %v4377
      %v4441 = vunpack.c.h.b16 %v4377
      %v4442 = vunpack.c.l.b16 %v4378
      %v4443 = vunpack.c.h.b16 %v4378
      %v4444 = vunpack.c.l.b16 %v4379
      %v4445 = vunpack.c.h.b16 %v4379
      %v4446 = vunpack.c.l.b16 %v4380
      %v4447 = vunpack.c.h.b16 %v4380
      %v4448 = vunpack.c.l.b16 %v4381
      %v4449 = vunpack.c.h.b16 %v4381
      %v4450 = vunpack.c.l.b16 %v4382
      %v4451 = vunpack.c.h.b16 %v4382
      %v4452 = vunpack.c.l.b16 %v4383
      %v4453 = vunpack.c.h.b16 %v4383
      %v4454 = vunpack.c.l.b16 %v4384
      %v4455 = vunpack.c.h.b16 %v4384
      %v4456 = vunpack.c.l.b16 %v4385
      %v4457 = vunpack.c.h.b16 %v4385
      %v4458 = vunpack.c.l.b16 %v4386
      %v4459 = vunpack.c.h.b16 %v4386
      %v4460 = vunpack.c.l.b16 %v4387
      %v4461 = vunpack.c.h.b16 %v4387
      %v4462 = vunpack.c.l.b16 %v4388
      %v4463 = vunpack.c.h.b16 %v4388
      %v4464 = vunpack.c.l.b16 %v4389
      %v4465 = vunpack.c.h.b16 %v4389
      %v4466 = vunpack.c.l.b16 %v4390
      %v4467 = vunpack.c.h.b16 %v4390
      %v4468 = vunpack.c.l.b16 %v4391
      %v4469 = vunpack.c.h.b16 %v4391
      %v4470 = vunpack.c.l.b16 %v4392
      %v4471 = vunpack.c.h.b16 %v4392
      %v4472 = vunpack.c.l.b16 %v4393
      %v4473 = vunpack.c.h.b16 %v4393
      %v4474 = vunpack.c.l.b16 %v4394
      %v4475 = vunpack.c.h.b16 %v4394
      %v4476 = vunpack.c.l.b16 %v4395
      %v4477 = vunpack.c.h.b16 %v4395
      %v4478 = vunpack.c.l.b16 %v4396
      %v4479 = vunpack.c.h.b16 %v4396
      %v4480 = vunpack.c.l.b16 %v4397
      %v4481 = vunpack.c.h.b16 %v4397
      %v4482 = vpack.c.b16 %v4434, %v4426
      %v4483 = vpack.c.b16 %v4435, %v4427
      %v4484 = vpack.c.b16 %v4436, %v4428
      %v4485 = vpack.c.b16 %v4437, %v4429
      %v4486 = vpack.c.b16 %v4438, %v4430
      %v4487 = vpack.c.b16 %v4439, %v4431
      %v4488 = vpack.c.b16 %v4440, %v4432
      %v4489 = vpack.c.b16 %v4441, %v4433
      %v4490 = vpack.c.b16 %v4450, %v4442
      %v4491 = vpack.c.b16 %v4451, %v4443
      %v4492 = vpack.c.b16 %v4452, %v4444
      %v4493 = vpack.c.b16 %v4453, %v4445
      %v4494 = vpack.c.b16 %v4454, %v4446
      %v4495 = vpack.c.b16 %v4455, %v4447
      %v4496 = vpack.c.b16 %v4456, %v4448
      %v4497 = vpack.c.b16 %v4457, %v4449
      %v4498 = vpack.c.b16 %v4466, %v4458
      %v4499 = vpack.c.b16 %v4467, %v4459
      %v4500 = vpack.c.b16 %v4468, %v4460
      %v4501 = vpack.c.b16 %v4469, %v4461
      %v4502 = vpack.c.b16 %v4470, %v4462
      %v4503 = vpack.c.b16 %v4471, %v4463
      %v4504 = vpack.c.b16 %v4472, %v4464
      %v4505 = vpack.c.b16 %v4473, %v4465
      %v4506 = vpack.c.b16 %v4474, %v4474
      %v4507 = vpack.c.b16 %v4475, %v4475
      %v4508 = vpack.c.b16 %v4476, %v4476
      %v4509 = vpack.c.b16 %v4477, %v4477
      %v4510 = vpack.c.b16 %v4478, %v4478
      %v4511 = vpack.c.b16 %v4479, %v4479
      %v4512 = vpack.c.b16 %v4480, %v4480
      %v4513 = vpack.c.b16 %v4481, %v4481
      %v4539 = vsel %vm2108, %v4368, 0
      %v4542 = vand.u32 %v4506, %v2114
      %v4545 = vand.u32 %v4507, %v2114
      %v4548 = vand.u32 %v4508, %v2114
      %v4551 = vand.u32 %v4509, %v2114
      %v4554 = vand.u32 %v4510, %v2114
      %v4557 = vand.u32 %v4511, %v2114
      %v4560 = vand.u32 %v4512, %v2114
      %v4563 = vand.u32 %v4513, %v2114
      %4565 = vmatpush.bf16.msra.mxu0 0
      %4566 = vmatpush.bf16.msra.mxu0 0
      %4567 = vmatpush.bf16.msra.mxu0 0
      %4568 = vmatpush.bf16.msra.mxu0 0
      %4569 = vmatpush.bf16.msra.mxu0 %v4542
      %4570 = vmatpush.bf16.msra.mxu0 %v4498
      %4571 = vmatpush.bf16.msra.mxu0 %v4490
      %4572 = vmatpush.bf16.msra.mxu0 %v4482
      %4573 = vmatmul.bf16.gmra.mxu0 %v4539
      %v4574 = vpop.f32.mrf.mxu0
      %v4575 = vadd.f32 0.0, %v4574
      %v4576 = vpop.f32.mrf.mxu0
      %4577 = vdwg.mxu0
      %4578 = vmatpush.bf16.msra.mxu0 0
      %4579 = vmatpush.bf16.msra.mxu0 0
      %4580 = vmatpush.bf16.msra.mxu0 0
      %4581 = vmatpush.bf16.msra.mxu0 0
      %4582 = vmatpush.bf16.msra.mxu0 %v4545
      %4583 = vmatpush.bf16.msra.mxu0 %v4499
      %4584 = vmatpush.bf16.msra.mxu0 %v4491
      %4585 = vmatpush.bf16.msra.mxu0 %v4483
      %4586 = vmatmul.bf16.gmra.mxu0 %v4539
      %v4587 = vpop.f32.mrf.mxu0
      %v4588 = vadd.f32 0.0, %v4587
      %v4589 = vpop.f32.mrf.mxu0
      %4590 = vdwg.mxu0
      %4591 = vmatpush.bf16.msra.mxu0 0
      %4592 = vmatpush.bf16.msra.mxu0 0
      %4593 = vmatpush.bf16.msra.mxu0 0
      %4594 = vmatpush.bf16.msra.mxu0 0
      %4595 = vmatpush.bf16.msra.mxu0 %v4548
      %4596 = vmatpush.bf16.msra.mxu0 %v4500
      %4597 = vmatpush.bf16.msra.mxu0 %v4492
      %4598 = vmatpush.bf16.msra.mxu0 %v4484
      %4599 = vmatmul.bf16.gmra.mxu0 %v4539
      %v4600 = vpop.f32.mrf.mxu0
      %v4601 = vadd.f32 0.0, %v4600
      %v4602 = vpop.f32.mrf.mxu0
      %4603 = vdwg.mxu0
      %4604 = vmatpush.bf16.msra.mxu0 0
      %4605 = vmatpush.bf16.msra.mxu0 0
      %4606 = vmatpush.bf16.msra.mxu0 0
      %4607 = vmatpush.bf16.msra.mxu0 0
      %4608 = vmatpush.bf16.msra.mxu0 %v4551
      %4609 = vmatpush.bf16.msra.mxu0 %v4501
      %4610 = vmatpush.bf16.msra.mxu0 %v4493
      %4611 = vmatpush.bf16.msra.mxu0 %v4485
      %4612 = vmatmul.bf16.gmra.mxu0 %v4539
      %v4613 = vpop.f32.mrf.mxu0
      %v4614 = vadd.f32 0.0, %v4613
      %v4615 = vpop.f32.mrf.mxu0
      %4616 = vdwg.mxu0
      %4617 = vmatpush.bf16.msra.mxu0 0
      %4618 = vmatpush.bf16.msra.mxu0 0
      %4619 = vmatpush.bf16.msra.mxu0 0
      %4620 = vmatpush.bf16.msra.mxu0 0
      %4621 = vmatpush.bf16.msra.mxu0 %v4554
      %4622 = vmatpush.bf16.msra.mxu0 %v4502
      %4623 = vmatpush.bf16.msra.mxu0 %v4494
      %4624 = vmatpush.bf16.msra.mxu0 %v4486
      %4625 = vmatmul.bf16.gmra.mxu0 %v4539
      %v4626 = vpop.f32.mrf.mxu0
      %v4627 = vadd.f32 0.0, %v4626
      %v4628 = vpop.f32.mrf.mxu0
      %4629 = vdwg.mxu0
      %4630 = vmatpush.bf16.msra.mxu0 0
      %4631 = vmatpush.bf16.msra.mxu0 0
      %4632 = vmatpush.bf16.msra.mxu0 0
      %4633 = vmatpush.bf16.msra.mxu0 0
      %4634 = vmatpush.bf16.msra.mxu0 %v4557
      %4635 = vmatpush.bf16.msra.mxu0 %v4503
      %4636 = vmatpush.bf16.msra.mxu0 %v4495
      %4637 = vmatpush.bf16.msra.mxu0 %v4487
      %4638 = vmatmul.bf16.gmra.mxu0 %v4539
      %v4639 = vpop.f32.mrf.mxu0
      %v4640 = vadd.f32 0.0, %v4639
      %v4641 = vpop.f32.mrf.mxu0
      %4642 = vdwg.mxu0
      %4643 = vmatpush.bf16.msra.mxu0 0
      %4644 = vmatpush.bf16.msra.mxu0 0
      %4645 = vmatpush.bf16.msra.mxu0 0
      %4646 = vmatpush.bf16.msra.mxu0 0
      %4647 = vmatpush.bf16.msra.mxu0 %v4560
      %4648 = vmatpush.bf16.msra.mxu0 %v4504
      %4649 = vmatpush.bf16.msra.mxu0 %v4496
      %4650 = vmatpush.bf16.msra.mxu0 %v4488
      %4651 = vmatmul.bf16.gmra.mxu0 %v4539
      %v4652 = vpop.f32.mrf.mxu0
      %v4653 = vadd.f32 0.0, %v4652
      %v4654 = vpop.f32.mrf.mxu0
      %4655 = vdwg.mxu0
      %4656 = vmatpush.bf16.msra.mxu0 0
      %4657 = vmatpush.bf16.msra.mxu0 0
      %4658 = vmatpush.bf16.msra.mxu0 0
      %4659 = vmatpush.bf16.msra.mxu0 0
      %4660 = vmatpush.bf16.msra.mxu0 %v4563
      %4661 = vmatpush.bf16.msra.mxu0 %v4505
      %4662 = vmatpush.bf16.msra.mxu0 %v4497
      %4663 = vmatpush.bf16.msra.mxu0 %v4489
      %4664 = vmatmul.bf16.gmra.mxu0 %v4539
      %v4665 = vpop.f32.mrf.mxu0
      %v4666 = vadd.f32 0.0, %v4665
      %v4667 = vpop.f32.mrf.mxu0
      %4668 = vdwg.mxu0
      %v4669 = vadd.f32 %v4360, %v4575
      %v4670 = vadd.f32 %v4361, %v4588
      %v4671 = vadd.f32 %v4362, %v4601
      %v4672 = vadd.f32 %v4363, %v4614
      %v4673 = vadd.f32 %v4364, %v4627
      %v4674 = vadd.f32 %v4365, %v4640
      %v4675 = vadd.f32 %v4366, %v4653
      %v4676 = vadd.f32 %v4367, %v4666
      %s4677 = scalar_lea.vmem %s9, 2016
      %v4678 = vld [vmem:[%s4677] sm:$0xff]
      %v4679 = vld [vmem:[%s4677 + $0x8] sm:$0xff]
      %v4680 = vld [vmem:[%s4677 + $0x10] sm:$0xff]
      %v4681 = vld [vmem:[%s4677 + $0x18] sm:$0xff]
      %v4682 = vld [vmem:[%s4677 + $0x20] sm:$0xff]
      %v4683 = vld [vmem:[%s4677 + $0x28] sm:$0xff]
      %v4684 = vld [vmem:[%s4677 + $0x30] sm:$0xff]
      %v4685 = vld [vmem:[%s4677 + $0x38] sm:$0xff]
      %v4686 = vld [vmem:[%s4677 + $0x40] sm:$0xff]
      %v4687 = vld [vmem:[%s4677 + $0x48] sm:$0xff]
      %v4688 = vld [vmem:[%s4677 + $0x50] sm:$0xff]
      %v4689 = vld [vmem:[%s4677 + $0x58] sm:$0xff]
      %v4690 = vld [vmem:[%s4677 + $0x60] sm:$0xff]
      %v4691 = vld [vmem:[%s4677 + $0x68] sm:$0xff]
      %v4692 = vld [vmem:[%s4677 + $0x70] sm:$0xff]
      %v4693 = vld [vmem:[%s4677 + $0x78] sm:$0xff]
      %v4694 = vld [vmem:[%s4677 + $0x80] sm:$0xff]
      %v4695 = vld [vmem:[%s4677 + $0x88] sm:$0xff]
      %v4696 = vld [vmem:[%s4677 + $0x90] sm:$0xff]
      %v4697 = vld [vmem:[%s4677 + $0x98] sm:$0xff]
      %v4698 = vld [vmem:[%s4677 + $0xa0] sm:$0xff]
      %v4699 = vld [vmem:[%s4677 + $0xa8] sm:$0xff]
      %v4700 = vld [vmem:[%s4677 + $0xb0] sm:$0xff]
      %v4701 = vld [vmem:[%s4677 + $0xb8] sm:$0xff]
      %v4702 = vld [vmem:[%s4677 + $0xc0] sm:$0x11]
      %v4703 = vld [vmem:[%s4677 + $0xc8] sm:$0x11]
      %v4704 = vld [vmem:[%s4677 + $0xd0] sm:$0x11]
      %v4705 = vld [vmem:[%s4677 + $0xd8] sm:$0x11]
      %v4706 = vshrl.u32 %v4368, 16
      %v4736 = vunpack.c.l.b16 %v4678
      %v4737 = vunpack.c.h.b16 %v4678
      %v4738 = vunpack.c.l.b16 %v4679
      %v4739 = vunpack.c.h.b16 %v4679
      %v4740 = vunpack.c.l.b16 %v4680
      %v4741 = vunpack.c.h.b16 %v4680
      %v4742 = vunpack.c.l.b16 %v4681
      %v4743 = vunpack.c.h.b16 %v4681
      %v4744 = vunpack.c.l.b16 %v4682
      %v4745 = vunpack.c.h.b16 %v4682
      %v4746 = vunpack.c.l.b16 %v4683
      %v4747 = vunpack.c.h.b16 %v4683
      %v4748 = vunpack.c.l.b16 %v4684
      %v4749 = vunpack.c.h.b16 %v4684
      %v4750 = vunpack.c.l.b16 %v4685
      %v4751 = vunpack.c.h.b16 %v4685
      %v4752 = vunpack.c.l.b16 %v4686
      %v4753 = vunpack.c.h.b16 %v4686
      %v4754 = vunpack.c.l.b16 %v4687
      %v4755 = vunpack.c.h.b16 %v4687
      %v4756 = vunpack.c.l.b16 %v4688
      %v4757 = vunpack.c.h.b16 %v4688
      %v4758 = vunpack.c.l.b16 %v4689
      %v4759 = vunpack.c.h.b16 %v4689
      %v4760 = vunpack.c.l.b16 %v4690
      %v4761 = vunpack.c.h.b16 %v4690
      %v4762 = vunpack.c.l.b16 %v4691
      %v4763 = vunpack.c.h.b16 %v4691
      %v4764 = vunpack.c.l.b16 %v4692
      %v4765 = vunpack.c.h.b16 %v4692
      %v4766 = vunpack.c.l.b16 %v4693
      %v4767 = vunpack.c.h.b16 %v4693
      %v4768 = vunpack.c.l.b16 %v4694
      %v4769 = vunpack.c.h.b16 %v4694
      %v4770 = vunpack.c.l.b16 %v4695
      %v4771 = vunpack.c.h.b16 %v4695
      %v4772 = vunpack.c.l.b16 %v4696
      %v4773 = vunpack.c.h.b16 %v4696
      %v4774 = vunpack.c.l.b16 %v4697
      %v4775 = vunpack.c.h.b16 %v4697
      %v4776 = vunpack.c.l.b16 %v4698
      %v4777 = vunpack.c.h.b16 %v4698
      %v4778 = vunpack.c.l.b16 %v4699
      %v4779 = vunpack.c.h.b16 %v4699
      %v4780 = vunpack.c.l.b16 %v4700
      %v4781 = vunpack.c.h.b16 %v4700
      %v4782 = vunpack.c.l.b16 %v4701
      %v4783 = vunpack.c.h.b16 %v4701
      %v4784 = vunpack.c.l.b16 %v4702
      %v4785 = vunpack.c.h.b16 %v4702
      %v4786 = vunpack.c.l.b16 %v4703
      %v4787 = vunpack.c.h.b16 %v4703
      %v4788 = vunpack.c.l.b16 %v4704
      %v4789 = vunpack.c.h.b16 %v4704
      %v4790 = vunpack.c.l.b16 %v4705
      %v4791 = vunpack.c.h.b16 %v4705
      %v4792 = vpack.c.b16 %v4744, %v4736
      %v4793 = vpack.c.b16 %v4745, %v4737
      %v4794 = vpack.c.b16 %v4746, %v4738
      %v4795 = vpack.c.b16 %v4747, %v4739
      %v4796 = vpack.c.b16 %v4748, %v4740
      %v4797 = vpack.c.b16 %v4749, %v4741
      %v4798 = vpack.c.b16 %v4750, %v4742
      %v4799 = vpack.c.b16 %v4751, %v4743
      %v4800 = vpack.c.b16 %v4760, %v4752
      %v4801 = vpack.c.b16 %v4761, %v4753
      %v4802 = vpack.c.b16 %v4762, %v4754
      %v4803 = vpack.c.b16 %v4763, %v4755
      %v4804 = vpack.c.b16 %v4764, %v4756
      %v4805 = vpack.c.b16 %v4765, %v4757
      %v4806 = vpack.c.b16 %v4766, %v4758
      %v4807 = vpack.c.b16 %v4767, %v4759
      %v4808 = vpack.c.b16 %v4776, %v4768
      %v4809 = vpack.c.b16 %v4777, %v4769
      %v4810 = vpack.c.b16 %v4778, %v4770
      %v4811 = vpack.c.b16 %v4779, %v4771
      %v4812 = vpack.c.b16 %v4780, %v4772
      %v4813 = vpack.c.b16 %v4781, %v4773
      %v4814 = vpack.c.b16 %v4782, %v4774
      %v4815 = vpack.c.b16 %v4783, %v4775
      %v4816 = vpack.c.b16 %v4784, %v4784
      %v4817 = vpack.c.b16 %v4785, %v4785
      %v4818 = vpack.c.b16 %v4786, %v4786
      %v4819 = vpack.c.b16 %v4787, %v4787
      %v4820 = vpack.c.b16 %v4788, %v4788
      %v4821 = vpack.c.b16 %v4789, %v4789
      %v4822 = vpack.c.b16 %v4790, %v4790
      %v4823 = vpack.c.b16 %v4791, %v4791
      %v4849 = vsel %vm2108, %v4706, 0
      %v4852 = vand.u32 %v4816, %v2114
      %v4855 = vand.u32 %v4817, %v2114
      %v4858 = vand.u32 %v4818, %v2114
      %v4861 = vand.u32 %v4819, %v2114
      %v4864 = vand.u32 %v4820, %v2114
      %v4867 = vand.u32 %v4821, %v2114
      %v4870 = vand.u32 %v4822, %v2114
      %v4873 = vand.u32 %v4823, %v2114
      %4875 = vmatpush.bf16.msra.mxu0 0
      %4876 = vmatpush.bf16.msra.mxu0 0
      %4877 = vmatpush.bf16.msra.mxu0 0
      %4878 = vmatpush.bf16.msra.mxu0 0
      %4879 = vmatpush.bf16.msra.mxu0 %v4852
      %4880 = vmatpush.bf16.msra.mxu0 %v4808
      %4881 = vmatpush.bf16.msra.mxu0 %v4800
      %4882 = vmatpush.bf16.msra.mxu0 %v4792
      %4883 = vmatmul.bf16.gmra.mxu0 %v4849
      %v4884 = vpop.f32.mrf.mxu0
      %v4885 = vadd.f32 0.0, %v4884
      %v4886 = vpop.f32.mrf.mxu0
      %4887 = vdwg.mxu0
      %4888 = vmatpush.bf16.msra.mxu0 0
      %4889 = vmatpush.bf16.msra.mxu0 0
      %4890 = vmatpush.bf16.msra.mxu0 0
      %4891 = vmatpush.bf16.msra.mxu0 0
      %4892 = vmatpush.bf16.msra.mxu0 %v4855
      %4893 = vmatpush.bf16.msra.mxu0 %v4809
      %4894 = vmatpush.bf16.msra.mxu0 %v4801
      %4895 = vmatpush.bf16.msra.mxu0 %v4793
      %4896 = vmatmul.bf16.gmra.mxu0 %v4849
      %v4897 = vpop.f32.mrf.mxu0
      %v4898 = vadd.f32 0.0, %v4897
      %v4899 = vpop.f32.mrf.mxu0
      %4900 = vdwg.mxu0
      %4901 = vmatpush.bf16.msra.mxu0 0
      %4902 = vmatpush.bf16.msra.mxu0 0
      %4903 = vmatpush.bf16.msra.mxu0 0
      %4904 = vmatpush.bf16.msra.mxu0 0
      %4905 = vmatpush.bf16.msra.mxu0 %v4858
      %4906 = vmatpush.bf16.msra.mxu0 %v4810
      %4907 = vmatpush.bf16.msra.mxu0 %v4802
      %4908 = vmatpush.bf16.msra.mxu0 %v4794
      %4909 = vmatmul.bf16.gmra.mxu0 %v4849
      %v4910 = vpop.f32.mrf.mxu0
      %v4911 = vadd.f32 0.0, %v4910
      %v4912 = vpop.f32.mrf.mxu0
      %4913 = vdwg.mxu0
      %4914 = vmatpush.bf16.msra.mxu0 0
      %4915 = vmatpush.bf16.msra.mxu0 0
      %4916 = vmatpush.bf16.msra.mxu0 0
      %4917 = vmatpush.bf16.msra.mxu0 0
      %4918 = vmatpush.bf16.msra.mxu0 %v4861
      %4919 = vmatpush.bf16.msra.mxu0 %v4811
      %4920 = vmatpush.bf16.msra.mxu0 %v4803
      %4921 = vmatpush.bf16.msra.mxu0 %v4795
      %4922 = vmatmul.bf16.gmra.mxu0 %v4849
      %v4923 = vpop.f32.mrf.mxu0
      %v4924 = vadd.f32 0.0, %v4923
      %v4925 = vpop.f32.mrf.mxu0
      %4926 = vdwg.mxu0
      %4927 = vmatpush.bf16.msra.mxu0 0
      %4928 = vmatpush.bf16.msra.mxu0 0
      %4929 = vmatpush.bf16.msra.mxu0 0
      %4930 = vmatpush.bf16.msra.mxu0 0
      %4931 = vmatpush.bf16.msra.mxu0 %v4864
      %4932 = vmatpush.bf16.msra.mxu0 %v4812
      %4933 = vmatpush.bf16.msra.mxu0 %v4804
      %4934 = vmatpush.bf16.msra.mxu0 %v4796
      %4935 = vmatmul.bf16.gmra.mxu0 %v4849
      %v4936 = vpop.f32.mrf.mxu0
      %v4937 = vadd.f32 0.0, %v4936
      %v4938 = vpop.f32.mrf.mxu0
      %4939 = vdwg.mxu0
      %4940 = vmatpush.bf16.msra.mxu0 0
      %4941 = vmatpush.bf16.msra.mxu0 0
      %4942 = vmatpush.bf16.msra.mxu0 0
      %4943 = vmatpush.bf16.msra.mxu0 0
      %4944 = vmatpush.bf16.msra.mxu0 %v4867
      %4945 = vmatpush.bf16.msra.mxu0 %v4813
      %4946 = vmatpush.bf16.msra.mxu0 %v4805
      %4947 = vmatpush.bf16.msra.mxu0 %v4797
      %4948 = vmatmul.bf16.gmra.mxu0 %v4849
      %v4949 = vpop.f32.mrf.mxu0
      %v4950 = vadd.f32 0.0, %v4949
      %v4951 = vpop.f32.mrf.mxu0
      %4952 = vdwg.mxu0
      %4953 = vmatpush.bf16.msra.mxu0 0
      %4954 = vmatpush.bf16.msra.mxu0 0
      %4955 = vmatpush.bf16.msra.mxu0 0
      %4956 = vmatpush.bf16.msra.mxu0 0
      %4957 = vmatpush.bf16.msra.mxu0 %v4870
      %4958 = vmatpush.bf16.msra.mxu0 %v4814
      %4959 = vmatpush.bf16.msra.mxu0 %v4806
      %4960 = vmatpush.bf16.msra.mxu0 %v4798
      %4961 = vmatmul.bf16.gmra.mxu0 %v4849
      %v4962 = vpop.f32.mrf.mxu0
      %v4963 = vadd.f32 0.0, %v4962
      %v4964 = vpop.f32.mrf.mxu0
      %4965 = vdwg.mxu0
      %4966 = vmatpush.bf16.msra.mxu0 0
      %4967 = vmatpush.bf16.msra.mxu0 0
      %4968 = vmatpush.bf16.msra.mxu0 0
      %4969 = vmatpush.bf16.msra.mxu0 0
      %4970 = vmatpush.bf16.msra.mxu0 %v4873
      %4971 = vmatpush.bf16.msra.mxu0 %v4815
      %4972 = vmatpush.bf16.msra.mxu0 %v4807
      %4973 = vmatpush.bf16.msra.mxu0 %v4799
      %4974 = vmatmul.bf16.gmra.mxu0 %v4849
      %v4975 = vpop.f32.mrf.mxu0
      %v4976 = vadd.f32 0.0, %v4975
      %v4977 = vpop.f32.mrf.mxu0
      %4978 = vdwg.mxu0
      %v4979 = vadd.f32 %v4669, %v4885
      %v4980 = vadd.f32 %v4670, %v4898
      %v4981 = vadd.f32 %v4671, %v4911
      %v4982 = vadd.f32 %v4672, %v4924
      %v4983 = vadd.f32 %v4673, %v4937
      %v4984 = vadd.f32 %v4674, %v4950
      %v4985 = vadd.f32 %v4675, %v4963
      %v4986 = vadd.f32 %v4676, %v4976
      %s4987 = scalar_lea.vmem %s9, 2240
      %v4988 = vld [vmem:[%s4987] sm:$0xff]
      %v4989 = vld [vmem:[%s4987 + $0x8] sm:$0xff]
      %v4990 = vld [vmem:[%s4987 + $0x10] sm:$0xff]
      %v4991 = vld [vmem:[%s4987 + $0x18] sm:$0xff]
      %v4992 = vld [vmem:[%s4987 + $0x20] sm:$0xff]
      %v4993 = vld [vmem:[%s4987 + $0x28] sm:$0xff]
      %v4994 = vld [vmem:[%s4987 + $0x30] sm:$0xff]
      %v4995 = vld [vmem:[%s4987 + $0x38] sm:$0xff]
      %v4996 = vld [vmem:[%s4987 + $0x40] sm:$0xff]
      %v4997 = vld [vmem:[%s4987 + $0x48] sm:$0xff]
      %v4998 = vld [vmem:[%s4987 + $0x50] sm:$0xff]
      %v4999 = vld [vmem:[%s4987 + $0x58] sm:$0xff]
      %v5000 = vld [vmem:[%s4987 + $0x60] sm:$0xff]
      %v5001 = vld [vmem:[%s4987 + $0x68] sm:$0xff]
      %v5002 = vld [vmem:[%s4987 + $0x70] sm:$0xff]
      %v5003 = vld [vmem:[%s4987 + $0x78] sm:$0xff]
      %v5004 = vld [vmem:[%s4987 + $0x80] sm:$0xff]
      %v5005 = vld [vmem:[%s4987 + $0x88] sm:$0xff]
      %v5006 = vld [vmem:[%s4987 + $0x90] sm:$0xff]
      %v5007 = vld [vmem:[%s4987 + $0x98] sm:$0xff]
      %v5008 = vld [vmem:[%s4987 + $0xa0] sm:$0xff]
      %v5009 = vld [vmem:[%s4987 + $0xa8] sm:$0xff]
      %v5010 = vld [vmem:[%s4987 + $0xb0] sm:$0xff]
      %v5011 = vld [vmem:[%s4987 + $0xb8] sm:$0xff]
      %v5012 = vld [vmem:[%s4987 + $0xc0] sm:$0x11]
      %v5013 = vld [vmem:[%s4987 + $0xc8] sm:$0x11]
      %v5014 = vld [vmem:[%s4987 + $0xd0] sm:$0x11]
      %v5015 = vld [vmem:[%s4987 + $0xd8] sm:$0x11]
      %v5017 = vrot.slane %v4368, 1
      %v5046 = vunpack.c.l.b16 %v4988
      %v5047 = vunpack.c.h.b16 %v4988
      %v5048 = vunpack.c.l.b16 %v4989
      %v5049 = vunpack.c.h.b16 %v4989
      %v5050 = vunpack.c.l.b16 %v4990
      %v5051 = vunpack.c.h.b16 %v4990
      %v5052 = vunpack.c.l.b16 %v4991
      %v5053 = vunpack.c.h.b16 %v4991
      %v5054 = vunpack.c.l.b16 %v4992
      %v5055 = vunpack.c.h.b16 %v4992
      %v5056 = vunpack.c.l.b16 %v4993
      %v5057 = vunpack.c.h.b16 %v4993
      %v5058 = vunpack.c.l.b16 %v4994
      %v5059 = vunpack.c.h.b16 %v4994
      %v5060 = vunpack.c.l.b16 %v4995
      %v5061 = vunpack.c.h.b16 %v4995
      %v5062 = vunpack.c.l.b16 %v4996
      %v5063 = vunpack.c.h.b16 %v4996
      %v5064 = vunpack.c.l.b16 %v4997
      %v5065 = vunpack.c.h.b16 %v4997
      %v5066 = vunpack.c.l.b16 %v4998
      %v5067 = vunpack.c.h.b16 %v4998
      %v5068 = vunpack.c.l.b16 %v4999
      %v5069 = vunpack.c.h.b16 %v4999
      %v5070 = vunpack.c.l.b16 %v5000
      %v5071 = vunpack.c.h.b16 %v5000
      %v5072 = vunpack.c.l.b16 %v5001
      %v5073 = vunpack.c.h.b16 %v5001
      %v5074 = vunpack.c.l.b16 %v5002
      %v5075 = vunpack.c.h.b16 %v5002
      %v5076 = vunpack.c.l.b16 %v5003
      %v5077 = vunpack.c.h.b16 %v5003
      %v5078 = vunpack.c.l.b16 %v5004
      %v5079 = vunpack.c.h.b16 %v5004
      %v5080 = vunpack.c.l.b16 %v5005
      %v5081 = vunpack.c.h.b16 %v5005
      %v5082 = vunpack.c.l.b16 %v5006
      %v5083 = vunpack.c.h.b16 %v5006
      %v5084 = vunpack.c.l.b16 %v5007
      %v5085 = vunpack.c.h.b16 %v5007
      %v5086 = vunpack.c.l.b16 %v5008
      %v5087 = vunpack.c.h.b16 %v5008
      %v5088 = vunpack.c.l.b16 %v5009
      %v5089 = vunpack.c.h.b16 %v5009
      %v5090 = vunpack.c.l.b16 %v5010
      %v5091 = vunpack.c.h.b16 %v5010
      %v5092 = vunpack.c.l.b16 %v5011
      %v5093 = vunpack.c.h.b16 %v5011
      %v5094 = vunpack.c.l.b16 %v5012
      %v5095 = vunpack.c.h.b16 %v5012
      %v5096 = vunpack.c.l.b16 %v5013
      %v5097 = vunpack.c.h.b16 %v5013
      %v5098 = vunpack.c.l.b16 %v5014
      %v5099 = vunpack.c.h.b16 %v5014
      %v5100 = vunpack.c.l.b16 %v5015
      %v5101 = vunpack.c.h.b16 %v5015
      %v5102 = vpack.c.b16 %v5054, %v5046
      %v5103 = vpack.c.b16 %v5055, %v5047
      %v5104 = vpack.c.b16 %v5056, %v5048
      %v5105 = vpack.c.b16 %v5057, %v5049
      %v5106 = vpack.c.b16 %v5058, %v5050
      %v5107 = vpack.c.b16 %v5059, %v5051
      %v5108 = vpack.c.b16 %v5060, %v5052
      %v5109 = vpack.c.b16 %v5061, %v5053
      %v5110 = vpack.c.b16 %v5070, %v5062
      %v5111 = vpack.c.b16 %v5071, %v5063
      %v5112 = vpack.c.b16 %v5072, %v5064
      %v5113 = vpack.c.b16 %v5073, %v5065
      %v5114 = vpack.c.b16 %v5074, %v5066
      %v5115 = vpack.c.b16 %v5075, %v5067
      %v5116 = vpack.c.b16 %v5076, %v5068
      %v5117 = vpack.c.b16 %v5077, %v5069
      %v5118 = vpack.c.b16 %v5086, %v5078
      %v5119 = vpack.c.b16 %v5087, %v5079
      %v5120 = vpack.c.b16 %v5088, %v5080
      %v5121 = vpack.c.b16 %v5089, %v5081
      %v5122 = vpack.c.b16 %v5090, %v5082
      %v5123 = vpack.c.b16 %v5091, %v5083
      %v5124 = vpack.c.b16 %v5092, %v5084
      %v5125 = vpack.c.b16 %v5093, %v5085
      %v5126 = vpack.c.b16 %v5094, %v5094
      %v5127 = vpack.c.b16 %v5095, %v5095
      %v5128 = vpack.c.b16 %v5096, %v5096
      %v5129 = vpack.c.b16 %v5097, %v5097
      %v5130 = vpack.c.b16 %v5098, %v5098
      %v5131 = vpack.c.b16 %v5099, %v5099
      %v5132 = vpack.c.b16 %v5100, %v5100
      %v5133 = vpack.c.b16 %v5101, %v5101
      %v5159 = vsel %vm2108, %v5017, 0
      %v5162 = vand.u32 %v5126, %v2114
      %v5165 = vand.u32 %v5127, %v2114
      %v5168 = vand.u32 %v5128, %v2114
      %v5171 = vand.u32 %v5129, %v2114
      %v5174 = vand.u32 %v5130, %v2114
      %v5177 = vand.u32 %v5131, %v2114
      %v5180 = vand.u32 %v5132, %v2114
      %v5183 = vand.u32 %v5133, %v2114
      %5185 = vmatpush.bf16.msra.mxu0 0
      %5186 = vmatpush.bf16.msra.mxu0 0
      %5187 = vmatpush.bf16.msra.mxu0 0
      %5188 = vmatpush.bf16.msra.mxu0 0
      %5189 = vmatpush.bf16.msra.mxu0 %v5162
      %5190 = vmatpush.bf16.msra.mxu0 %v5118
      %5191 = vmatpush.bf16.msra.mxu0 %v5110
      %5192 = vmatpush.bf16.msra.mxu0 %v5102
      %5193 = vmatmul.bf16.gmra.mxu0 %v5159
      %v5194 = vpop.f32.mrf.mxu0
      %v5195 = vadd.f32 0.0, %v5194
      %v5196 = vpop.f32.mrf.mxu0
      %5197 = vdwg.mxu0
      %5198 = vmatpush.bf16.msra.mxu0 0
      %5199 = vmatpush.bf16.msra.mxu0 0
      %5200 = vmatpush.bf16.msra.mxu0 0
      %5201 = vmatpush.bf16.msra.mxu0 0
      %5202 = vmatpush.bf16.msra.mxu0 %v5165
      %5203 = vmatpush.bf16.msra.mxu0 %v5119
      %5204 = vmatpush.bf16.msra.mxu0 %v5111
      %5205 = vmatpush.bf16.msra.mxu0 %v5103
      %5206 = vmatmul.bf16.gmra.mxu0 %v5159
      %v5207 = vpop.f32.mrf.mxu0
      %v5208 = vadd.f32 0.0, %v5207
      %v5209 = vpop.f32.mrf.mxu0
      %5210 = vdwg.mxu0
      %5211 = vmatpush.bf16.msra.mxu0 0
      %5212 = vmatpush.bf16.msra.mxu0 0
      %5213 = vmatpush.bf16.msra.mxu0 0
      %5214 = vmatpush.bf16.msra.mxu0 0
      %5215 = vmatpush.bf16.msra.mxu0 %v5168
      %5216 = vmatpush.bf16.msra.mxu0 %v5120
      %5217 = vmatpush.bf16.msra.mxu0 %v5112
      %5218 = vmatpush.bf16.msra.mxu0 %v5104
      %5219 = vmatmul.bf16.gmra.mxu0 %v5159
      %v5220 = vpop.f32.mrf.mxu0
      %v5221 = vadd.f32 0.0, %v5220
      %v5222 = vpop.f32.mrf.mxu0
      %5223 = vdwg.mxu0
      %5224 = vmatpush.bf16.msra.mxu0 0
      %5225 = vmatpush.bf16.msra.mxu0 0
      %5226 = vmatpush.bf16.msra.mxu0 0
      %5227 = vmatpush.bf16.msra.mxu0 0
      %5228 = vmatpush.bf16.msra.mxu0 %v5171
      %5229 = vmatpush.bf16.msra.mxu0 %v5121
      %5230 = vmatpush.bf16.msra.mxu0 %v5113
      %5231 = vmatpush.bf16.msra.mxu0 %v5105
      %5232 = vmatmul.bf16.gmra.mxu0 %v5159
      %v5233 = vpop.f32.mrf.mxu0
      %v5234 = vadd.f32 0.0, %v5233
      %v5235 = vpop.f32.mrf.mxu0
      %5236 = vdwg.mxu0
      %5237 = vmatpush.bf16.msra.mxu0 0
      %5238 = vmatpush.bf16.msra.mxu0 0
      %5239 = vmatpush.bf16.msra.mxu0 0
      %5240 = vmatpush.bf16.msra.mxu0 0
      %5241 = vmatpush.bf16.msra.mxu0 %v5174
      %5242 = vmatpush.bf16.msra.mxu0 %v5122
      %5243 = vmatpush.bf16.msra.mxu0 %v5114
      %5244 = vmatpush.bf16.msra.mxu0 %v5106
      %5245 = vmatmul.bf16.gmra.mxu0 %v5159
      %v5246 = vpop.f32.mrf.mxu0
      %v5247 = vadd.f32 0.0, %v5246
      %v5248 = vpop.f32.mrf.mxu0
      %5249 = vdwg.mxu0
      %5250 = vmatpush.bf16.msra.mxu0 0
      %5251 = vmatpush.bf16.msra.mxu0 0
      %5252 = vmatpush.bf16.msra.mxu0 0
      %5253 = vmatpush.bf16.msra.mxu0 0
      %5254 = vmatpush.bf16.msra.mxu0 %v5177
      %5255 = vmatpush.bf16.msra.mxu0 %v5123
      %5256 = vmatpush.bf16.msra.mxu0 %v5115
      %5257 = vmatpush.bf16.msra.mxu0 %v5107
      %5258 = vmatmul.bf16.gmra.mxu0 %v5159
      %v5259 = vpop.f32.mrf.mxu0
      %v5260 = vadd.f32 0.0, %v5259
      %v5261 = vpop.f32.mrf.mxu0
      %5262 = vdwg.mxu0
      %5263 = vmatpush.bf16.msra.mxu0 0
      %5264 = vmatpush.bf16.msra.mxu0 0
      %5265 = vmatpush.bf16.msra.mxu0 0
      %5266 = vmatpush.bf16.msra.mxu0 0
      %5267 = vmatpush.bf16.msra.mxu0 %v5180
      %5268 = vmatpush.bf16.msra.mxu0 %v5124
      %5269 = vmatpush.bf16.msra.mxu0 %v5116
      %5270 = vmatpush.bf16.msra.mxu0 %v5108
      %5271 = vmatmul.bf16.gmra.mxu0 %v5159
      %v5272 = vpop.f32.mrf.mxu0
      %v5273 = vadd.f32 0.0, %v5272
      %v5274 = vpop.f32.mrf.mxu0
      %5275 = vdwg.mxu0
      %5276 = vmatpush.bf16.msra.mxu0 0
      %5277 = vmatpush.bf16.msra.mxu0 0
      %5278 = vmatpush.bf16.msra.mxu0 0
      %5279 = vmatpush.bf16.msra.mxu0 0
      %5280 = vmatpush.bf16.msra.mxu0 %v5183
      %5281 = vmatpush.bf16.msra.mxu0 %v5125
      %5282 = vmatpush.bf16.msra.mxu0 %v5117
      %5283 = vmatpush.bf16.msra.mxu0 %v5109
      %5284 = vmatmul.bf16.gmra.mxu0 %v5159
      %v5285 = vpop.f32.mrf.mxu0
      %v5286 = vadd.f32 0.0, %v5285
      %v5287 = vpop.f32.mrf.mxu0
      %5288 = vdwg.mxu0
      %v5289 = vadd.f32 %v4979, %v5195
      %v5290 = vadd.f32 %v4980, %v5208
      %v5291 = vadd.f32 %v4981, %v5221
      %v5292 = vadd.f32 %v4982, %v5234
      %v5293 = vadd.f32 %v4983, %v5247
      %v5294 = vadd.f32 %v4984, %v5260
      %v5295 = vadd.f32 %v4985, %v5273
      %v5296 = vadd.f32 %v4986, %v5286
      %s5297 = scalar_lea.vmem %s9, 2464
      %v5298 = vld [vmem:[%s5297] sm:$0xff]
      %v5299 = vld [vmem:[%s5297 + $0x8] sm:$0xff]
      %v5300 = vld [vmem:[%s5297 + $0x10] sm:$0xff]
      %v5301 = vld [vmem:[%s5297 + $0x18] sm:$0xff]
      %v5302 = vld [vmem:[%s5297 + $0x20] sm:$0xff]
      %v5303 = vld [vmem:[%s5297 + $0x28] sm:$0xff]
      %v5304 = vld [vmem:[%s5297 + $0x30] sm:$0xff]
      %v5305 = vld [vmem:[%s5297 + $0x38] sm:$0xff]
      %v5306 = vld [vmem:[%s5297 + $0x40] sm:$0xff]
      %v5307 = vld [vmem:[%s5297 + $0x48] sm:$0xff]
      %v5308 = vld [vmem:[%s5297 + $0x50] sm:$0xff]
      %v5309 = vld [vmem:[%s5297 + $0x58] sm:$0xff]
      %v5310 = vld [vmem:[%s5297 + $0x60] sm:$0xff]
      %v5311 = vld [vmem:[%s5297 + $0x68] sm:$0xff]
      %v5312 = vld [vmem:[%s5297 + $0x70] sm:$0xff]
      %v5313 = vld [vmem:[%s5297 + $0x78] sm:$0xff]
      %v5314 = vld [vmem:[%s5297 + $0x80] sm:$0xff]
      %v5315 = vld [vmem:[%s5297 + $0x88] sm:$0xff]
      %v5316 = vld [vmem:[%s5297 + $0x90] sm:$0xff]
      %v5317 = vld [vmem:[%s5297 + $0x98] sm:$0xff]
      %v5318 = vld [vmem:[%s5297 + $0xa0] sm:$0xff]
      %v5319 = vld [vmem:[%s5297 + $0xa8] sm:$0xff]
      %v5320 = vld [vmem:[%s5297 + $0xb0] sm:$0xff]
      %v5321 = vld [vmem:[%s5297 + $0xb8] sm:$0xff]
      %v5322 = vld [vmem:[%s5297 + $0xc0] sm:$0x11]
      %v5323 = vld [vmem:[%s5297 + $0xc8] sm:$0x11]
      %v5324 = vld [vmem:[%s5297 + $0xd0] sm:$0x11]
      %v5325 = vld [vmem:[%s5297 + $0xd8] sm:$0x11]
      %v5326 = vrot.slane %v4706, 1
      %v5355 = vunpack.c.l.b16 %v5298
      %v5356 = vunpack.c.h.b16 %v5298
      %v5357 = vunpack.c.l.b16 %v5299
      %v5358 = vunpack.c.h.b16 %v5299
      %v5359 = vunpack.c.l.b16 %v5300
      %v5360 = vunpack.c.h.b16 %v5300
      %v5361 = vunpack.c.l.b16 %v5301
      %v5362 = vunpack.c.h.b16 %v5301
      %v5363 = vunpack.c.l.b16 %v5302
      %v5364 = vunpack.c.h.b16 %v5302
      %v5365 = vunpack.c.l.b16 %v5303
      %v5366 = vunpack.c.h.b16 %v5303
      %v5367 = vunpack.c.l.b16 %v5304
      %v5368 = vunpack.c.h.b16 %v5304
      %v5369 = vunpack.c.l.b16 %v5305
      %v5370 = vunpack.c.h.b16 %v5305
      %v5371 = vunpack.c.l.b16 %v5306
      %v5372 = vunpack.c.h.b16 %v5306
      %v5373 = vunpack.c.l.b16 %v5307
      %v5374 = vunpack.c.h.b16 %v5307
      %v5375 = vunpack.c.l.b16 %v5308
      %v5376 = vunpack.c.h.b16 %v5308
      %v5377 = vunpack.c.l.b16 %v5309
      %v5378 = vunpack.c.h.b16 %v5309
      %v5379 = vunpack.c.l.b16 %v5310
      %v5380 = vunpack.c.h.b16 %v5310
      %v5381 = vunpack.c.l.b16 %v5311
      %v5382 = vunpack.c.h.b16 %v5311
      %v5383 = vunpack.c.l.b16 %v5312
      %v5384 = vunpack.c.h.b16 %v5312
      %v5385 = vunpack.c.l.b16 %v5313
      %v5386 = vunpack.c.h.b16 %v5313
      %v5387 = vunpack.c.l.b16 %v5314
      %v5388 = vunpack.c.h.b16 %v5314
      %v5389 = vunpack.c.l.b16 %v5315
      %v5390 = vunpack.c.h.b16 %v5315
      %v5391 = vunpack.c.l.b16 %v5316
      %v5392 = vunpack.c.h.b16 %v5316
      %v5393 = vunpack.c.l.b16 %v5317
      %v5394 = vunpack.c.h.b16 %v5317
      %v5395 = vunpack.c.l.b16 %v5318
      %v5396 = vunpack.c.h.b16 %v5318
      %v5397 = vunpack.c.l.b16 %v5319
      %v5398 = vunpack.c.h.b16 %v5319
      %v5399 = vunpack.c.l.b16 %v5320
      %v5400 = vunpack.c.h.b16 %v5320
      %v5401 = vunpack.c.l.b16 %v5321
      %v5402 = vunpack.c.h.b16 %v5321
      %v5403 = vunpack.c.l.b16 %v5322
      %v5404 = vunpack.c.h.b16 %v5322
      %v5405 = vunpack.c.l.b16 %v5323
      %v5406 = vunpack.c.h.b16 %v5323
      %v5407 = vunpack.c.l.b16 %v5324
      %v5408 = vunpack.c.h.b16 %v5324
      %v5409 = vunpack.c.l.b16 %v5325
      %v5410 = vunpack.c.h.b16 %v5325
      %v5411 = vpack.c.b16 %v5363, %v5355
      %v5412 = vpack.c.b16 %v5364, %v5356
      %v5413 = vpack.c.b16 %v5365, %v5357
      %v5414 = vpack.c.b16 %v5366, %v5358
      %v5415 = vpack.c.b16 %v5367, %v5359
      %v5416 = vpack.c.b16 %v5368, %v5360
      %v5417 = vpack.c.b16 %v5369, %v5361
      %v5418 = vpack.c.b16 %v5370, %v5362
      %v5419 = vpack.c.b16 %v5379, %v5371
      %v5420 = vpack.c.b16 %v5380, %v5372
      %v5421 = vpack.c.b16 %v5381, %v5373
      %v5422 = vpack.c.b16 %v5382, %v5374
      %v5423 = vpack.c.b16 %v5383, %v5375
      %v5424 = vpack.c.b16 %v5384, %v5376
      %v5425 = vpack.c.b16 %v5385, %v5377
      %v5426 = vpack.c.b16 %v5386, %v5378
      %v5427 = vpack.c.b16 %v5395, %v5387
      %v5428 = vpack.c.b16 %v5396, %v5388
      %v5429 = vpack.c.b16 %v5397, %v5389
      %v5430 = vpack.c.b16 %v5398, %v5390
      %v5431 = vpack.c.b16 %v5399, %v5391
      %v5432 = vpack.c.b16 %v5400, %v5392
      %v5433 = vpack.c.b16 %v5401, %v5393
      %v5434 = vpack.c.b16 %v5402, %v5394
      %v5435 = vpack.c.b16 %v5403, %v5403
      %v5436 = vpack.c.b16 %v5404, %v5404
      %v5437 = vpack.c.b16 %v5405, %v5405
      %v5438 = vpack.c.b16 %v5406, %v5406
      %v5439 = vpack.c.b16 %v5407, %v5407
      %v5440 = vpack.c.b16 %v5408, %v5408
      %v5441 = vpack.c.b16 %v5409, %v5409
      %v5442 = vpack.c.b16 %v5410, %v5410
      %v5468 = vsel %vm2108, %v5326, 0
      %v5471 = vand.u32 %v5435, %v2114
      %v5474 = vand.u32 %v5436, %v2114
      %v5477 = vand.u32 %v5437, %v2114
      %v5480 = vand.u32 %v5438, %v2114
      %v5483 = vand.u32 %v5439, %v2114
      %v5486 = vand.u32 %v5440, %v2114
      %v5489 = vand.u32 %v5441, %v2114
      %v5492 = vand.u32 %v5442, %v2114
      %5494 = vmatpush.bf16.msra.mxu0 0
      %5495 = vmatpush.bf16.msra.mxu0 0
      %5496 = vmatpush.bf16.msra.mxu0 0
      %5497 = vmatpush.bf16.msra.mxu0 0
      %5498 = vmatpush.bf16.msra.mxu0 %v5471
      %5499 = vmatpush.bf16.msra.mxu0 %v5427
      %5500 = vmatpush.bf16.msra.mxu0 %v5419
      %5501 = vmatpush.bf16.msra.mxu0 %v5411
      %5502 = vmatmul.bf16.gmra.mxu0 %v5468
      %v5503 = vpop.f32.mrf.mxu0
      %v5504 = vadd.f32 0.0, %v5503
      %v5505 = vpop.f32.mrf.mxu0
      %5506 = vdwg.mxu0
      %5507 = vmatpush.bf16.msra.mxu0 0
      %5508 = vmatpush.bf16.msra.mxu0 0
      %5509 = vmatpush.bf16.msra.mxu0 0
      %5510 = vmatpush.bf16.msra.mxu0 0
      %5511 = vmatpush.bf16.msra.mxu0 %v5474
      %5512 = vmatpush.bf16.msra.mxu0 %v5428
      %5513 = vmatpush.bf16.msra.mxu0 %v5420
      %5514 = vmatpush.bf16.msra.mxu0 %v5412
      %5515 = vmatmul.bf16.gmra.mxu0 %v5468
      %v5516 = vpop.f32.mrf.mxu0
      %v5517 = vadd.f32 0.0, %v5516
      %v5518 = vpop.f32.mrf.mxu0
      %5519 = vdwg.mxu0
      %5520 = vmatpush.bf16.msra.mxu0 0
      %5521 = vmatpush.bf16.msra.mxu0 0
      %5522 = vmatpush.bf16.msra.mxu0 0
      %5523 = vmatpush.bf16.msra.mxu0 0
      %5524 = vmatpush.bf16.msra.mxu0 %v5477
      %5525 = vmatpush.bf16.msra.mxu0 %v5429
      %5526 = vmatpush.bf16.msra.mxu0 %v5421
      %5527 = vmatpush.bf16.msra.mxu0 %v5413
      %5528 = vmatmul.bf16.gmra.mxu0 %v5468
      %v5529 = vpop.f32.mrf.mxu0
      %v5530 = vadd.f32 0.0, %v5529
      %v5531 = vpop.f32.mrf.mxu0
      %5532 = vdwg.mxu0
      %5533 = vmatpush.bf16.msra.mxu0 0
      %5534 = vmatpush.bf16.msra.mxu0 0
      %5535 = vmatpush.bf16.msra.mxu0 0
      %5536 = vmatpush.bf16.msra.mxu0 0
      %5537 = vmatpush.bf16.msra.mxu0 %v5480
      %5538 = vmatpush.bf16.msra.mxu0 %v5430
      %5539 = vmatpush.bf16.msra.mxu0 %v5422
      %5540 = vmatpush.bf16.msra.mxu0 %v5414
      %5541 = vmatmul.bf16.gmra.mxu0 %v5468
      %v5542 = vpop.f32.mrf.mxu0
      %v5543 = vadd.f32 0.0, %v5542
      %v5544 = vpop.f32.mrf.mxu0
      %5545 = vdwg.mxu0
      %5546 = vmatpush.bf16.msra.mxu0 0
      %5547 = vmatpush.bf16.msra.mxu0 0
      %5548 = vmatpush.bf16.msra.mxu0 0
      %5549 = vmatpush.bf16.msra.mxu0 0
      %5550 = vmatpush.bf16.msra.mxu0 %v5483
      %5551 = vmatpush.bf16.msra.mxu0 %v5431
      %5552 = vmatpush.bf16.msra.mxu0 %v5423
      %5553 = vmatpush.bf16.msra.mxu0 %v5415
      %5554 = vmatmul.bf16.gmra.mxu0 %v5468
      %v5555 = vpop.f32.mrf.mxu0
      %v5556 = vadd.f32 0.0, %v5555
      %v5557 = vpop.f32.mrf.mxu0
      %5558 = vdwg.mxu0
      %5559 = vmatpush.bf16.msra.mxu0 0
      %5560 = vmatpush.bf16.msra.mxu0 0
      %5561 = vmatpush.bf16.msra.mxu0 0
      %5562 = vmatpush.bf16.msra.mxu0 0
      %5563 = vmatpush.bf16.msra.mxu0 %v5486
      %5564 = vmatpush.bf16.msra.mxu0 %v5432
      %5565 = vmatpush.bf16.msra.mxu0 %v5424
      %5566 = vmatpush.bf16.msra.mxu0 %v5416
      %5567 = vmatmul.bf16.gmra.mxu0 %v5468
      %v5568 = vpop.f32.mrf.mxu0
      %v5569 = vadd.f32 0.0, %v5568
      %v5570 = vpop.f32.mrf.mxu0
      %5571 = vdwg.mxu0
      %5572 = vmatpush.bf16.msra.mxu0 0
      %5573 = vmatpush.bf16.msra.mxu0 0
      %5574 = vmatpush.bf16.msra.mxu0 0
      %5575 = vmatpush.bf16.msra.mxu0 0
      %5576 = vmatpush.bf16.msra.mxu0 %v5489
      %5577 = vmatpush.bf16.msra.mxu0 %v5433
      %5578 = vmatpush.bf16.msra.mxu0 %v5425
      %5579 = vmatpush.bf16.msra.mxu0 %v5417
      %5580 = vmatmul.bf16.gmra.mxu0 %v5468
      %v5581 = vpop.f32.mrf.mxu0
      %v5582 = vadd.f32 0.0, %v5581
      %v5583 = vpop.f32.mrf.mxu0
      %5584 = vdwg.mxu0
      %5585 = vmatpush.bf16.msra.mxu0 0
      %5586 = vmatpush.bf16.msra.mxu0 0
      %5587 = vmatpush.bf16.msra.mxu0 0
      %5588 = vmatpush.bf16.msra.mxu0 0
      %5589 = vmatpush.bf16.msra.mxu0 %v5492
      %5590 = vmatpush.bf16.msra.mxu0 %v5434
      %5591 = vmatpush.bf16.msra.mxu0 %v5426
      %5592 = vmatpush.bf16.msra.mxu0 %v5418
      %5593 = vmatmul.bf16.gmra.mxu0 %v5468
      %v5594 = vpop.f32.mrf.mxu0
      %v5595 = vadd.f32 0.0, %v5594
      %v5596 = vpop.f32.mrf.mxu0
      %5597 = vdwg.mxu0
      %v5598 = vadd.f32 %v5289, %v5504
      %v5599 = vadd.f32 %v5290, %v5517
      %v5600 = vadd.f32 %v5291, %v5530
      %v5601 = vadd.f32 %v5292, %v5543
      %v5602 = vadd.f32 %v5293, %v5556
      %v5603 = vadd.f32 %v5294, %v5569
      %v5604 = vadd.f32 %v5295, %v5582
      %v5605 = vadd.f32 %v5296, %v5595
      %s5606 = scalar_lea.vmem %s9, 2688
      %v5607 = vld [vmem:[%s5606] sm:$0xff]
      %v5608 = vld [vmem:[%s5606 + $0x8] sm:$0xff]
      %v5609 = vld [vmem:[%s5606 + $0x10] sm:$0xff]
      %v5610 = vld [vmem:[%s5606 + $0x18] sm:$0xff]
      %v5611 = vld [vmem:[%s5606 + $0x20] sm:$0xff]
      %v5612 = vld [vmem:[%s5606 + $0x28] sm:$0xff]
      %v5613 = vld [vmem:[%s5606 + $0x30] sm:$0xff]
      %v5614 = vld [vmem:[%s5606 + $0x38] sm:$0xff]
      %v5615 = vld [vmem:[%s5606 + $0x40] sm:$0xff]
      %v5616 = vld [vmem:[%s5606 + $0x48] sm:$0xff]
      %v5617 = vld [vmem:[%s5606 + $0x50] sm:$0xff]
      %v5618 = vld [vmem:[%s5606 + $0x58] sm:$0xff]
      %v5619 = vld [vmem:[%s5606 + $0x60] sm:$0xff]
      %v5620 = vld [vmem:[%s5606 + $0x68] sm:$0xff]
      %v5621 = vld [vmem:[%s5606 + $0x70] sm:$0xff]
      %v5622 = vld [vmem:[%s5606 + $0x78] sm:$0xff]
      %v5623 = vld [vmem:[%s5606 + $0x80] sm:$0xff]
      %v5624 = vld [vmem:[%s5606 + $0x88] sm:$0xff]
      %v5625 = vld [vmem:[%s5606 + $0x90] sm:$0xff]
      %v5626 = vld [vmem:[%s5606 + $0x98] sm:$0xff]
      %v5627 = vld [vmem:[%s5606 + $0xa0] sm:$0xff]
      %v5628 = vld [vmem:[%s5606 + $0xa8] sm:$0xff]
      %v5629 = vld [vmem:[%s5606 + $0xb0] sm:$0xff]
      %v5630 = vld [vmem:[%s5606 + $0xb8] sm:$0xff]
      %v5631 = vld [vmem:[%s5606 + $0xc0] sm:$0x11]
      %v5632 = vld [vmem:[%s5606 + $0xc8] sm:$0x11]
      %v5633 = vld [vmem:[%s5606 + $0xd0] sm:$0x11]
      %v5634 = vld [vmem:[%s5606 + $0xd8] sm:$0x11]
      %v5635 = vrot.slane %v4368, 2
      %v5664 = vunpack.c.l.b16 %v5607
      %v5665 = vunpack.c.h.b16 %v5607
      %v5666 = vunpack.c.l.b16 %v5608
      %v5667 = vunpack.c.h.b16 %v5608
      %v5668 = vunpack.c.l.b16 %v5609
      %v5669 = vunpack.c.h.b16 %v5609
      %v5670 = vunpack.c.l.b16 %v5610
      %v5671 = vunpack.c.h.b16 %v5610
      %v5672 = vunpack.c.l.b16 %v5611
      %v5673 = vunpack.c.h.b16 %v5611
      %v5674 = vunpack.c.l.b16 %v5612
      %v5675 = vunpack.c.h.b16 %v5612
      %v5676 = vunpack.c.l.b16 %v5613
      %v5677 = vunpack.c.h.b16 %v5613
      %v5678 = vunpack.c.l.b16 %v5614
      %v5679 = vunpack.c.h.b16 %v5614
      %v5680 = vunpack.c.l.b16 %v5615
      %v5681 = vunpack.c.h.b16 %v5615
      %v5682 = vunpack.c.l.b16 %v5616
      %v5683 = vunpack.c.h.b16 %v5616
      %v5684 = vunpack.c.l.b16 %v5617
      %v5685 = vunpack.c.h.b16 %v5617
      %v5686 = vunpack.c.l.b16 %v5618
      %v5687 = vunpack.c.h.b16 %v5618
      %v5688 = vunpack.c.l.b16 %v5619
      %v5689 = vunpack.c.h.b16 %v5619
      %v5690 = vunpack.c.l.b16 %v5620
      %v5691 = vunpack.c.h.b16 %v5620
      %v5692 = vunpack.c.l.b16 %v5621
      %v5693 = vunpack.c.h.b16 %v5621
      %v5694 = vunpack.c.l.b16 %v5622
      %v5695 = vunpack.c.h.b16 %v5622
      %v5696 = vunpack.c.l.b16 %v5623
      %v5697 = vunpack.c.h.b16 %v5623
      %v5698 = vunpack.c.l.b16 %v5624
      %v5699 = vunpack.c.h.b16 %v5624
      %v5700 = vunpack.c.l.b16 %v5625
      %v5701 = vunpack.c.h.b16 %v5625
      %v5702 = vunpack.c.l.b16 %v5626
      %v5703 = vunpack.c.h.b16 %v5626
      %v5704 = vunpack.c.l.b16 %v5627
      %v5705 = vunpack.c.h.b16 %v5627
      %v5706 = vunpack.c.l.b16 %v5628
      %v5707 = vunpack.c.h.b16 %v5628
      %v5708 = vunpack.c.l.b16 %v5629
      %v5709 = vunpack.c.h.b16 %v5629
      %v5710 = vunpack.c.l.b16 %v5630
      %v5711 = vunpack.c.h.b16 %v5630
      %v5712 = vunpack.c.l.b16 %v5631
      %v5713 = vunpack.c.h.b16 %v5631
      %v5714 = vunpack.c.l.b16 %v5632
      %v5715 = vunpack.c.h.b16 %v5632
      %v5716 = vunpack.c.l.b16 %v5633
      %v5717 = vunpack.c.h.b16 %v5633
      %v5718 = vunpack.c.l.b16 %v5634
      %v5719 = vunpack.c.h.b16 %v5634
      %v5720 = vpack.c.b16 %v5672, %v5664
      %v5721 = vpack.c.b16 %v5673, %v5665
      %v5722 = vpack.c.b16 %v5674, %v5666
      %v5723 = vpack.c.b16 %v5675, %v5667
      %v5724 = vpack.c.b16 %v5676, %v5668
      %v5725 = vpack.c.b16 %v5677, %v5669
      %v5726 = vpack.c.b16 %v5678, %v5670
      %v5727 = vpack.c.b16 %v5679, %v5671
      %v5728 = vpack.c.b16 %v5688, %v5680
      %v5729 = vpack.c.b16 %v5689, %v5681
      %v5730 = vpack.c.b16 %v5690, %v5682
      %v5731 = vpack.c.b16 %v5691, %v5683
      %v5732 = vpack.c.b16 %v5692, %v5684
      %v5733 = vpack.c.b16 %v5693, %v5685
      %v5734 = vpack.c.b16 %v5694, %v5686
      %v5735 = vpack.c.b16 %v5695, %v5687
      %v5736 = vpack.c.b16 %v5704, %v5696
      %v5737 = vpack.c.b16 %v5705, %v5697
      %v5738 = vpack.c.b16 %v5706, %v5698
      %v5739 = vpack.c.b16 %v5707, %v5699
      %v5740 = vpack.c.b16 %v5708, %v5700
      %v5741 = vpack.c.b16 %v5709, %v5701
      %v5742 = vpack.c.b16 %v5710, %v5702
      %v5743 = vpack.c.b16 %v5711, %v5703
      %v5744 = vpack.c.b16 %v5712, %v5712
      %v5745 = vpack.c.b16 %v5713, %v5713
      %v5746 = vpack.c.b16 %v5714, %v5714
      %v5747 = vpack.c.b16 %v5715, %v5715
      %v5748 = vpack.c.b16 %v5716, %v5716
      %v5749 = vpack.c.b16 %v5717, %v5717
      %v5750 = vpack.c.b16 %v5718, %v5718
      %v5751 = vpack.c.b16 %v5719, %v5719
      %v5777 = vsel %vm2108, %v5635, 0
      %v5780 = vand.u32 %v5744, %v2114
      %v5783 = vand.u32 %v5745, %v2114
      %v5786 = vand.u32 %v5746, %v2114
      %v5789 = vand.u32 %v5747, %v2114
      %v5792 = vand.u32 %v5748, %v2114
      %v5795 = vand.u32 %v5749, %v2114
      %v5798 = vand.u32 %v5750, %v2114
      %v5801 = vand.u32 %v5751, %v2114
      %5803 = vmatpush.bf16.msra.mxu0 0
      %5804 = vmatpush.bf16.msra.mxu0 0
      %5805 = vmatpush.bf16.msra.mxu0 0
      %5806 = vmatpush.bf16.msra.mxu0 0
      %5807 = vmatpush.bf16.msra.mxu0 %v5780
      %5808 = vmatpush.bf16.msra.mxu0 %v5736
      %5809 = vmatpush.bf16.msra.mxu0 %v5728
      %5810 = vmatpush.bf16.msra.mxu0 %v5720
      %5811 = vmatmul.bf16.gmra.mxu0 %v5777
      %v5812 = vpop.f32.mrf.mxu0
      %v5813 = vadd.f32 0.0, %v5812
      %v5814 = vpop.f32.mrf.mxu0
      %5815 = vdwg.mxu0
      %5816 = vmatpush.bf16.msra.mxu0 0
      %5817 = vmatpush.bf16.msra.mxu0 0
      %5818 = vmatpush.bf16.msra.mxu0 0
      %5819 = vmatpush.bf16.msra.mxu0 0
      %5820 = vmatpush.bf16.msra.mxu0 %v5783
      %5821 = vmatpush.bf16.msra.mxu0 %v5737
      %5822 = vmatpush.bf16.msra.mxu0 %v5729
      %5823 = vmatpush.bf16.msra.mxu0 %v5721
      %5824 = vmatmul.bf16.gmra.mxu0 %v5777
      %v5825 = vpop.f32.mrf.mxu0
      %v5826 = vadd.f32 0.0, %v5825
      %v5827 = vpop.f32.mrf.mxu0
      %5828 = vdwg.mxu0
      %5829 = vmatpush.bf16.msra.mxu0 0
      %5830 = vmatpush.bf16.msra.mxu0 0
      %5831 = vmatpush.bf16.msra.mxu0 0
      %5832 = vmatpush.bf16.msra.mxu0 0
      %5833 = vmatpush.bf16.msra.mxu0 %v5786
      %5834 = vmatpush.bf16.msra.mxu0 %v5738
      %5835 = vmatpush.bf16.msra.mxu0 %v5730
      %5836 = vmatpush.bf16.msra.mxu0 %v5722
      %5837 = vmatmul.bf16.gmra.mxu0 %v5777
      %v5838 = vpop.f32.mrf.mxu0
      %v5839 = vadd.f32 0.0, %v5838
      %v5840 = vpop.f32.mrf.mxu0
      %5841 = vdwg.mxu0
      %5842 = vmatpush.bf16.msra.mxu0 0
      %5843 = vmatpush.bf16.msra.mxu0 0
      %5844 = vmatpush.bf16.msra.mxu0 0
      %5845 = vmatpush.bf16.msra.mxu0 0
      %5846 = vmatpush.bf16.msra.mxu0 %v5789
      %5847 = vmatpush.bf16.msra.mxu0 %v5739
      %5848 = vmatpush.bf16.msra.mxu0 %v5731
      %5849 = vmatpush.bf16.msra.mxu0 %v5723
      %5850 = vmatmul.bf16.gmra.mxu0 %v5777
      %v5851 = vpop.f32.mrf.mxu0
      %v5852 = vadd.f32 0.0, %v5851
      %v5853 = vpop.f32.mrf.mxu0
      %5854 = vdwg.mxu0
      %5855 = vmatpush.bf16.msra.mxu0 0
      %5856 = vmatpush.bf16.msra.mxu0 0
      %5857 = vmatpush.bf16.msra.mxu0 0
      %5858 = vmatpush.bf16.msra.mxu0 0
      %5859 = vmatpush.bf16.msra.mxu0 %v5792
      %5860 = vmatpush.bf16.msra.mxu0 %v5740
      %5861 = vmatpush.bf16.msra.mxu0 %v5732
      %5862 = vmatpush.bf16.msra.mxu0 %v5724
      %5863 = vmatmul.bf16.gmra.mxu0 %v5777
      %v5864 = vpop.f32.mrf.mxu0
      %v5865 = vadd.f32 0.0, %v5864
      %v5866 = vpop.f32.mrf.mxu0
      %5867 = vdwg.mxu0
      %5868 = vmatpush.bf16.msra.mxu0 0
      %5869 = vmatpush.bf16.msra.mxu0 0
      %5870 = vmatpush.bf16.msra.mxu0 0
      %5871 = vmatpush.bf16.msra.mxu0 0
      %5872 = vmatpush.bf16.msra.mxu0 %v5795
      %5873 = vmatpush.bf16.msra.mxu0 %v5741
      %5874 = vmatpush.bf16.msra.mxu0 %v5733
      %5875 = vmatpush.bf16.msra.mxu0 %v5725
      %5876 = vmatmul.bf16.gmra.mxu0 %v5777
      %v5877 = vpop.f32.mrf.mxu0
      %v5878 = vadd.f32 0.0, %v5877
      %v5879 = vpop.f32.mrf.mxu0
      %5880 = vdwg.mxu0
      %5881 = vmatpush.bf16.msra.mxu0 0
      %5882 = vmatpush.bf16.msra.mxu0 0
      %5883 = vmatpush.bf16.msra.mxu0 0
      %5884 = vmatpush.bf16.msra.mxu0 0
      %5885 = vmatpush.bf16.msra.mxu0 %v5798
      %5886 = vmatpush.bf16.msra.mxu0 %v5742
      %5887 = vmatpush.bf16.msra.mxu0 %v5734
      %5888 = vmatpush.bf16.msra.mxu0 %v5726
      %5889 = vmatmul.bf16.gmra.mxu0 %v5777
      %v5890 = vpop.f32.mrf.mxu0
      %v5891 = vadd.f32 0.0, %v5890
      %v5892 = vpop.f32.mrf.mxu0
      %5893 = vdwg.mxu0
      %5894 = vmatpush.bf16.msra.mxu0 0
      %5895 = vmatpush.bf16.msra.mxu0 0
      %5896 = vmatpush.bf16.msra.mxu0 0
      %5897 = vmatpush.bf16.msra.mxu0 0
      %5898 = vmatpush.bf16.msra.mxu0 %v5801
      %5899 = vmatpush.bf16.msra.mxu0 %v5743
      %5900 = vmatpush.bf16.msra.mxu0 %v5735
      %5901 = vmatpush.bf16.msra.mxu0 %v5727
      %5902 = vmatmul.bf16.gmra.mxu0 %v5777
      %v5903 = vpop.f32.mrf.mxu0
      %v5904 = vadd.f32 0.0, %v5903
      %v5905 = vpop.f32.mrf.mxu0
      %5906 = vdwg.mxu0
      %v5907 = vadd.f32 %v5598, %v5813
      %v5908 = vadd.f32 %v5599, %v5826
      %v5909 = vadd.f32 %v5600, %v5839
      %v5910 = vadd.f32 %v5601, %v5852
      %v5911 = vadd.f32 %v5602, %v5865
      %v5912 = vadd.f32 %v5603, %v5878
      %v5913 = vadd.f32 %v5604, %v5891
      %v5914 = vadd.f32 %v5605, %v5904
      %s5915 = scalar_lea.vmem %s9, 2912
      %v5916 = vld [vmem:[%s5915] sm:$0xff]
      %v5917 = vld [vmem:[%s5915 + $0x8] sm:$0xff]
      %v5918 = vld [vmem:[%s5915 + $0x10] sm:$0xff]
      %v5919 = vld [vmem:[%s5915 + $0x18] sm:$0xff]
      %v5920 = vld [vmem:[%s5915 + $0x20] sm:$0xff]
      %v5921 = vld [vmem:[%s5915 + $0x28] sm:$0xff]
      %v5922 = vld [vmem:[%s5915 + $0x30] sm:$0xff]
      %v5923 = vld [vmem:[%s5915 + $0x38] sm:$0xff]
      %v5924 = vld [vmem:[%s5915 + $0x40] sm:$0xff]
      %v5925 = vld [vmem:[%s5915 + $0x48] sm:$0xff]
      %v5926 = vld [vmem:[%s5915 + $0x50] sm:$0xff]
      %v5927 = vld [vmem:[%s5915 + $0x58] sm:$0xff]
      %v5928 = vld [vmem:[%s5915 + $0x60] sm:$0xff]
      %v5929 = vld [vmem:[%s5915 + $0x68] sm:$0xff]
      %v5930 = vld [vmem:[%s5915 + $0x70] sm:$0xff]
      %v5931 = vld [vmem:[%s5915 + $0x78] sm:$0xff]
      %v5932 = vld [vmem:[%s5915 + $0x80] sm:$0xff]
      %v5933 = vld [vmem:[%s5915 + $0x88] sm:$0xff]
      %v5934 = vld [vmem:[%s5915 + $0x90] sm:$0xff]
      %v5935 = vld [vmem:[%s5915 + $0x98] sm:$0xff]
      %v5936 = vld [vmem:[%s5915 + $0xa0] sm:$0xff]
      %v5937 = vld [vmem:[%s5915 + $0xa8] sm:$0xff]
      %v5938 = vld [vmem:[%s5915 + $0xb0] sm:$0xff]
      %v5939 = vld [vmem:[%s5915 + $0xb8] sm:$0xff]
      %v5940 = vld [vmem:[%s5915 + $0xc0] sm:$0x11]
      %v5941 = vld [vmem:[%s5915 + $0xc8] sm:$0x11]
      %v5942 = vld [vmem:[%s5915 + $0xd0] sm:$0x11]
      %v5943 = vld [vmem:[%s5915 + $0xd8] sm:$0x11]
      %v5944 = vrot.slane %v4706, 2
      %v5973 = vunpack.c.l.b16 %v5916
      %v5974 = vunpack.c.h.b16 %v5916
      %v5975 = vunpack.c.l.b16 %v5917
      %v5976 = vunpack.c.h.b16 %v5917
      %v5977 = vunpack.c.l.b16 %v5918
      %v5978 = vunpack.c.h.b16 %v5918
      %v5979 = vunpack.c.l.b16 %v5919
      %v5980 = vunpack.c.h.b16 %v5919
      %v5981 = vunpack.c.l.b16 %v5920
      %v5982 = vunpack.c.h.b16 %v5920
      %v5983 = vunpack.c.l.b16 %v5921
      %v5984 = vunpack.c.h.b16 %v5921
      %v5985 = vunpack.c.l.b16 %v5922
      %v5986 = vunpack.c.h.b16 %v5922
      %v5987 = vunpack.c.l.b16 %v5923
      %v5988 = vunpack.c.h.b16 %v5923
      %v5989 = vunpack.c.l.b16 %v5924
      %v5990 = vunpack.c.h.b16 %v5924
      %v5991 = vunpack.c.l.b16 %v5925
      %v5992 = vunpack.c.h.b16 %v5925
      %v5993 = vunpack.c.l.b16 %v5926
      %v5994 = vunpack.c.h.b16 %v5926
      %v5995 = vunpack.c.l.b16 %v5927
      %v5996 = vunpack.c.h.b16 %v5927
      %v5997 = vunpack.c.l.b16 %v5928
      %v5998 = vunpack.c.h.b16 %v5928
      %v5999 = vunpack.c.l.b16 %v5929
      %v6000 = vunpack.c.h.b16 %v5929
      %v6001 = vunpack.c.l.b16 %v5930
      %v6002 = vunpack.c.h.b16 %v5930
      %v6003 = vunpack.c.l.b16 %v5931
      %v6004 = vunpack.c.h.b16 %v5931
      %v6005 = vunpack.c.l.b16 %v5932
      %v6006 = vunpack.c.h.b16 %v5932
      %v6007 = vunpack.c.l.b16 %v5933
      %v6008 = vunpack.c.h.b16 %v5933
      %v6009 = vunpack.c.l.b16 %v5934
      %v6010 = vunpack.c.h.b16 %v5934
      %v6011 = vunpack.c.l.b16 %v5935
      %v6012 = vunpack.c.h.b16 %v5935
      %v6013 = vunpack.c.l.b16 %v5936
      %v6014 = vunpack.c.h.b16 %v5936
      %v6015 = vunpack.c.l.b16 %v5937
      %v6016 = vunpack.c.h.b16 %v5937
      %v6017 = vunpack.c.l.b16 %v5938
      %v6018 = vunpack.c.h.b16 %v5938
      %v6019 = vunpack.c.l.b16 %v5939
      %v6020 = vunpack.c.h.b16 %v5939
      %v6021 = vunpack.c.l.b16 %v5940
      %v6022 = vunpack.c.h.b16 %v5940
      %v6023 = vunpack.c.l.b16 %v5941
      %v6024 = vunpack.c.h.b16 %v5941
      %v6025 = vunpack.c.l.b16 %v5942
      %v6026 = vunpack.c.h.b16 %v5942
      %v6027 = vunpack.c.l.b16 %v5943
      %v6028 = vunpack.c.h.b16 %v5943
      %v6029 = vpack.c.b16 %v5981, %v5973
      %v6030 = vpack.c.b16 %v5982, %v5974
      %v6031 = vpack.c.b16 %v5983, %v5975
      %v6032 = vpack.c.b16 %v5984, %v5976
      %v6033 = vpack.c.b16 %v5985, %v5977
      %v6034 = vpack.c.b16 %v5986, %v5978
      %v6035 = vpack.c.b16 %v5987, %v5979
      %v6036 = vpack.c.b16 %v5988, %v5980
      %v6037 = vpack.c.b16 %v5997, %v5989
      %v6038 = vpack.c.b16 %v5998, %v5990
      %v6039 = vpack.c.b16 %v5999, %v5991
      %v6040 = vpack.c.b16 %v6000, %v5992
      %v6041 = vpack.c.b16 %v6001, %v5993
      %v6042 = vpack.c.b16 %v6002, %v5994
      %v6043 = vpack.c.b16 %v6003, %v5995
      %v6044 = vpack.c.b16 %v6004, %v5996
      %v6045 = vpack.c.b16 %v6013, %v6005
      %v6046 = vpack.c.b16 %v6014, %v6006
      %v6047 = vpack.c.b16 %v6015, %v6007
      %v6048 = vpack.c.b16 %v6016, %v6008
      %v6049 = vpack.c.b16 %v6017, %v6009
      %v6050 = vpack.c.b16 %v6018, %v6010
      %v6051 = vpack.c.b16 %v6019, %v6011
      %v6052 = vpack.c.b16 %v6020, %v6012
      %v6053 = vpack.c.b16 %v6021, %v6021
      %v6054 = vpack.c.b16 %v6022, %v6022
      %v6055 = vpack.c.b16 %v6023, %v6023
      %v6056 = vpack.c.b16 %v6024, %v6024
      %v6057 = vpack.c.b16 %v6025, %v6025
      %v6058 = vpack.c.b16 %v6026, %v6026
      %v6059 = vpack.c.b16 %v6027, %v6027
      %v6060 = vpack.c.b16 %v6028, %v6028
      %v6086 = vsel %vm2108, %v5944, 0
      %v6089 = vand.u32 %v6053, %v2114
      %v6092 = vand.u32 %v6054, %v2114
      %v6095 = vand.u32 %v6055, %v2114
      %v6098 = vand.u32 %v6056, %v2114
      %v6101 = vand.u32 %v6057, %v2114
      %v6104 = vand.u32 %v6058, %v2114
      %v6107 = vand.u32 %v6059, %v2114
      %v6110 = vand.u32 %v6060, %v2114
      %6112 = vmatpush.bf16.msra.mxu0 0
      %6113 = vmatpush.bf16.msra.mxu0 0
      %6114 = vmatpush.bf16.msra.mxu0 0
      %6115 = vmatpush.bf16.msra.mxu0 0
      %6116 = vmatpush.bf16.msra.mxu0 %v6089
      %6117 = vmatpush.bf16.msra.mxu0 %v6045
      %6118 = vmatpush.bf16.msra.mxu0 %v6037
      %6119 = vmatpush.bf16.msra.mxu0 %v6029
      %6120 = vmatmul.bf16.gmra.mxu0 %v6086
      %v6121 = vpop.f32.mrf.mxu0
      %v6122 = vadd.f32 0.0, %v6121
      %v6123 = vpop.f32.mrf.mxu0
      %6124 = vdwg.mxu0
      %6125 = vmatpush.bf16.msra.mxu0 0
      %6126 = vmatpush.bf16.msra.mxu0 0
      %6127 = vmatpush.bf16.msra.mxu0 0
      %6128 = vmatpush.bf16.msra.mxu0 0
      %6129 = vmatpush.bf16.msra.mxu0 %v6092
      %6130 = vmatpush.bf16.msra.mxu0 %v6046
      %6131 = vmatpush.bf16.msra.mxu0 %v6038
      %6132 = vmatpush.bf16.msra.mxu0 %v6030
      %6133 = vmatmul.bf16.gmra.mxu0 %v6086
      %v6134 = vpop.f32.mrf.mxu0
      %v6135 = vadd.f32 0.0, %v6134
      %v6136 = vpop.f32.mrf.mxu0
      %6137 = vdwg.mxu0
      %6138 = vmatpush.bf16.msra.mxu0 0
      %6139 = vmatpush.bf16.msra.mxu0 0
      %6140 = vmatpush.bf16.msra.mxu0 0
      %6141 = vmatpush.bf16.msra.mxu0 0
      %6142 = vmatpush.bf16.msra.mxu0 %v6095
      %6143 = vmatpush.bf16.msra.mxu0 %v6047
      %6144 = vmatpush.bf16.msra.mxu0 %v6039
      %6145 = vmatpush.bf16.msra.mxu0 %v6031
      %6146 = vmatmul.bf16.gmra.mxu0 %v6086
      %v6147 = vpop.f32.mrf.mxu0
      %v6148 = vadd.f32 0.0, %v6147
      %v6149 = vpop.f32.mrf.mxu0
      %6150 = vdwg.mxu0
      %6151 = vmatpush.bf16.msra.mxu0 0
      %6152 = vmatpush.bf16.msra.mxu0 0
      %6153 = vmatpush.bf16.msra.mxu0 0
      %6154 = vmatpush.bf16.msra.mxu0 0
      %6155 = vmatpush.bf16.msra.mxu0 %v6098
      %6156 = vmatpush.bf16.msra.mxu0 %v6048
      %6157 = vmatpush.bf16.msra.mxu0 %v6040
      %6158 = vmatpush.bf16.msra.mxu0 %v6032
      %6159 = vmatmul.bf16.gmra.mxu0 %v6086
      %v6160 = vpop.f32.mrf.mxu0
      %v6161 = vadd.f32 0.0, %v6160
      %v6162 = vpop.f32.mrf.mxu0
      %6163 = vdwg.mxu0
      %6164 = vmatpush.bf16.msra.mxu0 0
      %6165 = vmatpush.bf16.msra.mxu0 0
      %6166 = vmatpush.bf16.msra.mxu0 0
      %6167 = vmatpush.bf16.msra.mxu0 0
      %6168 = vmatpush.bf16.msra.mxu0 %v6101
      %6169 = vmatpush.bf16.msra.mxu0 %v6049
      %6170 = vmatpush.bf16.msra.mxu0 %v6041
      %6171 = vmatpush.bf16.msra.mxu0 %v6033
      %6172 = vmatmul.bf16.gmra.mxu0 %v6086
      %v6173 = vpop.f32.mrf.mxu0
      %v6174 = vadd.f32 0.0, %v6173
      %v6175 = vpop.f32.mrf.mxu0
      %6176 = vdwg.mxu0
      %6177 = vmatpush.bf16.msra.mxu0 0
      %6178 = vmatpush.bf16.msra.mxu0 0
      %6179 = vmatpush.bf16.msra.mxu0 0
      %6180 = vmatpush.bf16.msra.mxu0 0
      %6181 = vmatpush.bf16.msra.mxu0 %v6104
      %6182 = vmatpush.bf16.msra.mxu0 %v6050
      %6183 = vmatpush.bf16.msra.mxu0 %v6042
      %6184 = vmatpush.bf16.msra.mxu0 %v6034
      %6185 = vmatmul.bf16.gmra.mxu0 %v6086
      %v6186 = vpop.f32.mrf.mxu0
      %v6187 = vadd.f32 0.0, %v6186
      %v6188 = vpop.f32.mrf.mxu0
      %6189 = vdwg.mxu0
      %6190 = vmatpush.bf16.msra.mxu0 0
      %6191 = vmatpush.bf16.msra.mxu0 0
      %6192 = vmatpush.bf16.msra.mxu0 0
      %6193 = vmatpush.bf16.msra.mxu0 0
      %6194 = vmatpush.bf16.msra.mxu0 %v6107
      %6195 = vmatpush.bf16.msra.mxu0 %v6051
      %6196 = vmatpush.bf16.msra.mxu0 %v6043
      %6197 = vmatpush.bf16.msra.mxu0 %v6035
      %6198 = vmatmul.bf16.gmra.mxu0 %v6086
      %v6199 = vpop.f32.mrf.mxu0
      %v6200 = vadd.f32 0.0, %v6199
      %v6201 = vpop.f32.mrf.mxu0
      %6202 = vdwg.mxu0
      %6203 = vmatpush.bf16.msra.mxu0 0
      %6204 = vmatpush.bf16.msra.mxu0 0
      %6205 = vmatpush.bf16.msra.mxu0 0
      %6206 = vmatpush.bf16.msra.mxu0 0
      %6207 = vmatpush.bf16.msra.mxu0 %v6110
      %6208 = vmatpush.bf16.msra.mxu0 %v6052
      %6209 = vmatpush.bf16.msra.mxu0 %v6044
      %6210 = vmatpush.bf16.msra.mxu0 %v6036
      %6211 = vmatmul.bf16.gmra.mxu0 %v6086
      %v6212 = vpop.f32.mrf.mxu0
      %v6213 = vadd.f32 0.0, %v6212
      %v6214 = vpop.f32.mrf.mxu0
      %6215 = vdwg.mxu0
      %v6216 = vadd.f32 %v5907, %v6122
      %v6217 = vadd.f32 %v5908, %v6135
      %v6218 = vadd.f32 %v5909, %v6148
      %v6219 = vadd.f32 %v5910, %v6161
      %v6220 = vadd.f32 %v5911, %v6174
      %v6221 = vadd.f32 %v5912, %v6187
      %v6222 = vadd.f32 %v5913, %v6200
      %v6223 = vadd.f32 %v5914, %v6213
      %s6224 = scalar_lea.vmem %s9, 3136
      %v6225 = vld [vmem:[%s6224] sm:$0xff]
      %v6226 = vld [vmem:[%s6224 + $0x8] sm:$0xff]
      %v6227 = vld [vmem:[%s6224 + $0x10] sm:$0xff]
      %v6228 = vld [vmem:[%s6224 + $0x18] sm:$0xff]
      %v6229 = vld [vmem:[%s6224 + $0x20] sm:$0xff]
      %v6230 = vld [vmem:[%s6224 + $0x28] sm:$0xff]
      %v6231 = vld [vmem:[%s6224 + $0x30] sm:$0xff]
      %v6232 = vld [vmem:[%s6224 + $0x38] sm:$0xff]
      %v6233 = vld [vmem:[%s6224 + $0x40] sm:$0xff]
      %v6234 = vld [vmem:[%s6224 + $0x48] sm:$0xff]
      %v6235 = vld [vmem:[%s6224 + $0x50] sm:$0xff]
      %v6236 = vld [vmem:[%s6224 + $0x58] sm:$0xff]
      %v6237 = vld [vmem:[%s6224 + $0x60] sm:$0xff]
      %v6238 = vld [vmem:[%s6224 + $0x68] sm:$0xff]
      %v6239 = vld [vmem:[%s6224 + $0x70] sm:$0xff]
      %v6240 = vld [vmem:[%s6224 + $0x78] sm:$0xff]
      %v6241 = vld [vmem:[%s6224 + $0x80] sm:$0xff]
      %v6242 = vld [vmem:[%s6224 + $0x88] sm:$0xff]
      %v6243 = vld [vmem:[%s6224 + $0x90] sm:$0xff]
      %v6244 = vld [vmem:[%s6224 + $0x98] sm:$0xff]
      %v6245 = vld [vmem:[%s6224 + $0xa0] sm:$0xff]
      %v6246 = vld [vmem:[%s6224 + $0xa8] sm:$0xff]
      %v6247 = vld [vmem:[%s6224 + $0xb0] sm:$0xff]
      %v6248 = vld [vmem:[%s6224 + $0xb8] sm:$0xff]
      %v6249 = vld [vmem:[%s6224 + $0xc0] sm:$0x11]
      %v6250 = vld [vmem:[%s6224 + $0xc8] sm:$0x11]
      %v6251 = vld [vmem:[%s6224 + $0xd0] sm:$0x11]
      %v6252 = vld [vmem:[%s6224 + $0xd8] sm:$0x11]
      %v6253 = vrot.slane %v4368, 3
      %v6282 = vunpack.c.l.b16 %v6225
      %v6283 = vunpack.c.h.b16 %v6225
      %v6284 = vunpack.c.l.b16 %v6226
      %v6285 = vunpack.c.h.b16 %v6226
      %v6286 = vunpack.c.l.b16 %v6227
      %v6287 = vunpack.c.h.b16 %v6227
      %v6288 = vunpack.c.l.b16 %v6228
      %v6289 = vunpack.c.h.b16 %v6228
      %v6290 = vunpack.c.l.b16 %v6229
      %v6291 = vunpack.c.h.b16 %v6229
      %v6292 = vunpack.c.l.b16 %v6230
      %v6293 = vunpack.c.h.b16 %v6230
      %v6294 = vunpack.c.l.b16 %v6231
      %v6295 = vunpack.c.h.b16 %v6231
      %v6296 = vunpack.c.l.b16 %v6232
      %v6297 = vunpack.c.h.b16 %v6232
      %v6298 = vunpack.c.l.b16 %v6233
      %v6299 = vunpack.c.h.b16 %v6233
      %v6300 = vunpack.c.l.b16 %v6234
      %v6301 = vunpack.c.h.b16 %v6234
      %v6302 = vunpack.c.l.b16 %v6235
      %v6303 = vunpack.c.h.b16 %v6235
      %v6304 = vunpack.c.l.b16 %v6236
      %v6305 = vunpack.c.h.b16 %v6236
      %v6306 = vunpack.c.l.b16 %v6237
      %v6307 = vunpack.c.h.b16 %v6237
      %v6308 = vunpack.c.l.b16 %v6238
      %v6309 = vunpack.c.h.b16 %v6238
      %v6310 = vunpack.c.l.b16 %v6239
      %v6311 = vunpack.c.h.b16 %v6239
      %v6312 = vunpack.c.l.b16 %v6240
      %v6313 = vunpack.c.h.b16 %v6240
      %v6314 = vunpack.c.l.b16 %v6241
      %v6315 = vunpack.c.h.b16 %v6241
      %v6316 = vunpack.c.l.b16 %v6242
      %v6317 = vunpack.c.h.b16 %v6242
      %v6318 = vunpack.c.l.b16 %v6243
      %v6319 = vunpack.c.h.b16 %v6243
      %v6320 = vunpack.c.l.b16 %v6244
      %v6321 = vunpack.c.h.b16 %v6244
      %v6322 = vunpack.c.l.b16 %v6245
      %v6323 = vunpack.c.h.b16 %v6245
      %v6324 = vunpack.c.l.b16 %v6246
      %v6325 = vunpack.c.h.b16 %v6246
      %v6326 = vunpack.c.l.b16 %v6247
      %v6327 = vunpack.c.h.b16 %v6247
      %v6328 = vunpack.c.l.b16 %v6248
      %v6329 = vunpack.c.h.b16 %v6248
      %v6330 = vunpack.c.l.b16 %v6249
      %v6331 = vunpack.c.h.b16 %v6249
      %v6332 = vunpack.c.l.b16 %v6250
      %v6333 = vunpack.c.h.b16 %v6250
      %v6334 = vunpack.c.l.b16 %v6251
      %v6335 = vunpack.c.h.b16 %v6251
      %v6336 = vunpack.c.l.b16 %v6252
      %v6337 = vunpack.c.h.b16 %v6252
      %v6338 = vpack.c.b16 %v6290, %v6282
      %v6339 = vpack.c.b16 %v6291, %v6283
      %v6340 = vpack.c.b16 %v6292, %v6284
      %v6341 = vpack.c.b16 %v6293, %v6285
      %v6342 = vpack.c.b16 %v6294, %v6286
      %v6343 = vpack.c.b16 %v6295, %v6287
      %v6344 = vpack.c.b16 %v6296, %v6288
      %v6345 = vpack.c.b16 %v6297, %v6289
      %v6346 = vpack.c.b16 %v6306, %v6298
      %v6347 = vpack.c.b16 %v6307, %v6299
      %v6348 = vpack.c.b16 %v6308, %v6300
      %v6349 = vpack.c.b16 %v6309, %v6301
      %v6350 = vpack.c.b16 %v6310, %v6302
      %v6351 = vpack.c.b16 %v6311, %v6303
      %v6352 = vpack.c.b16 %v6312, %v6304
      %v6353 = vpack.c.b16 %v6313, %v6305
      %v6354 = vpack.c.b16 %v6322, %v6314
      %v6355 = vpack.c.b16 %v6323, %v6315
      %v6356 = vpack.c.b16 %v6324, %v6316
      %v6357 = vpack.c.b16 %v6325, %v6317
      %v6358 = vpack.c.b16 %v6326, %v6318
      %v6359 = vpack.c.b16 %v6327, %v6319
      %v6360 = vpack.c.b16 %v6328, %v6320
      %v6361 = vpack.c.b16 %v6329, %v6321
      %v6362 = vpack.c.b16 %v6330, %v6330
      %v6363 = vpack.c.b16 %v6331, %v6331
      %v6364 = vpack.c.b16 %v6332, %v6332
      %v6365 = vpack.c.b16 %v6333, %v6333
      %v6366 = vpack.c.b16 %v6334, %v6334
      %v6367 = vpack.c.b16 %v6335, %v6335
      %v6368 = vpack.c.b16 %v6336, %v6336
      %v6369 = vpack.c.b16 %v6337, %v6337
      %v6395 = vsel %vm2108, %v6253, 0
      %v6398 = vand.u32 %v6362, %v2114
      %v6401 = vand.u32 %v6363, %v2114
      %v6404 = vand.u32 %v6364, %v2114
      %v6407 = vand.u32 %v6365, %v2114
      %v6410 = vand.u32 %v6366, %v2114
      %v6413 = vand.u32 %v6367, %v2114
      %v6416 = vand.u32 %v6368, %v2114
      %v6419 = vand.u32 %v6369, %v2114
      %6421 = vmatpush.bf16.msra.mxu0 0
      %6422 = vmatpush.bf16.msra.mxu0 0
      %6423 = vmatpush.bf16.msra.mxu0 0
      %6424 = vmatpush.bf16.msra.mxu0 0
      %6425 = vmatpush.bf16.msra.mxu0 %v6398
      %6426 = vmatpush.bf16.msra.mxu0 %v6354
      %6427 = vmatpush.bf16.msra.mxu0 %v6346
      %6428 = vmatpush.bf16.msra.mxu0 %v6338
      %6429 = vmatmul.bf16.gmra.mxu0 %v6395
      %v6430 = vpop.f32.mrf.mxu0
      %v6431 = vadd.f32 0.0, %v6430
      %v6432 = vpop.f32.mrf.mxu0
      %6433 = vdwg.mxu0
      %6434 = vmatpush.bf16.msra.mxu0 0
      %6435 = vmatpush.bf16.msra.mxu0 0
      %6436 = vmatpush.bf16.msra.mxu0 0
      %6437 = vmatpush.bf16.msra.mxu0 0
      %6438 = vmatpush.bf16.msra.mxu0 %v6401
      %6439 = vmatpush.bf16.msra.mxu0 %v6355
      %6440 = vmatpush.bf16.msra.mxu0 %v6347
      %6441 = vmatpush.bf16.msra.mxu0 %v6339
      %6442 = vmatmul.bf16.gmra.mxu0 %v6395
      %v6443 = vpop.f32.mrf.mxu0
      %v6444 = vadd.f32 0.0, %v6443
      %v6445 = vpop.f32.mrf.mxu0
      %6446 = vdwg.mxu0
      %6447 = vmatpush.bf16.msra.mxu0 0
      %6448 = vmatpush.bf16.msra.mxu0 0
      %6449 = vmatpush.bf16.msra.mxu0 0
      %6450 = vmatpush.bf16.msra.mxu0 0
      %6451 = vmatpush.bf16.msra.mxu0 %v6404
      %6452 = vmatpush.bf16.msra.mxu0 %v6356
      %6453 = vmatpush.bf16.msra.mxu0 %v6348
      %6454 = vmatpush.bf16.msra.mxu0 %v6340
      %6455 = vmatmul.bf16.gmra.mxu0 %v6395
      %v6456 = vpop.f32.mrf.mxu0
      %v6457 = vadd.f32 0.0, %v6456
      %v6458 = vpop.f32.mrf.mxu0
      %6459 = vdwg.mxu0
      %6460 = vmatpush.bf16.msra.mxu0 0
      %6461 = vmatpush.bf16.msra.mxu0 0
      %6462 = vmatpush.bf16.msra.mxu0 0
      %6463 = vmatpush.bf16.msra.mxu0 0
      %6464 = vmatpush.bf16.msra.mxu0 %v6407
      %6465 = vmatpush.bf16.msra.mxu0 %v6357
      %6466 = vmatpush.bf16.msra.mxu0 %v6349
      %6467 = vmatpush.bf16.msra.mxu0 %v6341
      %6468 = vmatmul.bf16.gmra.mxu0 %v6395
      %v6469 = vpop.f32.mrf.mxu0
      %v6470 = vadd.f32 0.0, %v6469
      %v6471 = vpop.f32.mrf.mxu0
      %6472 = vdwg.mxu0
      %6473 = vmatpush.bf16.msra.mxu0 0
      %6474 = vmatpush.bf16.msra.mxu0 0
      %6475 = vmatpush.bf16.msra.mxu0 0
      %6476 = vmatpush.bf16.msra.mxu0 0
      %6477 = vmatpush.bf16.msra.mxu0 %v6410
      %6478 = vmatpush.bf16.msra.mxu0 %v6358
      %6479 = vmatpush.bf16.msra.mxu0 %v6350
      %6480 = vmatpush.bf16.msra.mxu0 %v6342
      %6481 = vmatmul.bf16.gmra.mxu0 %v6395
      %v6482 = vpop.f32.mrf.mxu0
      %v6483 = vadd.f32 0.0, %v6482
      %v6484 = vpop.f32.mrf.mxu0
      %6485 = vdwg.mxu0
      %6486 = vmatpush.bf16.msra.mxu0 0
      %6487 = vmatpush.bf16.msra.mxu0 0
      %6488 = vmatpush.bf16.msra.mxu0 0
      %6489 = vmatpush.bf16.msra.mxu0 0
      %6490 = vmatpush.bf16.msra.mxu0 %v6413
      %6491 = vmatpush.bf16.msra.mxu0 %v6359
      %6492 = vmatpush.bf16.msra.mxu0 %v6351
      %6493 = vmatpush.bf16.msra.mxu0 %v6343
      %6494 = vmatmul.bf16.gmra.mxu0 %v6395
      %v6495 = vpop.f32.mrf.mxu0
      %v6496 = vadd.f32 0.0, %v6495
      %v6497 = vpop.f32.mrf.mxu0
      %6498 = vdwg.mxu0
      %6499 = vmatpush.bf16.msra.mxu0 0
      %6500 = vmatpush.bf16.msra.mxu0 0
      %6501 = vmatpush.bf16.msra.mxu0 0
      %6502 = vmatpush.bf16.msra.mxu0 0
      %6503 = vmatpush.bf16.msra.mxu0 %v6416
      %6504 = vmatpush.bf16.msra.mxu0 %v6360
      %6505 = vmatpush.bf16.msra.mxu0 %v6352
      %6506 = vmatpush.bf16.msra.mxu0 %v6344
      %6507 = vmatmul.bf16.gmra.mxu0 %v6395
      %v6508 = vpop.f32.mrf.mxu0
      %v6509 = vadd.f32 0.0, %v6508
      %v6510 = vpop.f32.mrf.mxu0
      %6511 = vdwg.mxu0
      %6512 = vmatpush.bf16.msra.mxu0 0
      %6513 = vmatpush.bf16.msra.mxu0 0
      %6514 = vmatpush.bf16.msra.mxu0 0
      %6515 = vmatpush.bf16.msra.mxu0 0
      %6516 = vmatpush.bf16.msra.mxu0 %v6419
      %6517 = vmatpush.bf16.msra.mxu0 %v6361
      %6518 = vmatpush.bf16.msra.mxu0 %v6353
      %6519 = vmatpush.bf16.msra.mxu0 %v6345
      %6520 = vmatmul.bf16.gmra.mxu0 %v6395
      %v6521 = vpop.f32.mrf.mxu0
      %v6522 = vadd.f32 0.0, %v6521
      %v6523 = vpop.f32.mrf.mxu0
      %6524 = vdwg.mxu0
      %v6525 = vadd.f32 %v6216, %v6431
      %v6526 = vadd.f32 %v6217, %v6444
      %v6527 = vadd.f32 %v6218, %v6457
      %v6528 = vadd.f32 %v6219, %v6470
      %v6529 = vadd.f32 %v6220, %v6483
      %v6530 = vadd.f32 %v6221, %v6496
      %v6531 = vadd.f32 %v6222, %v6509
      %v6532 = vadd.f32 %v6223, %v6522
      %s6533 = scalar_lea.vmem %s9, 3360
      %v6534 = vld [vmem:[%s6533] sm:$0xff]
      %v6535 = vld [vmem:[%s6533 + $0x8] sm:$0xff]
      %v6536 = vld [vmem:[%s6533 + $0x10] sm:$0xff]
      %v6537 = vld [vmem:[%s6533 + $0x18] sm:$0xff]
      %v6538 = vld [vmem:[%s6533 + $0x20] sm:$0xff]
      %v6539 = vld [vmem:[%s6533 + $0x28] sm:$0xff]
      %v6540 = vld [vmem:[%s6533 + $0x30] sm:$0xff]
      %v6541 = vld [vmem:[%s6533 + $0x38] sm:$0xff]
      %v6542 = vld [vmem:[%s6533 + $0x40] sm:$0xff]
      %v6543 = vld [vmem:[%s6533 + $0x48] sm:$0xff]
      %v6544 = vld [vmem:[%s6533 + $0x50] sm:$0xff]
      %v6545 = vld [vmem:[%s6533 + $0x58] sm:$0xff]
      %v6546 = vld [vmem:[%s6533 + $0x60] sm:$0xff]
      %v6547 = vld [vmem:[%s6533 + $0x68] sm:$0xff]
      %v6548 = vld [vmem:[%s6533 + $0x70] sm:$0xff]
      %v6549 = vld [vmem:[%s6533 + $0x78] sm:$0xff]
      %v6550 = vld [vmem:[%s6533 + $0x80] sm:$0xff]
      %v6551 = vld [vmem:[%s6533 + $0x88] sm:$0xff]
      %v6552 = vld [vmem:[%s6533 + $0x90] sm:$0xff]
      %v6553 = vld [vmem:[%s6533 + $0x98] sm:$0xff]
      %v6554 = vld [vmem:[%s6533 + $0xa0] sm:$0xff]
      %v6555 = vld [vmem:[%s6533 + $0xa8] sm:$0xff]
      %v6556 = vld [vmem:[%s6533 + $0xb0] sm:$0xff]
      %v6557 = vld [vmem:[%s6533 + $0xb8] sm:$0xff]
      %v6558 = vld [vmem:[%s6533 + $0xc0] sm:$0x11]
      %v6559 = vld [vmem:[%s6533 + $0xc8] sm:$0x11]
      %v6560 = vld [vmem:[%s6533 + $0xd0] sm:$0x11]
      %v6561 = vld [vmem:[%s6533 + $0xd8] sm:$0x11]
      %v6562 = vrot.slane %v4706, 3
      %v6591 = vunpack.c.l.b16 %v6534
      %v6592 = vunpack.c.h.b16 %v6534
      %v6593 = vunpack.c.l.b16 %v6535
      %v6594 = vunpack.c.h.b16 %v6535
      %v6595 = vunpack.c.l.b16 %v6536
      %v6596 = vunpack.c.h.b16 %v6536
      %v6597 = vunpack.c.l.b16 %v6537
      %v6598 = vunpack.c.h.b16 %v6537
      %v6599 = vunpack.c.l.b16 %v6538
      %v6600 = vunpack.c.h.b16 %v6538
      %v6601 = vunpack.c.l.b16 %v6539
      %v6602 = vunpack.c.h.b16 %v6539
      %v6603 = vunpack.c.l.b16 %v6540
      %v6604 = vunpack.c.h.b16 %v6540
      %v6605 = vunpack.c.l.b16 %v6541
      %v6606 = vunpack.c.h.b16 %v6541
      %v6607 = vunpack.c.l.b16 %v6542
      %v6608 = vunpack.c.h.b16 %v6542
      %v6609 = vunpack.c.l.b16 %v6543
      %v6610 = vunpack.c.h.b16 %v6543
      %v6611 = vunpack.c.l.b16 %v6544
      %v6612 = vunpack.c.h.b16 %v6544
      %v6613 = vunpack.c.l.b16 %v6545
      %v6614 = vunpack.c.h.b16 %v6545
      %v6615 = vunpack.c.l.b16 %v6546
      %v6616 = vunpack.c.h.b16 %v6546
      %v6617 = vunpack.c.l.b16 %v6547
      %v6618 = vunpack.c.h.b16 %v6547
      %v6619 = vunpack.c.l.b16 %v6548
      %v6620 = vunpack.c.h.b16 %v6548
      %v6621 = vunpack.c.l.b16 %v6549
      %v6622 = vunpack.c.h.b16 %v6549
      %v6623 = vunpack.c.l.b16 %v6550
      %v6624 = vunpack.c.h.b16 %v6550
      %v6625 = vunpack.c.l.b16 %v6551
      %v6626 = vunpack.c.h.b16 %v6551
      %v6627 = vunpack.c.l.b16 %v6552
      %v6628 = vunpack.c.h.b16 %v6552
      %v6629 = vunpack.c.l.b16 %v6553
      %v6630 = vunpack.c.h.b16 %v6553
      %v6631 = vunpack.c.l.b16 %v6554
      %v6632 = vunpack.c.h.b16 %v6554
      %v6633 = vunpack.c.l.b16 %v6555
      %v6634 = vunpack.c.h.b16 %v6555
      %v6635 = vunpack.c.l.b16 %v6556
      %v6636 = vunpack.c.h.b16 %v6556
      %v6637 = vunpack.c.l.b16 %v6557
      %v6638 = vunpack.c.h.b16 %v6557
      %v6639 = vunpack.c.l.b16 %v6558
      %v6640 = vunpack.c.h.b16 %v6558
      %v6641 = vunpack.c.l.b16 %v6559
      %v6642 = vunpack.c.h.b16 %v6559
      %v6643 = vunpack.c.l.b16 %v6560
      %v6644 = vunpack.c.h.b16 %v6560
      %v6645 = vunpack.c.l.b16 %v6561
      %v6646 = vunpack.c.h.b16 %v6561
      %v6647 = vpack.c.b16 %v6599, %v6591
      %v6648 = vpack.c.b16 %v6600, %v6592
      %v6649 = vpack.c.b16 %v6601, %v6593
      %v6650 = vpack.c.b16 %v6602, %v6594
      %v6651 = vpack.c.b16 %v6603, %v6595
      %v6652 = vpack.c.b16 %v6604, %v6596
      %v6653 = vpack.c.b16 %v6605, %v6597
      %v6654 = vpack.c.b16 %v6606, %v6598
      %v6655 = vpack.c.b16 %v6615, %v6607
      %v6656 = vpack.c.b16 %v6616, %v6608
      %v6657 = vpack.c.b16 %v6617, %v6609
      %v6658 = vpack.c.b16 %v6618, %v6610
      %v6659 = vpack.c.b16 %v6619, %v6611
      %v6660 = vpack.c.b16 %v6620, %v6612
      %v6661 = vpack.c.b16 %v6621, %v6613
      %v6662 = vpack.c.b16 %v6622, %v6614
      %v6663 = vpack.c.b16 %v6631, %v6623
      %v6664 = vpack.c.b16 %v6632, %v6624
      %v6665 = vpack.c.b16 %v6633, %v6625
      %v6666 = vpack.c.b16 %v6634, %v6626
      %v6667 = vpack.c.b16 %v6635, %v6627
      %v6668 = vpack.c.b16 %v6636, %v6628
      %v6669 = vpack.c.b16 %v6637, %v6629
      %v6670 = vpack.c.b16 %v6638, %v6630
      %v6671 = vpack.c.b16 %v6639, %v6639
      %v6672 = vpack.c.b16 %v6640, %v6640
      %v6673 = vpack.c.b16 %v6641, %v6641
      %v6674 = vpack.c.b16 %v6642, %v6642
      %v6675 = vpack.c.b16 %v6643, %v6643
      %v6676 = vpack.c.b16 %v6644, %v6644
      %v6677 = vpack.c.b16 %v6645, %v6645
      %v6678 = vpack.c.b16 %v6646, %v6646
      %v6704 = vsel %vm2108, %v6562, 0
      %v6707 = vand.u32 %v6671, %v2114
      %v6710 = vand.u32 %v6672, %v2114
      %v6713 = vand.u32 %v6673, %v2114
      %v6716 = vand.u32 %v6674, %v2114
      %v6719 = vand.u32 %v6675, %v2114
      %v6722 = vand.u32 %v6676, %v2114
      %v6725 = vand.u32 %v6677, %v2114
      %v6728 = vand.u32 %v6678, %v2114
      %6730 = vmatpush.bf16.msra.mxu0 0
      %6731 = vmatpush.bf16.msra.mxu0 0
      %6732 = vmatpush.bf16.msra.mxu0 0
      %6733 = vmatpush.bf16.msra.mxu0 0
      %6734 = vmatpush.bf16.msra.mxu0 %v6707
      %6735 = vmatpush.bf16.msra.mxu0 %v6663
      %6736 = vmatpush.bf16.msra.mxu0 %v6655
      %6737 = vmatpush.bf16.msra.mxu0 %v6647
      %6738 = vmatmul.bf16.gmra.mxu0 %v6704
      %v6739 = vpop.f32.mrf.mxu0
      %v6740 = vadd.f32 0.0, %v6739
      %v6741 = vpop.f32.mrf.mxu0
      %6742 = vdwg.mxu0
      %6743 = vmatpush.bf16.msra.mxu0 0
      %6744 = vmatpush.bf16.msra.mxu0 0
      %6745 = vmatpush.bf16.msra.mxu0 0
      %6746 = vmatpush.bf16.msra.mxu0 0
      %6747 = vmatpush.bf16.msra.mxu0 %v6710
      %6748 = vmatpush.bf16.msra.mxu0 %v6664
      %6749 = vmatpush.bf16.msra.mxu0 %v6656
      %6750 = vmatpush.bf16.msra.mxu0 %v6648
      %6751 = vmatmul.bf16.gmra.mxu0 %v6704
      %v6752 = vpop.f32.mrf.mxu0
      %v6753 = vadd.f32 0.0, %v6752
      %v6754 = vpop.f32.mrf.mxu0
      %6755 = vdwg.mxu0
      %6756 = vmatpush.bf16.msra.mxu0 0
      %6757 = vmatpush.bf16.msra.mxu0 0
      %6758 = vmatpush.bf16.msra.mxu0 0
      %6759 = vmatpush.bf16.msra.mxu0 0
      %6760 = vmatpush.bf16.msra.mxu0 %v6713
      %6761 = vmatpush.bf16.msra.mxu0 %v6665
      %6762 = vmatpush.bf16.msra.mxu0 %v6657
      %6763 = vmatpush.bf16.msra.mxu0 %v6649
      %6764 = vmatmul.bf16.gmra.mxu0 %v6704
      %v6765 = vpop.f32.mrf.mxu0
      %v6766 = vadd.f32 0.0, %v6765
      %v6767 = vpop.f32.mrf.mxu0
      %6768 = vdwg.mxu0
      %6769 = vmatpush.bf16.msra.mxu0 0
      %6770 = vmatpush.bf16.msra.mxu0 0
      %6771 = vmatpush.bf16.msra.mxu0 0
      %6772 = vmatpush.bf16.msra.mxu0 0
      %6773 = vmatpush.bf16.msra.mxu0 %v6716
      %6774 = vmatpush.bf16.msra.mxu0 %v6666
      %6775 = vmatpush.bf16.msra.mxu0 %v6658
      %6776 = vmatpush.bf16.msra.mxu0 %v6650
      %6777 = vmatmul.bf16.gmra.mxu0 %v6704
      %v6778 = vpop.f32.mrf.mxu0
      %v6779 = vadd.f32 0.0, %v6778
      %v6780 = vpop.f32.mrf.mxu0
      %6781 = vdwg.mxu0
      %6782 = vmatpush.bf16.msra.mxu0 0
      %6783 = vmatpush.bf16.msra.mxu0 0
      %6784 = vmatpush.bf16.msra.mxu0 0
      %6785 = vmatpush.bf16.msra.mxu0 0
      %6786 = vmatpush.bf16.msra.mxu0 %v6719
      %6787 = vmatpush.bf16.msra.mxu0 %v6667
      %6788 = vmatpush.bf16.msra.mxu0 %v6659
      %6789 = vmatpush.bf16.msra.mxu0 %v6651
      %6790 = vmatmul.bf16.gmra.mxu0 %v6704
      %v6791 = vpop.f32.mrf.mxu0
      %v6792 = vadd.f32 0.0, %v6791
      %v6793 = vpop.f32.mrf.mxu0
      %6794 = vdwg.mxu0
      %6795 = vmatpush.bf16.msra.mxu0 0
      %6796 = vmatpush.bf16.msra.mxu0 0
      %6797 = vmatpush.bf16.msra.mxu0 0
      %6798 = vmatpush.bf16.msra.mxu0 0
      %6799 = vmatpush.bf16.msra.mxu0 %v6722
      %6800 = vmatpush.bf16.msra.mxu0 %v6668
      %6801 = vmatpush.bf16.msra.mxu0 %v6660
      %6802 = vmatpush.bf16.msra.mxu0 %v6652
      %6803 = vmatmul.bf16.gmra.mxu0 %v6704
      %v6804 = vpop.f32.mrf.mxu0
      %v6805 = vadd.f32 0.0, %v6804
      %v6806 = vpop.f32.mrf.mxu0
      %6807 = vdwg.mxu0
      %6808 = vmatpush.bf16.msra.mxu0 0
      %6809 = vmatpush.bf16.msra.mxu0 0
      %6810 = vmatpush.bf16.msra.mxu0 0
      %6811 = vmatpush.bf16.msra.mxu0 0
      %6812 = vmatpush.bf16.msra.mxu0 %v6725
      %6813 = vmatpush.bf16.msra.mxu0 %v6669
      %6814 = vmatpush.bf16.msra.mxu0 %v6661
      %6815 = vmatpush.bf16.msra.mxu0 %v6653
      %6816 = vmatmul.bf16.gmra.mxu0 %v6704
      %v6817 = vpop.f32.mrf.mxu0
      %v6818 = vadd.f32 0.0, %v6817
      %v6819 = vpop.f32.mrf.mxu0
      %6820 = vdwg.mxu0
      %6821 = vmatpush.bf16.msra.mxu0 0
      %6822 = vmatpush.bf16.msra.mxu0 0
      %6823 = vmatpush.bf16.msra.mxu0 0
      %6824 = vmatpush.bf16.msra.mxu0 0
      %6825 = vmatpush.bf16.msra.mxu0 %v6728
      %6826 = vmatpush.bf16.msra.mxu0 %v6670
      %6827 = vmatpush.bf16.msra.mxu0 %v6662
      %6828 = vmatpush.bf16.msra.mxu0 %v6654
      %6829 = vmatmul.bf16.gmra.mxu0 %v6704
      %v6830 = vpop.f32.mrf.mxu0
      %v6831 = vadd.f32 0.0, %v6830
      %v6832 = vpop.f32.mrf.mxu0
      %6833 = vdwg.mxu0
      %v6834 = vadd.f32 %v6525, %v6740
      %v6835 = vadd.f32 %v6526, %v6753
      %v6836 = vadd.f32 %v6527, %v6766
      %v6837 = vadd.f32 %v6528, %v6779
      %v6838 = vadd.f32 %v6529, %v6792
      %v6839 = vadd.f32 %v6530, %v6805
      %v6840 = vadd.f32 %v6531, %v6818
      %v6841 = vadd.f32 %v6532, %v6831
      %v6842 = vld [vmem:[%s10] sm:$0xff]
      %v6844 = vperm.slane %v6842, 0
      %v6845 = vperm.slane %v6842, 1
      %v6846 = vperm.slane %v6842, 2
      %v6847 = vperm.slane %v6842, 3
      %v6848 = vperm.slane %v6842, 4
      %v6849 = vperm.slane %v6842, 5
      %v6850 = vperm.slane %v6842, 6
      %v6851 = vperm.slane %v6842, 7
      %v6860 = vadd.f32 %v6834, %v6844
      %v6861 = vadd.f32 %v6835, %v6845
      %v6862 = vadd.f32 %v6836, %v6846
      %v6863 = vadd.f32 %v6837, %v6847
      %v6864 = vadd.f32 %v6838, %v6848
      %v6865 = vadd.f32 %v6839, %v6849
      %v6866 = vadd.f32 %v6840, %v6850
      %v6867 = vadd.f32 %v6841, %v6851
      %v6868 = vmax.f32 %v6860, 0.0
      %v6869 = vmax.f32 %v6861, 0.0
      %v6870 = vmax.f32 %v6862, 0.0
      %v6871 = vmax.f32 %v6863, 0.0
      %v6872 = vmax.f32 %v6864, 0.0
      %v6873 = vmax.f32 %v6865, 0.0
      %v6874 = vmax.f32 %v6866, 0.0
      %v6875 = vmax.f32 %v6867, 0.0
      %v6876 = vpack.c.bf16 %v6868, %v6868
      %v6877 = vpack.c.bf16 %v6869, %v6869
      %v6878 = vpack.c.bf16 %v6870, %v6870
      %v6879 = vpack.c.bf16 %v6871, %v6871
      %v6880 = vpack.c.bf16 %v6872, %v6872
      %v6881 = vpack.c.bf16 %v6873, %v6873
      %v6882 = vpack.c.bf16 %v6874, %v6874
      %v6883 = vpack.c.bf16 %v6875, %v6875
      %v6884 = vld [vmem:[%s11] sm:$0xff]
      %v6885 = vld [vmem:[%s11 + $0x8] sm:$0xff]
      %v6886 = vld [vmem:[%s11 + $0x10] sm:$0xff]
      %v6887 = vld [vmem:[%s11 + $0x18] sm:$0xff]
      %v6888 = vld [vmem:[%s11 + $0x20] sm:$0xff]
      %v6889 = vld [vmem:[%s11 + $0x28] sm:$0xff]
      %v6890 = vld [vmem:[%s11 + $0x30] sm:$0xff]
      %v6891 = vld [vmem:[%s11 + $0x38] sm:$0xff]
      %v6892 = vld [vmem:[%s11 + $0x40] sm:$0xff]
      %v6893 = vld [vmem:[%s11 + $0x48] sm:$0xff]
      %v6894 = vld [vmem:[%s11 + $0x50] sm:$0xff]
      %v6895 = vld [vmem:[%s11 + $0x58] sm:$0xff]
      %v6896 = vld [vmem:[%s11 + $0x60] sm:$0xff]
      %v6897 = vld [vmem:[%s11 + $0x68] sm:$0xff]
      %v6898 = vld [vmem:[%s11 + $0x70] sm:$0xff]
      %v6899 = vld [vmem:[%s11 + $0x78] sm:$0xff]
      %v6900 = vld [vmem:[%s11 + $0x80] sm:$0xff]
      %v6901 = vld [vmem:[%s11 + $0x88] sm:$0xff]
      %v6902 = vld [vmem:[%s11 + $0x90] sm:$0xff]
      %v6903 = vld [vmem:[%s11 + $0x98] sm:$0xff]
      %v6904 = vld [vmem:[%s11 + $0xa0] sm:$0xff]
      %v6905 = vld [vmem:[%s11 + $0xa8] sm:$0xff]
      %v6906 = vld [vmem:[%s11 + $0xb0] sm:$0xff]
      %v6907 = vld [vmem:[%s11 + $0xb8] sm:$0xff]
      %v6908 = vld [vmem:[%s11 + $0xc0] sm:$0xff]
      %v6909 = vld [vmem:[%s11 + $0xc8] sm:$0xff]
      %v6910 = vld [vmem:[%s11 + $0xd0] sm:$0xff]
      %v6911 = vld [vmem:[%s11 + $0xd8] sm:$0xff]
      %v6912 = vld [vmem:[%s11 + $0xe0] sm:$0xff]
      %v6913 = vld [vmem:[%s11 + $0xe8] sm:$0xff]
      %v6914 = vld [vmem:[%s11 + $0xf0] sm:$0xff]
      %v6915 = vld [vmem:[%s11 + $0xf8] sm:$0xff]
      %v6916 = vld [vmem:[%s11 + $0x100] sm:$0xff]
      %v6917 = vld [vmem:[%s11 + $0x108] sm:$0xff]
      %v6918 = vld [vmem:[%s11 + $0x110] sm:$0xff]
      %v6919 = vld [vmem:[%s11 + $0x118] sm:$0xff]
      %v6920 = vld [vmem:[%s11 + $0x120] sm:$0xff]
      %v6921 = vld [vmem:[%s11 + $0x128] sm:$0xff]
      %v6922 = vld [vmem:[%s11 + $0x130] sm:$0xff]
      %v6923 = vld [vmem:[%s11 + $0x138] sm:$0xff]
      %v6924 = vld [vmem:[%s11 + $0x140] sm:$0xff]
      %v6925 = vld [vmem:[%s11 + $0x148] sm:$0xff]
      %v6926 = vld [vmem:[%s11 + $0x150] sm:$0xff]
      %v6927 = vld [vmem:[%s11 + $0x158] sm:$0xff]
      %v6928 = vld [vmem:[%s11 + $0x160] sm:$0xff]
      %v6929 = vld [vmem:[%s11 + $0x168] sm:$0xff]
      %v6930 = vld [vmem:[%s11 + $0x170] sm:$0xff]
      %v6931 = vld [vmem:[%s11 + $0x178] sm:$0xff]
      %v6932 = vld [vmem:[%s11 + $0x180] sm:$0xff]
      %v6933 = vld [vmem:[%s11 + $0x188] sm:$0xff]
      %v6934 = vld [vmem:[%s11 + $0x190] sm:$0xff]
      %v6935 = vld [vmem:[%s11 + $0x198] sm:$0xff]
      %v6936 = vld [vmem:[%s11 + $0x1a0] sm:$0xff]
      %v6937 = vld [vmem:[%s11 + $0x1a8] sm:$0xff]
      %v6938 = vld [vmem:[%s11 + $0x1b0] sm:$0xff]
      %v6939 = vld [vmem:[%s11 + $0x1b8] sm:$0xff]
      %v6940 = vld [vmem:[%s11 + $0x1c0] sm:$0xff]
      %v6941 = vld [vmem:[%s11 + $0x1c8] sm:$0xff]
      %v6942 = vld [vmem:[%s11 + $0x1d0] sm:$0xff]
      %v6943 = vld [vmem:[%s11 + $0x1d8] sm:$0xff]
      %v6944 = vld [vmem:[%s11 + $0x1e0] sm:$0xff]
      %v6945 = vld [vmem:[%s11 + $0x1e8] sm:$0xff]
      %v6946 = vld [vmem:[%s11 + $0x1f0] sm:$0xff]
      %v6947 = vld [vmem:[%s11 + $0x1f8] sm:$0xff]
      %v6948 = vld [vmem:[%s11 + $0x200] sm:$0xff]
      %v6949 = vld [vmem:[%s11 + $0x208] sm:$0xff]
      %v6950 = vld [vmem:[%s11 + $0x210] sm:$0xff]
      %v6951 = vld [vmem:[%s11 + $0x218] sm:$0xff]
      %v6952 = vld [vmem:[%s11 + $0x220] sm:$0xff]
      %v6953 = vld [vmem:[%s11 + $0x228] sm:$0xff]
      %v6954 = vld [vmem:[%s11 + $0x230] sm:$0xff]
      %v6955 = vld [vmem:[%s11 + $0x238] sm:$0xff]
      %v6956 = vld [vmem:[%s11 + $0x240] sm:$0xff]
      %v6957 = vld [vmem:[%s11 + $0x248] sm:$0xff]
      %v6958 = vld [vmem:[%s11 + $0x250] sm:$0xff]
      %v6959 = vld [vmem:[%s11 + $0x258] sm:$0xff]
      %v6960 = vld [vmem:[%s11 + $0x260] sm:$0xff]
      %v6961 = vld [vmem:[%s11 + $0x268] sm:$0xff]
      %v6962 = vld [vmem:[%s11 + $0x270] sm:$0xff]
      %v6963 = vld [vmem:[%s11 + $0x278] sm:$0xff]
      %v6964 = vld [vmem:[%s11 + $0x280] sm:$0xff]
      %v6965 = vld [vmem:[%s11 + $0x288] sm:$0xff]
      %v6966 = vld [vmem:[%s11 + $0x290] sm:$0xff]
      %v6967 = vld [vmem:[%s11 + $0x298] sm:$0xff]
      %v6968 = vld [vmem:[%s11 + $0x2a0] sm:$0xff]
      %v6969 = vld [vmem:[%s11 + $0x2a8] sm:$0xff]
      %v6970 = vld [vmem:[%s11 + $0x2b0] sm:$0xff]
      %v6971 = vld [vmem:[%s11 + $0x2b8] sm:$0xff]
      %v6972 = vld [vmem:[%s11 + $0x2c0] sm:$0xff]
      %v6973 = vld [vmem:[%s11 + $0x2c8] sm:$0xff]
      %v6974 = vld [vmem:[%s11 + $0x2d0] sm:$0xff]
      %v6975 = vld [vmem:[%s11 + $0x2d8] sm:$0xff]
      %v6976 = vld [vmem:[%s11 + $0x2e0] sm:$0xff]
      %v6977 = vld [vmem:[%s11 + $0x2e8] sm:$0xff]
      %v6978 = vld [vmem:[%s11 + $0x2f0] sm:$0xff]
      %v6979 = vld [vmem:[%s11 + $0x2f8] sm:$0xff]
      %v6980 = vld [vmem:[%s11 + $0x300] sm:$0xff]
      %v6981 = vld [vmem:[%s11 + $0x308] sm:$0xff]
      %v6982 = vld [vmem:[%s11 + $0x310] sm:$0xff]
      %v6983 = vld [vmem:[%s11 + $0x318] sm:$0xff]
      %v6984 = vld [vmem:[%s11 + $0x320] sm:$0xff]
      %v6985 = vld [vmem:[%s11 + $0x328] sm:$0xff]
      %v6986 = vld [vmem:[%s11 + $0x330] sm:$0xff]
      %v6987 = vld [vmem:[%s11 + $0x338] sm:$0xff]
      %v6988 = vld [vmem:[%s11 + $0x340] sm:$0xff]
      %v6989 = vld [vmem:[%s11 + $0x348] sm:$0xff]
      %v6990 = vld [vmem:[%s11 + $0x350] sm:$0xff]
      %v6991 = vld [vmem:[%s11 + $0x358] sm:$0xff]
      %v6992 = vld [vmem:[%s11 + $0x360] sm:$0xff]
      %v6993 = vld [vmem:[%s11 + $0x368] sm:$0xff]
      %v6994 = vld [vmem:[%s11 + $0x370] sm:$0xff]
      %v6995 = vld [vmem:[%s11 + $0x378] sm:$0xff]
      %v6996 = vld [vmem:[%s11 + $0x380] sm:$0xff]
      %v6997 = vld [vmem:[%s11 + $0x388] sm:$0xff]
      %v6998 = vld [vmem:[%s11 + $0x390] sm:$0xff]
      %v6999 = vld [vmem:[%s11 + $0x398] sm:$0xff]
      %v7000 = vld [vmem:[%s11 + $0x3a0] sm:$0xff]
      %v7001 = vld [vmem:[%s11 + $0x3a8] sm:$0xff]
      %v7002 = vld [vmem:[%s11 + $0x3b0] sm:$0xff]
      %v7003 = vld [vmem:[%s11 + $0x3b8] sm:$0xff]
      %v7004 = vld [vmem:[%s11 + $0x3c0] sm:$0xff]
      %v7005 = vld [vmem:[%s11 + $0x3c8] sm:$0xff]
      %v7006 = vld [vmem:[%s11 + $0x3d0] sm:$0xff]
      %v7007 = vld [vmem:[%s11 + $0x3d8] sm:$0xff]
      %v7008 = vld [vmem:[%s11 + $0x3e0] sm:$0xff]
      %v7009 = vld [vmem:[%s11 + $0x3e8] sm:$0xff]
      %v7010 = vld [vmem:[%s11 + $0x3f0] sm:$0xff]
      %v7011 = vld [vmem:[%s11 + $0x3f8] sm:$0xff]
      %v7012 = vld [vmem:[%s11 + $0x400] sm:$0xff]
      %v7013 = vld [vmem:[%s11 + $0x408] sm:$0xff]
      %v7014 = vld [vmem:[%s11 + $0x410] sm:$0xff]
      %v7015 = vld [vmem:[%s11 + $0x418] sm:$0xff]
      %v7016 = vld [vmem:[%s11 + $0x420] sm:$0xff]
      %v7017 = vld [vmem:[%s11 + $0x428] sm:$0xff]
      %v7018 = vld [vmem:[%s11 + $0x430] sm:$0xff]
      %v7019 = vld [vmem:[%s11 + $0x438] sm:$0xff]
      %v7020 = vld [vmem:[%s11 + $0x440] sm:$0xff]
      %v7021 = vld [vmem:[%s11 + $0x448] sm:$0xff]
      %v7022 = vld [vmem:[%s11 + $0x450] sm:$0xff]
      %v7023 = vld [vmem:[%s11 + $0x458] sm:$0xff]
      %v7024 = vld [vmem:[%s11 + $0x460] sm:$0xff]
      %v7025 = vld [vmem:[%s11 + $0x468] sm:$0xff]
      %v7026 = vld [vmem:[%s11 + $0x470] sm:$0xff]
      %v7027 = vld [vmem:[%s11 + $0x478] sm:$0xff]
      %v7028 = vld [vmem:[%s11 + $0x480] sm:$0xff]
      %v7029 = vld [vmem:[%s11 + $0x488] sm:$0xff]
      %v7030 = vld [vmem:[%s11 + $0x490] sm:$0xff]
      %v7031 = vld [vmem:[%s11 + $0x498] sm:$0xff]
      %v7032 = vld [vmem:[%s11 + $0x4a0] sm:$0xff]
      %v7033 = vld [vmem:[%s11 + $0x4a8] sm:$0xff]
      %v7034 = vld [vmem:[%s11 + $0x4b0] sm:$0xff]
      %v7035 = vld [vmem:[%s11 + $0x4b8] sm:$0xff]
      %v7036 = vld [vmem:[%s11 + $0x4c0] sm:$0xff]
      %v7037 = vld [vmem:[%s11 + $0x4c8] sm:$0xff]
      %v7038 = vld [vmem:[%s11 + $0x4d0] sm:$0xff]
      %v7039 = vld [vmem:[%s11 + $0x4d8] sm:$0xff]
      %v7040 = vld [vmem:[%s11 + $0x4e0] sm:$0xff]
      %v7041 = vld [vmem:[%s11 + $0x4e8] sm:$0xff]
      %v7042 = vld [vmem:[%s11 + $0x4f0] sm:$0xff]
      %v7043 = vld [vmem:[%s11 + $0x4f8] sm:$0xff]
      %v7044 = vld [vmem:[%s11 + $0x500] sm:$0xff]
      %v7045 = vld [vmem:[%s11 + $0x508] sm:$0xff]
      %v7046 = vld [vmem:[%s11 + $0x510] sm:$0xff]
      %v7047 = vld [vmem:[%s11 + $0x518] sm:$0xff]
      %v7048 = vld [vmem:[%s11 + $0x520] sm:$0xff]
      %v7049 = vld [vmem:[%s11 + $0x528] sm:$0xff]
      %v7050 = vld [vmem:[%s11 + $0x530] sm:$0xff]
      %v7051 = vld [vmem:[%s11 + $0x538] sm:$0xff]
      %v7052 = vld [vmem:[%s11 + $0x540] sm:$0xff]
      %v7053 = vld [vmem:[%s11 + $0x548] sm:$0xff]
      %v7054 = vld [vmem:[%s11 + $0x550] sm:$0xff]
      %v7055 = vld [vmem:[%s11 + $0x558] sm:$0xff]
      %v7056 = vld [vmem:[%s11 + $0x560] sm:$0xff]
      %v7057 = vld [vmem:[%s11 + $0x568] sm:$0xff]
      %v7058 = vld [vmem:[%s11 + $0x570] sm:$0xff]
      %v7059 = vld [vmem:[%s11 + $0x578] sm:$0xff]
      %v7060 = vld [vmem:[%s11 + $0x580] sm:$0xff]
      %v7061 = vld [vmem:[%s11 + $0x588] sm:$0xff]
      %v7062 = vld [vmem:[%s11 + $0x590] sm:$0xff]
      %v7063 = vld [vmem:[%s11 + $0x598] sm:$0xff]
      %v7064 = vld [vmem:[%s11 + $0x5a0] sm:$0xff]
      %v7065 = vld [vmem:[%s11 + $0x5a8] sm:$0xff]
      %v7066 = vld [vmem:[%s11 + $0x5b0] sm:$0xff]
      %v7067 = vld [vmem:[%s11 + $0x5b8] sm:$0xff]
      %v7068 = vld [vmem:[%s11 + $0x5c0] sm:$0xff]
      %v7069 = vld [vmem:[%s11 + $0x5c8] sm:$0xff]
      %v7070 = vld [vmem:[%s11 + $0x5d0] sm:$0xff]
      %v7071 = vld [vmem:[%s11 + $0x5d8] sm:$0xff]
      %v7072 = vld [vmem:[%s11 + $0x5e0] sm:$0xff]
      %v7073 = vld [vmem:[%s11 + $0x5e8] sm:$0xff]
      %v7074 = vld [vmem:[%s11 + $0x5f0] sm:$0xff]
      %v7075 = vld [vmem:[%s11 + $0x5f8] sm:$0xff]
      %v7076 = vld [vmem:[%s11 + $0x600] sm:$0xff]
      %v7077 = vld [vmem:[%s11 + $0x608] sm:$0xff]
      %v7078 = vld [vmem:[%s11 + $0x610] sm:$0xff]
      %v7079 = vld [vmem:[%s11 + $0x618] sm:$0xff]
      %v7080 = vld [vmem:[%s11 + $0x620] sm:$0xff]
      %v7081 = vld [vmem:[%s11 + $0x628] sm:$0xff]
      %v7082 = vld [vmem:[%s11 + $0x630] sm:$0xff]
      %v7083 = vld [vmem:[%s11 + $0x638] sm:$0xff]
      %v7084 = vld [vmem:[%s11 + $0x640] sm:$0xff]
      %v7085 = vld [vmem:[%s11 + $0x648] sm:$0xff]
      %v7086 = vld [vmem:[%s11 + $0x650] sm:$0xff]
      %v7087 = vld [vmem:[%s11 + $0x658] sm:$0xff]
      %v7088 = vld [vmem:[%s11 + $0x660] sm:$0xff]
      %v7089 = vld [vmem:[%s11 + $0x668] sm:$0xff]
      %v7090 = vld [vmem:[%s11 + $0x670] sm:$0xff]
      %v7091 = vld [vmem:[%s11 + $0x678] sm:$0xff]
      %v7092 = vld [vmem:[%s11 + $0x680] sm:$0xff]
      %v7093 = vld [vmem:[%s11 + $0x688] sm:$0xff]
      %v7094 = vld [vmem:[%s11 + $0x690] sm:$0xff]
      %v7095 = vld [vmem:[%s11 + $0x698] sm:$0xff]
      %v7096 = vld [vmem:[%s11 + $0x6a0] sm:$0xff]
      %v7097 = vld [vmem:[%s11 + $0x6a8] sm:$0xff]
      %v7098 = vld [vmem:[%s11 + $0x6b0] sm:$0xff]
      %v7099 = vld [vmem:[%s11 + $0x6b8] sm:$0xff]
      %v7100 = vld [vmem:[%s11 + $0x6c0] sm:$0xff]
      %v7101 = vld [vmem:[%s11 + $0x6c8] sm:$0xff]
      %v7102 = vld [vmem:[%s11 + $0x6d0] sm:$0xff]
      %v7103 = vld [vmem:[%s11 + $0x6d8] sm:$0xff]
      %v7104 = vld [vmem:[%s11 + $0x6e0] sm:$0xff]
      %v7105 = vld [vmem:[%s11 + $0x6e8] sm:$0xff]
      %v7106 = vld [vmem:[%s11 + $0x6f0] sm:$0xff]
      %v7107 = vld [vmem:[%s11 + $0x6f8] sm:$0xff]
      %v7108 = vld [vmem:[%s11 + $0x700] sm:$0xff]
      %v7109 = vld [vmem:[%s11 + $0x708] sm:$0xff]
      %v7110 = vld [vmem:[%s11 + $0x710] sm:$0xff]
      %v7111 = vld [vmem:[%s11 + $0x718] sm:$0xff]
      %v7112 = vld [vmem:[%s11 + $0x720] sm:$0xff]
      %v7113 = vld [vmem:[%s11 + $0x728] sm:$0xff]
      %v7114 = vld [vmem:[%s11 + $0x730] sm:$0xff]
      %v7115 = vld [vmem:[%s11 + $0x738] sm:$0xff]
      %v7116 = vld [vmem:[%s11 + $0x740] sm:$0xff]
      %v7117 = vld [vmem:[%s11 + $0x748] sm:$0xff]
      %v7118 = vld [vmem:[%s11 + $0x750] sm:$0xff]
      %v7119 = vld [vmem:[%s11 + $0x758] sm:$0xff]
      %v7120 = vld [vmem:[%s11 + $0x760] sm:$0xff]
      %v7121 = vld [vmem:[%s11 + $0x768] sm:$0xff]
      %v7122 = vld [vmem:[%s11 + $0x770] sm:$0xff]
      %v7123 = vld [vmem:[%s11 + $0x778] sm:$0xff]
      %v7124 = vld [vmem:[%s11 + $0x780] sm:$0xff]
      %v7125 = vld [vmem:[%s11 + $0x788] sm:$0xff]
      %v7126 = vld [vmem:[%s11 + $0x790] sm:$0xff]
      %v7127 = vld [vmem:[%s11 + $0x798] sm:$0xff]
      %v7128 = vld [vmem:[%s11 + $0x7a0] sm:$0xff]
      %v7129 = vld [vmem:[%s11 + $0x7a8] sm:$0xff]
      %v7130 = vld [vmem:[%s11 + $0x7b0] sm:$0xff]
      %v7131 = vld [vmem:[%s11 + $0x7b8] sm:$0xff]
      %v7132 = vld [vmem:[%s11 + $0x7c0] sm:$0xff]
      %v7133 = vld [vmem:[%s11 + $0x7c8] sm:$0xff]
      %v7134 = vld [vmem:[%s11 + $0x7d0] sm:$0xff]
      %v7135 = vld [vmem:[%s11 + $0x7d8] sm:$0xff]
      %v7136 = vld [vmem:[%s11 + $0x7e0] sm:$0xff]
      %v7137 = vld [vmem:[%s11 + $0x7e8] sm:$0xff]
      %v7138 = vld [vmem:[%s11 + $0x7f0] sm:$0xff]
      %v7139 = vld [vmem:[%s11 + $0x7f8] sm:$0xff]
      %v7140 = vld [vmem:[%s11 + $0x800] sm:$0xff]
      %v7141 = vld [vmem:[%s11 + $0x808] sm:$0xff]
      %v7142 = vld [vmem:[%s11 + $0x810] sm:$0xff]
      %v7143 = vld [vmem:[%s11 + $0x818] sm:$0xff]
      %v7144 = vld [vmem:[%s11 + $0x820] sm:$0xff]
      %v7145 = vld [vmem:[%s11 + $0x828] sm:$0xff]
      %v7146 = vld [vmem:[%s11 + $0x830] sm:$0xff]
      %v7147 = vld [vmem:[%s11 + $0x838] sm:$0xff]
      %v7148 = vld [vmem:[%s11 + $0x840] sm:$0xff]
      %v7149 = vld [vmem:[%s11 + $0x848] sm:$0xff]
      %v7150 = vld [vmem:[%s11 + $0x850] sm:$0xff]
      %v7151 = vld [vmem:[%s11 + $0x858] sm:$0xff]
      %v7152 = vld [vmem:[%s11 + $0x860] sm:$0xff]
      %v7153 = vld [vmem:[%s11 + $0x868] sm:$0xff]
      %v7154 = vld [vmem:[%s11 + $0x870] sm:$0xff]
      %v7155 = vld [vmem:[%s11 + $0x878] sm:$0xff]
      %v7156 = vld [vmem:[%s11 + $0x880] sm:$0xff]
      %v7157 = vld [vmem:[%s11 + $0x888] sm:$0xff]
      %v7158 = vld [vmem:[%s11 + $0x890] sm:$0xff]
      %v7159 = vld [vmem:[%s11 + $0x898] sm:$0xff]
      %v7160 = vld [vmem:[%s11 + $0x8a0] sm:$0xff]
      %v7161 = vld [vmem:[%s11 + $0x8a8] sm:$0xff]
      %v7162 = vld [vmem:[%s11 + $0x8b0] sm:$0xff]
      %v7163 = vld [vmem:[%s11 + $0x8b8] sm:$0xff]
      %v7164 = vld [vmem:[%s11 + $0x8c0] sm:$0xff]
      %v7165 = vld [vmem:[%s11 + $0x8c8] sm:$0xff]
      %v7166 = vld [vmem:[%s11 + $0x8d0] sm:$0xff]
      %v7167 = vld [vmem:[%s11 + $0x8d8] sm:$0xff]
      %v7168 = vld [vmem:[%s11 + $0x8e0] sm:$0xff]
      %v7169 = vld [vmem:[%s11 + $0x8e8] sm:$0xff]
      %v7170 = vld [vmem:[%s11 + $0x8f0] sm:$0xff]
      %v7171 = vld [vmem:[%s11 + $0x8f8] sm:$0xff]
      %v7172 = vld [vmem:[%s11 + $0x900] sm:$0xff]
      %v7173 = vld [vmem:[%s11 + $0x908] sm:$0xff]
      %v7174 = vld [vmem:[%s11 + $0x910] sm:$0xff]
      %v7175 = vld [vmem:[%s11 + $0x918] sm:$0xff]
      %v7176 = vld [vmem:[%s11 + $0x920] sm:$0xff]
      %v7177 = vld [vmem:[%s11 + $0x928] sm:$0xff]
      %v7178 = vld [vmem:[%s11 + $0x930] sm:$0xff]
      %v7179 = vld [vmem:[%s11 + $0x938] sm:$0xff]
      %v7180 = vld [vmem:[%s11 + $0x940] sm:$0xff]
      %v7181 = vld [vmem:[%s11 + $0x948] sm:$0xff]
      %v7182 = vld [vmem:[%s11 + $0x950] sm:$0xff]
      %v7183 = vld [vmem:[%s11 + $0x958] sm:$0xff]
      %v7184 = vld [vmem:[%s11 + $0x960] sm:$0xff]
      %v7185 = vld [vmem:[%s11 + $0x968] sm:$0xff]
      %v7186 = vld [vmem:[%s11 + $0x970] sm:$0xff]
      %v7187 = vld [vmem:[%s11 + $0x978] sm:$0xff]
      %v7188 = vld [vmem:[%s11 + $0x980] sm:$0xff]
      %v7189 = vld [vmem:[%s11 + $0x988] sm:$0xff]
      %v7190 = vld [vmem:[%s11 + $0x990] sm:$0xff]
      %v7191 = vld [vmem:[%s11 + $0x998] sm:$0xff]
      %v7192 = vld [vmem:[%s11 + $0x9a0] sm:$0xff]
      %v7193 = vld [vmem:[%s11 + $0x9a8] sm:$0xff]
      %v7194 = vld [vmem:[%s11 + $0x9b0] sm:$0xff]
      %v7195 = vld [vmem:[%s11 + $0x9b8] sm:$0xff]
      %v7196 = vld [vmem:[%s11 + $0x9c0] sm:$0xff]
      %v7197 = vld [vmem:[%s11 + $0x9c8] sm:$0xff]
      %v7198 = vld [vmem:[%s11 + $0x9d0] sm:$0xff]
      %v7199 = vld [vmem:[%s11 + $0x9d8] sm:$0xff]
      %v7200 = vld [vmem:[%s11 + $0x9e0] sm:$0xff]
      %v7201 = vld [vmem:[%s11 + $0x9e8] sm:$0xff]
      %v7202 = vld [vmem:[%s11 + $0x9f0] sm:$0xff]
      %v7203 = vld [vmem:[%s11 + $0x9f8] sm:$0xff]
      %v7204 = vld [vmem:[%s11 + $0xa00] sm:$0xff]
      %v7205 = vld [vmem:[%s11 + $0xa08] sm:$0xff]
      %v7206 = vld [vmem:[%s11 + $0xa10] sm:$0xff]
      %v7207 = vld [vmem:[%s11 + $0xa18] sm:$0xff]
      %v7208 = vld [vmem:[%s11 + $0xa20] sm:$0xff]
      %v7209 = vld [vmem:[%s11 + $0xa28] sm:$0xff]
      %v7210 = vld [vmem:[%s11 + $0xa30] sm:$0xff]
      %v7211 = vld [vmem:[%s11 + $0xa38] sm:$0xff]
      %v7212 = vld [vmem:[%s11 + $0xa40] sm:$0xff]
      %v7213 = vld [vmem:[%s11 + $0xa48] sm:$0xff]
      %v7214 = vld [vmem:[%s11 + $0xa50] sm:$0xff]
      %v7215 = vld [vmem:[%s11 + $0xa58] sm:$0xff]
      %v7216 = vld [vmem:[%s11 + $0xa60] sm:$0xff]
      %v7217 = vld [vmem:[%s11 + $0xa68] sm:$0xff]
      %v7218 = vld [vmem:[%s11 + $0xa70] sm:$0xff]
      %v7219 = vld [vmem:[%s11 + $0xa78] sm:$0xff]
      %v7220 = vld [vmem:[%s11 + $0xa80] sm:$0xff]
      %v7221 = vld [vmem:[%s11 + $0xa88] sm:$0xff]
      %v7222 = vld [vmem:[%s11 + $0xa90] sm:$0xff]
      %v7223 = vld [vmem:[%s11 + $0xa98] sm:$0xff]
      %v7224 = vld [vmem:[%s11 + $0xaa0] sm:$0xff]
      %v7225 = vld [vmem:[%s11 + $0xaa8] sm:$0xff]
      %v7226 = vld [vmem:[%s11 + $0xab0] sm:$0xff]
      %v7227 = vld [vmem:[%s11 + $0xab8] sm:$0xff]
      %v7228 = vld [vmem:[%s11 + $0xac0] sm:$0xff]
      %v7229 = vld [vmem:[%s11 + $0xac8] sm:$0xff]
      %v7230 = vld [vmem:[%s11 + $0xad0] sm:$0xff]
      %v7231 = vld [vmem:[%s11 + $0xad8] sm:$0xff]
      %v7232 = vld [vmem:[%s11 + $0xae0] sm:$0xff]
      %v7233 = vld [vmem:[%s11 + $0xae8] sm:$0xff]
      %v7234 = vld [vmem:[%s11 + $0xaf0] sm:$0xff]
      %v7235 = vld [vmem:[%s11 + $0xaf8] sm:$0xff]
      %v7236 = vld [vmem:[%s11 + $0xb00] sm:$0xff]
      %v7237 = vld [vmem:[%s11 + $0xb08] sm:$0xff]
      %v7238 = vld [vmem:[%s11 + $0xb10] sm:$0xff]
      %v7239 = vld [vmem:[%s11 + $0xb18] sm:$0xff]
      %v7240 = vld [vmem:[%s11 + $0xb20] sm:$0xff]
      %v7241 = vld [vmem:[%s11 + $0xb28] sm:$0xff]
      %v7242 = vld [vmem:[%s11 + $0xb30] sm:$0xff]
      %v7243 = vld [vmem:[%s11 + $0xb38] sm:$0xff]
      %v7244 = vld [vmem:[%s11 + $0xb40] sm:$0xff]
      %v7245 = vld [vmem:[%s11 + $0xb48] sm:$0xff]
      %v7246 = vld [vmem:[%s11 + $0xb50] sm:$0xff]
      %v7247 = vld [vmem:[%s11 + $0xb58] sm:$0xff]
      %v7248 = vld [vmem:[%s11 + $0xb60] sm:$0xff]
      %v7249 = vld [vmem:[%s11 + $0xb68] sm:$0xff]
      %v7250 = vld [vmem:[%s11 + $0xb70] sm:$0xff]
      %v7251 = vld [vmem:[%s11 + $0xb78] sm:$0xff]
      %v7252 = vld [vmem:[%s11 + $0xb80] sm:$0xff]
      %v7253 = vld [vmem:[%s11 + $0xb88] sm:$0xff]
      %v7254 = vld [vmem:[%s11 + $0xb90] sm:$0xff]
      %v7255 = vld [vmem:[%s11 + $0xb98] sm:$0xff]
      %v7256 = vld [vmem:[%s11 + $0xba0] sm:$0xff]
      %v7257 = vld [vmem:[%s11 + $0xba8] sm:$0xff]
      %v7258 = vld [vmem:[%s11 + $0xbb0] sm:$0xff]
      %v7259 = vld [vmem:[%s11 + $0xbb8] sm:$0xff]
      %v7260 = vld [vmem:[%s11 + $0xbc0] sm:$0xff]
      %v7261 = vld [vmem:[%s11 + $0xbc8] sm:$0xff]
      %v7262 = vld [vmem:[%s11 + $0xbd0] sm:$0xff]
      %v7263 = vld [vmem:[%s11 + $0xbd8] sm:$0xff]
      %v7264 = vld [vmem:[%s11 + $0xbe0] sm:$0xff]
      %v7265 = vld [vmem:[%s11 + $0xbe8] sm:$0xff]
      %v7266 = vld [vmem:[%s11 + $0xbf0] sm:$0xff]
      %v7267 = vld [vmem:[%s11 + $0xbf8] sm:$0xff]
      %v7268 = vld [vmem:[%s11 + $0xc00] sm:$0xff]
      %v7269 = vld [vmem:[%s11 + $0xc08] sm:$0xff]
      %v7270 = vld [vmem:[%s11 + $0xc10] sm:$0xff]
      %v7271 = vld [vmem:[%s11 + $0xc18] sm:$0xff]
      %v7272 = vld [vmem:[%s11 + $0xc20] sm:$0xff]
      %v7273 = vld [vmem:[%s11 + $0xc28] sm:$0xff]
      %v7274 = vld [vmem:[%s11 + $0xc30] sm:$0xff]
      %v7275 = vld [vmem:[%s11 + $0xc38] sm:$0xff]
      %v7276 = vld [vmem:[%s11 + $0xc40] sm:$0xff]
      %v7277 = vld [vmem:[%s11 + $0xc48] sm:$0xff]
      %v7278 = vld [vmem:[%s11 + $0xc50] sm:$0xff]
      %v7279 = vld [vmem:[%s11 + $0xc58] sm:$0xff]
      %v7280 = vld [vmem:[%s11 + $0xc60] sm:$0xff]
      %v7281 = vld [vmem:[%s11 + $0xc68] sm:$0xff]
      %v7282 = vld [vmem:[%s11 + $0xc70] sm:$0xff]
      %v7283 = vld [vmem:[%s11 + $0xc78] sm:$0xff]
      %v7284 = vld [vmem:[%s11 + $0xc80] sm:$0xff]
      %v7285 = vld [vmem:[%s11 + $0xc88] sm:$0xff]
      %v7286 = vld [vmem:[%s11 + $0xc90] sm:$0xff]
      %v7287 = vld [vmem:[%s11 + $0xc98] sm:$0xff]
      %v7288 = vld [vmem:[%s11 + $0xca0] sm:$0xff]
      %v7289 = vld [vmem:[%s11 + $0xca8] sm:$0xff]
      %v7290 = vld [vmem:[%s11 + $0xcb0] sm:$0xff]
      %v7291 = vld [vmem:[%s11 + $0xcb8] sm:$0xff]
      %v7292 = vld [vmem:[%s11 + $0xcc0] sm:$0xff]
      %v7293 = vld [vmem:[%s11 + $0xcc8] sm:$0xff]
      %v7294 = vld [vmem:[%s11 + $0xcd0] sm:$0xff]
      %v7295 = vld [vmem:[%s11 + $0xcd8] sm:$0xff]
      %v7296 = vld [vmem:[%s11 + $0xce0] sm:$0xff]
      %v7297 = vld [vmem:[%s11 + $0xce8] sm:$0xff]
      %v7298 = vld [vmem:[%s11 + $0xcf0] sm:$0xff]
      %v7299 = vld [vmem:[%s11 + $0xcf8] sm:$0xff]
      %v7300 = vld [vmem:[%s11 + $0xd00] sm:$0xff]
      %v7301 = vld [vmem:[%s11 + $0xd08] sm:$0xff]
      %v7302 = vld [vmem:[%s11 + $0xd10] sm:$0xff]
      %v7303 = vld [vmem:[%s11 + $0xd18] sm:$0xff]
      %v7304 = vld [vmem:[%s11 + $0xd20] sm:$0xff]
      %v7305 = vld [vmem:[%s11 + $0xd28] sm:$0xff]
      %v7306 = vld [vmem:[%s11 + $0xd30] sm:$0xff]
      %v7307 = vld [vmem:[%s11 + $0xd38] sm:$0xff]
      %v7308 = vld [vmem:[%s11 + $0xd40] sm:$0xff]
      %v7309 = vld [vmem:[%s11 + $0xd48] sm:$0xff]
      %v7310 = vld [vmem:[%s11 + $0xd50] sm:$0xff]
      %v7311 = vld [vmem:[%s11 + $0xd58] sm:$0xff]
      %v7312 = vld [vmem:[%s11 + $0xd60] sm:$0xff]
      %v7313 = vld [vmem:[%s11 + $0xd68] sm:$0xff]
      %v7314 = vld [vmem:[%s11 + $0xd70] sm:$0xff]
      %v7315 = vld [vmem:[%s11 + $0xd78] sm:$0xff]
      %v7316 = vld [vmem:[%s11 + $0xd80] sm:$0xff]
      %v7317 = vld [vmem:[%s11 + $0xd88] sm:$0xff]
      %v7318 = vld [vmem:[%s11 + $0xd90] sm:$0xff]
      %v7319 = vld [vmem:[%s11 + $0xd98] sm:$0xff]
      %v7320 = vld [vmem:[%s11 + $0xda0] sm:$0xff]
      %v7321 = vld [vmem:[%s11 + $0xda8] sm:$0xff]
      %v7322 = vld [vmem:[%s11 + $0xdb0] sm:$0xff]
      %v7323 = vld [vmem:[%s11 + $0xdb8] sm:$0xff]
      %v7324 = vld [vmem:[%s11 + $0xdc0] sm:$0xff]
      %v7325 = vld [vmem:[%s11 + $0xdc8] sm:$0xff]
      %v7326 = vld [vmem:[%s11 + $0xdd0] sm:$0xff]
      %v7327 = vld [vmem:[%s11 + $0xdd8] sm:$0xff]
      %v7328 = vld [vmem:[%s11 + $0xde0] sm:$0xff]
      %v7329 = vld [vmem:[%s11 + $0xde8] sm:$0xff]
      %v7330 = vld [vmem:[%s11 + $0xdf0] sm:$0xff]
      %v7331 = vld [vmem:[%s11 + $0xdf8] sm:$0xff]
      %v7332 = vld [vmem:[%s11 + $0xe00] sm:$0xff]
      %v7333 = vld [vmem:[%s11 + $0xe08] sm:$0xff]
      %v7334 = vld [vmem:[%s11 + $0xe10] sm:$0xff]
      %v7335 = vld [vmem:[%s11 + $0xe18] sm:$0xff]
      %v7336 = vld [vmem:[%s11 + $0xe20] sm:$0xff]
      %v7337 = vld [vmem:[%s11 + $0xe28] sm:$0xff]
      %v7338 = vld [vmem:[%s11 + $0xe30] sm:$0xff]
      %v7339 = vld [vmem:[%s11 + $0xe38] sm:$0xff]
      %v7340 = vld [vmem:[%s11 + $0xe40] sm:$0xff]
      %v7341 = vld [vmem:[%s11 + $0xe48] sm:$0xff]
      %v7342 = vld [vmem:[%s11 + $0xe50] sm:$0xff]
      %v7343 = vld [vmem:[%s11 + $0xe58] sm:$0xff]
      %v7344 = vld [vmem:[%s11 + $0xe60] sm:$0xff]
      %v7345 = vld [vmem:[%s11 + $0xe68] sm:$0xff]
      %v7346 = vld [vmem:[%s11 + $0xe70] sm:$0xff]
      %v7347 = vld [vmem:[%s11 + $0xe78] sm:$0xff]
      %v7348 = vld [vmem:[%s11 + $0xe80] sm:$0xff]
      %v7349 = vld [vmem:[%s11 + $0xe88] sm:$0xff]
      %v7350 = vld [vmem:[%s11 + $0xe90] sm:$0xff]
      %v7351 = vld [vmem:[%s11 + $0xe98] sm:$0xff]
      %v7352 = vld [vmem:[%s11 + $0xea0] sm:$0xff]
      %v7353 = vld [vmem:[%s11 + $0xea8] sm:$0xff]
      %v7354 = vld [vmem:[%s11 + $0xeb0] sm:$0xff]
      %v7355 = vld [vmem:[%s11 + $0xeb8] sm:$0xff]
      %v7356 = vld [vmem:[%s11 + $0xec0] sm:$0xff]
      %v7357 = vld [vmem:[%s11 + $0xec8] sm:$0xff]
      %v7358 = vld [vmem:[%s11 + $0xed0] sm:$0xff]
      %v7359 = vld [vmem:[%s11 + $0xed8] sm:$0xff]
      %v7360 = vld [vmem:[%s11 + $0xee0] sm:$0xff]
      %v7361 = vld [vmem:[%s11 + $0xee8] sm:$0xff]
      %v7362 = vld [vmem:[%s11 + $0xef0] sm:$0xff]
      %v7363 = vld [vmem:[%s11 + $0xef8] sm:$0xff]
      %v7364 = vld [vmem:[%s11 + $0xf00] sm:$0xff]
      %v7365 = vld [vmem:[%s11 + $0xf08] sm:$0xff]
      %v7366 = vld [vmem:[%s11 + $0xf10] sm:$0xff]
      %v7367 = vld [vmem:[%s11 + $0xf18] sm:$0xff]
      %v7368 = vld [vmem:[%s11 + $0xf20] sm:$0xff]
      %v7369 = vld [vmem:[%s11 + $0xf28] sm:$0xff]
      %v7370 = vld [vmem:[%s11 + $0xf30] sm:$0xff]
      %v7371 = vld [vmem:[%s11 + $0xf38] sm:$0xff]
      %v7372 = vld [vmem:[%s11 + $0xf40] sm:$0xff]
      %v7373 = vld [vmem:[%s11 + $0xf48] sm:$0xff]
      %v7374 = vld [vmem:[%s11 + $0xf50] sm:$0xff]
      %v7375 = vld [vmem:[%s11 + $0xf58] sm:$0xff]
      %v7376 = vld [vmem:[%s11 + $0xf60] sm:$0xff]
      %v7377 = vld [vmem:[%s11 + $0xf68] sm:$0xff]
      %v7378 = vld [vmem:[%s11 + $0xf70] sm:$0xff]
      %v7379 = vld [vmem:[%s11 + $0xf78] sm:$0xff]
      %v7380 = vld [vmem:[%s11 + $0xf80] sm:$0xff]
      %v7381 = vld [vmem:[%s11 + $0xf88] sm:$0xff]
      %v7382 = vld [vmem:[%s11 + $0xf90] sm:$0xff]
      %v7383 = vld [vmem:[%s11 + $0xf98] sm:$0xff]
      %v7384 = vld [vmem:[%s11 + $0xfa0] sm:$0xff]
      %v7385 = vld [vmem:[%s11 + $0xfa8] sm:$0xff]
      %v7386 = vld [vmem:[%s11 + $0xfb0] sm:$0xff]
      %v7387 = vld [vmem:[%s11 + $0xfb8] sm:$0xff]
      %v7388 = vld [vmem:[%s11 + $0xfc0] sm:$0xff]
      %v7389 = vld [vmem:[%s11 + $0xfc8] sm:$0xff]
      %v7390 = vld [vmem:[%s11 + $0xfd0] sm:$0xff]
      %v7391 = vld [vmem:[%s11 + $0xfd8] sm:$0xff]
      %v7392 = vld [vmem:[%s11 + $0xfe0] sm:$0xff]
      %v7393 = vld [vmem:[%s11 + $0xfe8] sm:$0xff]
      %v7394 = vld [vmem:[%s11 + $0xff0] sm:$0xff]
      %v7395 = vld [vmem:[%s11 + $0xff8] sm:$0xff]
      %v7396 = vld [vmem:[%s12] sm:$0xff]
      %v7909 = vunpack.c.l.b16 %v6884
      %v7910 = vunpack.c.h.b16 %v6884
      %v7911 = vunpack.c.l.b16 %v6885
      %v7912 = vunpack.c.h.b16 %v6885
      %v7913 = vunpack.c.l.b16 %v6886
      %v7914 = vunpack.c.h.b16 %v6886
      %v7915 = vunpack.c.l.b16 %v6887
      %v7916 = vunpack.c.h.b16 %v6887
      %v7917 = vunpack.c.l.b16 %v6888
      %v7918 = vunpack.c.h.b16 %v6888
      %v7919 = vunpack.c.l.b16 %v6889
      %v7920 = vunpack.c.h.b16 %v6889
      %v7921 = vunpack.c.l.b16 %v6890
      %v7922 = vunpack.c.h.b16 %v6890
      %v7923 = vunpack.c.l.b16 %v6891
      %v7924 = vunpack.c.h.b16 %v6891
      %v7925 = vunpack.c.l.b16 %v6892
      %v7926 = vunpack.c.h.b16 %v6892
      %v7927 = vunpack.c.l.b16 %v6893
      %v7928 = vunpack.c.h.b16 %v6893
      %v7929 = vunpack.c.l.b16 %v6894
      %v7930 = vunpack.c.h.b16 %v6894
      %v7931 = vunpack.c.l.b16 %v6895
      %v7932 = vunpack.c.h.b16 %v6895
      %v7933 = vunpack.c.l.b16 %v6896
      %v7934 = vunpack.c.h.b16 %v6896
      %v7935 = vunpack.c.l.b16 %v6897
      %v7936 = vunpack.c.h.b16 %v6897
      %v7937 = vunpack.c.l.b16 %v6898
      %v7938 = vunpack.c.h.b16 %v6898
      %v7939 = vunpack.c.l.b16 %v6899
      %v7940 = vunpack.c.h.b16 %v6899
      %v7941 = vunpack.c.l.b16 %v6900
      %v7942 = vunpack.c.h.b16 %v6900
      %v7943 = vunpack.c.l.b16 %v6901
      %v7944 = vunpack.c.h.b16 %v6901
      %v7945 = vunpack.c.l.b16 %v6902
      %v7946 = vunpack.c.h.b16 %v6902
      %v7947 = vunpack.c.l.b16 %v6903
      %v7948 = vunpack.c.h.b16 %v6903
      %v7949 = vunpack.c.l.b16 %v6904
      %v7950 = vunpack.c.h.b16 %v6904
      %v7951 = vunpack.c.l.b16 %v6905
      %v7952 = vunpack.c.h.b16 %v6905
      %v7953 = vunpack.c.l.b16 %v6906
      %v7954 = vunpack.c.h.b16 %v6906
      %v7955 = vunpack.c.l.b16 %v6907
      %v7956 = vunpack.c.h.b16 %v6907
      %v7957 = vunpack.c.l.b16 %v6908
      %v7958 = vunpack.c.h.b16 %v6908
      %v7959 = vunpack.c.l.b16 %v6909
      %v7960 = vunpack.c.h.b16 %v6909
      %v7961 = vunpack.c.l.b16 %v6910
      %v7962 = vunpack.c.h.b16 %v6910
      %v7963 = vunpack.c.l.b16 %v6911
      %v7964 = vunpack.c.h.b16 %v6911
      %v7965 = vunpack.c.l.b16 %v6912
      %v7966 = vunpack.c.h.b16 %v6912
      %v7967 = vunpack.c.l.b16 %v6913
      %v7968 = vunpack.c.h.b16 %v6913
      %v7969 = vunpack.c.l.b16 %v6914
      %v7970 = vunpack.c.h.b16 %v6914
      %v7971 = vunpack.c.l.b16 %v6915
      %v7972 = vunpack.c.h.b16 %v6915
      %v7973 = vunpack.c.l.b16 %v6916
      %v7974 = vunpack.c.h.b16 %v6916
      %v7975 = vunpack.c.l.b16 %v6917
      %v7976 = vunpack.c.h.b16 %v6917
      %v7977 = vunpack.c.l.b16 %v6918
      %v7978 = vunpack.c.h.b16 %v6918
      %v7979 = vunpack.c.l.b16 %v6919
      %v7980 = vunpack.c.h.b16 %v6919
      %v7981 = vunpack.c.l.b16 %v6920
      %v7982 = vunpack.c.h.b16 %v6920
      %v7983 = vunpack.c.l.b16 %v6921
      %v7984 = vunpack.c.h.b16 %v6921
      %v7985 = vunpack.c.l.b16 %v6922
      %v7986 = vunpack.c.h.b16 %v6922
      %v7987 = vunpack.c.l.b16 %v6923
      %v7988 = vunpack.c.h.b16 %v6923
      %v7989 = vunpack.c.l.b16 %v6924
      %v7990 = vunpack.c.h.b16 %v6924
      %v7991 = vunpack.c.l.b16 %v6925
      %v7992 = vunpack.c.h.b16 %v6925
      %v7993 = vunpack.c.l.b16 %v6926
      %v7994 = vunpack.c.h.b16 %v6926
      %v7995 = vunpack.c.l.b16 %v6927
      %v7996 = vunpack.c.h.b16 %v6927
      %v7997 = vunpack.c.l.b16 %v6928
      %v7998 = vunpack.c.h.b16 %v6928
      %v7999 = vunpack.c.l.b16 %v6929
      %v8000 = vunpack.c.h.b16 %v6929
      %v8001 = vunpack.c.l.b16 %v6930
      %v8002 = vunpack.c.h.b16 %v6930
      %v8003 = vunpack.c.l.b16 %v6931
      %v8004 = vunpack.c.h.b16 %v6931
      %v8005 = vunpack.c.l.b16 %v6932
      %v8006 = vunpack.c.h.b16 %v6932
      %v8007 = vunpack.c.l.b16 %v6933
      %v8008 = vunpack.c.h.b16 %v6933
      %v8009 = vunpack.c.l.b16 %v6934
      %v8010 = vunpack.c.h.b16 %v6934
      %v8011 = vunpack.c.l.b16 %v6935
      %v8012 = vunpack.c.h.b16 %v6935
      %v8013 = vunpack.c.l.b16 %v6936
      %v8014 = vunpack.c.h.b16 %v6936
      %v8015 = vunpack.c.l.b16 %v6937
      %v8016 = vunpack.c.h.b16 %v6937
      %v8017 = vunpack.c.l.b16 %v6938
      %v8018 = vunpack.c.h.b16 %v6938
      %v8019 = vunpack.c.l.b16 %v6939
      %v8020 = vunpack.c.h.b16 %v6939
      %v8021 = vunpack.c.l.b16 %v6940
      %v8022 = vunpack.c.h.b16 %v6940
      %v8023 = vunpack.c.l.b16 %v6941
      %v8024 = vunpack.c.h.b16 %v6941
      %v8025 = vunpack.c.l.b16 %v6942
      %v8026 = vunpack.c.h.b16 %v6942
      %v8027 = vunpack.c.l.b16 %v6943
      %v8028 = vunpack.c.h.b16 %v6943
      %v8029 = vunpack.c.l.b16 %v6944
      %v8030 = vunpack.c.h.b16 %v6944
      %v8031 = vunpack.c.l.b16 %v6945
      %v8032 = vunpack.c.h.b16 %v6945
      %v8033 = vunpack.c.l.b16 %v6946
      %v8034 = vunpack.c.h.b16 %v6946
      %v8035 = vunpack.c.l.b16 %v6947
      %v8036 = vunpack.c.h.b16 %v6947
      %v8037 = vunpack.c.l.b16 %v6948
      %v8038 = vunpack.c.h.b16 %v6948
      %v8039 = vunpack.c.l.b16 %v6949
      %v8040 = vunpack.c.h.b16 %v6949
      %v8041 = vunpack.c.l.b16 %v6950
      %v8042 = vunpack.c.h.b16 %v6950
      %v8043 = vunpack.c.l.b16 %v6951
      %v8044 = vunpack.c.h.b16 %v6951
      %v8045 = vunpack.c.l.b16 %v6952
      %v8046 = vunpack.c.h.b16 %v6952
      %v8047 = vunpack.c.l.b16 %v6953
      %v8048 = vunpack.c.h.b16 %v6953
      %v8049 = vunpack.c.l.b16 %v6954
      %v8050 = vunpack.c.h.b16 %v6954
      %v8051 = vunpack.c.l.b16 %v6955
      %v8052 = vunpack.c.h.b16 %v6955
      %v8053 = vunpack.c.l.b16 %v6956
      %v8054 = vunpack.c.h.b16 %v6956
      %v8055 = vunpack.c.l.b16 %v6957
      %v8056 = vunpack.c.h.b16 %v6957
      %v8057 = vunpack.c.l.b16 %v6958
      %v8058 = vunpack.c.h.b16 %v6958
      %v8059 = vunpack.c.l.b16 %v6959
      %v8060 = vunpack.c.h.b16 %v6959
      %v8061 = vunpack.c.l.b16 %v6960
      %v8062 = vunpack.c.h.b16 %v6960
      %v8063 = vunpack.c.l.b16 %v6961
      %v8064 = vunpack.c.h.b16 %v6961
      %v8065 = vunpack.c.l.b16 %v6962
      %v8066 = vunpack.c.h.b16 %v6962
      %v8067 = vunpack.c.l.b16 %v6963
      %v8068 = vunpack.c.h.b16 %v6963
      %v8069 = vunpack.c.l.b16 %v6964
      %v8070 = vunpack.c.h.b16 %v6964
      %v8071 = vunpack.c.l.b16 %v6965
      %v8072 = vunpack.c.h.b16 %v6965
      %v8073 = vunpack.c.l.b16 %v6966
      %v8074 = vunpack.c.h.b16 %v6966
      %v8075 = vunpack.c.l.b16 %v6967
      %v8076 = vunpack.c.h.b16 %v6967
      %v8077 = vunpack.c.l.b16 %v6968
      %v8078 = vunpack.c.h.b16 %v6968
      %v8079 = vunpack.c.l.b16 %v6969
      %v8080 = vunpack.c.h.b16 %v6969
      %v8081 = vunpack.c.l.b16 %v6970
      %v8082 = vunpack.c.h.b16 %v6970
      %v8083 = vunpack.c.l.b16 %v6971
      %v8084 = vunpack.c.h.b16 %v6971
      %v8085 = vunpack.c.l.b16 %v6972
      %v8086 = vunpack.c.h.b16 %v6972
      %v8087 = vunpack.c.l.b16 %v6973
      %v8088 = vunpack.c.h.b16 %v6973
      %v8089 = vunpack.c.l.b16 %v6974
      %v8090 = vunpack.c.h.b16 %v6974
      %v8091 = vunpack.c.l.b16 %v6975
      %v8092 = vunpack.c.h.b16 %v6975
      %v8093 = vunpack.c.l.b16 %v6976
      %v8094 = vunpack.c.h.b16 %v6976
      %v8095 = vunpack.c.l.b16 %v6977
      %v8096 = vunpack.c.h.b16 %v6977
      %v8097 = vunpack.c.l.b16 %v6978
      %v8098 = vunpack.c.h.b16 %v6978
      %v8099 = vunpack.c.l.b16 %v6979
      %v8100 = vunpack.c.h.b16 %v6979
      %v8101 = vunpack.c.l.b16 %v6980
      %v8102 = vunpack.c.h.b16 %v6980
      %v8103 = vunpack.c.l.b16 %v6981
      %v8104 = vunpack.c.h.b16 %v6981
      %v8105 = vunpack.c.l.b16 %v6982
      %v8106 = vunpack.c.h.b16 %v6982
      %v8107 = vunpack.c.l.b16 %v6983
      %v8108 = vunpack.c.h.b16 %v6983
      %v8109 = vunpack.c.l.b16 %v6984
      %v8110 = vunpack.c.h.b16 %v6984
      %v8111 = vunpack.c.l.b16 %v6985
      %v8112 = vunpack.c.h.b16 %v6985
      %v8113 = vunpack.c.l.b16 %v6986
      %v8114 = vunpack.c.h.b16 %v6986
      %v8115 = vunpack.c.l.b16 %v6987
      %v8116 = vunpack.c.h.b16 %v6987
      %v8117 = vunpack.c.l.b16 %v6988
      %v8118 = vunpack.c.h.b16 %v6988
      %v8119 = vunpack.c.l.b16 %v6989
      %v8120 = vunpack.c.h.b16 %v6989
      %v8121 = vunpack.c.l.b16 %v6990
      %v8122 = vunpack.c.h.b16 %v6990
      %v8123 = vunpack.c.l.b16 %v6991
      %v8124 = vunpack.c.h.b16 %v6991
      %v8125 = vunpack.c.l.b16 %v6992
      %v8126 = vunpack.c.h.b16 %v6992
      %v8127 = vunpack.c.l.b16 %v6993
      %v8128 = vunpack.c.h.b16 %v6993
      %v8129 = vunpack.c.l.b16 %v6994
      %v8130 = vunpack.c.h.b16 %v6994
      %v8131 = vunpack.c.l.b16 %v6995
      %v8132 = vunpack.c.h.b16 %v6995
      %v8133 = vunpack.c.l.b16 %v6996
      %v8134 = vunpack.c.h.b16 %v6996
      %v8135 = vunpack.c.l.b16 %v6997
      %v8136 = vunpack.c.h.b16 %v6997
      %v8137 = vunpack.c.l.b16 %v6998
      %v8138 = vunpack.c.h.b16 %v6998
      %v8139 = vunpack.c.l.b16 %v6999
      %v8140 = vunpack.c.h.b16 %v6999
      %v8141 = vunpack.c.l.b16 %v7000
      %v8142 = vunpack.c.h.b16 %v7000
      %v8143 = vunpack.c.l.b16 %v7001
      %v8144 = vunpack.c.h.b16 %v7001
      %v8145 = vunpack.c.l.b16 %v7002
      %v8146 = vunpack.c.h.b16 %v7002
      %v8147 = vunpack.c.l.b16 %v7003
      %v8148 = vunpack.c.h.b16 %v7003
      %v8149 = vunpack.c.l.b16 %v7004
      %v8150 = vunpack.c.h.b16 %v7004
      %v8151 = vunpack.c.l.b16 %v7005
      %v8152 = vunpack.c.h.b16 %v7005
      %v8153 = vunpack.c.l.b16 %v7006
      %v8154 = vunpack.c.h.b16 %v7006
      %v8155 = vunpack.c.l.b16 %v7007
      %v8156 = vunpack.c.h.b16 %v7007
      %v8157 = vunpack.c.l.b16 %v7008
      %v8158 = vunpack.c.h.b16 %v7008
      %v8159 = vunpack.c.l.b16 %v7009
      %v8160 = vunpack.c.h.b16 %v7009
      %v8161 = vunpack.c.l.b16 %v7010
      %v8162 = vunpack.c.h.b16 %v7010
      %v8163 = vunpack.c.l.b16 %v7011
      %v8164 = vunpack.c.h.b16 %v7011
      %v8165 = vunpack.c.l.b16 %v7012
      %v8166 = vunpack.c.h.b16 %v7012
      %v8167 = vunpack.c.l.b16 %v7013
      %v8168 = vunpack.c.h.b16 %v7013
      %v8169 = vunpack.c.l.b16 %v7014
      %v8170 = vunpack.c.h.b16 %v7014
      %v8171 = vunpack.c.l.b16 %v7015
      %v8172 = vunpack.c.h.b16 %v7015
      %v8173 = vunpack.c.l.b16 %v7016
      %v8174 = vunpack.c.h.b16 %v7016
      %v8175 = vunpack.c.l.b16 %v7017
      %v8176 = vunpack.c.h.b16 %v7017
      %v8177 = vunpack.c.l.b16 %v7018
      %v8178 = vunpack.c.h.b16 %v7018
      %v8179 = vunpack.c.l.b16 %v7019
      %v8180 = vunpack.c.h.b16 %v7019
      %v8181 = vunpack.c.l.b16 %v7020
      %v8182 = vunpack.c.h.b16 %v7020
      %v8183 = vunpack.c.l.b16 %v7021
      %v8184 = vunpack.c.h.b16 %v7021
      %v8185 = vunpack.c.l.b16 %v7022
      %v8186 = vunpack.c.h.b16 %v7022
      %v8187 = vunpack.c.l.b16 %v7023
      %v8188 = vunpack.c.h.b16 %v7023
      %v8189 = vunpack.c.l.b16 %v7024
      %v8190 = vunpack.c.h.b16 %v7024
      %v8191 = vunpack.c.l.b16 %v7025
      %v8192 = vunpack.c.h.b16 %v7025
      %v8193 = vunpack.c.l.b16 %v7026
      %v8194 = vunpack.c.h.b16 %v7026
      %v8195 = vunpack.c.l.b16 %v7027
      %v8196 = vunpack.c.h.b16 %v7027
      %v8197 = vunpack.c.l.b16 %v7028
      %v8198 = vunpack.c.h.b16 %v7028
      %v8199 = vunpack.c.l.b16 %v7029
      %v8200 = vunpack.c.h.b16 %v7029
      %v8201 = vunpack.c.l.b16 %v7030
      %v8202 = vunpack.c.h.b16 %v7030
      %v8203 = vunpack.c.l.b16 %v7031
      %v8204 = vunpack.c.h.b16 %v7031
      %v8205 = vunpack.c.l.b16 %v7032
      %v8206 = vunpack.c.h.b16 %v7032
      %v8207 = vunpack.c.l.b16 %v7033
      %v8208 = vunpack.c.h.b16 %v7033
      %v8209 = vunpack.c.l.b16 %v7034
      %v8210 = vunpack.c.h.b16 %v7034
      %v8211 = vunpack.c.l.b16 %v7035
      %v8212 = vunpack.c.h.b16 %v7035
      %v8213 = vunpack.c.l.b16 %v7036
      %v8214 = vunpack.c.h.b16 %v7036
      %v8215 = vunpack.c.l.b16 %v7037
      %v8216 = vunpack.c.h.b16 %v7037
      %v8217 = vunpack.c.l.b16 %v7038
      %v8218 = vunpack.c.h.b16 %v7038
      %v8219 = vunpack.c.l.b16 %v7039
      %v8220 = vunpack.c.h.b16 %v7039
      %v8221 = vunpack.c.l.b16 %v7040
      %v8222 = vunpack.c.h.b16 %v7040
      %v8223 = vunpack.c.l.b16 %v7041
      %v8224 = vunpack.c.h.b16 %v7041
      %v8225 = vunpack.c.l.b16 %v7042
      %v8226 = vunpack.c.h.b16 %v7042
      %v8227 = vunpack.c.l.b16 %v7043
      %v8228 = vunpack.c.h.b16 %v7043
      %v8229 = vunpack.c.l.b16 %v7044
      %v8230 = vunpack.c.h.b16 %v7044
      %v8231 = vunpack.c.l.b16 %v7045
      %v8232 = vunpack.c.h.b16 %v7045
      %v8233 = vunpack.c.l.b16 %v7046
      %v8234 = vunpack.c.h.b16 %v7046
      %v8235 = vunpack.c.l.b16 %v7047
      %v8236 = vunpack.c.h.b16 %v7047
      %v8237 = vunpack.c.l.b16 %v7048
      %v8238 = vunpack.c.h.b16 %v7048
      %v8239 = vunpack.c.l.b16 %v7049
      %v8240 = vunpack.c.h.b16 %v7049
      %v8241 = vunpack.c.l.b16 %v7050
      %v8242 = vunpack.c.h.b16 %v7050
      %v8243 = vunpack.c.l.b16 %v7051
      %v8244 = vunpack.c.h.b16 %v7051
      %v8245 = vunpack.c.l.b16 %v7052
      %v8246 = vunpack.c.h.b16 %v7052
      %v8247 = vunpack.c.l.b16 %v7053
      %v8248 = vunpack.c.h.b16 %v7053
      %v8249 = vunpack.c.l.b16 %v7054
      %v8250 = vunpack.c.h.b16 %v7054
      %v8251 = vunpack.c.l.b16 %v7055
      %v8252 = vunpack.c.h.b16 %v7055
      %v8253 = vunpack.c.l.b16 %v7056
      %v8254 = vunpack.c.h.b16 %v7056
      %v8255 = vunpack.c.l.b16 %v7057
      %v8256 = vunpack.c.h.b16 %v7057
      %v8257 = vunpack.c.l.b16 %v7058
      %v8258 = vunpack.c.h.b16 %v7058
      %v8259 = vunpack.c.l.b16 %v7059
      %v8260 = vunpack.c.h.b16 %v7059
      %v8261 = vunpack.c.l.b16 %v7060
      %v8262 = vunpack.c.h.b16 %v7060
      %v8263 = vunpack.c.l.b16 %v7061
      %v8264 = vunpack.c.h.b16 %v7061
      %v8265 = vunpack.c.l.b16 %v7062
      %v8266 = vunpack.c.h.b16 %v7062
      %v8267 = vunpack.c.l.b16 %v7063
      %v8268 = vunpack.c.h.b16 %v7063
      %v8269 = vunpack.c.l.b16 %v7064
      %v8270 = vunpack.c.h.b16 %v7064
      %v8271 = vunpack.c.l.b16 %v7065
      %v8272 = vunpack.c.h.b16 %v7065
      %v8273 = vunpack.c.l.b16 %v7066
      %v8274 = vunpack.c.h.b16 %v7066
      %v8275 = vunpack.c.l.b16 %v7067
      %v8276 = vunpack.c.h.b16 %v7067
      %v8277 = vunpack.c.l.b16 %v7068
      %v8278 = vunpack.c.h.b16 %v7068
      %v8279 = vunpack.c.l.b16 %v7069
      %v8280 = vunpack.c.h.b16 %v7069
      %v8281 = vunpack.c.l.b16 %v7070
      %v8282 = vunpack.c.h.b16 %v7070
      %v8283 = vunpack.c.l.b16 %v7071
      %v8284 = vunpack.c.h.b16 %v7071
      %v8285 = vunpack.c.l.b16 %v7072
      %v8286 = vunpack.c.h.b16 %v7072
      %v8287 = vunpack.c.l.b16 %v7073
      %v8288 = vunpack.c.h.b16 %v7073
      %v8289 = vunpack.c.l.b16 %v7074
      %v8290 = vunpack.c.h.b16 %v7074
      %v8291 = vunpack.c.l.b16 %v7075
      %v8292 = vunpack.c.h.b16 %v7075
      %v8293 = vunpack.c.l.b16 %v7076
      %v8294 = vunpack.c.h.b16 %v7076
      %v8295 = vunpack.c.l.b16 %v7077
      %v8296 = vunpack.c.h.b16 %v7077
      %v8297 = vunpack.c.l.b16 %v7078
      %v8298 = vunpack.c.h.b16 %v7078
      %v8299 = vunpack.c.l.b16 %v7079
      %v8300 = vunpack.c.h.b16 %v7079
      %v8301 = vunpack.c.l.b16 %v7080
      %v8302 = vunpack.c.h.b16 %v7080
      %v8303 = vunpack.c.l.b16 %v7081
      %v8304 = vunpack.c.h.b16 %v7081
      %v8305 = vunpack.c.l.b16 %v7082
      %v8306 = vunpack.c.h.b16 %v7082
      %v8307 = vunpack.c.l.b16 %v7083
      %v8308 = vunpack.c.h.b16 %v7083
      %v8309 = vunpack.c.l.b16 %v7084
      %v8310 = vunpack.c.h.b16 %v7084
      %v8311 = vunpack.c.l.b16 %v7085
      %v8312 = vunpack.c.h.b16 %v7085
      %v8313 = vunpack.c.l.b16 %v7086
      %v8314 = vunpack.c.h.b16 %v7086
      %v8315 = vunpack.c.l.b16 %v7087
      %v8316 = vunpack.c.h.b16 %v7087
      %v8317 = vunpack.c.l.b16 %v7088
      %v8318 = vunpack.c.h.b16 %v7088
      %v8319 = vunpack.c.l.b16 %v7089
      %v8320 = vunpack.c.h.b16 %v7089
      %v8321 = vunpack.c.l.b16 %v7090
      %v8322 = vunpack.c.h.b16 %v7090
      %v8323 = vunpack.c.l.b16 %v7091
      %v8324 = vunpack.c.h.b16 %v7091
      %v8325 = vunpack.c.l.b16 %v7092
      %v8326 = vunpack.c.h.b16 %v7092
      %v8327 = vunpack.c.l.b16 %v7093
      %v8328 = vunpack.c.h.b16 %v7093
      %v8329 = vunpack.c.l.b16 %v7094
      %v8330 = vunpack.c.h.b16 %v7094
      %v8331 = vunpack.c.l.b16 %v7095
      %v8332 = vunpack.c.h.b16 %v7095
      %v8333 = vunpack.c.l.b16 %v7096
      %v8334 = vunpack.c.h.b16 %v7096
      %v8335 = vunpack.c.l.b16 %v7097
      %v8336 = vunpack.c.h.b16 %v7097
      %v8337 = vunpack.c.l.b16 %v7098
      %v8338 = vunpack.c.h.b16 %v7098
      %v8339 = vunpack.c.l.b16 %v7099
      %v8340 = vunpack.c.h.b16 %v7099
      %v8341 = vunpack.c.l.b16 %v7100
      %v8342 = vunpack.c.h.b16 %v7100
      %v8343 = vunpack.c.l.b16 %v7101
      %v8344 = vunpack.c.h.b16 %v7101
      %v8345 = vunpack.c.l.b16 %v7102
      %v8346 = vunpack.c.h.b16 %v7102
      %v8347 = vunpack.c.l.b16 %v7103
      %v8348 = vunpack.c.h.b16 %v7103
      %v8349 = vunpack.c.l.b16 %v7104
      %v8350 = vunpack.c.h.b16 %v7104
      %v8351 = vunpack.c.l.b16 %v7105
      %v8352 = vunpack.c.h.b16 %v7105
      %v8353 = vunpack.c.l.b16 %v7106
      %v8354 = vunpack.c.h.b16 %v7106
      %v8355 = vunpack.c.l.b16 %v7107
      %v8356 = vunpack.c.h.b16 %v7107
      %v8357 = vunpack.c.l.b16 %v7108
      %v8358 = vunpack.c.h.b16 %v7108
      %v8359 = vunpack.c.l.b16 %v7109
      %v8360 = vunpack.c.h.b16 %v7109
      %v8361 = vunpack.c.l.b16 %v7110
      %v8362 = vunpack.c.h.b16 %v7110
      %v8363 = vunpack.c.l.b16 %v7111
      %v8364 = vunpack.c.h.b16 %v7111
      %v8365 = vunpack.c.l.b16 %v7112
      %v8366 = vunpack.c.h.b16 %v7112
      %v8367 = vunpack.c.l.b16 %v7113
      %v8368 = vunpack.c.h.b16 %v7113
      %v8369 = vunpack.c.l.b16 %v7114
      %v8370 = vunpack.c.h.b16 %v7114
      %v8371 = vunpack.c.l.b16 %v7115
      %v8372 = vunpack.c.h.b16 %v7115
      %v8373 = vunpack.c.l.b16 %v7116
      %v8374 = vunpack.c.h.b16 %v7116
      %v8375 = vunpack.c.l.b16 %v7117
      %v8376 = vunpack.c.h.b16 %v7117
      %v8377 = vunpack.c.l.b16 %v7118
      %v8378 = vunpack.c.h.b16 %v7118
      %v8379 = vunpack.c.l.b16 %v7119
      %v8380 = vunpack.c.h.b16 %v7119
      %v8381 = vunpack.c.l.b16 %v7120
      %v8382 = vunpack.c.h.b16 %v7120
      %v8383 = vunpack.c.l.b16 %v7121
      %v8384 = vunpack.c.h.b16 %v7121
      %v8385 = vunpack.c.l.b16 %v7122
      %v8386 = vunpack.c.h.b16 %v7122
      %v8387 = vunpack.c.l.b16 %v7123
      %v8388 = vunpack.c.h.b16 %v7123
      %v8389 = vunpack.c.l.b16 %v7124
      %v8390 = vunpack.c.h.b16 %v7124
      %v8391 = vunpack.c.l.b16 %v7125
      %v8392 = vunpack.c.h.b16 %v7125
      %v8393 = vunpack.c.l.b16 %v7126
      %v8394 = vunpack.c.h.b16 %v7126
      %v8395 = vunpack.c.l.b16 %v7127
      %v8396 = vunpack.c.h.b16 %v7127
      %v8397 = vunpack.c.l.b16 %v7128
      %v8398 = vunpack.c.h.b16 %v7128
      %v8399 = vunpack.c.l.b16 %v7129
      %v8400 = vunpack.c.h.b16 %v7129
      %v8401 = vunpack.c.l.b16 %v7130
      %v8402 = vunpack.c.h.b16 %v7130
      %v8403 = vunpack.c.l.b16 %v7131
      %v8404 = vunpack.c.h.b16 %v7131
      %v8405 = vunpack.c.l.b16 %v7132
      %v8406 = vunpack.c.h.b16 %v7132
      %v8407 = vunpack.c.l.b16 %v7133
      %v8408 = vunpack.c.h.b16 %v7133
      %v8409 = vunpack.c.l.b16 %v7134
      %v8410 = vunpack.c.h.b16 %v7134
      %v8411 = vunpack.c.l.b16 %v7135
      %v8412 = vunpack.c.h.b16 %v7135
      %v8413 = vunpack.c.l.b16 %v7136
      %v8414 = vunpack.c.h.b16 %v7136
      %v8415 = vunpack.c.l.b16 %v7137
      %v8416 = vunpack.c.h.b16 %v7137
      %v8417 = vunpack.c.l.b16 %v7138
      %v8418 = vunpack.c.h.b16 %v7138
      %v8419 = vunpack.c.l.b16 %v7139
      %v8420 = vunpack.c.h.b16 %v7139
      %v8421 = vunpack.c.l.b16 %v7140
      %v8422 = vunpack.c.h.b16 %v7140
      %v8423 = vunpack.c.l.b16 %v7141
      %v8424 = vunpack.c.h.b16 %v7141
      %v8425 = vunpack.c.l.b16 %v7142
      %v8426 = vunpack.c.h.b16 %v7142
      %v8427 = vunpack.c.l.b16 %v7143
      %v8428 = vunpack.c.h.b16 %v7143
      %v8429 = vunpack.c.l.b16 %v7144
      %v8430 = vunpack.c.h.b16 %v7144
      %v8431 = vunpack.c.l.b16 %v7145
      %v8432 = vunpack.c.h.b16 %v7145
      %v8433 = vunpack.c.l.b16 %v7146
      %v8434 = vunpack.c.h.b16 %v7146
      %v8435 = vunpack.c.l.b16 %v7147
      %v8436 = vunpack.c.h.b16 %v7147
      %v8437 = vunpack.c.l.b16 %v7148
      %v8438 = vunpack.c.h.b16 %v7148
      %v8439 = vunpack.c.l.b16 %v7149
      %v8440 = vunpack.c.h.b16 %v7149
      %v8441 = vunpack.c.l.b16 %v7150
      %v8442 = vunpack.c.h.b16 %v7150
      %v8443 = vunpack.c.l.b16 %v7151
      %v8444 = vunpack.c.h.b16 %v7151
      %v8445 = vunpack.c.l.b16 %v7152
      %v8446 = vunpack.c.h.b16 %v7152
      %v8447 = vunpack.c.l.b16 %v7153
      %v8448 = vunpack.c.h.b16 %v7153
      %v8449 = vunpack.c.l.b16 %v7154
      %v8450 = vunpack.c.h.b16 %v7154
      %v8451 = vunpack.c.l.b16 %v7155
      %v8452 = vunpack.c.h.b16 %v7155
      %v8453 = vunpack.c.l.b16 %v7156
      %v8454 = vunpack.c.h.b16 %v7156
      %v8455 = vunpack.c.l.b16 %v7157
      %v8456 = vunpack.c.h.b16 %v7157
      %v8457 = vunpack.c.l.b16 %v7158
      %v8458 = vunpack.c.h.b16 %v7158
      %v8459 = vunpack.c.l.b16 %v7159
      %v8460 = vunpack.c.h.b16 %v7159
      %v8461 = vunpack.c.l.b16 %v7160
      %v8462 = vunpack.c.h.b16 %v7160
      %v8463 = vunpack.c.l.b16 %v7161
      %v8464 = vunpack.c.h.b16 %v7161
      %v8465 = vunpack.c.l.b16 %v7162
      %v8466 = vunpack.c.h.b16 %v7162
      %v8467 = vunpack.c.l.b16 %v7163
      %v8468 = vunpack.c.h.b16 %v7163
      %v8469 = vunpack.c.l.b16 %v7164
      %v8470 = vunpack.c.h.b16 %v7164
      %v8471 = vunpack.c.l.b16 %v7165
      %v8472 = vunpack.c.h.b16 %v7165
      %v8473 = vunpack.c.l.b16 %v7166
      %v8474 = vunpack.c.h.b16 %v7166
      %v8475 = vunpack.c.l.b16 %v7167
      %v8476 = vunpack.c.h.b16 %v7167
      %v8477 = vunpack.c.l.b16 %v7168
      %v8478 = vunpack.c.h.b16 %v7168
      %v8479 = vunpack.c.l.b16 %v7169
      %v8480 = vunpack.c.h.b16 %v7169
      %v8481 = vunpack.c.l.b16 %v7170
      %v8482 = vunpack.c.h.b16 %v7170
      %v8483 = vunpack.c.l.b16 %v7171
      %v8484 = vunpack.c.h.b16 %v7171
      %v8485 = vunpack.c.l.b16 %v7172
      %v8486 = vunpack.c.h.b16 %v7172
      %v8487 = vunpack.c.l.b16 %v7173
      %v8488 = vunpack.c.h.b16 %v7173
      %v8489 = vunpack.c.l.b16 %v7174
      %v8490 = vunpack.c.h.b16 %v7174
      %v8491 = vunpack.c.l.b16 %v7175
      %v8492 = vunpack.c.h.b16 %v7175
      %v8493 = vunpack.c.l.b16 %v7176
      %v8494 = vunpack.c.h.b16 %v7176
      %v8495 = vunpack.c.l.b16 %v7177
      %v8496 = vunpack.c.h.b16 %v7177
      %v8497 = vunpack.c.l.b16 %v7178
      %v8498 = vunpack.c.h.b16 %v7178
      %v8499 = vunpack.c.l.b16 %v7179
      %v8500 = vunpack.c.h.b16 %v7179
      %v8501 = vunpack.c.l.b16 %v7180
      %v8502 = vunpack.c.h.b16 %v7180
      %v8503 = vunpack.c.l.b16 %v7181
      %v8504 = vunpack.c.h.b16 %v7181
      %v8505 = vunpack.c.l.b16 %v7182
      %v8506 = vunpack.c.h.b16 %v7182
      %v8507 = vunpack.c.l.b16 %v7183
      %v8508 = vunpack.c.h.b16 %v7183
      %v8509 = vunpack.c.l.b16 %v7184
      %v8510 = vunpack.c.h.b16 %v7184
      %v8511 = vunpack.c.l.b16 %v7185
      %v8512 = vunpack.c.h.b16 %v7185
      %v8513 = vunpack.c.l.b16 %v7186
      %v8514 = vunpack.c.h.b16 %v7186
      %v8515 = vunpack.c.l.b16 %v7187
      %v8516 = vunpack.c.h.b16 %v7187
      %v8517 = vunpack.c.l.b16 %v7188
      %v8518 = vunpack.c.h.b16 %v7188
      %v8519 = vunpack.c.l.b16 %v7189
      %v8520 = vunpack.c.h.b16 %v7189
      %v8521 = vunpack.c.l.b16 %v7190
      %v8522 = vunpack.c.h.b16 %v7190
      %v8523 = vunpack.c.l.b16 %v7191
      %v8524 = vunpack.c.h.b16 %v7191
      %v8525 = vunpack.c.l.b16 %v7192
      %v8526 = vunpack.c.h.b16 %v7192
      %v8527 = vunpack.c.l.b16 %v7193
      %v8528 = vunpack.c.h.b16 %v7193
      %v8529 = vunpack.c.l.b16 %v7194
      %v8530 = vunpack.c.h.b16 %v7194
      %v8531 = vunpack.c.l.b16 %v7195
      %v8532 = vunpack.c.h.b16 %v7195
      %v8533 = vunpack.c.l.b16 %v7196
      %v8534 = vunpack.c.h.b16 %v7196
      %v8535 = vunpack.c.l.b16 %v7197
      %v8536 = vunpack.c.h.b16 %v7197
      %v8537 = vunpack.c.l.b16 %v7198
      %v8538 = vunpack.c.h.b16 %v7198
      %v8539 = vunpack.c.l.b16 %v7199
      %v8540 = vunpack.c.h.b16 %v7199
      %v8541 = vunpack.c.l.b16 %v7200
      %v8542 = vunpack.c.h.b16 %v7200
      %v8543 = vunpack.c.l.b16 %v7201
      %v8544 = vunpack.c.h.b16 %v7201
      %v8545 = vunpack.c.l.b16 %v7202
      %v8546 = vunpack.c.h.b16 %v7202
      %v8547 = vunpack.c.l.b16 %v7203
      %v8548 = vunpack.c.h.b16 %v7203
      %v8549 = vunpack.c.l.b16 %v7204
      %v8550 = vunpack.c.h.b16 %v7204
      %v8551 = vunpack.c.l.b16 %v7205
      %v8552 = vunpack.c.h.b16 %v7205
      %v8553 = vunpack.c.l.b16 %v7206
      %v8554 = vunpack.c.h.b16 %v7206
      %v8555 = vunpack.c.l.b16 %v7207
      %v8556 = vunpack.c.h.b16 %v7207
      %v8557 = vunpack.c.l.b16 %v7208
      %v8558 = vunpack.c.h.b16 %v7208
      %v8559 = vunpack.c.l.b16 %v7209
      %v8560 = vunpack.c.h.b16 %v7209
      %v8561 = vunpack.c.l.b16 %v7210
      %v8562 = vunpack.c.h.b16 %v7210
      %v8563 = vunpack.c.l.b16 %v7211
      %v8564 = vunpack.c.h.b16 %v7211
      %v8565 = vunpack.c.l.b16 %v7212
      %v8566 = vunpack.c.h.b16 %v7212
      %v8567 = vunpack.c.l.b16 %v7213
      %v8568 = vunpack.c.h.b16 %v7213
      %v8569 = vunpack.c.l.b16 %v7214
      %v8570 = vunpack.c.h.b16 %v7214
      %v8571 = vunpack.c.l.b16 %v7215
      %v8572 = vunpack.c.h.b16 %v7215
      %v8573 = vunpack.c.l.b16 %v7216
      %v8574 = vunpack.c.h.b16 %v7216
      %v8575 = vunpack.c.l.b16 %v7217
      %v8576 = vunpack.c.h.b16 %v7217
      %v8577 = vunpack.c.l.b16 %v7218
      %v8578 = vunpack.c.h.b16 %v7218
      %v8579 = vunpack.c.l.b16 %v7219
      %v8580 = vunpack.c.h.b16 %v7219
      %v8581 = vunpack.c.l.b16 %v7220
      %v8582 = vunpack.c.h.b16 %v7220
      %v8583 = vunpack.c.l.b16 %v7221
      %v8584 = vunpack.c.h.b16 %v7221
      %v8585 = vunpack.c.l.b16 %v7222
      %v8586 = vunpack.c.h.b16 %v7222
      %v8587 = vunpack.c.l.b16 %v7223
      %v8588 = vunpack.c.h.b16 %v7223
      %v8589 = vunpack.c.l.b16 %v7224
      %v8590 = vunpack.c.h.b16 %v7224
      %v8591 = vunpack.c.l.b16 %v7225
      %v8592 = vunpack.c.h.b16 %v7225
      %v8593 = vunpack.c.l.b16 %v7226
      %v8594 = vunpack.c.h.b16 %v7226
      %v8595 = vunpack.c.l.b16 %v7227
      %v8596 = vunpack.c.h.b16 %v7227
      %v8597 = vunpack.c.l.b16 %v7228
      %v8598 = vunpack.c.h.b16 %v7228
      %v8599 = vunpack.c.l.b16 %v7229
      %v8600 = vunpack.c.h.b16 %v7229
      %v8601 = vunpack.c.l.b16 %v7230
      %v8602 = vunpack.c.h.b16 %v7230
      %v8603 = vunpack.c.l.b16 %v7231
      %v8604 = vunpack.c.h.b16 %v7231
      %v8605 = vunpack.c.l.b16 %v7232
      %v8606 = vunpack.c.h.b16 %v7232
      %v8607 = vunpack.c.l.b16 %v7233
      %v8608 = vunpack.c.h.b16 %v7233
      %v8609 = vunpack.c.l.b16 %v7234
      %v8610 = vunpack.c.h.b16 %v7234
      %v8611 = vunpack.c.l.b16 %v7235
      %v8612 = vunpack.c.h.b16 %v7235
      %v8613 = vunpack.c.l.b16 %v7236
      %v8614 = vunpack.c.h.b16 %v7236
      %v8615 = vunpack.c.l.b16 %v7237
      %v8616 = vunpack.c.h.b16 %v7237
      %v8617 = vunpack.c.l.b16 %v7238
      %v8618 = vunpack.c.h.b16 %v7238
      %v8619 = vunpack.c.l.b16 %v7239
      %v8620 = vunpack.c.h.b16 %v7239
      %v8621 = vunpack.c.l.b16 %v7240
      %v8622 = vunpack.c.h.b16 %v7240
      %v8623 = vunpack.c.l.b16 %v7241
      %v8624 = vunpack.c.h.b16 %v7241
      %v8625 = vunpack.c.l.b16 %v7242
      %v8626 = vunpack.c.h.b16 %v7242
      %v8627 = vunpack.c.l.b16 %v7243
      %v8628 = vunpack.c.h.b16 %v7243
      %v8629 = vunpack.c.l.b16 %v7244
      %v8630 = vunpack.c.h.b16 %v7244
      %v8631 = vunpack.c.l.b16 %v7245
      %v8632 = vunpack.c.h.b16 %v7245
      %v8633 = vunpack.c.l.b16 %v7246
      %v8634 = vunpack.c.h.b16 %v7246
      %v8635 = vunpack.c.l.b16 %v7247
      %v8636 = vunpack.c.h.b16 %v7247
      %v8637 = vunpack.c.l.b16 %v7248
      %v8638 = vunpack.c.h.b16 %v7248
      %v8639 = vunpack.c.l.b16 %v7249
      %v8640 = vunpack.c.h.b16 %v7249
      %v8641 = vunpack.c.l.b16 %v7250
      %v8642 = vunpack.c.h.b16 %v7250
      %v8643 = vunpack.c.l.b16 %v7251
      %v8644 = vunpack.c.h.b16 %v7251
      %v8645 = vunpack.c.l.b16 %v7252
      %v8646 = vunpack.c.h.b16 %v7252
      %v8647 = vunpack.c.l.b16 %v7253
      %v8648 = vunpack.c.h.b16 %v7253
      %v8649 = vunpack.c.l.b16 %v7254
      %v8650 = vunpack.c.h.b16 %v7254
      %v8651 = vunpack.c.l.b16 %v7255
      %v8652 = vunpack.c.h.b16 %v7255
      %v8653 = vunpack.c.l.b16 %v7256
      %v8654 = vunpack.c.h.b16 %v7256
      %v8655 = vunpack.c.l.b16 %v7257
      %v8656 = vunpack.c.h.b16 %v7257
      %v8657 = vunpack.c.l.b16 %v7258
      %v8658 = vunpack.c.h.b16 %v7258
      %v8659 = vunpack.c.l.b16 %v7259
      %v8660 = vunpack.c.h.b16 %v7259
      %v8661 = vunpack.c.l.b16 %v7260
      %v8662 = vunpack.c.h.b16 %v7260
      %v8663 = vunpack.c.l.b16 %v7261
      %v8664 = vunpack.c.h.b16 %v7261
      %v8665 = vunpack.c.l.b16 %v7262
      %v8666 = vunpack.c.h.b16 %v7262
      %v8667 = vunpack.c.l.b16 %v7263
      %v8668 = vunpack.c.h.b16 %v7263
      %v8669 = vunpack.c.l.b16 %v7264
      %v8670 = vunpack.c.h.b16 %v7264
      %v8671 = vunpack.c.l.b16 %v7265
      %v8672 = vunpack.c.h.b16 %v7265
      %v8673 = vunpack.c.l.b16 %v7266
      %v8674 = vunpack.c.h.b16 %v7266
      %v8675 = vunpack.c.l.b16 %v7267
      %v8676 = vunpack.c.h.b16 %v7267
      %v8677 = vunpack.c.l.b16 %v7268
      %v8678 = vunpack.c.h.b16 %v7268
      %v8679 = vunpack.c.l.b16 %v7269
      %v8680 = vunpack.c.h.b16 %v7269
      %v8681 = vunpack.c.l.b16 %v7270
      %v8682 = vunpack.c.h.b16 %v7270
      %v8683 = vunpack.c.l.b16 %v7271
      %v8684 = vunpack.c.h.b16 %v7271
      %v8685 = vunpack.c.l.b16 %v7272
      %v8686 = vunpack.c.h.b16 %v7272
      %v8687 = vunpack.c.l.b16 %v7273
      %v8688 = vunpack.c.h.b16 %v7273
      %v8689 = vunpack.c.l.b16 %v7274
      %v8690 = vunpack.c.h.b16 %v7274
      %v8691 = vunpack.c.l.b16 %v7275
      %v8692 = vunpack.c.h.b16 %v7275
      %v8693 = vunpack.c.l.b16 %v7276
      %v8694 = vunpack.c.h.b16 %v7276
      %v8695 = vunpack.c.l.b16 %v7277
      %v8696 = vunpack.c.h.b16 %v7277
      %v8697 = vunpack.c.l.b16 %v7278
      %v8698 = vunpack.c.h.b16 %v7278
      %v8699 = vunpack.c.l.b16 %v7279
      %v8700 = vunpack.c.h.b16 %v7279
      %v8701 = vunpack.c.l.b16 %v7280
      %v8702 = vunpack.c.h.b16 %v7280
      %v8703 = vunpack.c.l.b16 %v7281
      %v8704 = vunpack.c.h.b16 %v7281
      %v8705 = vunpack.c.l.b16 %v7282
      %v8706 = vunpack.c.h.b16 %v7282
      %v8707 = vunpack.c.l.b16 %v7283
      %v8708 = vunpack.c.h.b16 %v7283
      %v8709 = vunpack.c.l.b16 %v7284
      %v8710 = vunpack.c.h.b16 %v7284
      %v8711 = vunpack.c.l.b16 %v7285
      %v8712 = vunpack.c.h.b16 %v7285
      %v8713 = vunpack.c.l.b16 %v7286
      %v8714 = vunpack.c.h.b16 %v7286
      %v8715 = vunpack.c.l.b16 %v7287
      %v8716 = vunpack.c.h.b16 %v7287
      %v8717 = vunpack.c.l.b16 %v7288
      %v8718 = vunpack.c.h.b16 %v7288
      %v8719 = vunpack.c.l.b16 %v7289
      %v8720 = vunpack.c.h.b16 %v7289
      %v8721 = vunpack.c.l.b16 %v7290
      %v8722 = vunpack.c.h.b16 %v7290
      %v8723 = vunpack.c.l.b16 %v7291
      %v8724 = vunpack.c.h.b16 %v7291
      %v8725 = vunpack.c.l.b16 %v7292
      %v8726 = vunpack.c.h.b16 %v7292
      %v8727 = vunpack.c.l.b16 %v7293
      %v8728 = vunpack.c.h.b16 %v7293
      %v8729 = vunpack.c.l.b16 %v7294
      %v8730 = vunpack.c.h.b16 %v7294
      %v8731 = vunpack.c.l.b16 %v7295
      %v8732 = vunpack.c.h.b16 %v7295
      %v8733 = vunpack.c.l.b16 %v7296
      %v8734 = vunpack.c.h.b16 %v7296
      %v8735 = vunpack.c.l.b16 %v7297
      %v8736 = vunpack.c.h.b16 %v7297
      %v8737 = vunpack.c.l.b16 %v7298
      %v8738 = vunpack.c.h.b16 %v7298
      %v8739 = vunpack.c.l.b16 %v7299
      %v8740 = vunpack.c.h.b16 %v7299
      %v8741 = vunpack.c.l.b16 %v7300
      %v8742 = vunpack.c.h.b16 %v7300
      %v8743 = vunpack.c.l.b16 %v7301
      %v8744 = vunpack.c.h.b16 %v7301
      %v8745 = vunpack.c.l.b16 %v7302
      %v8746 = vunpack.c.h.b16 %v7302
      %v8747 = vunpack.c.l.b16 %v7303
      %v8748 = vunpack.c.h.b16 %v7303
      %v8749 = vunpack.c.l.b16 %v7304
      %v8750 = vunpack.c.h.b16 %v7304
      %v8751 = vunpack.c.l.b16 %v7305
      %v8752 = vunpack.c.h.b16 %v7305
      %v8753 = vunpack.c.l.b16 %v7306
      %v8754 = vunpack.c.h.b16 %v7306
      %v8755 = vunpack.c.l.b16 %v7307
      %v8756 = vunpack.c.h.b16 %v7307
      %v8757 = vunpack.c.l.b16 %v7308
      %v8758 = vunpack.c.h.b16 %v7308
      %v8759 = vunpack.c.l.b16 %v7309
      %v8760 = vunpack.c.h.b16 %v7309
      %v8761 = vunpack.c.l.b16 %v7310
      %v8762 = vunpack.c.h.b16 %v7310
      %v8763 = vunpack.c.l.b16 %v7311
      %v8764 = vunpack.c.h.b16 %v7311
      %v8765 = vunpack.c.l.b16 %v7312
      %v8766 = vunpack.c.h.b16 %v7312
      %v8767 = vunpack.c.l.b16 %v7313
      %v8768 = vunpack.c.h.b16 %v7313
      %v8769 = vunpack.c.l.b16 %v7314
      %v8770 = vunpack.c.h.b16 %v7314
      %v8771 = vunpack.c.l.b16 %v7315
      %v8772 = vunpack.c.h.b16 %v7315
      %v8773 = vunpack.c.l.b16 %v7316
      %v8774 = vunpack.c.h.b16 %v7316
      %v8775 = vunpack.c.l.b16 %v7317
      %v8776 = vunpack.c.h.b16 %v7317
      %v8777 = vunpack.c.l.b16 %v7318
      %v8778 = vunpack.c.h.b16 %v7318
      %v8779 = vunpack.c.l.b16 %v7319
      %v8780 = vunpack.c.h.b16 %v7319
      %v8781 = vunpack.c.l.b16 %v7320
      %v8782 = vunpack.c.h.b16 %v7320
      %v8783 = vunpack.c.l.b16 %v7321
      %v8784 = vunpack.c.h.b16 %v7321
      %v8785 = vunpack.c.l.b16 %v7322
      %v8786 = vunpack.c.h.b16 %v7322
      %v8787 = vunpack.c.l.b16 %v7323
      %v8788 = vunpack.c.h.b16 %v7323
      %v8789 = vunpack.c.l.b16 %v7324
      %v8790 = vunpack.c.h.b16 %v7324
      %v8791 = vunpack.c.l.b16 %v7325
      %v8792 = vunpack.c.h.b16 %v7325
      %v8793 = vunpack.c.l.b16 %v7326
      %v8794 = vunpack.c.h.b16 %v7326
      %v8795 = vunpack.c.l.b16 %v7327
      %v8796 = vunpack.c.h.b16 %v7327
      %v8797 = vunpack.c.l.b16 %v7328
      %v8798 = vunpack.c.h.b16 %v7328
      %v8799 = vunpack.c.l.b16 %v7329
      %v8800 = vunpack.c.h.b16 %v7329
      %v8801 = vunpack.c.l.b16 %v7330
      %v8802 = vunpack.c.h.b16 %v7330
      %v8803 = vunpack.c.l.b16 %v7331
      %v8804 = vunpack.c.h.b16 %v7331
      %v8805 = vunpack.c.l.b16 %v7332
      %v8806 = vunpack.c.h.b16 %v7332
      %v8807 = vunpack.c.l.b16 %v7333
      %v8808 = vunpack.c.h.b16 %v7333
      %v8809 = vunpack.c.l.b16 %v7334
      %v8810 = vunpack.c.h.b16 %v7334
      %v8811 = vunpack.c.l.b16 %v7335
      %v8812 = vunpack.c.h.b16 %v7335
      %v8813 = vunpack.c.l.b16 %v7336
      %v8814 = vunpack.c.h.b16 %v7336
      %v8815 = vunpack.c.l.b16 %v7337
      %v8816 = vunpack.c.h.b16 %v7337
      %v8817 = vunpack.c.l.b16 %v7338
      %v8818 = vunpack.c.h.b16 %v7338
      %v8819 = vunpack.c.l.b16 %v7339
      %v8820 = vunpack.c.h.b16 %v7339
      %v8821 = vunpack.c.l.b16 %v7340
      %v8822 = vunpack.c.h.b16 %v7340
      %v8823 = vunpack.c.l.b16 %v7341
      %v8824 = vunpack.c.h.b16 %v7341
      %v8825 = vunpack.c.l.b16 %v7342
      %v8826 = vunpack.c.h.b16 %v7342
      %v8827 = vunpack.c.l.b16 %v7343
      %v8828 = vunpack.c.h.b16 %v7343
      %v8829 = vunpack.c.l.b16 %v7344
      %v8830 = vunpack.c.h.b16 %v7344
      %v8831 = vunpack.c.l.b16 %v7345
      %v8832 = vunpack.c.h.b16 %v7345
      %v8833 = vunpack.c.l.b16 %v7346
      %v8834 = vunpack.c.h.b16 %v7346
      %v8835 = vunpack.c.l.b16 %v7347
      %v8836 = vunpack.c.h.b16 %v7347
      %v8837 = vunpack.c.l.b16 %v7348
      %v8838 = vunpack.c.h.b16 %v7348
      %v8839 = vunpack.c.l.b16 %v7349
      %v8840 = vunpack.c.h.b16 %v7349
      %v8841 = vunpack.c.l.b16 %v7350
      %v8842 = vunpack.c.h.b16 %v7350
      %v8843 = vunpack.c.l.b16 %v7351
      %v8844 = vunpack.c.h.b16 %v7351
      %v8845 = vunpack.c.l.b16 %v7352
      %v8846 = vunpack.c.h.b16 %v7352
      %v8847 = vunpack.c.l.b16 %v7353
      %v8848 = vunpack.c.h.b16 %v7353
      %v8849 = vunpack.c.l.b16 %v7354
      %v8850 = vunpack.c.h.b16 %v7354
      %v8851 = vunpack.c.l.b16 %v7355
      %v8852 = vunpack.c.h.b16 %v7355
      %v8853 = vunpack.c.l.b16 %v7356
      %v8854 = vunpack.c.h.b16 %v7356
      %v8855 = vunpack.c.l.b16 %v7357
      %v8856 = vunpack.c.h.b16 %v7357
      %v8857 = vunpack.c.l.b16 %v7358
      %v8858 = vunpack.c.h.b16 %v7358
      %v8859 = vunpack.c.l.b16 %v7359
      %v8860 = vunpack.c.h.b16 %v7359
      %v8861 = vunpack.c.l.b16 %v7360
      %v8862 = vunpack.c.h.b16 %v7360
      %v8863 = vunpack.c.l.b16 %v7361
      %v8864 = vunpack.c.h.b16 %v7361
      %v8865 = vunpack.c.l.b16 %v7362
      %v8866 = vunpack.c.h.b16 %v7362
      %v8867 = vunpack.c.l.b16 %v7363
      %v8868 = vunpack.c.h.b16 %v7363
      %v8869 = vunpack.c.l.b16 %v7364
      %v8870 = vunpack.c.h.b16 %v7364
      %v8871 = vunpack.c.l.b16 %v7365
      %v8872 = vunpack.c.h.b16 %v7365
      %v8873 = vunpack.c.l.b16 %v7366
      %v8874 = vunpack.c.h.b16 %v7366
      %v8875 = vunpack.c.l.b16 %v7367
      %v8876 = vunpack.c.h.b16 %v7367
      %v8877 = vunpack.c.l.b16 %v7368
      %v8878 = vunpack.c.h.b16 %v7368
      %v8879 = vunpack.c.l.b16 %v7369
      %v8880 = vunpack.c.h.b16 %v7369
      %v8881 = vunpack.c.l.b16 %v7370
      %v8882 = vunpack.c.h.b16 %v7370
      %v8883 = vunpack.c.l.b16 %v7371
      %v8884 = vunpack.c.h.b16 %v7371
      %v8885 = vunpack.c.l.b16 %v7372
      %v8886 = vunpack.c.h.b16 %v7372
      %v8887 = vunpack.c.l.b16 %v7373
      %v8888 = vunpack.c.h.b16 %v7373
      %v8889 = vunpack.c.l.b16 %v7374
      %v8890 = vunpack.c.h.b16 %v7374
      %v8891 = vunpack.c.l.b16 %v7375
      %v8892 = vunpack.c.h.b16 %v7375
      %v8893 = vunpack.c.l.b16 %v7376
      %v8894 = vunpack.c.h.b16 %v7376
      %v8895 = vunpack.c.l.b16 %v7377
      %v8896 = vunpack.c.h.b16 %v7377
      %v8897 = vunpack.c.l.b16 %v7378
      %v8898 = vunpack.c.h.b16 %v7378
      %v8899 = vunpack.c.l.b16 %v7379
      %v8900 = vunpack.c.h.b16 %v7379
      %v8901 = vunpack.c.l.b16 %v7380
      %v8902 = vunpack.c.h.b16 %v7380
      %v8903 = vunpack.c.l.b16 %v7381
      %v8904 = vunpack.c.h.b16 %v7381
      %v8905 = vunpack.c.l.b16 %v7382
      %v8906 = vunpack.c.h.b16 %v7382
      %v8907 = vunpack.c.l.b16 %v7383
      %v8908 = vunpack.c.h.b16 %v7383
      %v8909 = vunpack.c.l.b16 %v7384
      %v8910 = vunpack.c.h.b16 %v7384
      %v8911 = vunpack.c.l.b16 %v7385
      %v8912 = vunpack.c.h.b16 %v7385
      %v8913 = vunpack.c.l.b16 %v7386
      %v8914 = vunpack.c.h.b16 %v7386
      %v8915 = vunpack.c.l.b16 %v7387
      %v8916 = vunpack.c.h.b16 %v7387
      %v8917 = vunpack.c.l.b16 %v7388
      %v8918 = vunpack.c.h.b16 %v7388
      %v8919 = vunpack.c.l.b16 %v7389
      %v8920 = vunpack.c.h.b16 %v7389
      %v8921 = vunpack.c.l.b16 %v7390
      %v8922 = vunpack.c.h.b16 %v7390
      %v8923 = vunpack.c.l.b16 %v7391
      %v8924 = vunpack.c.h.b16 %v7391
      %v8925 = vunpack.c.l.b16 %v7392
      %v8926 = vunpack.c.h.b16 %v7392
      %v8927 = vunpack.c.l.b16 %v7393
      %v8928 = vunpack.c.h.b16 %v7393
      %v8929 = vunpack.c.l.b16 %v7394
      %v8930 = vunpack.c.h.b16 %v7394
      %v8931 = vunpack.c.l.b16 %v7395
      %v8932 = vunpack.c.h.b16 %v7395
      %v8933 = vpack.c.b16 %v7917, %v7909
      %v8934 = vpack.c.b16 %v7918, %v7910
      %v8935 = vpack.c.b16 %v7919, %v7911
      %v8936 = vpack.c.b16 %v7920, %v7912
      %v8937 = vpack.c.b16 %v7921, %v7913
      %v8938 = vpack.c.b16 %v7922, %v7914
      %v8939 = vpack.c.b16 %v7923, %v7915
      %v8940 = vpack.c.b16 %v7924, %v7916
      %v8941 = vpack.c.b16 %v7933, %v7925
      %v8942 = vpack.c.b16 %v7934, %v7926
      %v8943 = vpack.c.b16 %v7935, %v7927
      %v8944 = vpack.c.b16 %v7936, %v7928
      %v8945 = vpack.c.b16 %v7937, %v7929
      %v8946 = vpack.c.b16 %v7938, %v7930
      %v8947 = vpack.c.b16 %v7939, %v7931
      %v8948 = vpack.c.b16 %v7940, %v7932
      %v8949 = vpack.c.b16 %v7949, %v7941
      %v8950 = vpack.c.b16 %v7950, %v7942
      %v8951 = vpack.c.b16 %v7951, %v7943
      %v8952 = vpack.c.b16 %v7952, %v7944
      %v8953 = vpack.c.b16 %v7953, %v7945
      %v8954 = vpack.c.b16 %v7954, %v7946
      %v8955 = vpack.c.b16 %v7955, %v7947
      %v8956 = vpack.c.b16 %v7956, %v7948
      %v8957 = vpack.c.b16 %v7965, %v7957
      %v8958 = vpack.c.b16 %v7966, %v7958
      %v8959 = vpack.c.b16 %v7967, %v7959
      %v8960 = vpack.c.b16 %v7968, %v7960
      %v8961 = vpack.c.b16 %v7969, %v7961
      %v8962 = vpack.c.b16 %v7970, %v7962
      %v8963 = vpack.c.b16 %v7971, %v7963
      %v8964 = vpack.c.b16 %v7972, %v7964
      %v8965 = vpack.c.b16 %v7981, %v7973
      %v8966 = vpack.c.b16 %v7982, %v7974
      %v8967 = vpack.c.b16 %v7983, %v7975
      %v8968 = vpack.c.b16 %v7984, %v7976
      %v8969 = vpack.c.b16 %v7985, %v7977
      %v8970 = vpack.c.b16 %v7986, %v7978
      %v8971 = vpack.c.b16 %v7987, %v7979
      %v8972 = vpack.c.b16 %v7988, %v7980
      %v8973 = vpack.c.b16 %v7997, %v7989
      %v8974 = vpack.c.b16 %v7998, %v7990
      %v8975 = vpack.c.b16 %v7999, %v7991
      %v8976 = vpack.c.b16 %v8000, %v7992
      %v8977 = vpack.c.b16 %v8001, %v7993
      %v8978 = vpack.c.b16 %v8002, %v7994
      %v8979 = vpack.c.b16 %v8003, %v7995
      %v8980 = vpack.c.b16 %v8004, %v7996
      %v8981 = vpack.c.b16 %v8013, %v8005
      %v8982 = vpack.c.b16 %v8014, %v8006
      %v8983 = vpack.c.b16 %v8015, %v8007
      %v8984 = vpack.c.b16 %v8016, %v8008
      %v8985 = vpack.c.b16 %v8017, %v8009
      %v8986 = vpack.c.b16 %v8018, %v8010
      %v8987 = vpack.c.b16 %v8019, %v8011
      %v8988 = vpack.c.b16 %v8020, %v8012
      %v8989 = vpack.c.b16 %v8029, %v8021
      %v8990 = vpack.c.b16 %v8030, %v8022
      %v8991 = vpack.c.b16 %v8031, %v8023
      %v8992 = vpack.c.b16 %v8032, %v8024
      %v8993 = vpack.c.b16 %v8033, %v8025
      %v8994 = vpack.c.b16 %v8034, %v8026
      %v8995 = vpack.c.b16 %v8035, %v8027
      %v8996 = vpack.c.b16 %v8036, %v8028
      %v8997 = vpack.c.b16 %v8045, %v8037
      %v8998 = vpack.c.b16 %v8046, %v8038
      %v8999 = vpack.c.b16 %v8047, %v8039
      %v9000 = vpack.c.b16 %v8048, %v8040
      %v9001 = vpack.c.b16 %v8049, %v8041
      %v9002 = vpack.c.b16 %v8050, %v8042
      %v9003 = vpack.c.b16 %v8051, %v8043
      %v9004 = vpack.c.b16 %v8052, %v8044
      %v9005 = vpack.c.b16 %v8061, %v8053
      %v9006 = vpack.c.b16 %v8062, %v8054
      %v9007 = vpack.c.b16 %v8063, %v8055
      %v9008 = vpack.c.b16 %v8064, %v8056
      %v9009 = vpack.c.b16 %v8065, %v8057
      %v9010 = vpack.c.b16 %v8066, %v8058
      %v9011 = vpack.c.b16 %v8067, %v8059
      %v9012 = vpack.c.b16 %v8068, %v8060
      %v9013 = vpack.c.b16 %v8077, %v8069
      %v9014 = vpack.c.b16 %v8078, %v8070
      %v9015 = vpack.c.b16 %v8079, %v8071
      %v9016 = vpack.c.b16 %v8080, %v8072
      %v9017 = vpack.c.b16 %v8081, %v8073
      %v9018 = vpack.c.b16 %v8082, %v8074
      %v9019 = vpack.c.b16 %v8083, %v8075
      %v9020 = vpack.c.b16 %v8084, %v8076
      %v9021 = vpack.c.b16 %v8093, %v8085
      %v9022 = vpack.c.b16 %v8094, %v8086
      %v9023 = vpack.c.b16 %v8095, %v8087
      %v9024 = vpack.c.b16 %v8096, %v8088
      %v9025 = vpack.c.b16 %v8097, %v8089
      %v9026 = vpack.c.b16 %v8098, %v8090
      %v9027 = vpack.c.b16 %v8099, %v8091
      %v9028 = vpack.c.b16 %v8100, %v8092
      %v9029 = vpack.c.b16 %v8109, %v8101
      %v9030 = vpack.c.b16 %v8110, %v8102
      %v9031 = vpack.c.b16 %v8111, %v8103
      %v9032 = vpack.c.b16 %v8112, %v8104
      %v9033 = vpack.c.b16 %v8113, %v8105
      %v9034 = vpack.c.b16 %v8114, %v8106
      %v9035 = vpack.c.b16 %v8115, %v8107
      %v9036 = vpack.c.b16 %v8116, %v8108
      %v9037 = vpack.c.b16 %v8125, %v8117
      %v9038 = vpack.c.b16 %v8126, %v8118
      %v9039 = vpack.c.b16 %v8127, %v8119
      %v9040 = vpack.c.b16 %v8128, %v8120
      %v9041 = vpack.c.b16 %v8129, %v8121
      %v9042 = vpack.c.b16 %v8130, %v8122
      %v9043 = vpack.c.b16 %v8131, %v8123
      %v9044 = vpack.c.b16 %v8132, %v8124
      %v9045 = vpack.c.b16 %v8141, %v8133
      %v9046 = vpack.c.b16 %v8142, %v8134
      %v9047 = vpack.c.b16 %v8143, %v8135
      %v9048 = vpack.c.b16 %v8144, %v8136
      %v9049 = vpack.c.b16 %v8145, %v8137
      %v9050 = vpack.c.b16 %v8146, %v8138
      %v9051 = vpack.c.b16 %v8147, %v8139
      %v9052 = vpack.c.b16 %v8148, %v8140
      %v9053 = vpack.c.b16 %v8157, %v8149
      %v9054 = vpack.c.b16 %v8158, %v8150
      %v9055 = vpack.c.b16 %v8159, %v8151
      %v9056 = vpack.c.b16 %v8160, %v8152
      %v9057 = vpack.c.b16 %v8161, %v8153
      %v9058 = vpack.c.b16 %v8162, %v8154
      %v9059 = vpack.c.b16 %v8163, %v8155
      %v9060 = vpack.c.b16 %v8164, %v8156
      %v9061 = vpack.c.b16 %v8173, %v8165
      %v9062 = vpack.c.b16 %v8174, %v8166
      %v9063 = vpack.c.b16 %v8175, %v8167
      %v9064 = vpack.c.b16 %v8176, %v8168
      %v9065 = vpack.c.b16 %v8177, %v8169
      %v9066 = vpack.c.b16 %v8178, %v8170
      %v9067 = vpack.c.b16 %v8179, %v8171
      %v9068 = vpack.c.b16 %v8180, %v8172
      %v9069 = vpack.c.b16 %v8189, %v8181
      %v9070 = vpack.c.b16 %v8190, %v8182
      %v9071 = vpack.c.b16 %v8191, %v8183
      %v9072 = vpack.c.b16 %v8192, %v8184
      %v9073 = vpack.c.b16 %v8193, %v8185
      %v9074 = vpack.c.b16 %v8194, %v8186
      %v9075 = vpack.c.b16 %v8195, %v8187
      %v9076 = vpack.c.b16 %v8196, %v8188
      %v9077 = vpack.c.b16 %v8205, %v8197
      %v9078 = vpack.c.b16 %v8206, %v8198
      %v9079 = vpack.c.b16 %v8207, %v8199
      %v9080 = vpack.c.b16 %v8208, %v8200
      %v9081 = vpack.c.b16 %v8209, %v8201
      %v9082 = vpack.c.b16 %v8210, %v8202
      %v9083 = vpack.c.b16 %v8211, %v8203
      %v9084 = vpack.c.b16 %v8212, %v8204
      %v9085 = vpack.c.b16 %v8221, %v8213
      %v9086 = vpack.c.b16 %v8222, %v8214
      %v9087 = vpack.c.b16 %v8223, %v8215
      %v9088 = vpack.c.b16 %v8224, %v8216
      %v9089 = vpack.c.b16 %v8225, %v8217
      %v9090 = vpack.c.b16 %v8226, %v8218
      %v9091 = vpack.c.b16 %v8227, %v8219
      %v9092 = vpack.c.b16 %v8228, %v8220
      %v9093 = vpack.c.b16 %v8237, %v8229
      %v9094 = vpack.c.b16 %v8238, %v8230
      %v9095 = vpack.c.b16 %v8239, %v8231
      %v9096 = vpack.c.b16 %v8240, %v8232
      %v9097 = vpack.c.b16 %v8241, %v8233
      %v9098 = vpack.c.b16 %v8242, %v8234
      %v9099 = vpack.c.b16 %v8243, %v8235
      %v9100 = vpack.c.b16 %v8244, %v8236
      %v9101 = vpack.c.b16 %v8253, %v8245
      %v9102 = vpack.c.b16 %v8254, %v8246
      %v9103 = vpack.c.b16 %v8255, %v8247
      %v9104 = vpack.c.b16 %v8256, %v8248
      %v9105 = vpack.c.b16 %v8257, %v8249
      %v9106 = vpack.c.b16 %v8258, %v8250
      %v9107 = vpack.c.b16 %v8259, %v8251
      %v9108 = vpack.c.b16 %v8260, %v8252
      %v9109 = vpack.c.b16 %v8269, %v8261
      %v9110 = vpack.c.b16 %v8270, %v8262
      %v9111 = vpack.c.b16 %v8271, %v8263
      %v9112 = vpack.c.b16 %v8272, %v8264
      %v9113 = vpack.c.b16 %v8273, %v8265
      %v9114 = vpack.c.b16 %v8274, %v8266
      %v9115 = vpack.c.b16 %v8275, %v8267
      %v9116 = vpack.c.b16 %v8276, %v8268
      %v9117 = vpack.c.b16 %v8285, %v8277
      %v9118 = vpack.c.b16 %v8286, %v8278
      %v9119 = vpack.c.b16 %v8287, %v8279
      %v9120 = vpack.c.b16 %v8288, %v8280
      %v9121 = vpack.c.b16 %v8289, %v8281
      %v9122 = vpack.c.b16 %v8290, %v8282
      %v9123 = vpack.c.b16 %v8291, %v8283
      %v9124 = vpack.c.b16 %v8292, %v8284
      %v9125 = vpack.c.b16 %v8301, %v8293
      %v9126 = vpack.c.b16 %v8302, %v8294
      %v9127 = vpack.c.b16 %v8303, %v8295
      %v9128 = vpack.c.b16 %v8304, %v8296
      %v9129 = vpack.c.b16 %v8305, %v8297
      %v9130 = vpack.c.b16 %v8306, %v8298
      %v9131 = vpack.c.b16 %v8307, %v8299
      %v9132 = vpack.c.b16 %v8308, %v8300
      %v9133 = vpack.c.b16 %v8317, %v8309
      %v9134 = vpack.c.b16 %v8318, %v8310
      %v9135 = vpack.c.b16 %v8319, %v8311
      %v9136 = vpack.c.b16 %v8320, %v8312
      %v9137 = vpack.c.b16 %v8321, %v8313
      %v9138 = vpack.c.b16 %v8322, %v8314
      %v9139 = vpack.c.b16 %v8323, %v8315
      %v9140 = vpack.c.b16 %v8324, %v8316
      %v9141 = vpack.c.b16 %v8333, %v8325
      %v9142 = vpack.c.b16 %v8334, %v8326
      %v9143 = vpack.c.b16 %v8335, %v8327
      %v9144 = vpack.c.b16 %v8336, %v8328
      %v9145 = vpack.c.b16 %v8337, %v8329
      %v9146 = vpack.c.b16 %v8338, %v8330
      %v9147 = vpack.c.b16 %v8339, %v8331
      %v9148 = vpack.c.b16 %v8340, %v8332
      %v9149 = vpack.c.b16 %v8349, %v8341
      %v9150 = vpack.c.b16 %v8350, %v8342
      %v9151 = vpack.c.b16 %v8351, %v8343
      %v9152 = vpack.c.b16 %v8352, %v8344
      %v9153 = vpack.c.b16 %v8353, %v8345
      %v9154 = vpack.c.b16 %v8354, %v8346
      %v9155 = vpack.c.b16 %v8355, %v8347
      %v9156 = vpack.c.b16 %v8356, %v8348
      %v9157 = vpack.c.b16 %v8365, %v8357
      %v9158 = vpack.c.b16 %v8366, %v8358
      %v9159 = vpack.c.b16 %v8367, %v8359
      %v9160 = vpack.c.b16 %v8368, %v8360
      %v9161 = vpack.c.b16 %v8369, %v8361
      %v9162 = vpack.c.b16 %v8370, %v8362
      %v9163 = vpack.c.b16 %v8371, %v8363
      %v9164 = vpack.c.b16 %v8372, %v8364
      %v9165 = vpack.c.b16 %v8381, %v8373
      %v9166 = vpack.c.b16 %v8382, %v8374
      %v9167 = vpack.c.b16 %v8383, %v8375
      %v9168 = vpack.c.b16 %v8384, %v8376
      %v9169 = vpack.c.b16 %v8385, %v8377
      %v9170 = vpack.c.b16 %v8386, %v8378
      %v9171 = vpack.c.b16 %v8387, %v8379
      %v9172 = vpack.c.b16 %v8388, %v8380
      %v9173 = vpack.c.b16 %v8397, %v8389
      %v9174 = vpack.c.b16 %v8398, %v8390
      %v9175 = vpack.c.b16 %v8399, %v8391
      %v9176 = vpack.c.b16 %v8400, %v8392
      %v9177 = vpack.c.b16 %v8401, %v8393
      %v9178 = vpack.c.b16 %v8402, %v8394
      %v9179 = vpack.c.b16 %v8403, %v8395
      %v9180 = vpack.c.b16 %v8404, %v8396
      %v9181 = vpack.c.b16 %v8413, %v8405
      %v9182 = vpack.c.b16 %v8414, %v8406
      %v9183 = vpack.c.b16 %v8415, %v8407
      %v9184 = vpack.c.b16 %v8416, %v8408
      %v9185 = vpack.c.b16 %v8417, %v8409
      %v9186 = vpack.c.b16 %v8418, %v8410
      %v9187 = vpack.c.b16 %v8419, %v8411
      %v9188 = vpack.c.b16 %v8420, %v8412
      %v9189 = vpack.c.b16 %v8429, %v8421
      %v9190 = vpack.c.b16 %v8430, %v8422
      %v9191 = vpack.c.b16 %v8431, %v8423
      %v9192 = vpack.c.b16 %v8432, %v8424
      %v9193 = vpack.c.b16 %v8433, %v8425
      %v9194 = vpack.c.b16 %v8434, %v8426
      %v9195 = vpack.c.b16 %v8435, %v8427
      %v9196 = vpack.c.b16 %v8436, %v8428
      %v9197 = vpack.c.b16 %v8445, %v8437
      %v9198 = vpack.c.b16 %v8446, %v8438
      %v9199 = vpack.c.b16 %v8447, %v8439
      %v9200 = vpack.c.b16 %v8448, %v8440
      %v9201 = vpack.c.b16 %v8449, %v8441
      %v9202 = vpack.c.b16 %v8450, %v8442
      %v9203 = vpack.c.b16 %v8451, %v8443
      %v9204 = vpack.c.b16 %v8452, %v8444
      %v9205 = vpack.c.b16 %v8461, %v8453
      %v9206 = vpack.c.b16 %v8462, %v8454
      %v9207 = vpack.c.b16 %v8463, %v8455
      %v9208 = vpack.c.b16 %v8464, %v8456
      %v9209 = vpack.c.b16 %v8465, %v8457
      %v9210 = vpack.c.b16 %v8466, %v8458
      %v9211 = vpack.c.b16 %v8467, %v8459
      %v9212 = vpack.c.b16 %v8468, %v8460
      %v9213 = vpack.c.b16 %v8477, %v8469
      %v9214 = vpack.c.b16 %v8478, %v8470
      %v9215 = vpack.c.b16 %v8479, %v8471
      %v9216 = vpack.c.b16 %v8480, %v8472
      %v9217 = vpack.c.b16 %v8481, %v8473
      %v9218 = vpack.c.b16 %v8482, %v8474
      %v9219 = vpack.c.b16 %v8483, %v8475
      %v9220 = vpack.c.b16 %v8484, %v8476
      %v9221 = vpack.c.b16 %v8493, %v8485
      %v9222 = vpack.c.b16 %v8494, %v8486
      %v9223 = vpack.c.b16 %v8495, %v8487
      %v9224 = vpack.c.b16 %v8496, %v8488
      %v9225 = vpack.c.b16 %v8497, %v8489
      %v9226 = vpack.c.b16 %v8498, %v8490
      %v9227 = vpack.c.b16 %v8499, %v8491
      %v9228 = vpack.c.b16 %v8500, %v8492
      %v9229 = vpack.c.b16 %v8509, %v8501
      %v9230 = vpack.c.b16 %v8510, %v8502
      %v9231 = vpack.c.b16 %v8511, %v8503
      %v9232 = vpack.c.b16 %v8512, %v8504
      %v9233 = vpack.c.b16 %v8513, %v8505
      %v9234 = vpack.c.b16 %v8514, %v8506
      %v9235 = vpack.c.b16 %v8515, %v8507
      %v9236 = vpack.c.b16 %v8516, %v8508
      %v9237 = vpack.c.b16 %v8525, %v8517
      %v9238 = vpack.c.b16 %v8526, %v8518
      %v9239 = vpack.c.b16 %v8527, %v8519
      %v9240 = vpack.c.b16 %v8528, %v8520
      %v9241 = vpack.c.b16 %v8529, %v8521
      %v9242 = vpack.c.b16 %v8530, %v8522
      %v9243 = vpack.c.b16 %v8531, %v8523
      %v9244 = vpack.c.b16 %v8532, %v8524
      %v9245 = vpack.c.b16 %v8541, %v8533
      %v9246 = vpack.c.b16 %v8542, %v8534
      %v9247 = vpack.c.b16 %v8543, %v8535
      %v9248 = vpack.c.b16 %v8544, %v8536
      %v9249 = vpack.c.b16 %v8545, %v8537
      %v9250 = vpack.c.b16 %v8546, %v8538
      %v9251 = vpack.c.b16 %v8547, %v8539
      %v9252 = vpack.c.b16 %v8548, %v8540
      %v9253 = vpack.c.b16 %v8557, %v8549
      %v9254 = vpack.c.b16 %v8558, %v8550
      %v9255 = vpack.c.b16 %v8559, %v8551
      %v9256 = vpack.c.b16 %v8560, %v8552
      %v9257 = vpack.c.b16 %v8561, %v8553
      %v9258 = vpack.c.b16 %v8562, %v8554
      %v9259 = vpack.c.b16 %v8563, %v8555
      %v9260 = vpack.c.b16 %v8564, %v8556
      %v9261 = vpack.c.b16 %v8573, %v8565
      %v9262 = vpack.c.b16 %v8574, %v8566
      %v9263 = vpack.c.b16 %v8575, %v8567
      %v9264 = vpack.c.b16 %v8576, %v8568
      %v9265 = vpack.c.b16 %v8577, %v8569
      %v9266 = vpack.c.b16 %v8578, %v8570
      %v9267 = vpack.c.b16 %v8579, %v8571
      %v9268 = vpack.c.b16 %v8580, %v8572
      %v9269 = vpack.c.b16 %v8589, %v8581
      %v9270 = vpack.c.b16 %v8590, %v8582
      %v9271 = vpack.c.b16 %v8591, %v8583
      %v9272 = vpack.c.b16 %v8592, %v8584
      %v9273 = vpack.c.b16 %v8593, %v8585
      %v9274 = vpack.c.b16 %v8594, %v8586
      %v9275 = vpack.c.b16 %v8595, %v8587
      %v9276 = vpack.c.b16 %v8596, %v8588
      %v9277 = vpack.c.b16 %v8605, %v8597
      %v9278 = vpack.c.b16 %v8606, %v8598
      %v9279 = vpack.c.b16 %v8607, %v8599
      %v9280 = vpack.c.b16 %v8608, %v8600
      %v9281 = vpack.c.b16 %v8609, %v8601
      %v9282 = vpack.c.b16 %v8610, %v8602
      %v9283 = vpack.c.b16 %v8611, %v8603
      %v9284 = vpack.c.b16 %v8612, %v8604
      %v9285 = vpack.c.b16 %v8621, %v8613
      %v9286 = vpack.c.b16 %v8622, %v8614
      %v9287 = vpack.c.b16 %v8623, %v8615
      %v9288 = vpack.c.b16 %v8624, %v8616
      %v9289 = vpack.c.b16 %v8625, %v8617
      %v9290 = vpack.c.b16 %v8626, %v8618
      %v9291 = vpack.c.b16 %v8627, %v8619
      %v9292 = vpack.c.b16 %v8628, %v8620
      %v9293 = vpack.c.b16 %v8637, %v8629
      %v9294 = vpack.c.b16 %v8638, %v8630
      %v9295 = vpack.c.b16 %v8639, %v8631
      %v9296 = vpack.c.b16 %v8640, %v8632
      %v9297 = vpack.c.b16 %v8641, %v8633
      %v9298 = vpack.c.b16 %v8642, %v8634
      %v9299 = vpack.c.b16 %v8643, %v8635
      %v9300 = vpack.c.b16 %v8644, %v8636
      %v9301 = vpack.c.b16 %v8653, %v8645
      %v9302 = vpack.c.b16 %v8654, %v8646
      %v9303 = vpack.c.b16 %v8655, %v8647
      %v9304 = vpack.c.b16 %v8656, %v8648
      %v9305 = vpack.c.b16 %v8657, %v8649
      %v9306 = vpack.c.b16 %v8658, %v8650
      %v9307 = vpack.c.b16 %v8659, %v8651
      %v9308 = vpack.c.b16 %v8660, %v8652
      %v9309 = vpack.c.b16 %v8669, %v8661
      %v9310 = vpack.c.b16 %v8670, %v8662
      %v9311 = vpack.c.b16 %v8671, %v8663
      %v9312 = vpack.c.b16 %v8672, %v8664
      %v9313 = vpack.c.b16 %v8673, %v8665
      %v9314 = vpack.c.b16 %v8674, %v8666
      %v9315 = vpack.c.b16 %v8675, %v8667
      %v9316 = vpack.c.b16 %v8676, %v8668
      %v9317 = vpack.c.b16 %v8685, %v8677
      %v9318 = vpack.c.b16 %v8686, %v8678
      %v9319 = vpack.c.b16 %v8687, %v8679
      %v9320 = vpack.c.b16 %v8688, %v8680
      %v9321 = vpack.c.b16 %v8689, %v8681
      %v9322 = vpack.c.b16 %v8690, %v8682
      %v9323 = vpack.c.b16 %v8691, %v8683
      %v9324 = vpack.c.b16 %v8692, %v8684
      %v9325 = vpack.c.b16 %v8701, %v8693
      %v9326 = vpack.c.b16 %v8702, %v8694
      %v9327 = vpack.c.b16 %v8703, %v8695
      %v9328 = vpack.c.b16 %v8704, %v8696
      %v9329 = vpack.c.b16 %v8705, %v8697
      %v9330 = vpack.c.b16 %v8706, %v8698
      %v9331 = vpack.c.b16 %v8707, %v8699
      %v9332 = vpack.c.b16 %v8708, %v8700
      %v9333 = vpack.c.b16 %v8717, %v8709
      %v9334 = vpack.c.b16 %v8718, %v8710
      %v9335 = vpack.c.b16 %v8719, %v8711
      %v9336 = vpack.c.b16 %v8720, %v8712
      %v9337 = vpack.c.b16 %v8721, %v8713
      %v9338 = vpack.c.b16 %v8722, %v8714
      %v9339 = vpack.c.b16 %v8723, %v8715
      %v9340 = vpack.c.b16 %v8724, %v8716
      %v9341 = vpack.c.b16 %v8733, %v8725
      %v9342 = vpack.c.b16 %v8734, %v8726
      %v9343 = vpack.c.b16 %v8735, %v8727
      %v9344 = vpack.c.b16 %v8736, %v8728
      %v9345 = vpack.c.b16 %v8737, %v8729
      %v9346 = vpack.c.b16 %v8738, %v8730
      %v9347 = vpack.c.b16 %v8739, %v8731
      %v9348 = vpack.c.b16 %v8740, %v8732
      %v9349 = vpack.c.b16 %v8749, %v8741
      %v9350 = vpack.c.b16 %v8750, %v8742
      %v9351 = vpack.c.b16 %v8751, %v8743
      %v9352 = vpack.c.b16 %v8752, %v8744
      %v9353 = vpack.c.b16 %v8753, %v8745
      %v9354 = vpack.c.b16 %v8754, %v8746
      %v9355 = vpack.c.b16 %v8755, %v8747
      %v9356 = vpack.c.b16 %v8756, %v8748
      %v9357 = vpack.c.b16 %v8765, %v8757
      %v9358 = vpack.c.b16 %v8766, %v8758
      %v9359 = vpack.c.b16 %v8767, %v8759
      %v9360 = vpack.c.b16 %v8768, %v8760
      %v9361 = vpack.c.b16 %v8769, %v8761
      %v9362 = vpack.c.b16 %v8770, %v8762
      %v9363 = vpack.c.b16 %v8771, %v8763
      %v9364 = vpack.c.b16 %v8772, %v8764
      %v9365 = vpack.c.b16 %v8781, %v8773
      %v9366 = vpack.c.b16 %v8782, %v8774
      %v9367 = vpack.c.b16 %v8783, %v8775
      %v9368 = vpack.c.b16 %v8784, %v8776
      %v9369 = vpack.c.b16 %v8785, %v8777
      %v9370 = vpack.c.b16 %v8786, %v8778
      %v9371 = vpack.c.b16 %v8787, %v8779
      %v9372 = vpack.c.b16 %v8788, %v8780
      %v9373 = vpack.c.b16 %v8797, %v8789
      %v9374 = vpack.c.b16 %v8798, %v8790
      %v9375 = vpack.c.b16 %v8799, %v8791
      %v9376 = vpack.c.b16 %v8800, %v8792
      %v9377 = vpack.c.b16 %v8801, %v8793
      %v9378 = vpack.c.b16 %v8802, %v8794
      %v9379 = vpack.c.b16 %v8803, %v8795
      %v9380 = vpack.c.b16 %v8804, %v8796
      %v9381 = vpack.c.b16 %v8813, %v8805
      %v9382 = vpack.c.b16 %v8814, %v8806
      %v9383 = vpack.c.b16 %v8815, %v8807
      %v9384 = vpack.c.b16 %v8816, %v8808
      %v9385 = vpack.c.b16 %v8817, %v8809
      %v9386 = vpack.c.b16 %v8818, %v8810
      %v9387 = vpack.c.b16 %v8819, %v8811
      %v9388 = vpack.c.b16 %v8820, %v8812
      %v9389 = vpack.c.b16 %v8829, %v8821
      %v9390 = vpack.c.b16 %v8830, %v8822
      %v9391 = vpack.c.b16 %v8831, %v8823
      %v9392 = vpack.c.b16 %v8832, %v8824
      %v9393 = vpack.c.b16 %v8833, %v8825
      %v9394 = vpack.c.b16 %v8834, %v8826
      %v9395 = vpack.c.b16 %v8835, %v8827
      %v9396 = vpack.c.b16 %v8836, %v8828
      %v9397 = vpack.c.b16 %v8845, %v8837
      %v9398 = vpack.c.b16 %v8846, %v8838
      %v9399 = vpack.c.b16 %v8847, %v8839
      %v9400 = vpack.c.b16 %v8848, %v8840
      %v9401 = vpack.c.b16 %v8849, %v8841
      %v9402 = vpack.c.b16 %v8850, %v8842
      %v9403 = vpack.c.b16 %v8851, %v8843
      %v9404 = vpack.c.b16 %v8852, %v8844
      %v9405 = vpack.c.b16 %v8861, %v8853
      %v9406 = vpack.c.b16 %v8862, %v8854
      %v9407 = vpack.c.b16 %v8863, %v8855
      %v9408 = vpack.c.b16 %v8864, %v8856
      %v9409 = vpack.c.b16 %v8865, %v8857
      %v9410 = vpack.c.b16 %v8866, %v8858
      %v9411 = vpack.c.b16 %v8867, %v8859
      %v9412 = vpack.c.b16 %v8868, %v8860
      %v9413 = vpack.c.b16 %v8877, %v8869
      %v9414 = vpack.c.b16 %v8878, %v8870
      %v9415 = vpack.c.b16 %v8879, %v8871
      %v9416 = vpack.c.b16 %v8880, %v8872
      %v9417 = vpack.c.b16 %v8881, %v8873
      %v9418 = vpack.c.b16 %v8882, %v8874
      %v9419 = vpack.c.b16 %v8883, %v8875
      %v9420 = vpack.c.b16 %v8884, %v8876
      %v9421 = vpack.c.b16 %v8893, %v8885
      %v9422 = vpack.c.b16 %v8894, %v8886
      %v9423 = vpack.c.b16 %v8895, %v8887
      %v9424 = vpack.c.b16 %v8896, %v8888
      %v9425 = vpack.c.b16 %v8897, %v8889
      %v9426 = vpack.c.b16 %v8898, %v8890
      %v9427 = vpack.c.b16 %v8899, %v8891
      %v9428 = vpack.c.b16 %v8900, %v8892
      %v9429 = vpack.c.b16 %v8909, %v8901
      %v9430 = vpack.c.b16 %v8910, %v8902
      %v9431 = vpack.c.b16 %v8911, %v8903
      %v9432 = vpack.c.b16 %v8912, %v8904
      %v9433 = vpack.c.b16 %v8913, %v8905
      %v9434 = vpack.c.b16 %v8914, %v8906
      %v9435 = vpack.c.b16 %v8915, %v8907
      %v9436 = vpack.c.b16 %v8916, %v8908
      %v9437 = vpack.c.b16 %v8925, %v8917
      %v9438 = vpack.c.b16 %v8926, %v8918
      %v9439 = vpack.c.b16 %v8927, %v8919
      %v9440 = vpack.c.b16 %v8928, %v8920
      %v9441 = vpack.c.b16 %v8929, %v8921
      %v9442 = vpack.c.b16 %v8930, %v8922
      %v9443 = vpack.c.b16 %v8931, %v8923
      %v9444 = vpack.c.b16 %v8932, %v8924
      %v9958 = vperm.slane %v7396, 0
      %v9959 = vperm.slane %v7396, 1
      %v9960 = vperm.slane %v7396, 2
      %v9961 = vperm.slane %v7396, 3
      %v9962 = vperm.slane %v7396, 4
      %v9963 = vperm.slane %v7396, 5
      %v9964 = vperm.slane %v7396, 6
      %v9965 = vperm.slane %v7396, 7
      %9974 = vmatpush.bf16.msra.mxu0 %v8989
      %9975 = vmatpush.bf16.msra.mxu0 %v8981
      %9976 = vmatpush.bf16.msra.mxu0 %v8973
      %9977 = vmatpush.bf16.msra.mxu0 %v8965
      %9978 = vmatpush.bf16.msra.mxu0 %v8957
      %9979 = vmatpush.bf16.msra.mxu0 %v8949
      %9980 = vmatpush.bf16.msra.mxu0 %v8941
      %9981 = vmatpush.bf16.msra.mxu0 %v8933
      %9982 = vmatmul.bf16.gmra.mxu0 %v6876
      %v9983 = vpop.f32.mrf.mxu0
      %v9984 = vadd.f32 %v9958, %v9983
      %v9985 = vpop.f32.mrf.mxu0
      %9986 = vdwg.mxu0
      %9987 = vmatpush.bf16.msra.mxu0 %v9053
      %9988 = vmatpush.bf16.msra.mxu0 %v9045
      %9989 = vmatpush.bf16.msra.mxu0 %v9037
      %9990 = vmatpush.bf16.msra.mxu0 %v9029
      %9991 = vmatpush.bf16.msra.mxu0 %v9021
      %9992 = vmatpush.bf16.msra.mxu0 %v9013
      %9993 = vmatpush.bf16.msra.mxu0 %v9005
      %9994 = vmatpush.bf16.msra.mxu0 %v8997
      %9995 = vmatmul.bf16.gmra.mxu0 %v6877
      %v9996 = vpop.f32.mrf.mxu0
      %v9997 = vadd.f32 %v9984, %v9996
      %v9998 = vpop.f32.mrf.mxu0
      %9999 = vdwg.mxu0
      %10000 = vmatpush.bf16.msra.mxu0 %v9117
      %10001 = vmatpush.bf16.msra.mxu0 %v9109
      %10002 = vmatpush.bf16.msra.mxu0 %v9101
      %10003 = vmatpush.bf16.msra.mxu0 %v9093
      %10004 = vmatpush.bf16.msra.mxu0 %v9085
      %10005 = vmatpush.bf16.msra.mxu0 %v9077
      %10006 = vmatpush.bf16.msra.mxu0 %v9069
      %10007 = vmatpush.bf16.msra.mxu0 %v9061
      %10008 = vmatmul.bf16.gmra.mxu0 %v6878
      %v10009 = vpop.f32.mrf.mxu0
      %v10010 = vadd.f32 %v9997, %v10009
      %v10011 = vpop.f32.mrf.mxu0
      %10012 = vdwg.mxu0
      %10013 = vmatpush.bf16.msra.mxu0 %v9181
      %10014 = vmatpush.bf16.msra.mxu0 %v9173
      %10015 = vmatpush.bf16.msra.mxu0 %v9165
      %10016 = vmatpush.bf16.msra.mxu0 %v9157
      %10017 = vmatpush.bf16.msra.mxu0 %v9149
      %10018 = vmatpush.bf16.msra.mxu0 %v9141
      %10019 = vmatpush.bf16.msra.mxu0 %v9133
      %10020 = vmatpush.bf16.msra.mxu0 %v9125
      %10021 = vmatmul.bf16.gmra.mxu0 %v6879
      %v10022 = vpop.f32.mrf.mxu0
      %v10023 = vadd.f32 %v10010, %v10022
      %v10024 = vpop.f32.mrf.mxu0
      %10025 = vdwg.mxu0
      %10026 = vmatpush.bf16.msra.mxu0 %v9245
      %10027 = vmatpush.bf16.msra.mxu0 %v9237
      %10028 = vmatpush.bf16.msra.mxu0 %v9229
      %10029 = vmatpush.bf16.msra.mxu0 %v9221
      %10030 = vmatpush.bf16.msra.mxu0 %v9213
      %10031 = vmatpush.bf16.msra.mxu0 %v9205
      %10032 = vmatpush.bf16.msra.mxu0 %v9197
      %10033 = vmatpush.bf16.msra.mxu0 %v9189
      %10034 = vmatmul.bf16.gmra.mxu0 %v6880
      %v10035 = vpop.f32.mrf.mxu0
      %v10036 = vadd.f32 %v10023, %v10035
      %v10037 = vpop.f32.mrf.mxu0
      %10038 = vdwg.mxu0
      %10039 = vmatpush.bf16.msra.mxu0 %v9309
      %10040 = vmatpush.bf16.msra.mxu0 %v9301
      %10041 = vmatpush.bf16.msra.mxu0 %v9293
      %10042 = vmatpush.bf16.msra.mxu0 %v9285
      %10043 = vmatpush.bf16.msra.mxu0 %v9277
      %10044 = vmatpush.bf16.msra.mxu0 %v9269
      %10045 = vmatpush.bf16.msra.mxu0 %v9261
      %10046 = vmatpush.bf16.msra.mxu0 %v9253
      %10047 = vmatmul.bf16.gmra.mxu0 %v6881
      %v10048 = vpop.f32.mrf.mxu0
      %v10049 = vadd.f32 %v10036, %v10048
      %v10050 = vpop.f32.mrf.mxu0
      %10051 = vdwg.mxu0
      %10052 = vmatpush.bf16.msra.mxu0 %v9373
      %10053 = vmatpush.bf16.msra.mxu0 %v9365
      %10054 = vmatpush.bf16.msra.mxu0 %v9357
      %10055 = vmatpush.bf16.msra.mxu0 %v9349
      %10056 = vmatpush.bf16.msra.mxu0 %v9341
      %10057 = vmatpush.bf16.msra.mxu0 %v9333
      %10058 = vmatpush.bf16.msra.mxu0 %v9325
      %10059 = vmatpush.bf16.msra.mxu0 %v9317
      %10060 = vmatmul.bf16.gmra.mxu0 %v6882
      %v10061 = vpop.f32.mrf.mxu0
      %v10062 = vadd.f32 %v10049, %v10061
      %v10063 = vpop.f32.mrf.mxu0
      %10064 = vdwg.mxu0
      %10065 = vmatpush.bf16.msra.mxu0 %v9437
      %10066 = vmatpush.bf16.msra.mxu0 %v9429
      %10067 = vmatpush.bf16.msra.mxu0 %v9421
      %10068 = vmatpush.bf16.msra.mxu0 %v9413
      %10069 = vmatpush.bf16.msra.mxu0 %v9405
      %10070 = vmatpush.bf16.msra.mxu0 %v9397
      %10071 = vmatpush.bf16.msra.mxu0 %v9389
      %10072 = vmatpush.bf16.msra.mxu0 %v9381
      %10073 = vmatmul.bf16.gmra.mxu0 %v6883
      %v10074 = vpop.f32.mrf.mxu0
      %v10075 = vadd.f32 %v10062, %v10074
      %v10076 = vpop.f32.mrf.mxu0
      %10077 = vdwg.mxu0
      %10078 = vmatpush.bf16.msra.mxu0 %v8990
      %10079 = vmatpush.bf16.msra.mxu0 %v8982
      %10080 = vmatpush.bf16.msra.mxu0 %v8974
      %10081 = vmatpush.bf16.msra.mxu0 %v8966
      %10082 = vmatpush.bf16.msra.mxu0 %v8958
      %10083 = vmatpush.bf16.msra.mxu0 %v8950
      %10084 = vmatpush.bf16.msra.mxu0 %v8942
      %10085 = vmatpush.bf16.msra.mxu0 %v8934
      %10086 = vmatmul.bf16.gmra.mxu0 %v6876
      %v10087 = vpop.f32.mrf.mxu0
      %v10088 = vadd.f32 %v9959, %v10087
      %v10089 = vpop.f32.mrf.mxu0
      %10090 = vdwg.mxu0
      %10091 = vmatpush.bf16.msra.mxu0 %v9054
      %10092 = vmatpush.bf16.msra.mxu0 %v9046
      %10093 = vmatpush.bf16.msra.mxu0 %v9038
      %10094 = vmatpush.bf16.msra.mxu0 %v9030
      %10095 = vmatpush.bf16.msra.mxu0 %v9022
      %10096 = vmatpush.bf16.msra.mxu0 %v9014
      %10097 = vmatpush.bf16.msra.mxu0 %v9006
      %10098 = vmatpush.bf16.msra.mxu0 %v8998
      %10099 = vmatmul.bf16.gmra.mxu0 %v6877
      %v10100 = vpop.f32.mrf.mxu0
      %v10101 = vadd.f32 %v10088, %v10100
      %v10102 = vpop.f32.mrf.mxu0
      %10103 = vdwg.mxu0
      %10104 = vmatpush.bf16.msra.mxu0 %v9118
      %10105 = vmatpush.bf16.msra.mxu0 %v9110
      %10106 = vmatpush.bf16.msra.mxu0 %v9102
      %10107 = vmatpush.bf16.msra.mxu0 %v9094
      %10108 = vmatpush.bf16.msra.mxu0 %v9086
      %10109 = vmatpush.bf16.msra.mxu0 %v9078
      %10110 = vmatpush.bf16.msra.mxu0 %v9070
      %10111 = vmatpush.bf16.msra.mxu0 %v9062
      %10112 = vmatmul.bf16.gmra.mxu0 %v6878
      %v10113 = vpop.f32.mrf.mxu0
      %v10114 = vadd.f32 %v10101, %v10113
      %v10115 = vpop.f32.mrf.mxu0
      %10116 = vdwg.mxu0
      %10117 = vmatpush.bf16.msra.mxu0 %v9182
      %10118 = vmatpush.bf16.msra.mxu0 %v9174
      %10119 = vmatpush.bf16.msra.mxu0 %v9166
      %10120 = vmatpush.bf16.msra.mxu0 %v9158
      %10121 = vmatpush.bf16.msra.mxu0 %v9150
      %10122 = vmatpush.bf16.msra.mxu0 %v9142
      %10123 = vmatpush.bf16.msra.mxu0 %v9134
      %10124 = vmatpush.bf16.msra.mxu0 %v9126
      %10125 = vmatmul.bf16.gmra.mxu0 %v6879
      %v10126 = vpop.f32.mrf.mxu0
      %v10127 = vadd.f32 %v10114, %v10126
      %v10128 = vpop.f32.mrf.mxu0
      %10129 = vdwg.mxu0
      %10130 = vmatpush.bf16.msra.mxu0 %v9246
      %10131 = vmatpush.bf16.msra.mxu0 %v9238
      %10132 = vmatpush.bf16.msra.mxu0 %v9230
      %10133 = vmatpush.bf16.msra.mxu0 %v9222
      %10134 = vmatpush.bf16.msra.mxu0 %v9214
      %10135 = vmatpush.bf16.msra.mxu0 %v9206
      %10136 = vmatpush.bf16.msra.mxu0 %v9198
      %10137 = vmatpush.bf16.msra.mxu0 %v9190
      %10138 = vmatmul.bf16.gmra.mxu0 %v6880
      %v10139 = vpop.f32.mrf.mxu0
      %v10140 = vadd.f32 %v10127, %v10139
      %v10141 = vpop.f32.mrf.mxu0
      %10142 = vdwg.mxu0
      %10143 = vmatpush.bf16.msra.mxu0 %v9310
      %10144 = vmatpush.bf16.msra.mxu0 %v9302
      %10145 = vmatpush.bf16.msra.mxu0 %v9294
      %10146 = vmatpush.bf16.msra.mxu0 %v9286
      %10147 = vmatpush.bf16.msra.mxu0 %v9278
      %10148 = vmatpush.bf16.msra.mxu0 %v9270
      %10149 = vmatpush.bf16.msra.mxu0 %v9262
      %10150 = vmatpush.bf16.msra.mxu0 %v9254
      %10151 = vmatmul.bf16.gmra.mxu0 %v6881
      %v10152 = vpop.f32.mrf.mxu0
      %v10153 = vadd.f32 %v10140, %v10152
      %v10154 = vpop.f32.mrf.mxu0
      %10155 = vdwg.mxu0
      %10156 = vmatpush.bf16.msra.mxu0 %v9374
      %10157 = vmatpush.bf16.msra.mxu0 %v9366
      %10158 = vmatpush.bf16.msra.mxu0 %v9358
      %10159 = vmatpush.bf16.msra.mxu0 %v9350
      %10160 = vmatpush.bf16.msra.mxu0 %v9342
      %10161 = vmatpush.bf16.msra.mxu0 %v9334
      %10162 = vmatpush.bf16.msra.mxu0 %v9326
      %10163 = vmatpush.bf16.msra.mxu0 %v9318
      %10164 = vmatmul.bf16.gmra.mxu0 %v6882
      %v10165 = vpop.f32.mrf.mxu0
      %v10166 = vadd.f32 %v10153, %v10165
      %v10167 = vpop.f32.mrf.mxu0
      %10168 = vdwg.mxu0
      %10169 = vmatpush.bf16.msra.mxu0 %v9438
      %10170 = vmatpush.bf16.msra.mxu0 %v9430
      %10171 = vmatpush.bf16.msra.mxu0 %v9422
      %10172 = vmatpush.bf16.msra.mxu0 %v9414
      %10173 = vmatpush.bf16.msra.mxu0 %v9406
      %10174 = vmatpush.bf16.msra.mxu0 %v9398
      %10175 = vmatpush.bf16.msra.mxu0 %v9390
      %10176 = vmatpush.bf16.msra.mxu0 %v9382
      %10177 = vmatmul.bf16.gmra.mxu0 %v6883
      %v10178 = vpop.f32.mrf.mxu0
      %v10179 = vadd.f32 %v10166, %v10178
      %v10180 = vpop.f32.mrf.mxu0
      %10181 = vdwg.mxu0
      %10182 = vmatpush.bf16.msra.mxu0 %v8991
      %10183 = vmatpush.bf16.msra.mxu0 %v8983
      %10184 = vmatpush.bf16.msra.mxu0 %v8975
      %10185 = vmatpush.bf16.msra.mxu0 %v8967
      %10186 = vmatpush.bf16.msra.mxu0 %v8959
      %10187 = vmatpush.bf16.msra.mxu0 %v8951
      %10188 = vmatpush.bf16.msra.mxu0 %v8943
      %10189 = vmatpush.bf16.msra.mxu0 %v8935
      %10190 = vmatmul.bf16.gmra.mxu0 %v6876
      %v10191 = vpop.f32.mrf.mxu0
      %v10192 = vadd.f32 %v9960, %v10191
      %v10193 = vpop.f32.mrf.mxu0
      %10194 = vdwg.mxu0
      %10195 = vmatpush.bf16.msra.mxu0 %v9055
      %10196 = vmatpush.bf16.msra.mxu0 %v9047
      %10197 = vmatpush.bf16.msra.mxu0 %v9039
      %10198 = vmatpush.bf16.msra.mxu0 %v9031
      %10199 = vmatpush.bf16.msra.mxu0 %v9023
      %10200 = vmatpush.bf16.msra.mxu0 %v9015
      %10201 = vmatpush.bf16.msra.mxu0 %v9007
      %10202 = vmatpush.bf16.msra.mxu0 %v8999
      %10203 = vmatmul.bf16.gmra.mxu0 %v6877
      %v10204 = vpop.f32.mrf.mxu0
      %v10205 = vadd.f32 %v10192, %v10204
      %v10206 = vpop.f32.mrf.mxu0
      %10207 = vdwg.mxu0
      %10208 = vmatpush.bf16.msra.mxu0 %v9119
      %10209 = vmatpush.bf16.msra.mxu0 %v9111
      %10210 = vmatpush.bf16.msra.mxu0 %v9103
      %10211 = vmatpush.bf16.msra.mxu0 %v9095
      %10212 = vmatpush.bf16.msra.mxu0 %v9087
      %10213 = vmatpush.bf16.msra.mxu0 %v9079
      %10214 = vmatpush.bf16.msra.mxu0 %v9071
      %10215 = vmatpush.bf16.msra.mxu0 %v9063
      %10216 = vmatmul.bf16.gmra.mxu0 %v6878
      %v10217 = vpop.f32.mrf.mxu0
      %v10218 = vadd.f32 %v10205, %v10217
      %v10219 = vpop.f32.mrf.mxu0
      %10220 = vdwg.mxu0
      %10221 = vmatpush.bf16.msra.mxu0 %v9183
      %10222 = vmatpush.bf16.msra.mxu0 %v9175
      %10223 = vmatpush.bf16.msra.mxu0 %v9167
      %10224 = vmatpush.bf16.msra.mxu0 %v9159
      %10225 = vmatpush.bf16.msra.mxu0 %v9151
      %10226 = vmatpush.bf16.msra.mxu0 %v9143
      %10227 = vmatpush.bf16.msra.mxu0 %v9135
      %10228 = vmatpush.bf16.msra.mxu0 %v9127
      %10229 = vmatmul.bf16.gmra.mxu0 %v6879
      %v10230 = vpop.f32.mrf.mxu0
      %v10231 = vadd.f32 %v10218, %v10230
      %v10232 = vpop.f32.mrf.mxu0
      %10233 = vdwg.mxu0
      %10234 = vmatpush.bf16.msra.mxu0 %v9247
      %10235 = vmatpush.bf16.msra.mxu0 %v9239
      %10236 = vmatpush.bf16.msra.mxu0 %v9231
      %10237 = vmatpush.bf16.msra.mxu0 %v9223
      %10238 = vmatpush.bf16.msra.mxu0 %v9215
      %10239 = vmatpush.bf16.msra.mxu0 %v9207
      %10240 = vmatpush.bf16.msra.mxu0 %v9199
      %10241 = vmatpush.bf16.msra.mxu0 %v9191
      %10242 = vmatmul.bf16.gmra.mxu0 %v6880
      %v10243 = vpop.f32.mrf.mxu0
      %v10244 = vadd.f32 %v10231, %v10243
      %v10245 = vpop.f32.mrf.mxu0
      %10246 = vdwg.mxu0
      %10247 = vmatpush.bf16.msra.mxu0 %v9311
      %10248 = vmatpush.bf16.msra.mxu0 %v9303
      %10249 = vmatpush.bf16.msra.mxu0 %v9295
      %10250 = vmatpush.bf16.msra.mxu0 %v9287
      %10251 = vmatpush.bf16.msra.mxu0 %v9279
      %10252 = vmatpush.bf16.msra.mxu0 %v9271
      %10253 = vmatpush.bf16.msra.mxu0 %v9263
      %10254 = vmatpush.bf16.msra.mxu0 %v9255
      %10255 = vmatmul.bf16.gmra.mxu0 %v6881
      %v10256 = vpop.f32.mrf.mxu0
      %v10257 = vadd.f32 %v10244, %v10256
      %v10258 = vpop.f32.mrf.mxu0
      %10259 = vdwg.mxu0
      %10260 = vmatpush.bf16.msra.mxu0 %v9375
      %10261 = vmatpush.bf16.msra.mxu0 %v9367
      %10262 = vmatpush.bf16.msra.mxu0 %v9359
      %10263 = vmatpush.bf16.msra.mxu0 %v9351
      %10264 = vmatpush.bf16.msra.mxu0 %v9343
      %10265 = vmatpush.bf16.msra.mxu0 %v9335
      %10266 = vmatpush.bf16.msra.mxu0 %v9327
      %10267 = vmatpush.bf16.msra.mxu0 %v9319
      %10268 = vmatmul.bf16.gmra.mxu0 %v6882
      %v10269 = vpop.f32.mrf.mxu0
      %v10270 = vadd.f32 %v10257, %v10269
      %v10271 = vpop.f32.mrf.mxu0
      %10272 = vdwg.mxu0
      %10273 = vmatpush.bf16.msra.mxu0 %v9439
      %10274 = vmatpush.bf16.msra.mxu0 %v9431
      %10275 = vmatpush.bf16.msra.mxu0 %v9423
      %10276 = vmatpush.bf16.msra.mxu0 %v9415
      %10277 = vmatpush.bf16.msra.mxu0 %v9407
      %10278 = vmatpush.bf16.msra.mxu0 %v9399
      %10279 = vmatpush.bf16.msra.mxu0 %v9391
      %10280 = vmatpush.bf16.msra.mxu0 %v9383
      %10281 = vmatmul.bf16.gmra.mxu0 %v6883
      %v10282 = vpop.f32.mrf.mxu0
      %v10283 = vadd.f32 %v10270, %v10282
      %v10284 = vpop.f32.mrf.mxu0
      %10285 = vdwg.mxu0
      %10286 = vmatpush.bf16.msra.mxu0 %v8992
      %10287 = vmatpush.bf16.msra.mxu0 %v8984
      %10288 = vmatpush.bf16.msra.mxu0 %v8976
      %10289 = vmatpush.bf16.msra.mxu0 %v8968
      %10290 = vmatpush.bf16.msra.mxu0 %v8960
      %10291 = vmatpush.bf16.msra.mxu0 %v8952
      %10292 = vmatpush.bf16.msra.mxu0 %v8944
      %10293 = vmatpush.bf16.msra.mxu0 %v8936
      %10294 = vmatmul.bf16.gmra.mxu0 %v6876
      %v10295 = vpop.f32.mrf.mxu0
      %v10296 = vadd.f32 %v9961, %v10295
      %v10297 = vpop.f32.mrf.mxu0
      %10298 = vdwg.mxu0
      %10299 = vmatpush.bf16.msra.mxu0 %v9056
      %10300 = vmatpush.bf16.msra.mxu0 %v9048
      %10301 = vmatpush.bf16.msra.mxu0 %v9040
      %10302 = vmatpush.bf16.msra.mxu0 %v9032
      %10303 = vmatpush.bf16.msra.mxu0 %v9024
      %10304 = vmatpush.bf16.msra.mxu0 %v9016
      %10305 = vmatpush.bf16.msra.mxu0 %v9008
      %10306 = vmatpush.bf16.msra.mxu0 %v9000
      %10307 = vmatmul.bf16.gmra.mxu0 %v6877
      %v10308 = vpop.f32.mrf.mxu0
      %v10309 = vadd.f32 %v10296, %v10308
      %v10310 = vpop.f32.mrf.mxu0
      %10311 = vdwg.mxu0
      %10312 = vmatpush.bf16.msra.mxu0 %v9120
      %10313 = vmatpush.bf16.msra.mxu0 %v9112
      %10314 = vmatpush.bf16.msra.mxu0 %v9104
      %10315 = vmatpush.bf16.msra.mxu0 %v9096
      %10316 = vmatpush.bf16.msra.mxu0 %v9088
      %10317 = vmatpush.bf16.msra.mxu0 %v9080
      %10318 = vmatpush.bf16.msra.mxu0 %v9072
      %10319 = vmatpush.bf16.msra.mxu0 %v9064
      %10320 = vmatmul.bf16.gmra.mxu0 %v6878
      %v10321 = vpop.f32.mrf.mxu0
      %v10322 = vadd.f32 %v10309, %v10321
      %v10323 = vpop.f32.mrf.mxu0
      %10324 = vdwg.mxu0
      %10325 = vmatpush.bf16.msra.mxu0 %v9184
      %10326 = vmatpush.bf16.msra.mxu0 %v9176
      %10327 = vmatpush.bf16.msra.mxu0 %v9168
      %10328 = vmatpush.bf16.msra.mxu0 %v9160
      %10329 = vmatpush.bf16.msra.mxu0 %v9152
      %10330 = vmatpush.bf16.msra.mxu0 %v9144
      %10331 = vmatpush.bf16.msra.mxu0 %v9136
      %10332 = vmatpush.bf16.msra.mxu0 %v9128
      %10333 = vmatmul.bf16.gmra.mxu0 %v6879
      %v10334 = vpop.f32.mrf.mxu0
      %v10335 = vadd.f32 %v10322, %v10334
      %v10336 = vpop.f32.mrf.mxu0
      %10337 = vdwg.mxu0
      %10338 = vmatpush.bf16.msra.mxu0 %v9248
      %10339 = vmatpush.bf16.msra.mxu0 %v9240
      %10340 = vmatpush.bf16.msra.mxu0 %v9232
      %10341 = vmatpush.bf16.msra.mxu0 %v9224
      %10342 = vmatpush.bf16.msra.mxu0 %v9216
      %10343 = vmatpush.bf16.msra.mxu0 %v9208
      %10344 = vmatpush.bf16.msra.mxu0 %v9200
      %10345 = vmatpush.bf16.msra.mxu0 %v9192
      %10346 = vmatmul.bf16.gmra.mxu0 %v6880
      %v10347 = vpop.f32.mrf.mxu0
      %v10348 = vadd.f32 %v10335, %v10347
      %v10349 = vpop.f32.mrf.mxu0
      %10350 = vdwg.mxu0
      %10351 = vmatpush.bf16.msra.mxu0 %v9312
      %10352 = vmatpush.bf16.msra.mxu0 %v9304
      %10353 = vmatpush.bf16.msra.mxu0 %v9296
      %10354 = vmatpush.bf16.msra.mxu0 %v9288
      %10355 = vmatpush.bf16.msra.mxu0 %v9280
      %10356 = vmatpush.bf16.msra.mxu0 %v9272
      %10357 = vmatpush.bf16.msra.mxu0 %v9264
      %10358 = vmatpush.bf16.msra.mxu0 %v9256
      %10359 = vmatmul.bf16.gmra.mxu0 %v6881
      %v10360 = vpop.f32.mrf.mxu0
      %v10361 = vadd.f32 %v10348, %v10360
      %v10362 = vpop.f32.mrf.mxu0
      %10363 = vdwg.mxu0
      %10364 = vmatpush.bf16.msra.mxu0 %v9376
      %10365 = vmatpush.bf16.msra.mxu0 %v9368
      %10366 = vmatpush.bf16.msra.mxu0 %v9360
      %10367 = vmatpush.bf16.msra.mxu0 %v9352
      %10368 = vmatpush.bf16.msra.mxu0 %v9344
      %10369 = vmatpush.bf16.msra.mxu0 %v9336
      %10370 = vmatpush.bf16.msra.mxu0 %v9328
      %10371 = vmatpush.bf16.msra.mxu0 %v9320
      %10372 = vmatmul.bf16.gmra.mxu0 %v6882
      %v10373 = vpop.f32.mrf.mxu0
      %v10374 = vadd.f32 %v10361, %v10373
      %v10375 = vpop.f32.mrf.mxu0
      %10376 = vdwg.mxu0
      %10377 = vmatpush.bf16.msra.mxu0 %v9440
      %10378 = vmatpush.bf16.msra.mxu0 %v9432
      %10379 = vmatpush.bf16.msra.mxu0 %v9424
      %10380 = vmatpush.bf16.msra.mxu0 %v9416
      %10381 = vmatpush.bf16.msra.mxu0 %v9408
      %10382 = vmatpush.bf16.msra.mxu0 %v9400
      %10383 = vmatpush.bf16.msra.mxu0 %v9392
      %10384 = vmatpush.bf16.msra.mxu0 %v9384
      %10385 = vmatmul.bf16.gmra.mxu0 %v6883
      %v10386 = vpop.f32.mrf.mxu0
      %v10387 = vadd.f32 %v10374, %v10386
      %v10388 = vpop.f32.mrf.mxu0
      %10389 = vdwg.mxu0
      %10390 = vmatpush.bf16.msra.mxu0 %v8993
      %10391 = vmatpush.bf16.msra.mxu0 %v8985
      %10392 = vmatpush.bf16.msra.mxu0 %v8977
      %10393 = vmatpush.bf16.msra.mxu0 %v8969
      %10394 = vmatpush.bf16.msra.mxu0 %v8961
      %10395 = vmatpush.bf16.msra.mxu0 %v8953
      %10396 = vmatpush.bf16.msra.mxu0 %v8945
      %10397 = vmatpush.bf16.msra.mxu0 %v8937
      %10398 = vmatmul.bf16.gmra.mxu0 %v6876
      %v10399 = vpop.f32.mrf.mxu0
      %v10400 = vadd.f32 %v9962, %v10399
      %v10401 = vpop.f32.mrf.mxu0
      %10402 = vdwg.mxu0
      %10403 = vmatpush.bf16.msra.mxu0 %v9057
      %10404 = vmatpush.bf16.msra.mxu0 %v9049
      %10405 = vmatpush.bf16.msra.mxu0 %v9041
      %10406 = vmatpush.bf16.msra.mxu0 %v9033
      %10407 = vmatpush.bf16.msra.mxu0 %v9025
      %10408 = vmatpush.bf16.msra.mxu0 %v9017
      %10409 = vmatpush.bf16.msra.mxu0 %v9009
      %10410 = vmatpush.bf16.msra.mxu0 %v9001
      %10411 = vmatmul.bf16.gmra.mxu0 %v6877
      %v10412 = vpop.f32.mrf.mxu0
      %v10413 = vadd.f32 %v10400, %v10412
      %v10414 = vpop.f32.mrf.mxu0
      %10415 = vdwg.mxu0
      %10416 = vmatpush.bf16.msra.mxu0 %v9121
      %10417 = vmatpush.bf16.msra.mxu0 %v9113
      %10418 = vmatpush.bf16.msra.mxu0 %v9105
      %10419 = vmatpush.bf16.msra.mxu0 %v9097
      %10420 = vmatpush.bf16.msra.mxu0 %v9089
      %10421 = vmatpush.bf16.msra.mxu0 %v9081
      %10422 = vmatpush.bf16.msra.mxu0 %v9073
      %10423 = vmatpush.bf16.msra.mxu0 %v9065
      %10424 = vmatmul.bf16.gmra.mxu0 %v6878
      %v10425 = vpop.f32.mrf.mxu0
      %v10426 = vadd.f32 %v10413, %v10425
      %v10427 = vpop.f32.mrf.mxu0
      %10428 = vdwg.mxu0
      %10429 = vmatpush.bf16.msra.mxu0 %v9185
      %10430 = vmatpush.bf16.msra.mxu0 %v9177
      %10431 = vmatpush.bf16.msra.mxu0 %v9169
      %10432 = vmatpush.bf16.msra.mxu0 %v9161
      %10433 = vmatpush.bf16.msra.mxu0 %v9153
      %10434 = vmatpush.bf16.msra.mxu0 %v9145
      %10435 = vmatpush.bf16.msra.mxu0 %v9137
      %10436 = vmatpush.bf16.msra.mxu0 %v9129
      %10437 = vmatmul.bf16.gmra.mxu0 %v6879
      %v10438 = vpop.f32.mrf.mxu0
      %v10439 = vadd.f32 %v10426, %v10438
      %v10440 = vpop.f32.mrf.mxu0
      %10441 = vdwg.mxu0
      %10442 = vmatpush.bf16.msra.mxu0 %v9249
      %10443 = vmatpush.bf16.msra.mxu0 %v9241
      %10444 = vmatpush.bf16.msra.mxu0 %v9233
      %10445 = vmatpush.bf16.msra.mxu0 %v9225
      %10446 = vmatpush.bf16.msra.mxu0 %v9217
      %10447 = vmatpush.bf16.msra.mxu0 %v9209
      %10448 = vmatpush.bf16.msra.mxu0 %v9201
      %10449 = vmatpush.bf16.msra.mxu0 %v9193
      %10450 = vmatmul.bf16.gmra.mxu0 %v6880
      %v10451 = vpop.f32.mrf.mxu0
      %v10452 = vadd.f32 %v10439, %v10451
      %v10453 = vpop.f32.mrf.mxu0
      %10454 = vdwg.mxu0
      %10455 = vmatpush.bf16.msra.mxu0 %v9313
      %10456 = vmatpush.bf16.msra.mxu0 %v9305
      %10457 = vmatpush.bf16.msra.mxu0 %v9297
      %10458 = vmatpush.bf16.msra.mxu0 %v9289
      %10459 = vmatpush.bf16.msra.mxu0 %v9281
      %10460 = vmatpush.bf16.msra.mxu0 %v9273
      %10461 = vmatpush.bf16.msra.mxu0 %v9265
      %10462 = vmatpush.bf16.msra.mxu0 %v9257
      %10463 = vmatmul.bf16.gmra.mxu0 %v6881
      %v10464 = vpop.f32.mrf.mxu0
      %v10465 = vadd.f32 %v10452, %v10464
      %v10466 = vpop.f32.mrf.mxu0
      %10467 = vdwg.mxu0
      %10468 = vmatpush.bf16.msra.mxu0 %v9377
      %10469 = vmatpush.bf16.msra.mxu0 %v9369
      %10470 = vmatpush.bf16.msra.mxu0 %v9361
      %10471 = vmatpush.bf16.msra.mxu0 %v9353
      %10472 = vmatpush.bf16.msra.mxu0 %v9345
      %10473 = vmatpush.bf16.msra.mxu0 %v9337
      %10474 = vmatpush.bf16.msra.mxu0 %v9329
      %10475 = vmatpush.bf16.msra.mxu0 %v9321
      %10476 = vmatmul.bf16.gmra.mxu0 %v6882
      %v10477 = vpop.f32.mrf.mxu0
      %v10478 = vadd.f32 %v10465, %v10477
      %v10479 = vpop.f32.mrf.mxu0
      %10480 = vdwg.mxu0
      %10481 = vmatpush.bf16.msra.mxu0 %v9441
      %10482 = vmatpush.bf16.msra.mxu0 %v9433
      %10483 = vmatpush.bf16.msra.mxu0 %v9425
      %10484 = vmatpush.bf16.msra.mxu0 %v9417
      %10485 = vmatpush.bf16.msra.mxu0 %v9409
      %10486 = vmatpush.bf16.msra.mxu0 %v9401
      %10487 = vmatpush.bf16.msra.mxu0 %v9393
      %10488 = vmatpush.bf16.msra.mxu0 %v9385
      %10489 = vmatmul.bf16.gmra.mxu0 %v6883
      %v10490 = vpop.f32.mrf.mxu0
      %v10491 = vadd.f32 %v10478, %v10490
      %v10492 = vpop.f32.mrf.mxu0
      %10493 = vdwg.mxu0
      %10494 = vmatpush.bf16.msra.mxu0 %v8994
      %10495 = vmatpush.bf16.msra.mxu0 %v8986
      %10496 = vmatpush.bf16.msra.mxu0 %v8978
      %10497 = vmatpush.bf16.msra.mxu0 %v8970
      %10498 = vmatpush.bf16.msra.mxu0 %v8962
      %10499 = vmatpush.bf16.msra.mxu0 %v8954
      %10500 = vmatpush.bf16.msra.mxu0 %v8946
      %10501 = vmatpush.bf16.msra.mxu0 %v8938
      %10502 = vmatmul.bf16.gmra.mxu0 %v6876
      %v10503 = vpop.f32.mrf.mxu0
      %v10504 = vadd.f32 %v9963, %v10503
      %v10505 = vpop.f32.mrf.mxu0
      %10506 = vdwg.mxu0
      %10507 = vmatpush.bf16.msra.mxu0 %v9058
      %10508 = vmatpush.bf16.msra.mxu0 %v9050
      %10509 = vmatpush.bf16.msra.mxu0 %v9042
      %10510 = vmatpush.bf16.msra.mxu0 %v9034
      %10511 = vmatpush.bf16.msra.mxu0 %v9026
      %10512 = vmatpush.bf16.msra.mxu0 %v9018
      %10513 = vmatpush.bf16.msra.mxu0 %v9010
      %10514 = vmatpush.bf16.msra.mxu0 %v9002
      %10515 = vmatmul.bf16.gmra.mxu0 %v6877
      %v10516 = vpop.f32.mrf.mxu0
      %v10517 = vadd.f32 %v10504, %v10516
      %v10518 = vpop.f32.mrf.mxu0
      %10519 = vdwg.mxu0
      %10520 = vmatpush.bf16.msra.mxu0 %v9122
      %10521 = vmatpush.bf16.msra.mxu0 %v9114
      %10522 = vmatpush.bf16.msra.mxu0 %v9106
      %10523 = vmatpush.bf16.msra.mxu0 %v9098
      %10524 = vmatpush.bf16.msra.mxu0 %v9090
      %10525 = vmatpush.bf16.msra.mxu0 %v9082
      %10526 = vmatpush.bf16.msra.mxu0 %v9074
      %10527 = vmatpush.bf16.msra.mxu0 %v9066
      %10528 = vmatmul.bf16.gmra.mxu0 %v6878
      %v10529 = vpop.f32.mrf.mxu0
      %v10530 = vadd.f32 %v10517, %v10529
      %v10531 = vpop.f32.mrf.mxu0
      %10532 = vdwg.mxu0
      %10533 = vmatpush.bf16.msra.mxu0 %v9186
      %10534 = vmatpush.bf16.msra.mxu0 %v9178
      %10535 = vmatpush.bf16.msra.mxu0 %v9170
      %10536 = vmatpush.bf16.msra.mxu0 %v9162
      %10537 = vmatpush.bf16.msra.mxu0 %v9154
      %10538 = vmatpush.bf16.msra.mxu0 %v9146
      %10539 = vmatpush.bf16.msra.mxu0 %v9138
      %10540 = vmatpush.bf16.msra.mxu0 %v9130
      %10541 = vmatmul.bf16.gmra.mxu0 %v6879
      %v10542 = vpop.f32.mrf.mxu0
      %v10543 = vadd.f32 %v10530, %v10542
      %v10544 = vpop.f32.mrf.mxu0
      %10545 = vdwg.mxu0
      %10546 = vmatpush.bf16.msra.mxu0 %v9250
      %10547 = vmatpush.bf16.msra.mxu0 %v9242
      %10548 = vmatpush.bf16.msra.mxu0 %v9234
      %10549 = vmatpush.bf16.msra.mxu0 %v9226
      %10550 = vmatpush.bf16.msra.mxu0 %v9218
      %10551 = vmatpush.bf16.msra.mxu0 %v9210
      %10552 = vmatpush.bf16.msra.mxu0 %v9202
      %10553 = vmatpush.bf16.msra.mxu0 %v9194
      %10554 = vmatmul.bf16.gmra.mxu0 %v6880
      %v10555 = vpop.f32.mrf.mxu0
      %v10556 = vadd.f32 %v10543, %v10555
      %v10557 = vpop.f32.mrf.mxu0
      %10558 = vdwg.mxu0
      %10559 = vmatpush.bf16.msra.mxu0 %v9314
      %10560 = vmatpush.bf16.msra.mxu0 %v9306
      %10561 = vmatpush.bf16.msra.mxu0 %v9298
      %10562 = vmatpush.bf16.msra.mxu0 %v9290
      %10563 = vmatpush.bf16.msra.mxu0 %v9282
      %10564 = vmatpush.bf16.msra.mxu0 %v9274
      %10565 = vmatpush.bf16.msra.mxu0 %v9266
      %10566 = vmatpush.bf16.msra.mxu0 %v9258
      %10567 = vmatmul.bf16.gmra.mxu0 %v6881
      %v10568 = vpop.f32.mrf.mxu0
      %v10569 = vadd.f32 %v10556, %v10568
      %v10570 = vpop.f32.mrf.mxu0
      %10571 = vdwg.mxu0
      %10572 = vmatpush.bf16.msra.mxu0 %v9378
      %10573 = vmatpush.bf16.msra.mxu0 %v9370
      %10574 = vmatpush.bf16.msra.mxu0 %v9362
      %10575 = vmatpush.bf16.msra.mxu0 %v9354
      %10576 = vmatpush.bf16.msra.mxu0 %v9346
      %10577 = vmatpush.bf16.msra.mxu0 %v9338
      %10578 = vmatpush.bf16.msra.mxu0 %v9330
      %10579 = vmatpush.bf16.msra.mxu0 %v9322
      %10580 = vmatmul.bf16.gmra.mxu0 %v6882
      %v10581 = vpop.f32.mrf.mxu0
      %v10582 = vadd.f32 %v10569, %v10581
      %v10583 = vpop.f32.mrf.mxu0
      %10584 = vdwg.mxu0
      %10585 = vmatpush.bf16.msra.mxu0 %v9442
      %10586 = vmatpush.bf16.msra.mxu0 %v9434
      %10587 = vmatpush.bf16.msra.mxu0 %v9426
      %10588 = vmatpush.bf16.msra.mxu0 %v9418
      %10589 = vmatpush.bf16.msra.mxu0 %v9410
      %10590 = vmatpush.bf16.msra.mxu0 %v9402
      %10591 = vmatpush.bf16.msra.mxu0 %v9394
      %10592 = vmatpush.bf16.msra.mxu0 %v9386
      %10593 = vmatmul.bf16.gmra.mxu0 %v6883
      %v10594 = vpop.f32.mrf.mxu0
      %v10595 = vadd.f32 %v10582, %v10594
      %v10596 = vpop.f32.mrf.mxu0
      %10597 = vdwg.mxu0
      %10598 = vmatpush.bf16.msra.mxu0 %v8995
      %10599 = vmatpush.bf16.msra.mxu0 %v8987
      %10600 = vmatpush.bf16.msra.mxu0 %v8979
      %10601 = vmatpush.bf16.msra.mxu0 %v8971
      %10602 = vmatpush.bf16.msra.mxu0 %v8963
      %10603 = vmatpush.bf16.msra.mxu0 %v8955
      %10604 = vmatpush.bf16.msra.mxu0 %v8947
      %10605 = vmatpush.bf16.msra.mxu0 %v8939
      %10606 = vmatmul.bf16.gmra.mxu0 %v6876
      %v10607 = vpop.f32.mrf.mxu0
      %v10608 = vadd.f32 %v9964, %v10607
      %v10609 = vpop.f32.mrf.mxu0
      %10610 = vdwg.mxu0
      %10611 = vmatpush.bf16.msra.mxu0 %v9059
      %10612 = vmatpush.bf16.msra.mxu0 %v9051
      %10613 = vmatpush.bf16.msra.mxu0 %v9043
      %10614 = vmatpush.bf16.msra.mxu0 %v9035
      %10615 = vmatpush.bf16.msra.mxu0 %v9027
      %10616 = vmatpush.bf16.msra.mxu0 %v9019
      %10617 = vmatpush.bf16.msra.mxu0 %v9011
      %10618 = vmatpush.bf16.msra.mxu0 %v9003
      %10619 = vmatmul.bf16.gmra.mxu0 %v6877
      %v10620 = vpop.f32.mrf.mxu0
      %v10621 = vadd.f32 %v10608, %v10620
      %v10622 = vpop.f32.mrf.mxu0
      %10623 = vdwg.mxu0
      %10624 = vmatpush.bf16.msra.mxu0 %v9123
      %10625 = vmatpush.bf16.msra.mxu0 %v9115
      %10626 = vmatpush.bf16.msra.mxu0 %v9107
      %10627 = vmatpush.bf16.msra.mxu0 %v9099
      %10628 = vmatpush.bf16.msra.mxu0 %v9091
      %10629 = vmatpush.bf16.msra.mxu0 %v9083
      %10630 = vmatpush.bf16.msra.mxu0 %v9075
      %10631 = vmatpush.bf16.msra.mxu0 %v9067
      %10632 = vmatmul.bf16.gmra.mxu0 %v6878
      %v10633 = vpop.f32.mrf.mxu0
      %v10634 = vadd.f32 %v10621, %v10633
      %v10635 = vpop.f32.mrf.mxu0
      %10636 = vdwg.mxu0
      %10637 = vmatpush.bf16.msra.mxu0 %v9187
      %10638 = vmatpush.bf16.msra.mxu0 %v9179
      %10639 = vmatpush.bf16.msra.mxu0 %v9171
      %10640 = vmatpush.bf16.msra.mxu0 %v9163
      %10641 = vmatpush.bf16.msra.mxu0 %v9155
      %10642 = vmatpush.bf16.msra.mxu0 %v9147
      %10643 = vmatpush.bf16.msra.mxu0 %v9139
      %10644 = vmatpush.bf16.msra.mxu0 %v9131
      %10645 = vmatmul.bf16.gmra.mxu0 %v6879
      %v10646 = vpop.f32.mrf.mxu0
      %v10647 = vadd.f32 %v10634, %v10646
      %v10648 = vpop.f32.mrf.mxu0
      %10649 = vdwg.mxu0
      %10650 = vmatpush.bf16.msra.mxu0 %v9251
      %10651 = vmatpush.bf16.msra.mxu0 %v9243
      %10652 = vmatpush.bf16.msra.mxu0 %v9235
      %10653 = vmatpush.bf16.msra.mxu0 %v9227
      %10654 = vmatpush.bf16.msra.mxu0 %v9219
      %10655 = vmatpush.bf16.msra.mxu0 %v9211
      %10656 = vmatpush.bf16.msra.mxu0 %v9203
      %10657 = vmatpush.bf16.msra.mxu0 %v9195
      %10658 = vmatmul.bf16.gmra.mxu0 %v6880
      %v10659 = vpop.f32.mrf.mxu0
      %v10660 = vadd.f32 %v10647, %v10659
      %v10661 = vpop.f32.mrf.mxu0
      %10662 = vdwg.mxu0
      %10663 = vmatpush.bf16.msra.mxu0 %v9315
      %10664 = vmatpush.bf16.msra.mxu0 %v9307
      %10665 = vmatpush.bf16.msra.mxu0 %v9299
      %10666 = vmatpush.bf16.msra.mxu0 %v9291
      %10667 = vmatpush.bf16.msra.mxu0 %v9283
      %10668 = vmatpush.bf16.msra.mxu0 %v9275
      %10669 = vmatpush.bf16.msra.mxu0 %v9267
      %10670 = vmatpush.bf16.msra.mxu0 %v9259
      %10671 = vmatmul.bf16.gmra.mxu0 %v6881
      %v10672 = vpop.f32.mrf.mxu0
      %v10673 = vadd.f32 %v10660, %v10672
      %v10674 = vpop.f32.mrf.mxu0
      %10675 = vdwg.mxu0
      %10676 = vmatpush.bf16.msra.mxu0 %v9379
      %10677 = vmatpush.bf16.msra.mxu0 %v9371
      %10678 = vmatpush.bf16.msra.mxu0 %v9363
      %10679 = vmatpush.bf16.msra.mxu0 %v9355
      %10680 = vmatpush.bf16.msra.mxu0 %v9347
      %10681 = vmatpush.bf16.msra.mxu0 %v9339
      %10682 = vmatpush.bf16.msra.mxu0 %v9331
      %10683 = vmatpush.bf16.msra.mxu0 %v9323
      %10684 = vmatmul.bf16.gmra.mxu0 %v6882
      %v10685 = vpop.f32.mrf.mxu0
      %v10686 = vadd.f32 %v10673, %v10685
      %v10687 = vpop.f32.mrf.mxu0
      %10688 = vdwg.mxu0
      %10689 = vmatpush.bf16.msra.mxu0 %v9443
      %10690 = vmatpush.bf16.msra.mxu0 %v9435
      %10691 = vmatpush.bf16.msra.mxu0 %v9427
      %10692 = vmatpush.bf16.msra.mxu0 %v9419
      %10693 = vmatpush.bf16.msra.mxu0 %v9411
      %10694 = vmatpush.bf16.msra.mxu0 %v9403
      %10695 = vmatpush.bf16.msra.mxu0 %v9395
      %10696 = vmatpush.bf16.msra.mxu0 %v9387
      %10697 = vmatmul.bf16.gmra.mxu0 %v6883
      %v10698 = vpop.f32.mrf.mxu0
      %v10699 = vadd.f32 %v10686, %v10698
      %v10700 = vpop.f32.mrf.mxu0
      %10701 = vdwg.mxu0
      %10702 = vmatpush.bf16.msra.mxu0 %v8996
      %10703 = vmatpush.bf16.msra.mxu0 %v8988
      %10704 = vmatpush.bf16.msra.mxu0 %v8980
      %10705 = vmatpush.bf16.msra.mxu0 %v8972
      %10706 = vmatpush.bf16.msra.mxu0 %v8964
      %10707 = vmatpush.bf16.msra.mxu0 %v8956
      %10708 = vmatpush.bf16.msra.mxu0 %v8948
      %10709 = vmatpush.bf16.msra.mxu0 %v8940
      %10710 = vmatmul.bf16.gmra.mxu0 %v6876
      %v10711 = vpop.f32.mrf.mxu0
      %v10712 = vadd.f32 %v9965, %v10711
      %v10713 = vpop.f32.mrf.mxu0
      %10714 = vdwg.mxu0
      %10715 = vmatpush.bf16.msra.mxu0 %v9060
      %10716 = vmatpush.bf16.msra.mxu0 %v9052
      %10717 = vmatpush.bf16.msra.mxu0 %v9044
      %10718 = vmatpush.bf16.msra.mxu0 %v9036
      %10719 = vmatpush.bf16.msra.mxu0 %v9028
      %10720 = vmatpush.bf16.msra.mxu0 %v9020
      %10721 = vmatpush.bf16.msra.mxu0 %v9012
      %10722 = vmatpush.bf16.msra.mxu0 %v9004
      %10723 = vmatmul.bf16.gmra.mxu0 %v6877
      %v10724 = vpop.f32.mrf.mxu0
      %v10725 = vadd.f32 %v10712, %v10724
      %v10726 = vpop.f32.mrf.mxu0
      %10727 = vdwg.mxu0
      %10728 = vmatpush.bf16.msra.mxu0 %v9124
      %10729 = vmatpush.bf16.msra.mxu0 %v9116
      %10730 = vmatpush.bf16.msra.mxu0 %v9108
      %10731 = vmatpush.bf16.msra.mxu0 %v9100
      %10732 = vmatpush.bf16.msra.mxu0 %v9092
      %10733 = vmatpush.bf16.msra.mxu0 %v9084
      %10734 = vmatpush.bf16.msra.mxu0 %v9076
      %10735 = vmatpush.bf16.msra.mxu0 %v9068
      %10736 = vmatmul.bf16.gmra.mxu0 %v6878
      %v10737 = vpop.f32.mrf.mxu0
      %v10738 = vadd.f32 %v10725, %v10737
      %v10739 = vpop.f32.mrf.mxu0
      %10740 = vdwg.mxu0
      %10741 = vmatpush.bf16.msra.mxu0 %v9188
      %10742 = vmatpush.bf16.msra.mxu0 %v9180
      %10743 = vmatpush.bf16.msra.mxu0 %v9172
      %10744 = vmatpush.bf16.msra.mxu0 %v9164
      %10745 = vmatpush.bf16.msra.mxu0 %v9156
      %10746 = vmatpush.bf16.msra.mxu0 %v9148
      %10747 = vmatpush.bf16.msra.mxu0 %v9140
      %10748 = vmatpush.bf16.msra.mxu0 %v9132
      %10749 = vmatmul.bf16.gmra.mxu0 %v6879
      %v10750 = vpop.f32.mrf.mxu0
      %v10751 = vadd.f32 %v10738, %v10750
      %v10752 = vpop.f32.mrf.mxu0
      %10753 = vdwg.mxu0
      %10754 = vmatpush.bf16.msra.mxu0 %v9252
      %10755 = vmatpush.bf16.msra.mxu0 %v9244
      %10756 = vmatpush.bf16.msra.mxu0 %v9236
      %10757 = vmatpush.bf16.msra.mxu0 %v9228
      %10758 = vmatpush.bf16.msra.mxu0 %v9220
      %10759 = vmatpush.bf16.msra.mxu0 %v9212
      %10760 = vmatpush.bf16.msra.mxu0 %v9204
      %10761 = vmatpush.bf16.msra.mxu0 %v9196
      %10762 = vmatmul.bf16.gmra.mxu0 %v6880
      %v10763 = vpop.f32.mrf.mxu0
      %v10764 = vadd.f32 %v10751, %v10763
      %v10765 = vpop.f32.mrf.mxu0
      %10766 = vdwg.mxu0
      %10767 = vmatpush.bf16.msra.mxu0 %v9316
      %10768 = vmatpush.bf16.msra.mxu0 %v9308
      %10769 = vmatpush.bf16.msra.mxu0 %v9300
      %10770 = vmatpush.bf16.msra.mxu0 %v9292
      %10771 = vmatpush.bf16.msra.mxu0 %v9284
      %10772 = vmatpush.bf16.msra.mxu0 %v9276
      %10773 = vmatpush.bf16.msra.mxu0 %v9268
      %10774 = vmatpush.bf16.msra.mxu0 %v9260
      %10775 = vmatmul.bf16.gmra.mxu0 %v6881
      %v10776 = vpop.f32.mrf.mxu0
      %v10777 = vadd.f32 %v10764, %v10776
      %v10778 = vpop.f32.mrf.mxu0
      %10779 = vdwg.mxu0
      %10780 = vmatpush.bf16.msra.mxu0 %v9380
      %10781 = vmatpush.bf16.msra.mxu0 %v9372
      %10782 = vmatpush.bf16.msra.mxu0 %v9364
      %10783 = vmatpush.bf16.msra.mxu0 %v9356
      %10784 = vmatpush.bf16.msra.mxu0 %v9348
      %10785 = vmatpush.bf16.msra.mxu0 %v9340
      %10786 = vmatpush.bf16.msra.mxu0 %v9332
      %10787 = vmatpush.bf16.msra.mxu0 %v9324
      %10788 = vmatmul.bf16.gmra.mxu0 %v6882
      %v10789 = vpop.f32.mrf.mxu0
      %v10790 = vadd.f32 %v10777, %v10789
      %v10791 = vpop.f32.mrf.mxu0
      %10792 = vdwg.mxu0
      %10793 = vmatpush.bf16.msra.mxu0 %v9444
      %10794 = vmatpush.bf16.msra.mxu0 %v9436
      %10795 = vmatpush.bf16.msra.mxu0 %v9428
      %10796 = vmatpush.bf16.msra.mxu0 %v9420
      %10797 = vmatpush.bf16.msra.mxu0 %v9412
      %10798 = vmatpush.bf16.msra.mxu0 %v9404
      %10799 = vmatpush.bf16.msra.mxu0 %v9396
      %10800 = vmatpush.bf16.msra.mxu0 %v9388
      %10801 = vmatmul.bf16.gmra.mxu0 %v6883
      %v10802 = vpop.f32.mrf.mxu0
      %v10803 = vadd.f32 %v10790, %v10802
      %v10804 = vpop.f32.mrf.mxu0
      %10805 = vdwg.mxu0
      %v10806 = vpack.c.bf16 %v10075, %v10075
      %v10807 = vpack.c.bf16 %v10179, %v10179
      %v10808 = vpack.c.bf16 %v10283, %v10283
      %v10809 = vpack.c.bf16 %v10387, %v10387
      %v10810 = vpack.c.bf16 %v10491, %v10491
      %v10811 = vpack.c.bf16 %v10595, %v10595
      %v10812 = vpack.c.bf16 %v10699, %v10699
      %v10813 = vpack.c.bf16 %v10803, %v10803
      %v10814 = vld [vmem:[%s13] sm:$0xf]
      %v10815 = vld [vmem:[%s13 + $0x4] sm:$0xf]
      %v10816 = vld [vmem:[%s13 + $0x8] sm:$0xf]
      %v10817 = vld [vmem:[%s13 + $0xc] sm:$0xf]
      %v10818 = vld [vmem:[%s13 + $0x10] sm:$0xf]
      %v10819 = vld [vmem:[%s13 + $0x14] sm:$0xf]
      %v10820 = vld [vmem:[%s13 + $0x18] sm:$0xf]
      %v10821 = vld [vmem:[%s13 + $0x1c] sm:$0xf]
      %v10822 = vld [vmem:[%s13 + $0x20] sm:$0xf]
      %v10823 = vld [vmem:[%s13 + $0x24] sm:$0xf]
      %v10824 = vld [vmem:[%s13 + $0x28] sm:$0xf]
      %v10825 = vld [vmem:[%s13 + $0x2c] sm:$0xf]
      %v10826 = vld [vmem:[%s13 + $0x30] sm:$0xf]
      %v10827 = vld [vmem:[%s13 + $0x34] sm:$0xf]
      %v10828 = vld [vmem:[%s13 + $0x38] sm:$0xf]
      %v10829 = vld [vmem:[%s13 + $0x3c] sm:$0xf]
      %v10830 = vld [vmem:[%s13 + $0x40] sm:$0xf]
      %v10831 = vld [vmem:[%s13 + $0x44] sm:$0xf]
      %v10832 = vld [vmem:[%s13 + $0x48] sm:$0xf]
      %v10833 = vld [vmem:[%s13 + $0x4c] sm:$0xf]
      %v10834 = vld [vmem:[%s13 + $0x50] sm:$0xf]
      %v10835 = vld [vmem:[%s13 + $0x54] sm:$0xf]
      %v10836 = vld [vmem:[%s13 + $0x58] sm:$0xf]
      %v10837 = vld [vmem:[%s13 + $0x5c] sm:$0xf]
      %v10838 = vld [vmem:[%s13 + $0x60] sm:$0xf]
      %v10839 = vld [vmem:[%s13 + $0x64] sm:$0xf]
      %v10840 = vld [vmem:[%s13 + $0x68] sm:$0xf]
      %v10841 = vld [vmem:[%s13 + $0x6c] sm:$0xf]
      %v10842 = vld [vmem:[%s13 + $0x70] sm:$0xf]
      %v10843 = vld [vmem:[%s13 + $0x74] sm:$0xf]
      %v10844 = vld [vmem:[%s13 + $0x78] sm:$0xf]
      %v10845 = vld [vmem:[%s13 + $0x7c] sm:$0xf]
      %v10846 = vld [vmem:[%s13 + $0x80] sm:$0xf]
      %v10847 = vld [vmem:[%s13 + $0x84] sm:$0xf]
      %v10848 = vld [vmem:[%s13 + $0x88] sm:$0xf]
      %v10849 = vld [vmem:[%s13 + $0x8c] sm:$0xf]
      %v10850 = vld [vmem:[%s13 + $0x90] sm:$0xf]
      %v10851 = vld [vmem:[%s13 + $0x94] sm:$0xf]
      %v10852 = vld [vmem:[%s13 + $0x98] sm:$0xf]
      %v10853 = vld [vmem:[%s13 + $0x9c] sm:$0xf]
      %v10854 = vld [vmem:[%s13 + $0xa0] sm:$0xf]
      %v10855 = vld [vmem:[%s13 + $0xa4] sm:$0xf]
      %v10856 = vld [vmem:[%s13 + $0xa8] sm:$0xf]
      %v10857 = vld [vmem:[%s13 + $0xac] sm:$0xf]
      %v10858 = vld [vmem:[%s13 + $0xb0] sm:$0xf]
      %v10859 = vld [vmem:[%s13 + $0xb4] sm:$0xf]
      %v10860 = vld [vmem:[%s13 + $0xb8] sm:$0xf]
      %v10861 = vld [vmem:[%s13 + $0xbc] sm:$0xf]
      %v10862 = vld [vmem:[%s13 + $0xc0] sm:$0xf]
      %v10863 = vld [vmem:[%s13 + $0xc4] sm:$0xf]
      %v10864 = vld [vmem:[%s13 + $0xc8] sm:$0xf]
      %v10865 = vld [vmem:[%s13 + $0xcc] sm:$0xf]
      %v10866 = vld [vmem:[%s13 + $0xd0] sm:$0xf]
      %v10867 = vld [vmem:[%s13 + $0xd4] sm:$0xf]
      %v10868 = vld [vmem:[%s13 + $0xd8] sm:$0xf]
      %v10869 = vld [vmem:[%s13 + $0xdc] sm:$0xf]
      %v10870 = vld [vmem:[%s13 + $0xe0] sm:$0xf]
      %v10871 = vld [vmem:[%s13 + $0xe4] sm:$0xf]
      %v10872 = vld [vmem:[%s13 + $0xe8] sm:$0xf]
      %v10873 = vld [vmem:[%s13 + $0xec] sm:$0xf]
      %v10874 = vld [vmem:[%s13 + $0xf0] sm:$0xf]
      %v10875 = vld [vmem:[%s13 + $0xf4] sm:$0xf]
      %v10876 = vld [vmem:[%s13 + $0xf8] sm:$0xf]
      %v10877 = vld [vmem:[%s13 + $0xfc] sm:$0xf]
      %v10878 = vld [vmem:[%s13 + $0x100] sm:$0xf]
      %v10879 = vld [vmem:[%s13 + $0x104] sm:$0xf]
      %v10880 = vld [vmem:[%s13 + $0x108] sm:$0xf]
      %v10881 = vld [vmem:[%s13 + $0x10c] sm:$0xf]
      %v10882 = vld [vmem:[%s13 + $0x110] sm:$0xf]
      %v10883 = vld [vmem:[%s13 + $0x114] sm:$0xf]
      %v10884 = vld [vmem:[%s13 + $0x118] sm:$0xf]
      %v10885 = vld [vmem:[%s13 + $0x11c] sm:$0xf]
      %v10886 = vld [vmem:[%s13 + $0x120] sm:$0xf]
      %v10887 = vld [vmem:[%s13 + $0x124] sm:$0xf]
      %v10888 = vld [vmem:[%s13 + $0x128] sm:$0xf]
      %v10889 = vld [vmem:[%s13 + $0x12c] sm:$0xf]
      %v10890 = vld [vmem:[%s13 + $0x130] sm:$0xf]
      %v10891 = vld [vmem:[%s13 + $0x134] sm:$0xf]
      %v10892 = vld [vmem:[%s13 + $0x138] sm:$0xf]
      %v10893 = vld [vmem:[%s13 + $0x13c] sm:$0xf]
      %v10894 = vld [vmem:[%s13 + $0x140] sm:$0xf]
      %v10895 = vld [vmem:[%s13 + $0x144] sm:$0xf]
      %v10896 = vld [vmem:[%s13 + $0x148] sm:$0xf]
      %v10897 = vld [vmem:[%s13 + $0x14c] sm:$0xf]
      %v10898 = vld [vmem:[%s13 + $0x150] sm:$0xf]
      %v10899 = vld [vmem:[%s13 + $0x154] sm:$0xf]
      %v10900 = vld [vmem:[%s13 + $0x158] sm:$0xf]
      %v10901 = vld [vmem:[%s13 + $0x15c] sm:$0xf]
      %v10902 = vld [vmem:[%s13 + $0x160] sm:$0xf]
      %v10903 = vld [vmem:[%s13 + $0x164] sm:$0xf]
      %v10904 = vld [vmem:[%s13 + $0x168] sm:$0xf]
      %v10905 = vld [vmem:[%s13 + $0x16c] sm:$0xf]
      %v10906 = vld [vmem:[%s13 + $0x170] sm:$0xf]
      %v10907 = vld [vmem:[%s13 + $0x174] sm:$0xf]
      %v10908 = vld [vmem:[%s13 + $0x178] sm:$0xf]
      %v10909 = vld [vmem:[%s13 + $0x17c] sm:$0xf]
      %v10910 = vld [vmem:[%s13 + $0x180] sm:$0xf]
      %v10911 = vld [vmem:[%s13 + $0x184] sm:$0xf]
      %v10912 = vld [vmem:[%s13 + $0x188] sm:$0xf]
      %v10913 = vld [vmem:[%s13 + $0x18c] sm:$0xf]
      %v10914 = vld [vmem:[%s13 + $0x190] sm:$0xf]
      %v10915 = vld [vmem:[%s13 + $0x194] sm:$0xf]
      %v10916 = vld [vmem:[%s13 + $0x198] sm:$0xf]
      %v10917 = vld [vmem:[%s13 + $0x19c] sm:$0xf]
      %v10918 = vld [vmem:[%s13 + $0x1a0] sm:$0xf]
      %v10919 = vld [vmem:[%s13 + $0x1a4] sm:$0xf]
      %v10920 = vld [vmem:[%s13 + $0x1a8] sm:$0xf]
      %v10921 = vld [vmem:[%s13 + $0x1ac] sm:$0xf]
      %v10922 = vld [vmem:[%s13 + $0x1b0] sm:$0xf]
      %v10923 = vld [vmem:[%s13 + $0x1b4] sm:$0xf]
      %v10924 = vld [vmem:[%s13 + $0x1b8] sm:$0xf]
      %v10925 = vld [vmem:[%s13 + $0x1bc] sm:$0xf]
      %v10926 = vld [vmem:[%s13 + $0x1c0] sm:$0xf]
      %v10927 = vld [vmem:[%s13 + $0x1c4] sm:$0xf]
      %v10928 = vld [vmem:[%s13 + $0x1c8] sm:$0xf]
      %v10929 = vld [vmem:[%s13 + $0x1cc] sm:$0xf]
      %v10930 = vld [vmem:[%s13 + $0x1d0] sm:$0xf]
      %v10931 = vld [vmem:[%s13 + $0x1d4] sm:$0xf]
      %v10932 = vld [vmem:[%s13 + $0x1d8] sm:$0xf]
      %v10933 = vld [vmem:[%s13 + $0x1dc] sm:$0xf]
      %v10934 = vld [vmem:[%s13 + $0x1e0] sm:$0xf]
      %v10935 = vld [vmem:[%s13 + $0x1e4] sm:$0xf]
      %v10936 = vld [vmem:[%s13 + $0x1e8] sm:$0xf]
      %v10937 = vld [vmem:[%s13 + $0x1ec] sm:$0xf]
      %v10938 = vld [vmem:[%s13 + $0x1f0] sm:$0xf]
      %v10939 = vld [vmem:[%s13 + $0x1f4] sm:$0xf]
      %v10940 = vld [vmem:[%s13 + $0x1f8] sm:$0xf]
      %v10941 = vld [vmem:[%s13 + $0x1fc] sm:$0xf]
      %v10942 = vld [vmem:[%s14] sm:$0x1]
      %v11071 = vunpack.c.l.b16 %v10814
      %v11072 = vunpack.c.l.b16 %v10815
      %v11073 = vunpack.c.l.b16 %v10816
      %v11074 = vunpack.c.l.b16 %v10817
      %v11075 = vunpack.c.l.b16 %v10818
      %v11076 = vunpack.c.l.b16 %v10819
      %v11077 = vunpack.c.l.b16 %v10820
      %v11078 = vunpack.c.l.b16 %v10821
      %v11079 = vunpack.c.l.b16 %v10822
      %v11080 = vunpack.c.l.b16 %v10823
      %v11081 = vunpack.c.l.b16 %v10824
      %v11082 = vunpack.c.l.b16 %v10825
      %v11083 = vunpack.c.l.b16 %v10826
      %v11084 = vunpack.c.l.b16 %v10827
      %v11085 = vunpack.c.l.b16 %v10828
      %v11086 = vunpack.c.l.b16 %v10829
      %v11087 = vunpack.c.l.b16 %v10830
      %v11088 = vunpack.c.l.b16 %v10831
      %v11089 = vunpack.c.l.b16 %v10832
      %v11090 = vunpack.c.l.b16 %v10833
      %v11091 = vunpack.c.l.b16 %v10834
      %v11092 = vunpack.c.l.b16 %v10835
      %v11093 = vunpack.c.l.b16 %v10836
      %v11094 = vunpack.c.l.b16 %v10837
      %v11095 = vunpack.c.l.b16 %v10838
      %v11096 = vunpack.c.l.b16 %v10839
      %v11097 = vunpack.c.l.b16 %v10840
      %v11098 = vunpack.c.l.b16 %v10841
      %v11099 = vunpack.c.l.b16 %v10842
      %v11100 = vunpack.c.l.b16 %v10843
      %v11101 = vunpack.c.l.b16 %v10844
      %v11102 = vunpack.c.l.b16 %v10845
      %v11103 = vunpack.c.l.b16 %v10846
      %v11104 = vunpack.c.l.b16 %v10847
      %v11105 = vunpack.c.l.b16 %v10848
      %v11106 = vunpack.c.l.b16 %v10849
      %v11107 = vunpack.c.l.b16 %v10850
      %v11108 = vunpack.c.l.b16 %v10851
      %v11109 = vunpack.c.l.b16 %v10852
      %v11110 = vunpack.c.l.b16 %v10853
      %v11111 = vunpack.c.l.b16 %v10854
      %v11112 = vunpack.c.l.b16 %v10855
      %v11113 = vunpack.c.l.b16 %v10856
      %v11114 = vunpack.c.l.b16 %v10857
      %v11115 = vunpack.c.l.b16 %v10858
      %v11116 = vunpack.c.l.b16 %v10859
      %v11117 = vunpack.c.l.b16 %v10860
      %v11118 = vunpack.c.l.b16 %v10861
      %v11119 = vunpack.c.l.b16 %v10862
      %v11120 = vunpack.c.l.b16 %v10863
      %v11121 = vunpack.c.l.b16 %v10864
      %v11122 = vunpack.c.l.b16 %v10865
      %v11123 = vunpack.c.l.b16 %v10866
      %v11124 = vunpack.c.l.b16 %v10867
      %v11125 = vunpack.c.l.b16 %v10868
      %v11126 = vunpack.c.l.b16 %v10869
      %v11127 = vunpack.c.l.b16 %v10870
      %v11128 = vunpack.c.l.b16 %v10871
      %v11129 = vunpack.c.l.b16 %v10872
      %v11130 = vunpack.c.l.b16 %v10873
      %v11131 = vunpack.c.l.b16 %v10874
      %v11132 = vunpack.c.l.b16 %v10875
      %v11133 = vunpack.c.l.b16 %v10876
      %v11134 = vunpack.c.l.b16 %v10877
      %v11135 = vunpack.c.l.b16 %v10878
      %v11136 = vunpack.c.l.b16 %v10879
      %v11137 = vunpack.c.l.b16 %v10880
      %v11138 = vunpack.c.l.b16 %v10881
      %v11139 = vunpack.c.l.b16 %v10882
      %v11140 = vunpack.c.l.b16 %v10883
      %v11141 = vunpack.c.l.b16 %v10884
      %v11142 = vunpack.c.l.b16 %v10885
      %v11143 = vunpack.c.l.b16 %v10886
      %v11144 = vunpack.c.l.b16 %v10887
      %v11145 = vunpack.c.l.b16 %v10888
      %v11146 = vunpack.c.l.b16 %v10889
      %v11147 = vunpack.c.l.b16 %v10890
      %v11148 = vunpack.c.l.b16 %v10891
      %v11149 = vunpack.c.l.b16 %v10892
      %v11150 = vunpack.c.l.b16 %v10893
      %v11151 = vunpack.c.l.b16 %v10894
      %v11152 = vunpack.c.l.b16 %v10895
      %v11153 = vunpack.c.l.b16 %v10896
      %v11154 = vunpack.c.l.b16 %v10897
      %v11155 = vunpack.c.l.b16 %v10898
      %v11156 = vunpack.c.l.b16 %v10899
      %v11157 = vunpack.c.l.b16 %v10900
      %v11158 = vunpack.c.l.b16 %v10901
      %v11159 = vunpack.c.l.b16 %v10902
      %v11160 = vunpack.c.l.b16 %v10903
      %v11161 = vunpack.c.l.b16 %v10904
      %v11162 = vunpack.c.l.b16 %v10905
      %v11163 = vunpack.c.l.b16 %v10906
      %v11164 = vunpack.c.l.b16 %v10907
      %v11165 = vunpack.c.l.b16 %v10908
      %v11166 = vunpack.c.l.b16 %v10909
      %v11167 = vunpack.c.l.b16 %v10910
      %v11168 = vunpack.c.l.b16 %v10911
      %v11169 = vunpack.c.l.b16 %v10912
      %v11170 = vunpack.c.l.b16 %v10913
      %v11171 = vunpack.c.l.b16 %v10914
      %v11172 = vunpack.c.l.b16 %v10915
      %v11173 = vunpack.c.l.b16 %v10916
      %v11174 = vunpack.c.l.b16 %v10917
      %v11175 = vunpack.c.l.b16 %v10918
      %v11176 = vunpack.c.l.b16 %v10919
      %v11177 = vunpack.c.l.b16 %v10920
      %v11178 = vunpack.c.l.b16 %v10921
      %v11179 = vunpack.c.l.b16 %v10922
      %v11180 = vunpack.c.l.b16 %v10923
      %v11181 = vunpack.c.l.b16 %v10924
      %v11182 = vunpack.c.l.b16 %v10925
      %v11183 = vunpack.c.l.b16 %v10926
      %v11184 = vunpack.c.l.b16 %v10927
      %v11185 = vunpack.c.l.b16 %v10928
      %v11186 = vunpack.c.l.b16 %v10929
      %v11187 = vunpack.c.l.b16 %v10930
      %v11188 = vunpack.c.l.b16 %v10931
      %v11189 = vunpack.c.l.b16 %v10932
      %v11190 = vunpack.c.l.b16 %v10933
      %v11191 = vunpack.c.l.b16 %v10934
      %v11192 = vunpack.c.l.b16 %v10935
      %v11193 = vunpack.c.l.b16 %v10936
      %v11194 = vunpack.c.l.b16 %v10937
      %v11195 = vunpack.c.l.b16 %v10938
      %v11196 = vunpack.c.l.b16 %v10939
      %v11197 = vunpack.c.l.b16 %v10940
      %v11198 = vunpack.c.l.b16 %v10941
      %v11199 = vpack.c.b16 %v11072, %v11071
      %v11200 = vpack.c.b16 %v11074, %v11073
      %v11201 = vpack.c.b16 %v11076, %v11075
      %v11202 = vpack.c.b16 %v11078, %v11077
      %v11203 = vpack.c.b16 %v11080, %v11079
      %v11204 = vpack.c.b16 %v11082, %v11081
      %v11205 = vpack.c.b16 %v11084, %v11083
      %v11206 = vpack.c.b16 %v11086, %v11085
      %v11207 = vpack.c.b16 %v11088, %v11087
      %v11208 = vpack.c.b16 %v11090, %v11089
      %v11209 = vpack.c.b16 %v11092, %v11091
      %v11210 = vpack.c.b16 %v11094, %v11093
      %v11211 = vpack.c.b16 %v11096, %v11095
      %v11212 = vpack.c.b16 %v11098, %v11097
      %v11213 = vpack.c.b16 %v11100, %v11099
      %v11214 = vpack.c.b16 %v11102, %v11101
      %v11215 = vpack.c.b16 %v11104, %v11103
      %v11216 = vpack.c.b16 %v11106, %v11105
      %v11217 = vpack.c.b16 %v11108, %v11107
      %v11218 = vpack.c.b16 %v11110, %v11109
      %v11219 = vpack.c.b16 %v11112, %v11111
      %v11220 = vpack.c.b16 %v11114, %v11113
      %v11221 = vpack.c.b16 %v11116, %v11115
      %v11222 = vpack.c.b16 %v11118, %v11117
      %v11223 = vpack.c.b16 %v11120, %v11119
      %v11224 = vpack.c.b16 %v11122, %v11121
      %v11225 = vpack.c.b16 %v11124, %v11123
      %v11226 = vpack.c.b16 %v11126, %v11125
      %v11227 = vpack.c.b16 %v11128, %v11127
      %v11228 = vpack.c.b16 %v11130, %v11129
      %v11229 = vpack.c.b16 %v11132, %v11131
      %v11230 = vpack.c.b16 %v11134, %v11133
      %v11231 = vpack.c.b16 %v11136, %v11135
      %v11232 = vpack.c.b16 %v11138, %v11137
      %v11233 = vpack.c.b16 %v11140, %v11139
      %v11234 = vpack.c.b16 %v11142, %v11141
      %v11235 = vpack.c.b16 %v11144, %v11143
      %v11236 = vpack.c.b16 %v11146, %v11145
      %v11237 = vpack.c.b16 %v11148, %v11147
      %v11238 = vpack.c.b16 %v11150, %v11149
      %v11239 = vpack.c.b16 %v11152, %v11151
      %v11240 = vpack.c.b16 %v11154, %v11153
      %v11241 = vpack.c.b16 %v11156, %v11155
      %v11242 = vpack.c.b16 %v11158, %v11157
      %v11243 = vpack.c.b16 %v11160, %v11159
      %v11244 = vpack.c.b16 %v11162, %v11161
      %v11245 = vpack.c.b16 %v11164, %v11163
      %v11246 = vpack.c.b16 %v11166, %v11165
      %v11247 = vpack.c.b16 %v11168, %v11167
      %v11248 = vpack.c.b16 %v11170, %v11169
      %v11249 = vpack.c.b16 %v11172, %v11171
      %v11250 = vpack.c.b16 %v11174, %v11173
      %v11251 = vpack.c.b16 %v11176, %v11175
      %v11252 = vpack.c.b16 %v11178, %v11177
      %v11253 = vpack.c.b16 %v11180, %v11179
      %v11254 = vpack.c.b16 %v11182, %v11181
      %v11255 = vpack.c.b16 %v11184, %v11183
      %v11256 = vpack.c.b16 %v11186, %v11185
      %v11257 = vpack.c.b16 %v11188, %v11187
      %v11258 = vpack.c.b16 %v11190, %v11189
      %v11259 = vpack.c.b16 %v11192, %v11191
      %v11260 = vpack.c.b16 %v11194, %v11193
      %v11261 = vpack.c.b16 %v11196, %v11195
      %v11262 = vpack.c.b16 %v11198, %v11197
      %11327 = vmatpush.bf16.msra.mxu0 %v11206
      %11328 = vmatpush.bf16.msra.mxu0 %v11205
      %11329 = vmatpush.bf16.msra.mxu0 %v11204
      %11330 = vmatpush.bf16.msra.mxu0 %v11203
      %11331 = vmatpush.bf16.msra.mxu0 %v11202
      %11332 = vmatpush.bf16.msra.mxu0 %v11201
      %11333 = vmatpush.bf16.msra.mxu0 %v11200
      %11334 = vmatpush.bf16.msra.mxu0 %v11199
      %11335 = vmatmul.bf16.gmra.mxu0 %v10806
      %v11336 = vpop.f32.mrf.mxu0
      %v11337 = vadd.f32 %v10942, %v11336
      %v11338 = vpop.f32.mrf.mxu0
      %11339 = vdwg.mxu0
      %11340 = vmatpush.bf16.msra.mxu0 %v11214
      %11341 = vmatpush.bf16.msra.mxu0 %v11213
      %11342 = vmatpush.bf16.msra.mxu0 %v11212
      %11343 = vmatpush.bf16.msra.mxu0 %v11211
      %11344 = vmatpush.bf16.msra.mxu0 %v11210
      %11345 = vmatpush.bf16.msra.mxu0 %v11209
      %11346 = vmatpush.bf16.msra.mxu0 %v11208
      %11347 = vmatpush.bf16.msra.mxu0 %v11207
      %11348 = vmatmul.bf16.gmra.mxu0 %v10807
      %v11349 = vpop.f32.mrf.mxu0
      %v11350 = vadd.f32 %v11337, %v11349
      %v11351 = vpop.f32.mrf.mxu0
      %11352 = vdwg.mxu0
      %11353 = vmatpush.bf16.msra.mxu0 %v11222
      %11354 = vmatpush.bf16.msra.mxu0 %v11221
      %11355 = vmatpush.bf16.msra.mxu0 %v11220
      %11356 = vmatpush.bf16.msra.mxu0 %v11219
      %11357 = vmatpush.bf16.msra.mxu0 %v11218
      %11358 = vmatpush.bf16.msra.mxu0 %v11217
      %11359 = vmatpush.bf16.msra.mxu0 %v11216
      %11360 = vmatpush.bf16.msra.mxu0 %v11215
      %11361 = vmatmul.bf16.gmra.mxu0 %v10808
      %v11362 = vpop.f32.mrf.mxu0
      %v11363 = vadd.f32 %v11350, %v11362
      %v11364 = vpop.f32.mrf.mxu0
      %11365 = vdwg.mxu0
      %11366 = vmatpush.bf16.msra.mxu0 %v11230
      %11367 = vmatpush.bf16.msra.mxu0 %v11229
      %11368 = vmatpush.bf16.msra.mxu0 %v11228
      %11369 = vmatpush.bf16.msra.mxu0 %v11227
      %11370 = vmatpush.bf16.msra.mxu0 %v11226
      %11371 = vmatpush.bf16.msra.mxu0 %v11225
      %11372 = vmatpush.bf16.msra.mxu0 %v11224
      %11373 = vmatpush.bf16.msra.mxu0 %v11223
      %11374 = vmatmul.bf16.gmra.mxu0 %v10809
      %v11375 = vpop.f32.mrf.mxu0
      %v11376 = vadd.f32 %v11363, %v11375
      %v11377 = vpop.f32.mrf.mxu0
      %11378 = vdwg.mxu0
      %11379 = vmatpush.bf16.msra.mxu0 %v11238
      %11380 = vmatpush.bf16.msra.mxu0 %v11237
      %11381 = vmatpush.bf16.msra.mxu0 %v11236
      %11382 = vmatpush.bf16.msra.mxu0 %v11235
      %11383 = vmatpush.bf16.msra.mxu0 %v11234
      %11384 = vmatpush.bf16.msra.mxu0 %v11233
      %11385 = vmatpush.bf16.msra.mxu0 %v11232
      %11386 = vmatpush.bf16.msra.mxu0 %v11231
      %11387 = vmatmul.bf16.gmra.mxu0 %v10810
      %v11388 = vpop.f32.mrf.mxu0
      %v11389 = vadd.f32 %v11376, %v11388
      %v11390 = vpop.f32.mrf.mxu0
      %11391 = vdwg.mxu0
      %11392 = vmatpush.bf16.msra.mxu0 %v11246
      %11393 = vmatpush.bf16.msra.mxu0 %v11245
      %11394 = vmatpush.bf16.msra.mxu0 %v11244
      %11395 = vmatpush.bf16.msra.mxu0 %v11243
      %11396 = vmatpush.bf16.msra.mxu0 %v11242
      %11397 = vmatpush.bf16.msra.mxu0 %v11241
      %11398 = vmatpush.bf16.msra.mxu0 %v11240
      %11399 = vmatpush.bf16.msra.mxu0 %v11239
      %11400 = vmatmul.bf16.gmra.mxu0 %v10811
      %v11401 = vpop.f32.mrf.mxu0
      %v11402 = vadd.f32 %v11389, %v11401
      %v11403 = vpop.f32.mrf.mxu0
      %11404 = vdwg.mxu0
      %11405 = vmatpush.bf16.msra.mxu0 %v11254
      %11406 = vmatpush.bf16.msra.mxu0 %v11253
      %11407 = vmatpush.bf16.msra.mxu0 %v11252
      %11408 = vmatpush.bf16.msra.mxu0 %v11251
      %11409 = vmatpush.bf16.msra.mxu0 %v11250
      %11410 = vmatpush.bf16.msra.mxu0 %v11249
      %11411 = vmatpush.bf16.msra.mxu0 %v11248
      %11412 = vmatpush.bf16.msra.mxu0 %v11247
      %11413 = vmatmul.bf16.gmra.mxu0 %v10812
      %v11414 = vpop.f32.mrf.mxu0
      %v11415 = vadd.f32 %v11402, %v11414
      %v11416 = vpop.f32.mrf.mxu0
      %11417 = vdwg.mxu0
      %11418 = vmatpush.bf16.msra.mxu0 %v11262
      %11419 = vmatpush.bf16.msra.mxu0 %v11261
      %11420 = vmatpush.bf16.msra.mxu0 %v11260
      %11421 = vmatpush.bf16.msra.mxu0 %v11259
      %11422 = vmatpush.bf16.msra.mxu0 %v11258
      %11423 = vmatpush.bf16.msra.mxu0 %v11257
      %11424 = vmatpush.bf16.msra.mxu0 %v11256
      %11425 = vmatpush.bf16.msra.mxu0 %v11255
      %11426 = vmatmul.bf16.gmra.mxu0 %v10813
      %v11427 = vpop.f32.mrf.mxu0
      %v11428 = vadd.f32 %v11415, %v11427
      %v11429 = vpop.f32.mrf.mxu0
      %11430 = vdwg.mxu0
      %vm11431 = vcmask 196608
      %11432 = vst.msk [vmem:[%s530] sm:$0x1] %vm11431, %v11428
      %p11433 = scmp.lt.s32.totalorder %s28, 1
      %s11434 = scalar_select %p11433, %s28, 1
      %s11435 = smul.addr %s11434, 4
      %s11436 = smul.addr %s11435, 8
      %s11437 = scalar_lea.vmem %s15, %s11436
      %p11438 = scmp.lt.s32.totalorder %s28, 1
      %s11439 = scalar_select %p11438, %s28, 1
      %s11440 = scalar_lea.vmem %s16, %s11439
      // Predicated region
      $region81: #{faster_rcnn_forward.1} parent=79 // pred_check
        %p11441 = pneg %p366
      $region82: #{faster_rcnn_forward.1} parent=79 // pred_check_branch
        %11443 = sbr.rel (%p11441) target = $region84
      $region83: #{faster_rcnn_forward.1} parent=79 // pred_region
        _
      $region84: #{faster_rcnn_forward.1} parent=79 // pred_fallthru
        _
      // Predicated region
      $region85: #{faster_rcnn_forward.1} parent=79 // pred_check
        %p11444 = pneg %p392
      $region86: #{faster_rcnn_forward.1} parent=79 // pred_check_branch
        %11446 = sbr.rel (%p11444) target = $region88
      $region87: #{faster_rcnn_forward.1} parent=79 // pred_region
        _
      $region88: #{faster_rcnn_forward.1} parent=79 // pred_fallthru
        _
    $region80: #{faster_rcnn_forward.1} parent=5 // pred_fallthru
      _
    %p11447 = scmp.le.s32.totalorder 2, %s23
    // Predicated region
    $region89: #{faster_rcnn_forward.1} parent=5 // pred_check
      %p11448 = pneg %p11447
    $region90: #{faster_rcnn_forward.1} parent=5 // pred_check_branch
      %11450 = sbr.rel (%p11448) target = $region92
    $region91: #{faster_rcnn_forward.1} parent=5 // pred_region
      %s11451 = ssub.s32 %s23, 2
      // Predicated region
      $region93: #{faster_rcnn_forward.1} parent=91 // pred_check
        %p11452 = pneg %p372
      $region94: #{faster_rcnn_forward.1} parent=91 // pred_check_branch
        %11454 = sbr.rel (%p11452) target = $region96
      $region95: #{faster_rcnn_forward.1} parent=91 // pred_region
        %p11455 = scmp.lt.s32.totalorder %s29, 1
        %s11456 = scalar_select %p11455, %s29, 1
        %s11457 = smul.addr %s11456, 4
        %s11458 = smul.addr %s11457, 8
        %s11459 = scalar_lea.vmem %s15, %s11458
      $region96: #{faster_rcnn_forward.1} parent=91 // pred_fallthru
        _
      // Predicated region
      $region97: #{faster_rcnn_forward.1} parent=91 // pred_check
        %p11460 = pneg %p398
      $region98: #{faster_rcnn_forward.1} parent=91 // pred_check_branch
        %11462 = sbr.rel (%p11460) target = $region100
      $region99: #{faster_rcnn_forward.1} parent=91 // pred_region
        %p11463 = scmp.lt.s32.totalorder %s29, 1
        %s11464 = scalar_select %p11463, %s29, 1
        %s11465 = scalar_lea.vmem %s16, %s11464
      $region100: #{faster_rcnn_forward.1} parent=91 // pred_fallthru
        _
    $region92: #{faster_rcnn_forward.1} parent=5 // pred_fallthru
      _
  $region6: #{faster_rcnn_forward.1} parent=0 // loop_footer
    %s27 = sadd.s32 1, %s23
  $region7: #{faster_rcnn_forward.1} parent=0 // loop_footer_branch
    %22 = sbr.rel target = $region3
  $region8: #{faster_rcnn_forward.1} parent=0 // loop_exit
    _

</llo_original>
